<compile_context>
chip_gen: v7x
topology: tpu7x:2x2x1
jax: 0.10.0
libtpu: 0.0.40
codegen_flags: <defaults>
</compile_context>

<pallas_src>
import functools

import jax
import jax.numpy as jnp
from jax.experimental import pallas as pl
from jax.experimental.pallas import tpu as pltpu


# ----------------------------------------------------------------------------
# Fused residual-block kernel (one batch slab per grid step)
# ----------------------------------------------------------------------------
def _residual_block_kernel(x_ref, m_ref, w1_ref, t1_ref, w2_ref, t2_ref,
                           o_ref, p_ref, *, C, Wp, Lout, top):
    """
    x_ref : (1, NR, C)   zero-padded activation slab (compute dtype), NR = top + (H+2)*Wp + bot
    m_ref : (Lout, 1)    interior-column mask (f32), Lout = H*Wp
    w*_ref: (9C, C)      BN-scale-folded conv taps, stacked along the contraction dim
    t*_ref: (1, C)       folded conv-bias + eval-BN shift (f32)
    o_ref : (1, Lout, C) output, interior rows only (f32)
    p_ref : (Lout, 9C)   VMEM scratch holding the im2col slab (compute dtype)
    """
    nrows = x_ref.shape[1]
    r0 = top + Wp                                   # first output-window row (8-aligned)
    # tap start rows in the slab for output-window row 0 (t = kh*3 + kw)
    starts = [top - 1 + kh * Wp + kw for kh in range(3) for kw in range(3)]

    def im2col(read_slab):
        # One build pass: all relayout work for the +/-1-column taps is folded
        # into these 9 stores (centre-column taps are sublane-aligned).
        for t, s in enumerate(starts):
            p_ref[:, t * C:(t + 1) * C] = read_slab(s)

    def gemm_bias(w_ref, t_ref):
        # Single K=9C MXU GEMM, f32 accumulation, per-channel shift epilogue.
        return jnp.dot(p_ref[...], w_ref[...],
                       preferred_element_type=jnp.float32) + t_ref[...]

    # ---- conv1 (+ folded bn1) -> relu; mask zeroes the width padding ring ----
    im2col(lambda s: x_ref[0, s:s + Lout, :])
    h1 = jnp.maximum(gemm_bias(w1_ref, t1_ref), 0.0) * m_ref[...]
    h1 = h1.astype(p_ref.dtype)

    # Re-padded intermediate stays on chip as a value; only tiny zero halos are
    # materialized (no full-slab zero-fill per grid step).
    ztop = jnp.zeros((r0, C), p_ref.dtype)
    zbot = jnp.zeros((nrows - r0 - Lout, C), p_ref.dtype)
    h_slab = jnp.concatenate([ztop, h1, zbot], axis=0)

    # ---- conv2 (+ folded bn2) -> residual add -> relu ----
    im2col(lambda s: h_slab[s:s + Lout, :])
    res = x_ref[0, r0:r0 + Lout, :].astype(jnp.float32)
    o_ref[0] = jnp.maximum(gemm_bias(w2_ref, t2_ref) + res, 0.0).astype(o_ref.dtype)


# ----------------------------------------------------------------------------
# Host-side parameter folding
# ----------------------------------------------------------------------------
def _fold_conv_bn(w_oihw, bias, gamma, beta, mean, var, eps, dtype):
    """Fold eval-mode BN scale into the conv weights; keep only a per-channel shift."""
    C = w_oihw.shape[0]
    s = gamma / jnp.sqrt(var + eps)                         # per OUTPUT channel
    w = w_oihw * s[:, None, None, None]                     # scale folded into weights
    # (Cout, Cin, KH, KW) -> (KH, KW, Cin, Cout) -> (9*Cin, Cout), matching im2col order
    w9 = jnp.transpose(w, (2, 3, 1, 0)).reshape(9 * C, C).astype(dtype)
    shift = ((bias - mean) * s + beta).reshape(1, C).astype(jnp.float32)
    return w9, shift


# ----------------------------------------------------------------------------
# Wrapper
# ----------------------------------------------------------------------------
def basic_residual_block_forward(x_nchw, params, eps=1e-5,
                                 compute_dtype=jnp.bfloat16):
    B, C, H, W = x_nchw.shape
    Wp = ((W + 2 + 7) // 8) * 8          # padded width rounded to a sublane multiple
    Hp = H + 2
    TOP = BOT = 8                        # extra zero rows: in-bounds taps + aligned window
    Lout = H * Wp                        # output window: whole rows h=1..H
    NR = TOP + Hp * Wp + BOT

    # Glue in: NCHW -> zero-padded (and width-padded) NHWC, flattened row slab.
    x_nhwc = jnp.transpose(x_nchw, (0, 2, 3, 1))
    xp = jnp.pad(x_nhwc, ((0, 0), (1, 1), (1, Wp - W - 1), (0, 0)))
    xp = xp.reshape(B, Hp * Wp, C)
    xp = jnp.pad(xp, ((0, 0), (TOP, BOT), (0, 0))).astype(compute_dtype)

    # Interior-column mask for the window rows (precomputed once, stays resident).
    wcol = jnp.arange(Lout, dtype=jnp.int32) % Wp
    mask = ((wcol >= 1) & (wcol <= W)).astype(jnp.float32).reshape(Lout, 1)

    w1, t1 = _fold_conv_bn(params["conv1_w"], params["conv1_b"],
                           params["bn1_gamma"], params["bn1_beta"],
                           params["bn1_mean"], params["bn1_var"], eps, compute_dtype)
    w2, t2 = _fold_conv_bn(params["conv2_w"], params["conv2_b"],
                           params["bn2_gamma"], params["bn2_beta"],
                           params["bn2_mean"], params["bn2_var"], eps, compute_dtype)

    kernel = functools.partial(_residual_block_kernel, C=C, Wp=Wp, Lout=Lout, top=TOP)

    itemsize = jnp.dtype(compute_dtype).itemsize
    flops = B * 2 * (2 * Lout * 9 * C * C)
    bytes_accessed = (B * NR * C * itemsize            # activation slabs in
                      + B * Lout * C * 4               # f32 output out
                      + 2 * 9 * C * C * itemsize       # folded weights
                      + Lout * 4 + 2 * C * 4)          # mask + shifts

    out_flat = pl.pallas_call(
        kernel,
        out_shape=jax.ShapeDtypeStruct((B, Lout, C), jnp.float32),
        grid_spec=pltpu.PrefetchScalarGridSpec(
            num_scalar_prefetch=0,
            grid=(B,),
            in_specs=[
                pl.BlockSpec((1, NR, C), lambda b: (b, 0, 0)),      # activation slab
                pl.BlockSpec((Lout, 1), lambda b: (0, 0)),          # interior-col mask (resident)
                pl.BlockSpec((9 * C, C), lambda b: (0, 0)),         # w1 (BN-folded, resident)
                pl.BlockSpec((1, C), lambda b: (0, 0)),             # bn1 shift
                pl.BlockSpec((9 * C, C), lambda b: (0, 0)),         # w2 (BN-folded, resident)
                pl.BlockSpec((1, C), lambda b: (0, 0)),             # bn2 shift
            ],
            out_specs=pl.BlockSpec((1, Lout, C), lambda b: (b, 0, 0)),
            scratch_shapes=[pltpu.VMEM((Lout, 9 * C), compute_dtype)],
        ),
        compiler_params=pltpu.CompilerParams(
            dimension_semantics=("parallel",),          # v7x: 2 TCs split the batch
            vmem_limit_bytes=32 * 1024 * 1024,          # ample headroom at these shapes
        ),
        cost_estimate=pl.CostEstimate(flops=flops, transcendentals=0,
                                      bytes_accessed=bytes_accessed),
    )(xp, mask, w1, t1, w2, t2)

    # Glue out: drop the width padding columns, back to NCHW.
    out = out_flat.reshape(B, H, Wp, C)[:, :, 1:W + 1, :]
    return jnp.transpose(out, (0, 3, 1, 2))


# ----------------------------------------------------------------------------
# Pure-JAX reference (eval-mode BN, f32 / HIGHEST precision)
# ----------------------------------------------------------------------------
def _reference(x_nchw, p, eps=1e-5):
    def conv_bn(h, w, b, gamma, beta, mean, var):
        y = jax.lax.conv_general_dilated(
            h, w, window_strides=(1, 1), padding=((1, 1), (1, 1)),
            dimension_numbers=("NCHW", "OIHW", "NCHW"),
            precision=jax.lax.Precision.HIGHEST)
        y = y + b.reshape(1, -1, 1, 1)
        s = (gamma / jnp.sqrt(var + eps)).reshape(1, -1, 1, 1)
        return (y - mean.reshape(1, -1, 1, 1)) * s + beta.reshape(1, -1, 1, 1)

    h = jax.nn.relu(conv_bn(x_nchw, p["conv1_w"], p["conv1_b"],
                            p["bn1_gamma"], p["bn1_beta"], p["bn1_mean"], p["bn1_var"]))
    h = conv_bn(h, p["conv2_w"], p["conv2_b"],
                p["bn2_gamma"], p["bn2_beta"], p["bn2_mean"], p["bn2_var"])
    return jax.nn.relu(h + x_nchw)


# ----------------------------------------------------------------------------
# Main
# ----------------------------------------------------------------------------
if __name__ == "__main__":
    key = jax.random.PRNGKey(0)
    ks = jax.random.split(key, 13)

    B, C, H, W = 2, 32, 16, 16
    x = jax.random.normal(ks[0], (B, C, H, W), jnp.float32)
    params = {
        "conv1_w": 0.1 * jax.random.normal(ks[1], (C, C, 3, 3), jnp.float32),
        "conv1_b": 0.1 * jax.random.normal(ks[2], (C,), jnp.float32),
        "bn1_gamma": 1.0 + 0.1 * jax.random.normal(ks[3], (C,), jnp.float32),
        "bn1_beta": 0.1 * jax.random.normal(ks[4], (C,), jnp.float32),
        "bn1_mean": 0.1 * jax.random.normal(ks[5], (C,), jnp.float32),
        "bn1_var": 0.5 + jnp.abs(jax.random.normal(ks[6], (C,), jnp.float32)),
        "conv2_w": 0.1 * jax.random.normal(ks[7], (C, C, 3, 3), jnp.float32),
        "conv2_b": 0.1 * jax.random.normal(ks[8], (C,), jnp.float32),
        "bn2_gamma": 1.0 + 0.1 * jax.random.normal(ks[9], (C,), jnp.float32),
        "bn2_beta": 0.1 * jax.random.normal(ks[10], (C,), jnp.float32),
        "bn2_mean": 0.1 * jax.random.normal(ks[11], (C,), jnp.float32),
        "bn2_var": 0.5 + jnp.abs(jax.random.normal(ks[12], (C,), jnp.float32)),
    }

    ref = jax.block_until_ready(_reference(x, params))

    # Strict check: f32 compute path proves the im2col indexing / BN folding is exact.
    fwd_f32 = jax.jit(functools.partial(basic_residual_block_forward,
                                        compute_dtype=jnp.float32))
    out_f32 = jax.block_until_ready(fwd_f32(x, params))
    assert out_f32.shape == (B, C, H, W), out_f32.shape
    err_f32 = float(jnp.max(jnp.abs(out_f32 - ref)))
    assert err_f32 < 5e-3, f"f32 path mismatch vs reference, max abs err = {err_f32}"

    # Fast path: bf16 GEMM operands, f32 accumulation/epilogue (tolerance relaxed to
    # bf16 level per the review's correctness note).
    fwd = jax.jit(basic_residual_block_forward)
    out = jax.block_until_ready(fwd(x, params))
    assert out.shape == (B, C, H, W), out.shape
    err_max = float(jnp.max(jnp.abs(out - ref)))
    err_mean = float(jnp.mean(jnp.abs(out - ref)))
    assert err_max < 2.5e-1 and err_mean < 4e-2, \
        f"bf16 path mismatch vs reference, max={err_max}, mean={err_mean}"

    print("KERNEL_OK")
</pallas_src>

<mosaic_0001>
module attributes {stable_mosaic.version = 11 : i64} {
  func.func @_residual_block_kernel(%arg0: i32, %arg1: memref<1x448x32xf32, #tpu.memory_space<vmem>>, %arg2: memref<384x1xf32, #tpu.memory_space<vmem>>, %arg3: memref<288x32xf32, #tpu.memory_space<vmem>>, %arg4: memref<1x32xf32, #tpu.memory_space<vmem>>, %arg5: memref<288x32xf32, #tpu.memory_space<vmem>>, %arg6: memref<1x32xf32, #tpu.memory_space<vmem>>, %arg7: memref<1x384x32xf32, #tpu.memory_space<vmem>>, %arg8: memref<384x288xf32, #tpu.memory_space<vmem>>) attributes {dimension_semantics = [#tpu.dimension_semantics<parallel>], iteration_bounds = array<i64: 2>, scalar_prefetch = 0 : i64, scratch_operands = 1 : i64, tpu.core_type = #tpu.core_type<tc>, window_params = [{transform_indices = @transform_0, window_bounds = array<i64: 1, 448, 32>}, {pipeline_mode = #tpu.pipeline_mode<synchronous>, transform_indices = @transform_1, window_bounds = array<i64: 384, 1>}, {pipeline_mode = #tpu.pipeline_mode<synchronous>, transform_indices = @transform_2, window_bounds = array<i64: 288, 32>}, {pipeline_mode = #tpu.pipeline_mode<synchronous>, transform_indices = @transform_3, window_bounds = array<i64: 1, 32>}, {pipeline_mode = #tpu.pipeline_mode<synchronous>, transform_indices = @transform_4, window_bounds = array<i64: 288, 32>}, {pipeline_mode = #tpu.pipeline_mode<synchronous>, transform_indices = @transform_5, window_bounds = array<i64: 1, 32>}, {transform_indices = @transform_6, window_bounds = array<i64: 1, 384, 32>}]} {
    %c0 = arith.constant 0 : index
    %c7 = arith.constant 7 : index
    %c0_0 = arith.constant 0 : index
    %0 = vector.load %arg1[%c0, %c7, %c0_0] : memref<1x448x32xf32, #tpu.memory_space<vmem>>, vector<1x384x32xf32>
    %1 = vector.shape_cast %0 : vector<1x384x32xf32> to vector<384x32xf32>
    %c0_1 = arith.constant 0 : index
    %c0_2 = arith.constant 0 : index
    %2 = vector.load %arg8[%c0_1, %c0_2] : memref<384x288xf32, #tpu.memory_space<vmem>>, vector<384x32xf32>
    tpu.vector_store %arg8[%c0_1, %c0_2], %1 {strides = array<i32>} : memref<384x288xf32, #tpu.memory_space<vmem>>, vector<384x32xf32>,
    %c0_3 = arith.constant 0 : index
    %c8 = arith.constant 8 : index
    %c0_4 = arith.constant 0 : index
    %3 = vector.load %arg1[%c0_3, %c8, %c0_4] : memref<1x448x32xf32, #tpu.memory_space<vmem>>, vector<1x384x32xf32>
    %4 = vector.shape_cast %3 : vector<1x384x32xf32> to vector<384x32xf32>
    %c0_5 = arith.constant 0 : index
    %c32 = arith.constant 32 : index
    %5 = vector.load %arg8[%c0_5, %c32] : memref<384x288xf32, #tpu.memory_space<vmem>>, vector<384x32xf32>
    tpu.vector_store %arg8[%c0_5, %c32], %4 {strides = array<i32>} : memref<384x288xf32, #tpu.memory_space<vmem>>, vector<384x32xf32>,
    %c0_6 = arith.constant 0 : index
    %c9 = arith.constant 9 : index
    %c0_7 = arith.constant 0 : index
    %6 = vector.load %arg1[%c0_6, %c9, %c0_7] : memref<1x448x32xf32, #tpu.memory_space<vmem>>, vector<1x384x32xf32>
    %7 = vector.shape_cast %6 : vector<1x384x32xf32> to vector<384x32xf32>
    %c0_8 = arith.constant 0 : index
    %c64 = arith.constant 64 : index
    %8 = vector.load %arg8[%c0_8, %c64] : memref<384x288xf32, #tpu.memory_space<vmem>>, vector<384x32xf32>
    tpu.vector_store %arg8[%c0_8, %c64], %7 {strides = array<i32>} : memref<384x288xf32, #tpu.memory_space<vmem>>, vector<384x32xf32>,
    %c0_9 = arith.constant 0 : index
    %c31 = arith.constant 31 : index
    %c0_10 = arith.constant 0 : index
    %9 = vector.load %arg1[%c0_9, %c31, %c0_10] : memref<1x448x32xf32, #tpu.memory_space<vmem>>, vector<1x384x32xf32>
    %10 = vector.shape_cast %9 : vector<1x384x32xf32> to vector<384x32xf32>
    %c0_11 = arith.constant 0 : index
    %c96 = arith.constant 96 : index
    %11 = vector.load %arg8[%c0_11, %c96] : memref<384x288xf32, #tpu.memory_space<vmem>>, vector<384x32xf32>
    tpu.vector_store %arg8[%c0_11, %c96], %10 {strides = array<i32>} : memref<384x288xf32, #tpu.memory_space<vmem>>, vector<384x32xf32>,
    %c0_12 = arith.constant 0 : index
    %c32_13 = arith.constant 32 : index
    %c0_14 = arith.constant 0 : index
    %12 = vector.load %arg1[%c0_12, %c32_13, %c0_14] : memref<1x448x32xf32, #tpu.memory_space<vmem>>, vector<1x384x32xf32>
    %13 = vector.shape_cast %12 : vector<1x384x32xf32> to vector<384x32xf32>
    %c0_15 = arith.constant 0 : index
    %c128 = arith.constant 128 : index
    %14 = vector.load %arg8[%c0_15, %c128] : memref<384x288xf32, #tpu.memory_space<vmem>>, vector<384x32xf32>
    tpu.vector_store %arg8[%c0_15, %c128], %13 {strides = array<i32>} : memref<384x288xf32, #tpu.memory_space<vmem>>, vector<384x32xf32>,
    %c0_16 = arith.constant 0 : index
    %c33 = arith.constant 33 : index
    %c0_17 = arith.constant 0 : index
    %15 = vector.load %arg1[%c0_16, %c33, %c0_17] : memref<1x448x32xf32, #tpu.memory_space<vmem>>, vector<1x384x32xf32>
    %16 = vector.shape_cast %15 : vector<1x384x32xf32> to vector<384x32xf32>
    %c0_18 = arith.constant 0 : index
    %c160 = arith.constant 160 : index
    %17 = vector.load %arg8[%c0_18, %c160] : memref<384x288xf32, #tpu.memory_space<vmem>>, vector<384x32xf32>
    tpu.vector_store %arg8[%c0_18, %c160], %16 {strides = array<i32>} : memref<384x288xf32, #tpu.memory_space<vmem>>, vector<384x32xf32>,
    %c0_19 = arith.constant 0 : index
    %c55 = arith.constant 55 : index
    %c0_20 = arith.constant 0 : index
    %18 = vector.load %arg1[%c0_19, %c55, %c0_20] : memref<1x448x32xf32, #tpu.memory_space<vmem>>, vector<1x384x32xf32>
    %19 = vector.shape_cast %18 : vector<1x384x32xf32> to vector<384x32xf32>
    %c0_21 = arith.constant 0 : index
    %c192 = arith.constant 192 : index
    %20 = vector.load %arg8[%c0_21, %c192] : memref<384x288xf32, #tpu.memory_space<vmem>>, vector<384x32xf32>
    tpu.vector_store %arg8[%c0_21, %c192], %19 {strides = array<i32>} : memref<384x288xf32, #tpu.memory_space<vmem>>, vector<384x32xf32>,
    %c0_22 = arith.constant 0 : index
    %c56 = arith.constant 56 : index
    %c0_23 = arith.constant 0 : index
    %21 = vector.load %arg1[%c0_22, %c56, %c0_23] : memref<1x448x32xf32, #tpu.memory_space<vmem>>, vector<1x384x32xf32>
    %22 = vector.shape_cast %21 : vector<1x384x32xf32> to vector<384x32xf32>
    %c0_24 = arith.constant 0 : index
    %c224 = arith.constant 224 : index
    %23 = vector.load %arg8[%c0_24, %c224] : memref<384x288xf32, #tpu.memory_space<vmem>>, vector<384x32xf32>
    tpu.vector_store %arg8[%c0_24, %c224], %22 {strides = array<i32>} : memref<384x288xf32, #tpu.memory_space<vmem>>, vector<384x32xf32>,
    %c0_25 = arith.constant 0 : index
    %c57 = arith.constant 57 : index
    %c0_26 = arith.constant 0 : index
    %24 = vector.load %arg1[%c0_25, %c57, %c0_26] : memref<1x448x32xf32, #tpu.memory_space<vmem>>, vector<1x384x32xf32>
    %25 = vector.shape_cast %24 : vector<1x384x32xf32> to vector<384x32xf32>
    %c0_27 = arith.constant 0 : index
    %c256 = arith.constant 256 : index
    %26 = vector.load %arg8[%c0_27, %c256] : memref<384x288xf32, #tpu.memory_space<vmem>>, vector<384x32xf32>
    tpu.vector_store %arg8[%c0_27, %c256], %25 {strides = array<i32>} : memref<384x288xf32, #tpu.memory_space<vmem>>, vector<384x32xf32>,
    %c0_28 = arith.constant 0 : index
    %c0_29 = arith.constant 0 : index
    %27 = vector.load %arg8[%c0_28, %c0_29] : memref<384x288xf32, #tpu.memory_space<vmem>>, vector<384x288xf32>
    %c0_30 = arith.constant 0 : index
    %c0_31 = arith.constant 0 : index
    %28 = vector.load %arg3[%c0_30, %c0_31] : memref<288x32xf32, #tpu.memory_space<vmem>>, vector<288x32xf32>
    %cst = arith.constant dense<0.000000e+00> : vector<384x32xf32>
    %29 = tpu.matmul %27, %28, %cst {dimension_numbers = #tpu.dot_dimension_numbers<[1], [0], [0], [1], [0, 0, 1, 1], [], []>} : vector<384x288xf32>, vector<288x32xf32>, vector<384x32xf32> -> vector<384x32xf32>
    %c0_32 = arith.constant 0 : index
    %c0_33 = arith.constant 0 : index
    %30 = vector.load %arg4[%c0_32, %c0_33] : memref<1x32xf32, #tpu.memory_space<vmem>>, vector<1x32xf32>
    %31 = vector.broadcast %30 : vector<1x32xf32> to vector<384x32xf32>
    %32 = arith.addf %29, %31 : vector<384x32xf32>
    %cst_34 = arith.constant 0.000000e+00 : f32
    %33 = vector.broadcast %cst_34 : f32 to vector<384x32xf32>
    %34 = arith.maximumf %32, %33 : vector<384x32xf32>
    %c0_35 = arith.constant 0 : index
    %c0_36 = arith.constant 0 : index
    %35 = vector.load %arg2[%c0_35, %c0_36] : memref<384x1xf32, #tpu.memory_space<vmem>>, vector<384x1xf32>
    %36 = vector.broadcast %35 : vector<384x1xf32> to vector<384x32xf32>
    %37 = arith.mulf %34, %36 : vector<384x32xf32>
    %cst_37 = arith.constant 0.000000e+00 : f32
    %38 = vector.broadcast %cst_37 : f32 to vector<32x32xf32>
    %cst_38 = arith.constant 0.000000e+00 : f32
    %39 = vector.broadcast %cst_38 : f32 to vector<32x32xf32>
    %40 = tpu.concatenate %38, %37, %39 in 0 : vector<32x32xf32>, vector<384x32xf32>, vector<32x32xf32> -> vector<448x32xf32>
    %41 = vector.extract_strided_slice %40 {offsets = [7, 0], sizes = [384, 32], strides = [1, 1]} : vector<448x32xf32> to vector<384x32xf32>
    %c0_39 = arith.constant 0 : index
    %c0_40 = arith.constant 0 : index
    %42 = vector.load %arg8[%c0_39, %c0_40] : memref<384x288xf32, #tpu.memory_space<vmem>>, vector<384x32xf32>
    tpu.vector_store %arg8[%c0_39, %c0_40], %41 {strides = array<i32>} : memref<384x288xf32, #tpu.memory_space<vmem>>, vector<384x32xf32>,
    %43 = vector.extract_strided_slice %40 {offsets = [8, 0], sizes = [384, 32], strides = [1, 1]} : vector<448x32xf32> to vector<384x32xf32>
    %c0_41 = arith.constant 0 : index
    %c32_42 = arith.constant 32 : index
    %44 = vector.load %arg8[%c0_41, %c32_42] : memref<384x288xf32, #tpu.memory_space<vmem>>, vector<384x32xf32>
    tpu.vector_store %arg8[%c0_41, %c32_42], %43 {strides = array<i32>} : memref<384x288xf32, #tpu.memory_space<vmem>>, vector<384x32xf32>,
    %45 = vector.extract_strided_slice %40 {offsets = [9, 0], sizes = [384, 32], strides = [1, 1]} : vector<448x32xf32> to vector<384x32xf32>
    %c0_43 = arith.constant 0 : index
    %c64_44 = arith.constant 64 : index
    %46 = vector.load %arg8[%c0_43, %c64_44] : memref<384x288xf32, #tpu.memory_space<vmem>>, vector<384x32xf32>
    tpu.vector_store %arg8[%c0_43, %c64_44], %45 {strides = array<i32>} : memref<384x288xf32, #tpu.memory_space<vmem>>, vector<384x32xf32>,
    %47 = vector.extract_strided_slice %40 {offsets = [31, 0], sizes = [384, 32], strides = [1, 1]} : vector<448x32xf32> to vector<384x32xf32>
    %c0_45 = arith.constant 0 : index
    %c96_46 = arith.constant 96 : index
    %48 = vector.load %arg8[%c0_45, %c96_46] : memref<384x288xf32, #tpu.memory_space<vmem>>, vector<384x32xf32>
    tpu.vector_store %arg8[%c0_45, %c96_46], %47 {strides = array<i32>} : memref<384x288xf32, #tpu.memory_space<vmem>>, vector<384x32xf32>,
    %49 = vector.extract_strided_slice %40 {offsets = [32, 0], sizes = [384, 32], strides = [1, 1]} : vector<448x32xf32> to vector<384x32xf32>
    %c0_47 = arith.constant 0 : index
    %c128_48 = arith.constant 128 : index
    %50 = vector.load %arg8[%c0_47, %c128_48] : memref<384x288xf32, #tpu.memory_space<vmem>>, vector<384x32xf32>
    tpu.vector_store %arg8[%c0_47, %c128_48], %49 {strides = array<i32>} : memref<384x288xf32, #tpu.memory_space<vmem>>, vector<384x32xf32>,
    %51 = vector.extract_strided_slice %40 {offsets = [33, 0], sizes = [384, 32], strides = [1, 1]} : vector<448x32xf32> to vector<384x32xf32>
    %c0_49 = arith.constant 0 : index
    %c160_50 = arith.constant 160 : index
    %52 = vector.load %arg8[%c0_49, %c160_50] : memref<384x288xf32, #tpu.memory_space<vmem>>, vector<384x32xf32>
    tpu.vector_store %arg8[%c0_49, %c160_50], %51 {strides = array<i32>} : memref<384x288xf32, #tpu.memory_space<vmem>>, vector<384x32xf32>,
    %53 = vector.extract_strided_slice %40 {offsets = [55, 0], sizes = [384, 32], strides = [1, 1]} : vector<448x32xf32> to vector<384x32xf32>
    %c0_51 = arith.constant 0 : index
    %c192_52 = arith.constant 192 : index
    %54 = vector.load %arg8[%c0_51, %c192_52] : memref<384x288xf32, #tpu.memory_space<vmem>>, vector<384x32xf32>
    tpu.vector_store %arg8[%c0_51, %c192_52], %53 {strides = array<i32>} : memref<384x288xf32, #tpu.memory_space<vmem>>, vector<384x32xf32>,
    %55 = vector.extract_strided_slice %40 {offsets = [56, 0], sizes = [384, 32], strides = [1, 1]} : vector<448x32xf32> to vector<384x32xf32>
    %c0_53 = arith.constant 0 : index
    %c224_54 = arith.constant 224 : index
    %56 = vector.load %arg8[%c0_53, %c224_54] : memref<384x288xf32, #tpu.memory_space<vmem>>, vector<384x32xf32>
    tpu.vector_store %arg8[%c0_53, %c224_54], %55 {strides = array<i32>} : memref<384x288xf32, #tpu.memory_space<vmem>>, vector<384x32xf32>,
    %57 = vector.extract_strided_slice %40 {offsets = [57, 0], sizes = [384, 32], strides = [1, 1]} : vector<448x32xf32> to vector<384x32xf32>
    %c0_55 = arith.constant 0 : index
    %c256_56 = arith.constant 256 : index
    %58 = vector.load %arg8[%c0_55, %c256_56] : memref<384x288xf32, #tpu.memory_space<vmem>>, vector<384x32xf32>
    tpu.vector_store %arg8[%c0_55, %c256_56], %57 {strides = array<i32>} : memref<384x288xf32, #tpu.memory_space<vmem>>, vector<384x32xf32>,
    %c0_57 = arith.constant 0 : index
    %c32_58 = arith.constant 32 : index
    %c0_59 = arith.constant 0 : index
    %59 = vector.load %arg1[%c0_57, %c32_58, %c0_59] : memref<1x448x32xf32, #tpu.memory_space<vmem>>, vector<1x384x32xf32>
    %60 = vector.shape_cast %59 : vector<1x384x32xf32> to vector<384x32xf32>
    %c0_60 = arith.constant 0 : index
    %c0_61 = arith.constant 0 : index
    %61 = vector.load %arg8[%c0_60, %c0_61] : memref<384x288xf32, #tpu.memory_space<vmem>>, vector<384x288xf32>
    %c0_62 = arith.constant 0 : index
    %c0_63 = arith.constant 0 : index
    %62 = vector.load %arg5[%c0_62, %c0_63] : memref<288x32xf32, #tpu.memory_space<vmem>>, vector<288x32xf32>
    %cst_64 = arith.constant dense<0.000000e+00> : vector<384x32xf32>
    %63 = tpu.matmul %61, %62, %cst_64 {dimension_numbers = #tpu.dot_dimension_numbers<[1], [0], [0], [1], [0, 0, 1, 1], [], []>} : vector<384x288xf32>, vector<288x32xf32>, vector<384x32xf32> -> vector<384x32xf32>
    %c0_65 = arith.constant 0 : index
    %c0_66 = arith.constant 0 : index
    %64 = vector.load %arg6[%c0_65, %c0_66] : memref<1x32xf32, #tpu.memory_space<vmem>>, vector<1x32xf32>
    %65 = vector.broadcast %64 : vector<1x32xf32> to vector<384x32xf32>
    %66 = arith.addf %63, %65 : vector<384x32xf32>
    %67 = arith.addf %66, %60 : vector<384x32xf32>
    %cst_67 = arith.constant 0.000000e+00 : f32
    %68 = vector.broadcast %cst_67 : f32 to vector<384x32xf32>
    %69 = arith.maximumf %67, %68 : vector<384x32xf32>
    %c0_68 = arith.constant 0 : index
    %c0_69 = arith.constant 0 : index
    %c0_70 = arith.constant 0 : index
    %70 = vector.load %arg7[%c0_68, %c0_69, %c0_70] : memref<1x384x32xf32, #tpu.memory_space<vmem>>, vector<1x384x32xf32>
    %71 = vector.shape_cast %70 : vector<1x384x32xf32> to vector<384x32xf32>
    %72 = vector.shape_cast %69 : vector<384x32xf32> to vector<1x384x32xf32>
    tpu.vector_store %arg7[%c0_68, %c0_69, %c0_70], %72 {strides = array<i32>} : memref<1x384x32xf32, #tpu.memory_space<vmem>>, vector<1x384x32xf32>,
    return
  }
  func.func @transform_0(%arg0: i32) -> (i32, i32, i32) {
    %c0_i32 = arith.constant 0 : i32
    %c0_i32_0 = arith.constant 0 : i32
    %c0_i32_1 = arith.constant 0 : i32
    return %arg0, %c0_i32, %c0_i32_0 : i32, i32, i32
  }
  func.func @transform_1(%arg0: i32) -> (i32, i32) {
    %c0_i32 = arith.constant 0 : i32
    %c0_i32_0 = arith.constant 0 : i32
    %c0_i32_1 = arith.constant 0 : i32
    return %c0_i32, %c0_i32_0 : i32, i32
  }
  func.func @transform_2(%arg0: i32) -> (i32, i32) {
    %c0_i32 = arith.constant 0 : i32
    %c0_i32_0 = arith.constant 0 : i32
    %c0_i32_1 = arith.constant 0 : i32
    return %c0_i32, %c0_i32_0 : i32, i32
  }
  func.func @transform_3(%arg0: i32) -> (i32, i32) {
    %c0_i32 = arith.constant 0 : i32
    %c0_i32_0 = arith.constant 0 : i32
    %c0_i32_1 = arith.constant 0 : i32
    return %c0_i32, %c0_i32_0 : i32, i32
  }
  func.func @transform_4(%arg0: i32) -> (i32, i32) {
    %c0_i32 = arith.constant 0 : i32
    %c0_i32_0 = arith.constant 0 : i32
    %c0_i32_1 = arith.constant 0 : i32
    return %c0_i32, %c0_i32_0 : i32, i32
  }
  func.func @transform_5(%arg0: i32) -> (i32, i32) {
    %c0_i32 = arith.constant 0 : i32
    %c0_i32_0 = arith.constant 0 : i32
    %c0_i32_1 = arith.constant 0 : i32
    return %c0_i32, %c0_i32_0 : i32, i32
  }
  func.func @transform_6(%arg0: i32) -> (i32, i32, i32) {
    %c0_i32 = arith.constant 0 : i32
    %c0_i32_0 = arith.constant 0 : i32
    %c0_i32_1 = arith.constant 0 : i32
    return %arg0, %c0_i32, %c0_i32_0 : i32, i32, i32
  }
}

</mosaic_0001>

<llo_original>
// kernel: basic_residual_block_forward.1
$region0: #{basic_residual_block_forward.1}
  #allocation0 [shape = 'u32[]', space=smem, size = 0x4, offset = 0x4, fixed_abs, tag = 'smem constant byte address 0x4 - core index']
  #allocation1 [shape = 'u32[144,128]{1,0:T(1,128)}', space=vmem, size = 0x12000, scoped, tag = 'internal scratch']
  #allocation2 [shape = 'f32[384,288]{1,0:T(8,128)}', space=vmem, size = 0x90000, scoped, tag = 'scratch operand']
  %s0 = inlined_call_operand.vmem [shape: f32[2,448,32], index: 0, kind: input, shape index: {}]
  %s1 = inlined_call_operand.vmem [shape: f32[384,1], index: 1, kind: input, shape index: {}]
  %s2 = inlined_call_operand.vmem [shape: f32[288,32], index: 2, kind: input, shape index: {}]
  %s3 = inlined_call_operand.vmem [shape: f32[1,32], index: 3, kind: input, shape index: {}]
  %s4 = inlined_call_operand.vmem [shape: f32[288,32], index: 4, kind: input, shape index: {}]
  %s5 = inlined_call_operand.vmem [shape: f32[1,32], index: 5, kind: input, shape index: {}]
  %s6 = inlined_call_operand.vmem [shape: f32[2,384,32], index: 6, kind: output, shape index: {}]
  %s7 = sld [smem:[#allocation0]]
  $region57: #{basic_residual_block_forward.1} parent=0
    _
  %s9 = ssub.s32 1, %s7
  %s10 = scalar_select 0, %s9, %s7
  loop: start=0, step=1, limit=4
  $region2: #{basic_residual_block_forward.1} parent=0 // loop_pre_header
    _
  $region3: #{basic_residual_block_forward.1} parent=0 // loop_header
    %s12 = sphi 0, %s16
    %p13 = scmp.ge.s32.totalorder %s12, 4
    %s22 = sphi 0, %s24
    %s25 = sphi 0, %s22
    %s26 = sphi 0, %s25
    %s42 = sphi 0, %s26
    %s46 = sphi 0, %s46
    %s48 = sphi 0, %s46
    %s49 = sphi 0, %s48
    %s63 = sphi 0, %s49
    %s67 = sphi 0, %s67
    %s69 = sphi 0, %s67
    %s70 = sphi 0, %s69
    %s84 = sphi 0, %s70
    %s88 = sphi 0, %s88
    %s90 = sphi 0, %s88
    %s91 = sphi 0, %s90
    %s105 = sphi 0, %s91
    %s109 = sphi 0, %s109
    %s111 = sphi 0, %s109
    %s112 = sphi 0, %s111
    %s126 = sphi 0, %s112
    %s130 = sphi 0, %s130
    %s132 = sphi 0, %s130
    %s133 = sphi 0, %s132
    %s147 = sphi 0, %s133
    %s153 = sphi 0, %s155
    %s156 = sphi 0, %s153
    %s157 = sphi 0, %s156
    %s173 = sphi 0, %s157
  $region4: #{basic_residual_block_forward.1} parent=0 // loop_header_branch
    %15 = sbr.rel (%p13) target = $region8
  $region5: #{basic_residual_block_forward.1} parent=0 // loop_body
    %s17 = ssub.s32 %s12, 1
    %s18 = ssub.s32 %s12, 2
    %s19 = sadd.s32 %s12, 1
    %s20 = ssub.s32 %s12, %s19
    %p21 = scmp.eq.s32.totalorder %s20, 0
    %s23 = sadd.s32 %s22, 1
    %s24 = scalar_select %p21, %s22, %s23
    %p27 = pneg %p21
    %p28 = scmp.eq.s32.totalorder %s12, 1
    %p29 = por %p27, %p28
    %p30 = scmp.ne.s32.totalorder %s22, %s25
    %p31 = scmp.eq.s32.totalorder %s12, 0
    %p32 = por %p30, %p31
    %p33 = scmp.ne.s32.totalorder %s22, %s25
    %p34 = scmp.eq.s32.totalorder %s17, 1
    %p35 = por %p33, %p34
    %p36 = scmp.ne.s32.totalorder %s25, %s26
    %p37 = scmp.eq.s32.totalorder %s17, 0
    %p38 = por %p36, %p37
    %p39 = scmp.ne.s32.totalorder %s25, %s26
    %p40 = scmp.eq.s32.totalorder %s18, 1
    %p41 = por %p39, %p40
    %p43 = scmp.ne.s32.totalorder %s26, %s42
    %p44 = scmp.eq.s32.totalorder %s18, 0
    %p45 = por %p43, %p44
    %s47 = sadd.s32 %s46, 1
    %p50 = scmp.eq.s32.totalorder %s12, 1
    %p51 = scmp.ne.s32.totalorder %s46, %s48
    %p52 = scmp.eq.s32.totalorder %s12, 0
    %p53 = por %p51, %p52
    %p54 = scmp.ne.s32.totalorder %s46, %s48
    %p55 = scmp.eq.s32.totalorder %s17, 1
    %p56 = por %p54, %p55
    %p57 = scmp.ne.s32.totalorder %s48, %s49
    %p58 = scmp.eq.s32.totalorder %s17, 0
    %p59 = por %p57, %p58
    %p60 = scmp.ne.s32.totalorder %s48, %s49
    %p61 = scmp.eq.s32.totalorder %s18, 1
    %p62 = por %p60, %p61
    %p64 = scmp.ne.s32.totalorder %s49, %s63
    %p65 = scmp.eq.s32.totalorder %s18, 0
    %p66 = por %p64, %p65
    %s68 = sadd.s32 %s67, 1
    %p71 = scmp.eq.s32.totalorder %s12, 1
    %p72 = scmp.ne.s32.totalorder %s67, %s69
    %p73 = scmp.eq.s32.totalorder %s12, 0
    %p74 = por %p72, %p73
    %p75 = scmp.ne.s32.totalorder %s67, %s69
    %p76 = scmp.eq.s32.totalorder %s17, 1
    %p77 = por %p75, %p76
    %p78 = scmp.ne.s32.totalorder %s69, %s70
    %p79 = scmp.eq.s32.totalorder %s17, 0
    %p80 = por %p78, %p79
    %p81 = scmp.ne.s32.totalorder %s69, %s70
    %p82 = scmp.eq.s32.totalorder %s18, 1
    %p83 = por %p81, %p82
    %p85 = scmp.ne.s32.totalorder %s70, %s84
    %p86 = scmp.eq.s32.totalorder %s18, 0
    %p87 = por %p85, %p86
    %s89 = sadd.s32 %s88, 1
    %p92 = scmp.eq.s32.totalorder %s12, 1
    %p93 = scmp.ne.s32.totalorder %s88, %s90
    %p94 = scmp.eq.s32.totalorder %s12, 0
    %p95 = por %p93, %p94
    %p96 = scmp.ne.s32.totalorder %s88, %s90
    %p97 = scmp.eq.s32.totalorder %s17, 1
    %p98 = por %p96, %p97
    %p99 = scmp.ne.s32.totalorder %s90, %s91
    %p100 = scmp.eq.s32.totalorder %s17, 0
    %p101 = por %p99, %p100
    %p102 = scmp.ne.s32.totalorder %s90, %s91
    %p103 = scmp.eq.s32.totalorder %s18, 1
    %p104 = por %p102, %p103
    %p106 = scmp.ne.s32.totalorder %s91, %s105
    %p107 = scmp.eq.s32.totalorder %s18, 0
    %p108 = por %p106, %p107
    %s110 = sadd.s32 %s109, 1
    %p113 = scmp.eq.s32.totalorder %s12, 1
    %p114 = scmp.ne.s32.totalorder %s109, %s111
    %p115 = scmp.eq.s32.totalorder %s12, 0
    %p116 = por %p114, %p115
    %p117 = scmp.ne.s32.totalorder %s109, %s111
    %p118 = scmp.eq.s32.totalorder %s17, 1
    %p119 = por %p117, %p118
    %p120 = scmp.ne.s32.totalorder %s111, %s112
    %p121 = scmp.eq.s32.totalorder %s17, 0
    %p122 = por %p120, %p121
    %p123 = scmp.ne.s32.totalorder %s111, %s112
    %p124 = scmp.eq.s32.totalorder %s18, 1
    %p125 = por %p123, %p124
    %p127 = scmp.ne.s32.totalorder %s112, %s126
    %p128 = scmp.eq.s32.totalorder %s18, 0
    %p129 = por %p127, %p128
    %s131 = sadd.s32 %s130, 1
    %p134 = scmp.eq.s32.totalorder %s12, 1
    %p135 = scmp.ne.s32.totalorder %s130, %s132
    %p136 = scmp.eq.s32.totalorder %s12, 0
    %p137 = por %p135, %p136
    %p138 = scmp.ne.s32.totalorder %s130, %s132
    %p139 = scmp.eq.s32.totalorder %s17, 1
    %p140 = por %p138, %p139
    %p141 = scmp.ne.s32.totalorder %s132, %s133
    %p142 = scmp.eq.s32.totalorder %s17, 0
    %p143 = por %p141, %p142
    %p144 = scmp.ne.s32.totalorder %s132, %s133
    %p145 = scmp.eq.s32.totalorder %s18, 1
    %p146 = por %p144, %p145
    %p148 = scmp.ne.s32.totalorder %s133, %s147
    %p149 = scmp.eq.s32.totalorder %s18, 0
    %p150 = por %p148, %p149
    %s151 = ssub.s32 %s12, %s19
    %p152 = scmp.eq.s32.totalorder %s151, 0
    %s154 = sadd.s32 %s153, 1
    %s155 = scalar_select %p152, %s153, %s154
    %p158 = pneg %p152
    %p159 = scmp.eq.s32.totalorder %s12, 1
    %p160 = por %p158, %p159
    %p161 = scmp.ne.s32.totalorder %s153, %s156
    %p162 = scmp.eq.s32.totalorder %s12, 0
    %p163 = por %p161, %p162
    %p164 = scmp.ne.s32.totalorder %s153, %s156
    %p165 = scmp.eq.s32.totalorder %s17, 1
    %p166 = por %p164, %p165
    %p167 = scmp.ne.s32.totalorder %s156, %s157
    %p168 = scmp.eq.s32.totalorder %s17, 0
    %p169 = por %p167, %p168
    %p170 = scmp.ne.s32.totalorder %s156, %s157
    %p171 = scmp.eq.s32.totalorder %s18, 1
    %p172 = por %p170, %p171
    %p174 = scmp.ne.s32.totalorder %s157, %s173
    %p175 = scmp.eq.s32.totalorder %s18, 0
    %p176 = por %p174, %p175
    %p177 = scmp.le.s32.totalorder 1, %s12
    %p178 = scmp.lt.s32.totalorder %s12, 3
    %p179 = pnand %p177, %p178
    %p180 = pneg %p179
    // Predicated region
    $region9: #{basic_residual_block_forward.1} parent=5 // pred_check
      _
    $region10: #{basic_residual_block_forward.1} parent=5 // pred_check_branch
      %182 = sbr.rel (%p179) target = $region12
    $region11: #{basic_residual_block_forward.1} parent=5 // pred_region
      %s183 = ssub.s32 %s12, 1
      // Predicated region
      $region13: #{basic_residual_block_forward.1} parent=11 // pred_check
        %p184 = pneg %p59
      $region14: #{basic_residual_block_forward.1} parent=11 // pred_check_branch
        %186 = sbr.rel (%p184) target = $region16
      $region15: #{basic_residual_block_forward.1} parent=11 // pred_region
        _
      $region16: #{basic_residual_block_forward.1} parent=11 // pred_fallthru
        _
      // Predicated region
      $region17: #{basic_residual_block_forward.1} parent=11 // pred_check
        %p187 = pneg %p80
      $region18: #{basic_residual_block_forward.1} parent=11 // pred_check_branch
        %189 = sbr.rel (%p187) target = $region20
      $region19: #{basic_residual_block_forward.1} parent=11 // pred_region
        _
      $region20: #{basic_residual_block_forward.1} parent=11 // pred_fallthru
        _
      // Predicated region
      $region21: #{basic_residual_block_forward.1} parent=11 // pred_check
        %p190 = pneg %p101
      $region22: #{basic_residual_block_forward.1} parent=11 // pred_check_branch
        %192 = sbr.rel (%p190) target = $region24
      $region23: #{basic_residual_block_forward.1} parent=11 // pred_region
        _
      $region24: #{basic_residual_block_forward.1} parent=11 // pred_fallthru
        _
      // Predicated region
      $region25: #{basic_residual_block_forward.1} parent=11 // pred_check
        %p193 = pneg %p122
      $region26: #{basic_residual_block_forward.1} parent=11 // pred_check_branch
        %195 = sbr.rel (%p193) target = $region28
      $region27: #{basic_residual_block_forward.1} parent=11 // pred_region
        _
      $region28: #{basic_residual_block_forward.1} parent=11 // pred_fallthru
        _
      // Predicated region
      $region29: #{basic_residual_block_forward.1} parent=11 // pred_check
        %p196 = pneg %p143
      $region30: #{basic_residual_block_forward.1} parent=11 // pred_check_branch
        %198 = sbr.rel (%p196) target = $region32
      $region31: #{basic_residual_block_forward.1} parent=11 // pred_region
        _
      $region32: #{basic_residual_block_forward.1} parent=11 // pred_fallthru
        _
    $region12: #{basic_residual_block_forward.1} parent=5 // pred_fallthru
      _
    %p199 = scmp.lt.s32.totalorder %s12, 2
    // Predicated region
    $region33: #{basic_residual_block_forward.1} parent=5 // pred_check
      %p200 = pneg %p199
    $region34: #{basic_residual_block_forward.1} parent=5 // pred_check_branch
      %202 = sbr.rel (%p200) target = $region36
    $region35: #{basic_residual_block_forward.1} parent=5 // pred_region
      // Predicated region
      $region37: #{basic_residual_block_forward.1} parent=35 // pred_check
        %p203 = pneg %p32
      $region38: #{basic_residual_block_forward.1} parent=35 // pred_check_branch
        %205 = sbr.rel (%p203) target = $region40
      $region39: #{basic_residual_block_forward.1} parent=35 // pred_region
        %p206 = scmp.lt.s32.totalorder %s12, 1
        %s207 = scalar_select %p206, %s12, 1
        %s208 = smul.addr %s207, 56
        %s209 = smul.addr %s208, 8
        %s210 = scalar_lea.vmem %s0, %s209
      $region40: #{basic_residual_block_forward.1} parent=35 // pred_fallthru
        _
    $region36: #{basic_residual_block_forward.1} parent=5 // pred_fallthru
      _
    %p211 = scmp.le.s32.totalorder 1, %s12
    %p212 = scmp.lt.s32.totalorder %s12, 3
    %p213 = pnand %p211, %p212
    %p214 = pneg %p213
    // Predicated region
    $region41: #{basic_residual_block_forward.1} parent=5 // pred_check
      _
    $region42: #{basic_residual_block_forward.1} parent=5 // pred_check_branch
      %216 = sbr.rel (%p213) target = $region44
    $region43: #{basic_residual_block_forward.1} parent=5 // pred_region
      %s217 = ssub.s32 %s12, 1
      %p218 = scmp.lt.s32.totalorder %s17, 1
      %s219 = scalar_select %p218, %s17, 1
      %s220 = smul.addr %s219, 56
      %s221 = smul.addr %s220, 8
      %s222 = scalar_lea.vmem %s0, %s221
      %p223 = pneg %p38
      %p224 = pneg %p35
      %p225 = pneg %p59
      %p226 = pneg %p56
      %p227 = pneg %p80
      %p228 = pneg %p77
      %p229 = pneg %p101
      %p230 = pneg %p98
      %p231 = pneg %p122
      %p232 = pneg %p119
      %p233 = pneg %p143
      %p234 = pneg %p140
      %p235 = pneg %p169
      %p236 = pneg %p166
      %p237 = scmp.lt.s32.totalorder %s17, 1
      %s238 = scalar_select %p237, %s17, 1
      %s239 = smul.addr %s238, 48
      %s240 = smul.addr %s239, 8
      %s241 = scalar_lea.vmem %s6, %s240
      %p242 = scmp.lt.s32.totalorder %s17, 1
      %s243 = scalar_select %p242, %s17, 1
      %s244 = smul.addr %s243, 56
      %s245 = smul.addr %s244, 8
      %s246 = scalar_lea.vmem %s0, %s245
      %p247 = scmp.lt.s32.totalorder %s17, 1
      %s248 = scalar_select %p247, %s17, 1
      %s249 = smul.addr %s248, 48
      %s250 = smul.addr %s249, 8
      %s251 = scalar_lea.vmem %s6, %s250
      %v252 = vld [vmem:[%s246 + $0x7] sm:$0xff]
      %v253 = vld [vmem:[%s246 + $0xf] sm:$0xff]
      %v254 = vld [vmem:[%s246 + $0x17] sm:$0xff]
      %v255 = vld [vmem:[%s246 + $0x1f] sm:$0xff]
      %v256 = vld [vmem:[%s246 + $0x27] sm:$0xff]
      %v257 = vld [vmem:[%s246 + $0x2f] sm:$0xff]
      %v258 = vld [vmem:[%s246 + $0x37] sm:$0xff]
      %v259 = vld [vmem:[%s246 + $0x3f] sm:$0xff]
      %v260 = vld [vmem:[%s246 + $0x47] sm:$0xff]
      %v261 = vld [vmem:[%s246 + $0x4f] sm:$0xff]
      %v262 = vld [vmem:[%s246 + $0x57] sm:$0xff]
      %v263 = vld [vmem:[%s246 + $0x5f] sm:$0xff]
      %v264 = vld [vmem:[%s246 + $0x67] sm:$0xff]
      %v265 = vld [vmem:[%s246 + $0x6f] sm:$0xff]
      %v266 = vld [vmem:[%s246 + $0x77] sm:$0xff]
      %v267 = vld [vmem:[%s246 + $0x7f] sm:$0xff]
      %v268 = vld [vmem:[%s246 + $0x87] sm:$0xff]
      %v269 = vld [vmem:[%s246 + $0x8f] sm:$0xff]
      %v270 = vld [vmem:[%s246 + $0x97] sm:$0xff]
      %v271 = vld [vmem:[%s246 + $0x9f] sm:$0xff]
      %v272 = vld [vmem:[%s246 + $0xa7] sm:$0xff]
      %v273 = vld [vmem:[%s246 + $0xaf] sm:$0xff]
      %v274 = vld [vmem:[%s246 + $0xb7] sm:$0xff]
      %v275 = vld [vmem:[%s246 + $0xbf] sm:$0xff]
      %v276 = vld [vmem:[%s246 + $0xc7] sm:$0xff]
      %v277 = vld [vmem:[%s246 + $0xcf] sm:$0xff]
      %v278 = vld [vmem:[%s246 + $0xd7] sm:$0xff]
      %v279 = vld [vmem:[%s246 + $0xdf] sm:$0xff]
      %v280 = vld [vmem:[%s246 + $0xe7] sm:$0xff]
      %v281 = vld [vmem:[%s246 + $0xef] sm:$0xff]
      %v282 = vld [vmem:[%s246 + $0xf7] sm:$0xff]
      %v283 = vld [vmem:[%s246 + $0xff] sm:$0xff]
      %v284 = vld [vmem:[%s246 + $0x107] sm:$0xff]
      %v285 = vld [vmem:[%s246 + $0x10f] sm:$0xff]
      %v286 = vld [vmem:[%s246 + $0x117] sm:$0xff]
      %v287 = vld [vmem:[%s246 + $0x11f] sm:$0xff]
      %v288 = vld [vmem:[%s246 + $0x127] sm:$0xff]
      %v289 = vld [vmem:[%s246 + $0x12f] sm:$0xff]
      %v290 = vld [vmem:[%s246 + $0x137] sm:$0xff]
      %v291 = vld [vmem:[%s246 + $0x13f] sm:$0xff]
      %v292 = vld [vmem:[%s246 + $0x147] sm:$0xff]
      %v293 = vld [vmem:[%s246 + $0x14f] sm:$0xff]
      %v294 = vld [vmem:[%s246 + $0x157] sm:$0xff]
      %v295 = vld [vmem:[%s246 + $0x15f] sm:$0xff]
      %v296 = vld [vmem:[%s246 + $0x167] sm:$0xff]
      %v297 = vld [vmem:[%s246 + $0x16f] sm:$0xff]
      %v298 = vld [vmem:[%s246 + $0x177] sm:$0xff]
      %v299 = vld [vmem:[%s246 + $0x17f] sm:$0xff]
      %vm300 = vcmask 261120
      %301 = vst.msk [vmem:[#allocation2] sm:$0xff] %vm300, %v252
      %302 = vst.msk [vmem:[#allocation2 + $0x18] sm:$0xff] %vm300, %v253
      %303 = vst.msk [vmem:[#allocation2 + $0x30] sm:$0xff] %vm300, %v254
      %304 = vst.msk [vmem:[#allocation2 + $0x48] sm:$0xff] %vm300, %v255
      %305 = vst.msk [vmem:[#allocation2 + $0x60] sm:$0xff] %vm300, %v256
      %306 = vst.msk [vmem:[#allocation2 + $0x78] sm:$0xff] %vm300, %v257
      %307 = vst.msk [vmem:[#allocation2 + $0x90] sm:$0xff] %vm300, %v258
      %308 = vst.msk [vmem:[#allocation2 + $0xa8] sm:$0xff] %vm300, %v259
      %309 = vst.msk [vmem:[#allocation2 + $0xc0] sm:$0xff] %vm300, %v260
      %310 = vst.msk [vmem:[#allocation2 + $0xd8] sm:$0xff] %vm300, %v261
      %311 = vst.msk [vmem:[#allocation2 + $0xf0] sm:$0xff] %vm300, %v262
      %312 = vst.msk [vmem:[#allocation2 + $0x108] sm:$0xff] %vm300, %v263
      %313 = vst.msk [vmem:[#allocation2 + $0x120] sm:$0xff] %vm300, %v264
      %314 = vst.msk [vmem:[#allocation2 + $0x138] sm:$0xff] %vm300, %v265
      %315 = vst.msk [vmem:[#allocation2 + $0x150] sm:$0xff] %vm300, %v266
      %316 = vst.msk [vmem:[#allocation2 + $0x168] sm:$0xff] %vm300, %v267
      %317 = vst.msk [vmem:[#allocation2 + $0x180] sm:$0xff] %vm300, %v268
      %318 = vst.msk [vmem:[#allocation2 + $0x198] sm:$0xff] %vm300, %v269
      %319 = vst.msk [vmem:[#allocation2 + $0x1b0] sm:$0xff] %vm300, %v270
      %320 = vst.msk [vmem:[#allocation2 + $0x1c8] sm:$0xff] %vm300, %v271
      %321 = vst.msk [vmem:[#allocation2 + $0x1e0] sm:$0xff] %vm300, %v272
      %322 = vst.msk [vmem:[#allocation2 + $0x1f8] sm:$0xff] %vm300, %v273
      %323 = vst.msk [vmem:[#allocation2 + $0x210] sm:$0xff] %vm300, %v274
      %324 = vst.msk [vmem:[#allocation2 + $0x228] sm:$0xff] %vm300, %v275
      %325 = vst.msk [vmem:[#allocation2 + $0x240] sm:$0xff] %vm300, %v276
      %326 = vst.msk [vmem:[#allocation2 + $0x258] sm:$0xff] %vm300, %v277
      %327 = vst.msk [vmem:[#allocation2 + $0x270] sm:$0xff] %vm300, %v278
      %328 = vst.msk [vmem:[#allocation2 + $0x288] sm:$0xff] %vm300, %v279
      %329 = vst.msk [vmem:[#allocation2 + $0x2a0] sm:$0xff] %vm300, %v280
      %330 = vst.msk [vmem:[#allocation2 + $0x2b8] sm:$0xff] %vm300, %v281
      %331 = vst.msk [vmem:[#allocation2 + $0x2d0] sm:$0xff] %vm300, %v282
      %332 = vst.msk [vmem:[#allocation2 + $0x2e8] sm:$0xff] %vm300, %v283
      %333 = vst.msk [vmem:[#allocation2 + $0x300] sm:$0xff] %vm300, %v284
      %334 = vst.msk [vmem:[#allocation2 + $0x318] sm:$0xff] %vm300, %v285
      %335 = vst.msk [vmem:[#allocation2 + $0x330] sm:$0xff] %vm300, %v286
      %336 = vst.msk [vmem:[#allocation2 + $0x348] sm:$0xff] %vm300, %v287
      %337 = vst.msk [vmem:[#allocation2 + $0x360] sm:$0xff] %vm300, %v288
      %338 = vst.msk [vmem:[#allocation2 + $0x378] sm:$0xff] %vm300, %v289
      %339 = vst.msk [vmem:[#allocation2 + $0x390] sm:$0xff] %vm300, %v290
      %340 = vst.msk [vmem:[#allocation2 + $0x3a8] sm:$0xff] %vm300, %v291
      %341 = vst.msk [vmem:[#allocation2 + $0x3c0] sm:$0xff] %vm300, %v292
      %342 = vst.msk [vmem:[#allocation2 + $0x3d8] sm:$0xff] %vm300, %v293
      %343 = vst.msk [vmem:[#allocation2 + $0x3f0] sm:$0xff] %vm300, %v294
      %344 = vst.msk [vmem:[#allocation2 + $0x408] sm:$0xff] %vm300, %v295
      %345 = vst.msk [vmem:[#allocation2 + $0x420] sm:$0xff] %vm300, %v296
      %346 = vst.msk [vmem:[#allocation2 + $0x438] sm:$0xff] %vm300, %v297
      %347 = vst.msk [vmem:[#allocation2 + $0x450] sm:$0xff] %vm300, %v298
      %348 = vst.msk [vmem:[#allocation2 + $0x468] sm:$0xff] %vm300, %v299
      %v349 = vld [vmem:[%s246 + $0x8] sm:$0xff]
      %v350 = vld [vmem:[%s246 + $0x10] sm:$0xff]
      %v351 = vld [vmem:[%s246 + $0x18] sm:$0xff]
      %v352 = vld [vmem:[%s246 + $0x20] sm:$0xff]
      %v353 = vld [vmem:[%s246 + $0x28] sm:$0xff]
      %v354 = vld [vmem:[%s246 + $0x30] sm:$0xff]
      %v355 = vld [vmem:[%s246 + $0x38] sm:$0xff]
      %v356 = vld [vmem:[%s246 + $0x40] sm:$0xff]
      %v357 = vld [vmem:[%s246 + $0x48] sm:$0xff]
      %v358 = vld [vmem:[%s246 + $0x50] sm:$0xff]
      %v359 = vld [vmem:[%s246 + $0x58] sm:$0xff]
      %v360 = vld [vmem:[%s246 + $0x60] sm:$0xff]
      %v361 = vld [vmem:[%s246 + $0x68] sm:$0xff]
      %v362 = vld [vmem:[%s246 + $0x70] sm:$0xff]
      %v363 = vld [vmem:[%s246 + $0x78] sm:$0xff]
      %v364 = vld [vmem:[%s246 + $0x80] sm:$0xff]
      %v365 = vld [vmem:[%s246 + $0x88] sm:$0xff]
      %v366 = vld [vmem:[%s246 + $0x90] sm:$0xff]
      %v367 = vld [vmem:[%s246 + $0x98] sm:$0xff]
      %v368 = vld [vmem:[%s246 + $0xa0] sm:$0xff]
      %v369 = vld [vmem:[%s246 + $0xa8] sm:$0xff]
      %v370 = vld [vmem:[%s246 + $0xb0] sm:$0xff]
      %v371 = vld [vmem:[%s246 + $0xb8] sm:$0xff]
      %v372 = vld [vmem:[%s246 + $0xc0] sm:$0xff]
      %v373 = vld [vmem:[%s246 + $0xc8] sm:$0xff]
      %v374 = vld [vmem:[%s246 + $0xd0] sm:$0xff]
      %v375 = vld [vmem:[%s246 + $0xd8] sm:$0xff]
      %v376 = vld [vmem:[%s246 + $0xe0] sm:$0xff]
      %v377 = vld [vmem:[%s246 + $0xe8] sm:$0xff]
      %v378 = vld [vmem:[%s246 + $0xf0] sm:$0xff]
      %v379 = vld [vmem:[%s246 + $0xf8] sm:$0xff]
      %v380 = vld [vmem:[%s246 + $0x100] sm:$0xff]
      %v381 = vld [vmem:[%s246 + $0x108] sm:$0xff]
      %v382 = vld [vmem:[%s246 + $0x110] sm:$0xff]
      %v383 = vld [vmem:[%s246 + $0x118] sm:$0xff]
      %v384 = vld [vmem:[%s246 + $0x120] sm:$0xff]
      %v385 = vld [vmem:[%s246 + $0x128] sm:$0xff]
      %v386 = vld [vmem:[%s246 + $0x130] sm:$0xff]
      %v387 = vld [vmem:[%s246 + $0x138] sm:$0xff]
      %v388 = vld [vmem:[%s246 + $0x140] sm:$0xff]
      %v389 = vld [vmem:[%s246 + $0x148] sm:$0xff]
      %v390 = vld [vmem:[%s246 + $0x150] sm:$0xff]
      %v391 = vld [vmem:[%s246 + $0x158] sm:$0xff]
      %v392 = vld [vmem:[%s246 + $0x160] sm:$0xff]
      %v393 = vld [vmem:[%s246 + $0x168] sm:$0xff]
      %v394 = vld [vmem:[%s246 + $0x170] sm:$0xff]
      %v395 = vld [vmem:[%s246 + $0x178] sm:$0xff]
      %v396 = vld [vmem:[%s246 + $0x180] sm:$0xff]
      %445 = vrot.lane.b32.xlu0 %v349, 32
      %v446 = vpop.permute.xlu0 %445
      %447 = vrot.lane.b32.xlu0 %v350, 32
      %v448 = vpop.permute.xlu0 %447
      %449 = vrot.lane.b32.xlu0 %v351, 32
      %v450 = vpop.permute.xlu0 %449
      %451 = vrot.lane.b32.xlu0 %v352, 32
      %v452 = vpop.permute.xlu0 %451
      %453 = vrot.lane.b32.xlu0 %v353, 32
      %v454 = vpop.permute.xlu0 %453
      %455 = vrot.lane.b32.xlu0 %v354, 32
      %v456 = vpop.permute.xlu0 %455
      %457 = vrot.lane.b32.xlu0 %v355, 32
      %v458 = vpop.permute.xlu0 %457
      %459 = vrot.lane.b32.xlu0 %v356, 32
      %v460 = vpop.permute.xlu0 %459
      %461 = vrot.lane.b32.xlu0 %v357, 32
      %v462 = vpop.permute.xlu0 %461
      %463 = vrot.lane.b32.xlu0 %v358, 32
      %v464 = vpop.permute.xlu0 %463
      %465 = vrot.lane.b32.xlu0 %v359, 32
      %v466 = vpop.permute.xlu0 %465
      %467 = vrot.lane.b32.xlu0 %v360, 32
      %v468 = vpop.permute.xlu0 %467
      %469 = vrot.lane.b32.xlu0 %v361, 32
      %v470 = vpop.permute.xlu0 %469
      %471 = vrot.lane.b32.xlu0 %v362, 32
      %v472 = vpop.permute.xlu0 %471
      %473 = vrot.lane.b32.xlu0 %v363, 32
      %v474 = vpop.permute.xlu0 %473
      %475 = vrot.lane.b32.xlu0 %v364, 32
      %v476 = vpop.permute.xlu0 %475
      %477 = vrot.lane.b32.xlu0 %v365, 32
      %v478 = vpop.permute.xlu0 %477
      %479 = vrot.lane.b32.xlu0 %v366, 32
      %v480 = vpop.permute.xlu0 %479
      %481 = vrot.lane.b32.xlu0 %v367, 32
      %v482 = vpop.permute.xlu0 %481
      %483 = vrot.lane.b32.xlu0 %v368, 32
      %v484 = vpop.permute.xlu0 %483
      %485 = vrot.lane.b32.xlu0 %v369, 32
      %v486 = vpop.permute.xlu0 %485
      %487 = vrot.lane.b32.xlu0 %v370, 32
      %v488 = vpop.permute.xlu0 %487
      %489 = vrot.lane.b32.xlu0 %v371, 32
      %v490 = vpop.permute.xlu0 %489
      %491 = vrot.lane.b32.xlu0 %v372, 32
      %v492 = vpop.permute.xlu0 %491
      %493 = vrot.lane.b32.xlu0 %v373, 32
      %v494 = vpop.permute.xlu0 %493
      %495 = vrot.lane.b32.xlu0 %v374, 32
      %v496 = vpop.permute.xlu0 %495
      %497 = vrot.lane.b32.xlu0 %v375, 32
      %v498 = vpop.permute.xlu0 %497
      %499 = vrot.lane.b32.xlu0 %v376, 32
      %v500 = vpop.permute.xlu0 %499
      %501 = vrot.lane.b32.xlu0 %v377, 32
      %v502 = vpop.permute.xlu0 %501
      %503 = vrot.lane.b32.xlu0 %v378, 32
      %v504 = vpop.permute.xlu0 %503
      %505 = vrot.lane.b32.xlu0 %v379, 32
      %v506 = vpop.permute.xlu0 %505
      %507 = vrot.lane.b32.xlu0 %v380, 32
      %v508 = vpop.permute.xlu0 %507
      %509 = vrot.lane.b32.xlu0 %v381, 32
      %v510 = vpop.permute.xlu0 %509
      %511 = vrot.lane.b32.xlu0 %v382, 32
      %v512 = vpop.permute.xlu0 %511
      %513 = vrot.lane.b32.xlu0 %v383, 32
      %v514 = vpop.permute.xlu0 %513
      %515 = vrot.lane.b32.xlu0 %v384, 32
      %v516 = vpop.permute.xlu0 %515
      %517 = vrot.lane.b32.xlu0 %v385, 32
      %v518 = vpop.permute.xlu0 %517
      %519 = vrot.lane.b32.xlu0 %v386, 32
      %v520 = vpop.permute.xlu0 %519
      %521 = vrot.lane.b32.xlu0 %v387, 32
      %v522 = vpop.permute.xlu0 %521
      %523 = vrot.lane.b32.xlu0 %v388, 32
      %v524 = vpop.permute.xlu0 %523
      %525 = vrot.lane.b32.xlu0 %v389, 32
      %v526 = vpop.permute.xlu0 %525
      %527 = vrot.lane.b32.xlu0 %v390, 32
      %v528 = vpop.permute.xlu0 %527
      %529 = vrot.lane.b32.xlu0 %v391, 32
      %v530 = vpop.permute.xlu0 %529
      %531 = vrot.lane.b32.xlu0 %v392, 32
      %v532 = vpop.permute.xlu0 %531
      %533 = vrot.lane.b32.xlu0 %v393, 32
      %v534 = vpop.permute.xlu0 %533
      %535 = vrot.lane.b32.xlu0 %v394, 32
      %v536 = vpop.permute.xlu0 %535
      %537 = vrot.lane.b32.xlu0 %v395, 32
      %v538 = vpop.permute.xlu0 %537
      %539 = vrot.lane.b32.xlu0 %v396, 32
      %v540 = vpop.permute.xlu0 %539
      %vm589 = vcmask 523520
      %590 = vst.msk [vmem:[#allocation2] sm:$0xff] %vm589, %v446
      %591 = vst.msk [vmem:[#allocation2 + $0x18] sm:$0xff] %vm589, %v448
      %592 = vst.msk [vmem:[#allocation2 + $0x30] sm:$0xff] %vm589, %v450
      %593 = vst.msk [vmem:[#allocation2 + $0x48] sm:$0xff] %vm589, %v452
      %594 = vst.msk [vmem:[#allocation2 + $0x60] sm:$0xff] %vm589, %v454
      %595 = vst.msk [vmem:[#allocation2 + $0x78] sm:$0xff] %vm589, %v456
      %596 = vst.msk [vmem:[#allocation2 + $0x90] sm:$0xff] %vm589, %v458
      %597 = vst.msk [vmem:[#allocation2 + $0xa8] sm:$0xff] %vm589, %v460
      %598 = vst.msk [vmem:[#allocation2 + $0xc0] sm:$0xff] %vm589, %v462
      %599 = vst.msk [vmem:[#allocation2 + $0xd8] sm:$0xff] %vm589, %v464
      %600 = vst.msk [vmem:[#allocation2 + $0xf0] sm:$0xff] %vm589, %v466
      %601 = vst.msk [vmem:[#allocation2 + $0x108] sm:$0xff] %vm589, %v468
      %602 = vst.msk [vmem:[#allocation2 + $0x120] sm:$0xff] %vm589, %v470
      %603 = vst.msk [vmem:[#allocation2 + $0x138] sm:$0xff] %vm589, %v472
      %604 = vst.msk [vmem:[#allocation2 + $0x150] sm:$0xff] %vm589, %v474
      %605 = vst.msk [vmem:[#allocation2 + $0x168] sm:$0xff] %vm589, %v476
      %606 = vst.msk [vmem:[#allocation2 + $0x180] sm:$0xff] %vm589, %v478
      %607 = vst.msk [vmem:[#allocation2 + $0x198] sm:$0xff] %vm589, %v480
      %608 = vst.msk [vmem:[#allocation2 + $0x1b0] sm:$0xff] %vm589, %v482
      %609 = vst.msk [vmem:[#allocation2 + $0x1c8] sm:$0xff] %vm589, %v484
      %610 = vst.msk [vmem:[#allocation2 + $0x1e0] sm:$0xff] %vm589, %v486
      %611 = vst.msk [vmem:[#allocation2 + $0x1f8] sm:$0xff] %vm589, %v488
      %612 = vst.msk [vmem:[#allocation2 + $0x210] sm:$0xff] %vm589, %v490
      %613 = vst.msk [vmem:[#allocation2 + $0x228] sm:$0xff] %vm589, %v492
      %614 = vst.msk [vmem:[#allocation2 + $0x240] sm:$0xff] %vm589, %v494
      %615 = vst.msk [vmem:[#allocation2 + $0x258] sm:$0xff] %vm589, %v496
      %616 = vst.msk [vmem:[#allocation2 + $0x270] sm:$0xff] %vm589, %v498
      %617 = vst.msk [vmem:[#allocation2 + $0x288] sm:$0xff] %vm589, %v500
      %618 = vst.msk [vmem:[#allocation2 + $0x2a0] sm:$0xff] %vm589, %v502
      %619 = vst.msk [vmem:[#allocation2 + $0x2b8] sm:$0xff] %vm589, %v504
      %620 = vst.msk [vmem:[#allocation2 + $0x2d0] sm:$0xff] %vm589, %v506
      %621 = vst.msk [vmem:[#allocation2 + $0x2e8] sm:$0xff] %vm589, %v508
      %622 = vst.msk [vmem:[#allocation2 + $0x300] sm:$0xff] %vm589, %v510
      %623 = vst.msk [vmem:[#allocation2 + $0x318] sm:$0xff] %vm589, %v512
      %624 = vst.msk [vmem:[#allocation2 + $0x330] sm:$0xff] %vm589, %v514
      %625 = vst.msk [vmem:[#allocation2 + $0x348] sm:$0xff] %vm589, %v516
      %626 = vst.msk [vmem:[#allocation2 + $0x360] sm:$0xff] %vm589, %v518
      %627 = vst.msk [vmem:[#allocation2 + $0x378] sm:$0xff] %vm589, %v520
      %628 = vst.msk [vmem:[#allocation2 + $0x390] sm:$0xff] %vm589, %v522
      %629 = vst.msk [vmem:[#allocation2 + $0x3a8] sm:$0xff] %vm589, %v524
      %630 = vst.msk [vmem:[#allocation2 + $0x3c0] sm:$0xff] %vm589, %v526
      %631 = vst.msk [vmem:[#allocation2 + $0x3d8] sm:$0xff] %vm589, %v528
      %632 = vst.msk [vmem:[#allocation2 + $0x3f0] sm:$0xff] %vm589, %v530
      %633 = vst.msk [vmem:[#allocation2 + $0x408] sm:$0xff] %vm589, %v532
      %634 = vst.msk [vmem:[#allocation2 + $0x420] sm:$0xff] %vm589, %v534
      %635 = vst.msk [vmem:[#allocation2 + $0x438] sm:$0xff] %vm589, %v536
      %636 = vst.msk [vmem:[#allocation2 + $0x450] sm:$0xff] %vm589, %v538
      %637 = vst.msk [vmem:[#allocation2 + $0x468] sm:$0xff] %vm589, %v540
      %v638 = vld [vmem:[%s246 + $0x9] sm:$0xff]
      %v639 = vld [vmem:[%s246 + $0x11] sm:$0xff]
      %v640 = vld [vmem:[%s246 + $0x19] sm:$0xff]
      %v641 = vld [vmem:[%s246 + $0x21] sm:$0xff]
      %v642 = vld [vmem:[%s246 + $0x29] sm:$0xff]
      %v643 = vld [vmem:[%s246 + $0x31] sm:$0xff]
      %v644 = vld [vmem:[%s246 + $0x39] sm:$0xff]
      %v645 = vld [vmem:[%s246 + $0x41] sm:$0xff]
      %v646 = vld [vmem:[%s246 + $0x49] sm:$0xff]
      %v647 = vld [vmem:[%s246 + $0x51] sm:$0xff]
      %v648 = vld [vmem:[%s246 + $0x59] sm:$0xff]
      %v649 = vld [vmem:[%s246 + $0x61] sm:$0xff]
      %v650 = vld [vmem:[%s246 + $0x69] sm:$0xff]
      %v651 = vld [vmem:[%s246 + $0x71] sm:$0xff]
      %v652 = vld [vmem:[%s246 + $0x79] sm:$0xff]
      %v653 = vld [vmem:[%s246 + $0x81] sm:$0xff]
      %v654 = vld [vmem:[%s246 + $0x89] sm:$0xff]
      %v655 = vld [vmem:[%s246 + $0x91] sm:$0xff]
      %v656 = vld [vmem:[%s246 + $0x99] sm:$0xff]
      %v657 = vld [vmem:[%s246 + $0xa1] sm:$0xff]
      %v658 = vld [vmem:[%s246 + $0xa9] sm:$0xff]
      %v659 = vld [vmem:[%s246 + $0xb1] sm:$0xff]
      %v660 = vld [vmem:[%s246 + $0xb9] sm:$0xff]
      %v661 = vld [vmem:[%s246 + $0xc1] sm:$0xff]
      %v662 = vld [vmem:[%s246 + $0xc9] sm:$0xff]
      %v663 = vld [vmem:[%s246 + $0xd1] sm:$0xff]
      %v664 = vld [vmem:[%s246 + $0xd9] sm:$0xff]
      %v665 = vld [vmem:[%s246 + $0xe1] sm:$0xff]
      %v666 = vld [vmem:[%s246 + $0xe9] sm:$0xff]
      %v667 = vld [vmem:[%s246 + $0xf1] sm:$0xff]
      %v668 = vld [vmem:[%s246 + $0xf9] sm:$0xff]
      %v669 = vld [vmem:[%s246 + $0x101] sm:$0xff]
      %v670 = vld [vmem:[%s246 + $0x109] sm:$0xff]
      %v671 = vld [vmem:[%s246 + $0x111] sm:$0xff]
      %v672 = vld [vmem:[%s246 + $0x119] sm:$0xff]
      %v673 = vld [vmem:[%s246 + $0x121] sm:$0xff]
      %v674 = vld [vmem:[%s246 + $0x129] sm:$0xff]
      %v675 = vld [vmem:[%s246 + $0x131] sm:$0xff]
      %v676 = vld [vmem:[%s246 + $0x139] sm:$0xff]
      %v677 = vld [vmem:[%s246 + $0x141] sm:$0xff]
      %v678 = vld [vmem:[%s246 + $0x149] sm:$0xff]
      %v679 = vld [vmem:[%s246 + $0x151] sm:$0xff]
      %v680 = vld [vmem:[%s246 + $0x159] sm:$0xff]
      %v681 = vld [vmem:[%s246 + $0x161] sm:$0xff]
      %v682 = vld [vmem:[%s246 + $0x169] sm:$0xff]
      %v683 = vld [vmem:[%s246 + $0x171] sm:$0xff]
      %v684 = vld [vmem:[%s246 + $0x179] sm:$0xff]
      %v685 = vld [vmem:[%s246 + $0x181] sm:$0xff]
      %734 = vrot.lane.b32.xlu0 %v638, 64
      %v735 = vpop.permute.xlu0 %734
      %736 = vrot.lane.b32.xlu0 %v639, 64
      %v737 = vpop.permute.xlu0 %736
      %738 = vrot.lane.b32.xlu0 %v640, 64
      %v739 = vpop.permute.xlu0 %738
      %740 = vrot.lane.b32.xlu0 %v641, 64
      %v741 = vpop.permute.xlu0 %740
      %742 = vrot.lane.b32.xlu0 %v642, 64
      %v743 = vpop.permute.xlu0 %742
      %744 = vrot.lane.b32.xlu0 %v643, 64
      %v745 = vpop.permute.xlu0 %744
      %746 = vrot.lane.b32.xlu0 %v644, 64
      %v747 = vpop.permute.xlu0 %746
      %748 = vrot.lane.b32.xlu0 %v645, 64
      %v749 = vpop.permute.xlu0 %748
      %750 = vrot.lane.b32.xlu0 %v646, 64
      %v751 = vpop.permute.xlu0 %750
      %752 = vrot.lane.b32.xlu0 %v647, 64
      %v753 = vpop.permute.xlu0 %752
      %754 = vrot.lane.b32.xlu0 %v648, 64
      %v755 = vpop.permute.xlu0 %754
      %756 = vrot.lane.b32.xlu0 %v649, 64
      %v757 = vpop.permute.xlu0 %756
      %758 = vrot.lane.b32.xlu0 %v650, 64
      %v759 = vpop.permute.xlu0 %758
      %760 = vrot.lane.b32.xlu0 %v651, 64
      %v761 = vpop.permute.xlu0 %760
      %762 = vrot.lane.b32.xlu0 %v652, 64
      %v763 = vpop.permute.xlu0 %762
      %764 = vrot.lane.b32.xlu0 %v653, 64
      %v765 = vpop.permute.xlu0 %764
      %766 = vrot.lane.b32.xlu0 %v654, 64
      %v767 = vpop.permute.xlu0 %766
      %768 = vrot.lane.b32.xlu0 %v655, 64
      %v769 = vpop.permute.xlu0 %768
      %770 = vrot.lane.b32.xlu0 %v656, 64
      %v771 = vpop.permute.xlu0 %770
      %772 = vrot.lane.b32.xlu0 %v657, 64
      %v773 = vpop.permute.xlu0 %772
      %774 = vrot.lane.b32.xlu0 %v658, 64
      %v775 = vpop.permute.xlu0 %774
      %776 = vrot.lane.b32.xlu0 %v659, 64
      %v777 = vpop.permute.xlu0 %776
      %778 = vrot.lane.b32.xlu0 %v660, 64
      %v779 = vpop.permute.xlu0 %778
      %780 = vrot.lane.b32.xlu0 %v661, 64
      %v781 = vpop.permute.xlu0 %780
      %782 = vrot.lane.b32.xlu0 %v662, 64
      %v783 = vpop.permute.xlu0 %782
      %784 = vrot.lane.b32.xlu0 %v663, 64
      %v785 = vpop.permute.xlu0 %784
      %786 = vrot.lane.b32.xlu0 %v664, 64
      %v787 = vpop.permute.xlu0 %786
      %788 = vrot.lane.b32.xlu0 %v665, 64
      %v789 = vpop.permute.xlu0 %788
      %790 = vrot.lane.b32.xlu0 %v666, 64
      %v791 = vpop.permute.xlu0 %790
      %792 = vrot.lane.b32.xlu0 %v667, 64
      %v793 = vpop.permute.xlu0 %792
      %794 = vrot.lane.b32.xlu0 %v668, 64
      %v795 = vpop.permute.xlu0 %794
      %796 = vrot.lane.b32.xlu0 %v669, 64
      %v797 = vpop.permute.xlu0 %796
      %798 = vrot.lane.b32.xlu0 %v670, 64
      %v799 = vpop.permute.xlu0 %798
      %800 = vrot.lane.b32.xlu0 %v671, 64
      %v801 = vpop.permute.xlu0 %800
      %802 = vrot.lane.b32.xlu0 %v672, 64
      %v803 = vpop.permute.xlu0 %802
      %804 = vrot.lane.b32.xlu0 %v673, 64
      %v805 = vpop.permute.xlu0 %804
      %806 = vrot.lane.b32.xlu0 %v674, 64
      %v807 = vpop.permute.xlu0 %806
      %808 = vrot.lane.b32.xlu0 %v675, 64
      %v809 = vpop.permute.xlu0 %808
      %810 = vrot.lane.b32.xlu0 %v676, 64
      %v811 = vpop.permute.xlu0 %810
      %812 = vrot.lane.b32.xlu0 %v677, 64
      %v813 = vpop.permute.xlu0 %812
      %814 = vrot.lane.b32.xlu0 %v678, 64
      %v815 = vpop.permute.xlu0 %814
      %816 = vrot.lane.b32.xlu0 %v679, 64
      %v817 = vpop.permute.xlu0 %816
      %818 = vrot.lane.b32.xlu0 %v680, 64
      %v819 = vpop.permute.xlu0 %818
      %820 = vrot.lane.b32.xlu0 %v681, 64
      %v821 = vpop.permute.xlu0 %820
      %822 = vrot.lane.b32.xlu0 %v682, 64
      %v823 = vpop.permute.xlu0 %822
      %824 = vrot.lane.b32.xlu0 %v683, 64
      %v825 = vpop.permute.xlu0 %824
      %826 = vrot.lane.b32.xlu0 %v684, 64
      %v827 = vpop.permute.xlu0 %826
      %828 = vrot.lane.b32.xlu0 %v685, 64
      %v829 = vpop.permute.xlu0 %828
      %vm878 = vcmask 785920
      %879 = vst.msk [vmem:[#allocation2] sm:$0xff] %vm878, %v735
      %880 = vst.msk [vmem:[#allocation2 + $0x18] sm:$0xff] %vm878, %v737
      %881 = vst.msk [vmem:[#allocation2 + $0x30] sm:$0xff] %vm878, %v739
      %882 = vst.msk [vmem:[#allocation2 + $0x48] sm:$0xff] %vm878, %v741
      %883 = vst.msk [vmem:[#allocation2 + $0x60] sm:$0xff] %vm878, %v743
      %884 = vst.msk [vmem:[#allocation2 + $0x78] sm:$0xff] %vm878, %v745
      %885 = vst.msk [vmem:[#allocation2 + $0x90] sm:$0xff] %vm878, %v747
      %886 = vst.msk [vmem:[#allocation2 + $0xa8] sm:$0xff] %vm878, %v749
      %887 = vst.msk [vmem:[#allocation2 + $0xc0] sm:$0xff] %vm878, %v751
      %888 = vst.msk [vmem:[#allocation2 + $0xd8] sm:$0xff] %vm878, %v753
      %889 = vst.msk [vmem:[#allocation2 + $0xf0] sm:$0xff] %vm878, %v755
      %890 = vst.msk [vmem:[#allocation2 + $0x108] sm:$0xff] %vm878, %v757
      %891 = vst.msk [vmem:[#allocation2 + $0x120] sm:$0xff] %vm878, %v759
      %892 = vst.msk [vmem:[#allocation2 + $0x138] sm:$0xff] %vm878, %v761
      %893 = vst.msk [vmem:[#allocation2 + $0x150] sm:$0xff] %vm878, %v763
      %894 = vst.msk [vmem:[#allocation2 + $0x168] sm:$0xff] %vm878, %v765
      %895 = vst.msk [vmem:[#allocation2 + $0x180] sm:$0xff] %vm878, %v767
      %896 = vst.msk [vmem:[#allocation2 + $0x198] sm:$0xff] %vm878, %v769
      %897 = vst.msk [vmem:[#allocation2 + $0x1b0] sm:$0xff] %vm878, %v771
      %898 = vst.msk [vmem:[#allocation2 + $0x1c8] sm:$0xff] %vm878, %v773
      %899 = vst.msk [vmem:[#allocation2 + $0x1e0] sm:$0xff] %vm878, %v775
      %900 = vst.msk [vmem:[#allocation2 + $0x1f8] sm:$0xff] %vm878, %v777
      %901 = vst.msk [vmem:[#allocation2 + $0x210] sm:$0xff] %vm878, %v779
      %902 = vst.msk [vmem:[#allocation2 + $0x228] sm:$0xff] %vm878, %v781
      %903 = vst.msk [vmem:[#allocation2 + $0x240] sm:$0xff] %vm878, %v783
      %904 = vst.msk [vmem:[#allocation2 + $0x258] sm:$0xff] %vm878, %v785
      %905 = vst.msk [vmem:[#allocation2 + $0x270] sm:$0xff] %vm878, %v787
      %906 = vst.msk [vmem:[#allocation2 + $0x288] sm:$0xff] %vm878, %v789
      %907 = vst.msk [vmem:[#allocation2 + $0x2a0] sm:$0xff] %vm878, %v791
      %908 = vst.msk [vmem:[#allocation2 + $0x2b8] sm:$0xff] %vm878, %v793
      %909 = vst.msk [vmem:[#allocation2 + $0x2d0] sm:$0xff] %vm878, %v795
      %910 = vst.msk [vmem:[#allocation2 + $0x2e8] sm:$0xff] %vm878, %v797
      %911 = vst.msk [vmem:[#allocation2 + $0x300] sm:$0xff] %vm878, %v799
      %912 = vst.msk [vmem:[#allocation2 + $0x318] sm:$0xff] %vm878, %v801
      %913 = vst.msk [vmem:[#allocation2 + $0x330] sm:$0xff] %vm878, %v803
      %914 = vst.msk [vmem:[#allocation2 + $0x348] sm:$0xff] %vm878, %v805
      %915 = vst.msk [vmem:[#allocation2 + $0x360] sm:$0xff] %vm878, %v807
      %916 = vst.msk [vmem:[#allocation2 + $0x378] sm:$0xff] %vm878, %v809
      %917 = vst.msk [vmem:[#allocation2 + $0x390] sm:$0xff] %vm878, %v811
      %918 = vst.msk [vmem:[#allocation2 + $0x3a8] sm:$0xff] %vm878, %v813
      %919 = vst.msk [vmem:[#allocation2 + $0x3c0] sm:$0xff] %vm878, %v815
      %920 = vst.msk [vmem:[#allocation2 + $0x3d8] sm:$0xff] %vm878, %v817
      %921 = vst.msk [vmem:[#allocation2 + $0x3f0] sm:$0xff] %vm878, %v819
      %922 = vst.msk [vmem:[#allocation2 + $0x408] sm:$0xff] %vm878, %v821
      %923 = vst.msk [vmem:[#allocation2 + $0x420] sm:$0xff] %vm878, %v823
      %924 = vst.msk [vmem:[#allocation2 + $0x438] sm:$0xff] %vm878, %v825
      %925 = vst.msk [vmem:[#allocation2 + $0x450] sm:$0xff] %vm878, %v827
      %926 = vst.msk [vmem:[#allocation2 + $0x468] sm:$0xff] %vm878, %v829
      %v927 = vld [vmem:[%s246 + $0x1f] sm:$0xff]
      %v928 = vld [vmem:[%s246 + $0x27] sm:$0xff]
      %v929 = vld [vmem:[%s246 + $0x2f] sm:$0xff]
      %v930 = vld [vmem:[%s246 + $0x37] sm:$0xff]
      %v931 = vld [vmem:[%s246 + $0x3f] sm:$0xff]
      %v932 = vld [vmem:[%s246 + $0x47] sm:$0xff]
      %v933 = vld [vmem:[%s246 + $0x4f] sm:$0xff]
      %v934 = vld [vmem:[%s246 + $0x57] sm:$0xff]
      %v935 = vld [vmem:[%s246 + $0x5f] sm:$0xff]
      %v936 = vld [vmem:[%s246 + $0x67] sm:$0xff]
      %v937 = vld [vmem:[%s246 + $0x6f] sm:$0xff]
      %v938 = vld [vmem:[%s246 + $0x77] sm:$0xff]
      %v939 = vld [vmem:[%s246 + $0x7f] sm:$0xff]
      %v940 = vld [vmem:[%s246 + $0x87] sm:$0xff]
      %v941 = vld [vmem:[%s246 + $0x8f] sm:$0xff]
      %v942 = vld [vmem:[%s246 + $0x97] sm:$0xff]
      %v943 = vld [vmem:[%s246 + $0x9f] sm:$0xff]
      %v944 = vld [vmem:[%s246 + $0xa7] sm:$0xff]
      %v945 = vld [vmem:[%s246 + $0xaf] sm:$0xff]
      %v946 = vld [vmem:[%s246 + $0xb7] sm:$0xff]
      %v947 = vld [vmem:[%s246 + $0xbf] sm:$0xff]
      %v948 = vld [vmem:[%s246 + $0xc7] sm:$0xff]
      %v949 = vld [vmem:[%s246 + $0xcf] sm:$0xff]
      %v950 = vld [vmem:[%s246 + $0xd7] sm:$0xff]
      %v951 = vld [vmem:[%s246 + $0xdf] sm:$0xff]
      %v952 = vld [vmem:[%s246 + $0xe7] sm:$0xff]
      %v953 = vld [vmem:[%s246 + $0xef] sm:$0xff]
      %v954 = vld [vmem:[%s246 + $0xf7] sm:$0xff]
      %v955 = vld [vmem:[%s246 + $0xff] sm:$0xff]
      %v956 = vld [vmem:[%s246 + $0x107] sm:$0xff]
      %v957 = vld [vmem:[%s246 + $0x10f] sm:$0xff]
      %v958 = vld [vmem:[%s246 + $0x117] sm:$0xff]
      %v959 = vld [vmem:[%s246 + $0x11f] sm:$0xff]
      %v960 = vld [vmem:[%s246 + $0x127] sm:$0xff]
      %v961 = vld [vmem:[%s246 + $0x12f] sm:$0xff]
      %v962 = vld [vmem:[%s246 + $0x137] sm:$0xff]
      %v963 = vld [vmem:[%s246 + $0x13f] sm:$0xff]
      %v964 = vld [vmem:[%s246 + $0x147] sm:$0xff]
      %v965 = vld [vmem:[%s246 + $0x14f] sm:$0xff]
      %v966 = vld [vmem:[%s246 + $0x157] sm:$0xff]
      %v967 = vld [vmem:[%s246 + $0x15f] sm:$0xff]
      %v968 = vld [vmem:[%s246 + $0x167] sm:$0xff]
      %v969 = vld [vmem:[%s246 + $0x16f] sm:$0xff]
      %v970 = vld [vmem:[%s246 + $0x177] sm:$0xff]
      %v971 = vld [vmem:[%s246 + $0x17f] sm:$0xff]
      %v972 = vld [vmem:[%s246 + $0x187] sm:$0xff]
      %v973 = vld [vmem:[%s246 + $0x18f] sm:$0xff]
      %v974 = vld [vmem:[%s246 + $0x197] sm:$0xff]
      %1023 = vrot.lane.b32.xlu0 %v927, 96
      %v1024 = vpop.permute.xlu0 %1023
      %1025 = vrot.lane.b32.xlu0 %v928, 96
      %v1026 = vpop.permute.xlu0 %1025
      %1027 = vrot.lane.b32.xlu0 %v929, 96
      %v1028 = vpop.permute.xlu0 %1027
      %1029 = vrot.lane.b32.xlu0 %v930, 96
      %v1030 = vpop.permute.xlu0 %1029
      %1031 = vrot.lane.b32.xlu0 %v931, 96
      %v1032 = vpop.permute.xlu0 %1031
      %1033 = vrot.lane.b32.xlu0 %v932, 96
      %v1034 = vpop.permute.xlu0 %1033
      %1035 = vrot.lane.b32.xlu0 %v933, 96
      %v1036 = vpop.permute.xlu0 %1035
      %1037 = vrot.lane.b32.xlu0 %v934, 96
      %v1038 = vpop.permute.xlu0 %1037
      %1039 = vrot.lane.b32.xlu0 %v935, 96
      %v1040 = vpop.permute.xlu0 %1039
      %1041 = vrot.lane.b32.xlu0 %v936, 96
      %v1042 = vpop.permute.xlu0 %1041
      %1043 = vrot.lane.b32.xlu0 %v937, 96
      %v1044 = vpop.permute.xlu0 %1043
      %1045 = vrot.lane.b32.xlu0 %v938, 96
      %v1046 = vpop.permute.xlu0 %1045
      %1047 = vrot.lane.b32.xlu0 %v939, 96
      %v1048 = vpop.permute.xlu0 %1047
      %1049 = vrot.lane.b32.xlu0 %v940, 96
      %v1050 = vpop.permute.xlu0 %1049
      %1051 = vrot.lane.b32.xlu0 %v941, 96
      %v1052 = vpop.permute.xlu0 %1051
      %1053 = vrot.lane.b32.xlu0 %v942, 96
      %v1054 = vpop.permute.xlu0 %1053
      %1055 = vrot.lane.b32.xlu0 %v943, 96
      %v1056 = vpop.permute.xlu0 %1055
      %1057 = vrot.lane.b32.xlu0 %v944, 96
      %v1058 = vpop.permute.xlu0 %1057
      %1059 = vrot.lane.b32.xlu0 %v945, 96
      %v1060 = vpop.permute.xlu0 %1059
      %1061 = vrot.lane.b32.xlu0 %v946, 96
      %v1062 = vpop.permute.xlu0 %1061
      %1063 = vrot.lane.b32.xlu0 %v947, 96
      %v1064 = vpop.permute.xlu0 %1063
      %1065 = vrot.lane.b32.xlu0 %v948, 96
      %v1066 = vpop.permute.xlu0 %1065
      %1067 = vrot.lane.b32.xlu0 %v949, 96
      %v1068 = vpop.permute.xlu0 %1067
      %1069 = vrot.lane.b32.xlu0 %v950, 96
      %v1070 = vpop.permute.xlu0 %1069
      %1071 = vrot.lane.b32.xlu0 %v951, 96
      %v1072 = vpop.permute.xlu0 %1071
      %1073 = vrot.lane.b32.xlu0 %v952, 96
      %v1074 = vpop.permute.xlu0 %1073
      %1075 = vrot.lane.b32.xlu0 %v953, 96
      %v1076 = vpop.permute.xlu0 %1075
      %1077 = vrot.lane.b32.xlu0 %v954, 96
      %v1078 = vpop.permute.xlu0 %1077
      %1079 = vrot.lane.b32.xlu0 %v955, 96
      %v1080 = vpop.permute.xlu0 %1079
      %1081 = vrot.lane.b32.xlu0 %v956, 96
      %v1082 = vpop.permute.xlu0 %1081
      %1083 = vrot.lane.b32.xlu0 %v957, 96
      %v1084 = vpop.permute.xlu0 %1083
      %1085 = vrot.lane.b32.xlu0 %v958, 96
      %v1086 = vpop.permute.xlu0 %1085
      %1087 = vrot.lane.b32.xlu0 %v959, 96
      %v1088 = vpop.permute.xlu0 %1087
      %1089 = vrot.lane.b32.xlu0 %v960, 96
      %v1090 = vpop.permute.xlu0 %1089
      %1091 = vrot.lane.b32.xlu0 %v961, 96
      %v1092 = vpop.permute.xlu0 %1091
      %1093 = vrot.lane.b32.xlu0 %v962, 96
      %v1094 = vpop.permute.xlu0 %1093
      %1095 = vrot.lane.b32.xlu0 %v963, 96
      %v1096 = vpop.permute.xlu0 %1095
      %1097 = vrot.lane.b32.xlu0 %v964, 96
      %v1098 = vpop.permute.xlu0 %1097
      %1099 = vrot.lane.b32.xlu0 %v965, 96
      %v1100 = vpop.permute.xlu0 %1099
      %1101 = vrot.lane.b32.xlu0 %v966, 96
      %v1102 = vpop.permute.xlu0 %1101
      %1103 = vrot.lane.b32.xlu0 %v967, 96
      %v1104 = vpop.permute.xlu0 %1103
      %1105 = vrot.lane.b32.xlu0 %v968, 96
      %v1106 = vpop.permute.xlu0 %1105
      %1107 = vrot.lane.b32.xlu0 %v969, 96
      %v1108 = vpop.permute.xlu0 %1107
      %1109 = vrot.lane.b32.xlu0 %v970, 96
      %v1110 = vpop.permute.xlu0 %1109
      %1111 = vrot.lane.b32.xlu0 %v971, 96
      %v1112 = vpop.permute.xlu0 %1111
      %1113 = vrot.lane.b32.xlu0 %v972, 96
      %v1114 = vpop.permute.xlu0 %1113
      %1115 = vrot.lane.b32.xlu0 %v973, 96
      %v1116 = vpop.permute.xlu0 %1115
      %1117 = vrot.lane.b32.xlu0 %v974, 96
      %v1118 = vpop.permute.xlu0 %1117
      %vm1167 = vcmask 1048320
      %1168 = vst.msk [vmem:[#allocation2] sm:$0xff] %vm1167, %v1024
      %1169 = vst.msk [vmem:[#allocation2 + $0x18] sm:$0xff] %vm1167, %v1026
      %1170 = vst.msk [vmem:[#allocation2 + $0x30] sm:$0xff] %vm1167, %v1028
      %1171 = vst.msk [vmem:[#allocation2 + $0x48] sm:$0xff] %vm1167, %v1030
      %1172 = vst.msk [vmem:[#allocation2 + $0x60] sm:$0xff] %vm1167, %v1032
      %1173 = vst.msk [vmem:[#allocation2 + $0x78] sm:$0xff] %vm1167, %v1034
      %1174 = vst.msk [vmem:[#allocation2 + $0x90] sm:$0xff] %vm1167, %v1036
      %1175 = vst.msk [vmem:[#allocation2 + $0xa8] sm:$0xff] %vm1167, %v1038
      %1176 = vst.msk [vmem:[#allocation2 + $0xc0] sm:$0xff] %vm1167, %v1040
      %1177 = vst.msk [vmem:[#allocation2 + $0xd8] sm:$0xff] %vm1167, %v1042
      %1178 = vst.msk [vmem:[#allocation2 + $0xf0] sm:$0xff] %vm1167, %v1044
      %1179 = vst.msk [vmem:[#allocation2 + $0x108] sm:$0xff] %vm1167, %v1046
      %1180 = vst.msk [vmem:[#allocation2 + $0x120] sm:$0xff] %vm1167, %v1048
      %1181 = vst.msk [vmem:[#allocation2 + $0x138] sm:$0xff] %vm1167, %v1050
      %1182 = vst.msk [vmem:[#allocation2 + $0x150] sm:$0xff] %vm1167, %v1052
      %1183 = vst.msk [vmem:[#allocation2 + $0x168] sm:$0xff] %vm1167, %v1054
      %1184 = vst.msk [vmem:[#allocation2 + $0x180] sm:$0xff] %vm1167, %v1056
      %1185 = vst.msk [vmem:[#allocation2 + $0x198] sm:$0xff] %vm1167, %v1058
      %1186 = vst.msk [vmem:[#allocation2 + $0x1b0] sm:$0xff] %vm1167, %v1060
      %1187 = vst.msk [vmem:[#allocation2 + $0x1c8] sm:$0xff] %vm1167, %v1062
      %1188 = vst.msk [vmem:[#allocation2 + $0x1e0] sm:$0xff] %vm1167, %v1064
      %1189 = vst.msk [vmem:[#allocation2 + $0x1f8] sm:$0xff] %vm1167, %v1066
      %1190 = vst.msk [vmem:[#allocation2 + $0x210] sm:$0xff] %vm1167, %v1068
      %1191 = vst.msk [vmem:[#allocation2 + $0x228] sm:$0xff] %vm1167, %v1070
      %1192 = vst.msk [vmem:[#allocation2 + $0x240] sm:$0xff] %vm1167, %v1072
      %1193 = vst.msk [vmem:[#allocation2 + $0x258] sm:$0xff] %vm1167, %v1074
      %1194 = vst.msk [vmem:[#allocation2 + $0x270] sm:$0xff] %vm1167, %v1076
      %1195 = vst.msk [vmem:[#allocation2 + $0x288] sm:$0xff] %vm1167, %v1078
      %1196 = vst.msk [vmem:[#allocation2 + $0x2a0] sm:$0xff] %vm1167, %v1080
      %1197 = vst.msk [vmem:[#allocation2 + $0x2b8] sm:$0xff] %vm1167, %v1082
      %1198 = vst.msk [vmem:[#allocation2 + $0x2d0] sm:$0xff] %vm1167, %v1084
      %1199 = vst.msk [vmem:[#allocation2 + $0x2e8] sm:$0xff] %vm1167, %v1086
      %1200 = vst.msk [vmem:[#allocation2 + $0x300] sm:$0xff] %vm1167, %v1088
      %1201 = vst.msk [vmem:[#allocation2 + $0x318] sm:$0xff] %vm1167, %v1090
      %1202 = vst.msk [vmem:[#allocation2 + $0x330] sm:$0xff] %vm1167, %v1092
      %1203 = vst.msk [vmem:[#allocation2 + $0x348] sm:$0xff] %vm1167, %v1094
      %1204 = vst.msk [vmem:[#allocation2 + $0x360] sm:$0xff] %vm1167, %v1096
      %1205 = vst.msk [vmem:[#allocation2 + $0x378] sm:$0xff] %vm1167, %v1098
      %1206 = vst.msk [vmem:[#allocation2 + $0x390] sm:$0xff] %vm1167, %v1100
      %1207 = vst.msk [vmem:[#allocation2 + $0x3a8] sm:$0xff] %vm1167, %v1102
      %1208 = vst.msk [vmem:[#allocation2 + $0x3c0] sm:$0xff] %vm1167, %v1104
      %1209 = vst.msk [vmem:[#allocation2 + $0x3d8] sm:$0xff] %vm1167, %v1106
      %1210 = vst.msk [vmem:[#allocation2 + $0x3f0] sm:$0xff] %vm1167, %v1108
      %1211 = vst.msk [vmem:[#allocation2 + $0x408] sm:$0xff] %vm1167, %v1110
      %1212 = vst.msk [vmem:[#allocation2 + $0x420] sm:$0xff] %vm1167, %v1112
      %1213 = vst.msk [vmem:[#allocation2 + $0x438] sm:$0xff] %vm1167, %v1114
      %1214 = vst.msk [vmem:[#allocation2 + $0x450] sm:$0xff] %vm1167, %v1116
      %1215 = vst.msk [vmem:[#allocation2 + $0x468] sm:$0xff] %vm1167, %v1118
      %v1216 = vld [vmem:[%s246 + $0x20] sm:$0xff]
      %v1217 = vld [vmem:[%s246 + $0x28] sm:$0xff]
      %v1218 = vld [vmem:[%s246 + $0x30] sm:$0xff]
      %v1219 = vld [vmem:[%s246 + $0x38] sm:$0xff]
      %v1220 = vld [vmem:[%s246 + $0x40] sm:$0xff]
      %v1221 = vld [vmem:[%s246 + $0x48] sm:$0xff]
      %v1222 = vld [vmem:[%s246 + $0x50] sm:$0xff]
      %v1223 = vld [vmem:[%s246 + $0x58] sm:$0xff]
      %v1224 = vld [vmem:[%s246 + $0x60] sm:$0xff]
      %v1225 = vld [vmem:[%s246 + $0x68] sm:$0xff]
      %v1226 = vld [vmem:[%s246 + $0x70] sm:$0xff]
      %v1227 = vld [vmem:[%s246 + $0x78] sm:$0xff]
      %v1228 = vld [vmem:[%s246 + $0x80] sm:$0xff]
      %v1229 = vld [vmem:[%s246 + $0x88] sm:$0xff]
      %v1230 = vld [vmem:[%s246 + $0x90] sm:$0xff]
      %v1231 = vld [vmem:[%s246 + $0x98] sm:$0xff]
      %v1232 = vld [vmem:[%s246 + $0xa0] sm:$0xff]
      %v1233 = vld [vmem:[%s246 + $0xa8] sm:$0xff]
      %v1234 = vld [vmem:[%s246 + $0xb0] sm:$0xff]
      %v1235 = vld [vmem:[%s246 + $0xb8] sm:$0xff]
      %v1236 = vld [vmem:[%s246 + $0xc0] sm:$0xff]
      %v1237 = vld [vmem:[%s246 + $0xc8] sm:$0xff]
      %v1238 = vld [vmem:[%s246 + $0xd0] sm:$0xff]
      %v1239 = vld [vmem:[%s246 + $0xd8] sm:$0xff]
      %v1240 = vld [vmem:[%s246 + $0xe0] sm:$0xff]
      %v1241 = vld [vmem:[%s246 + $0xe8] sm:$0xff]
      %v1242 = vld [vmem:[%s246 + $0xf0] sm:$0xff]
      %v1243 = vld [vmem:[%s246 + $0xf8] sm:$0xff]
      %v1244 = vld [vmem:[%s246 + $0x100] sm:$0xff]
      %v1245 = vld [vmem:[%s246 + $0x108] sm:$0xff]
      %v1246 = vld [vmem:[%s246 + $0x110] sm:$0xff]
      %v1247 = vld [vmem:[%s246 + $0x118] sm:$0xff]
      %v1248 = vld [vmem:[%s246 + $0x120] sm:$0xff]
      %v1249 = vld [vmem:[%s246 + $0x128] sm:$0xff]
      %v1250 = vld [vmem:[%s246 + $0x130] sm:$0xff]
      %v1251 = vld [vmem:[%s246 + $0x138] sm:$0xff]
      %v1252 = vld [vmem:[%s246 + $0x140] sm:$0xff]
      %v1253 = vld [vmem:[%s246 + $0x148] sm:$0xff]
      %v1254 = vld [vmem:[%s246 + $0x150] sm:$0xff]
      %v1255 = vld [vmem:[%s246 + $0x158] sm:$0xff]
      %v1256 = vld [vmem:[%s246 + $0x160] sm:$0xff]
      %v1257 = vld [vmem:[%s246 + $0x168] sm:$0xff]
      %v1258 = vld [vmem:[%s246 + $0x170] sm:$0xff]
      %v1259 = vld [vmem:[%s246 + $0x178] sm:$0xff]
      %v1260 = vld [vmem:[%s246 + $0x180] sm:$0xff]
      %v1261 = vld [vmem:[%s246 + $0x188] sm:$0xff]
      %v1262 = vld [vmem:[%s246 + $0x190] sm:$0xff]
      %v1263 = vld [vmem:[%s246 + $0x198] sm:$0xff]
      %1264 = vst.msk [vmem:[#allocation2 + $0x8] sm:$0xff] %vm300, %v1216
      %1265 = vst.msk [vmem:[#allocation2 + $0x20] sm:$0xff] %vm300, %v1217
      %1266 = vst.msk [vmem:[#allocation2 + $0x38] sm:$0xff] %vm300, %v1218
      %1267 = vst.msk [vmem:[#allocation2 + $0x50] sm:$0xff] %vm300, %v1219
      %1268 = vst.msk [vmem:[#allocation2 + $0x68] sm:$0xff] %vm300, %v1220
      %1269 = vst.msk [vmem:[#allocation2 + $0x80] sm:$0xff] %vm300, %v1221
      %1270 = vst.msk [vmem:[#allocation2 + $0x98] sm:$0xff] %vm300, %v1222
      %1271 = vst.msk [vmem:[#allocation2 + $0xb0] sm:$0xff] %vm300, %v1223
      %1272 = vst.msk [vmem:[#allocation2 + $0xc8] sm:$0xff] %vm300, %v1224
      %1273 = vst.msk [vmem:[#allocation2 + $0xe0] sm:$0xff] %vm300, %v1225
      %1274 = vst.msk [vmem:[#allocation2 + $0xf8] sm:$0xff] %vm300, %v1226
      %1275 = vst.msk [vmem:[#allocation2 + $0x110] sm:$0xff] %vm300, %v1227
      %1276 = vst.msk [vmem:[#allocation2 + $0x128] sm:$0xff] %vm300, %v1228
      %1277 = vst.msk [vmem:[#allocation2 + $0x140] sm:$0xff] %vm300, %v1229
      %1278 = vst.msk [vmem:[#allocation2 + $0x158] sm:$0xff] %vm300, %v1230
      %1279 = vst.msk [vmem:[#allocation2 + $0x170] sm:$0xff] %vm300, %v1231
      %1280 = vst.msk [vmem:[#allocation2 + $0x188] sm:$0xff] %vm300, %v1232
      %1281 = vst.msk [vmem:[#allocation2 + $0x1a0] sm:$0xff] %vm300, %v1233
      %1282 = vst.msk [vmem:[#allocation2 + $0x1b8] sm:$0xff] %vm300, %v1234
      %1283 = vst.msk [vmem:[#allocation2 + $0x1d0] sm:$0xff] %vm300, %v1235
      %1284 = vst.msk [vmem:[#allocation2 + $0x1e8] sm:$0xff] %vm300, %v1236
      %1285 = vst.msk [vmem:[#allocation2 + $0x200] sm:$0xff] %vm300, %v1237
      %1286 = vst.msk [vmem:[#allocation2 + $0x218] sm:$0xff] %vm300, %v1238
      %1287 = vst.msk [vmem:[#allocation2 + $0x230] sm:$0xff] %vm300, %v1239
      %1288 = vst.msk [vmem:[#allocation2 + $0x248] sm:$0xff] %vm300, %v1240
      %1289 = vst.msk [vmem:[#allocation2 + $0x260] sm:$0xff] %vm300, %v1241
      %1290 = vst.msk [vmem:[#allocation2 + $0x278] sm:$0xff] %vm300, %v1242
      %1291 = vst.msk [vmem:[#allocation2 + $0x290] sm:$0xff] %vm300, %v1243
      %1292 = vst.msk [vmem:[#allocation2 + $0x2a8] sm:$0xff] %vm300, %v1244
      %1293 = vst.msk [vmem:[#allocation2 + $0x2c0] sm:$0xff] %vm300, %v1245
      %1294 = vst.msk [vmem:[#allocation2 + $0x2d8] sm:$0xff] %vm300, %v1246
      %1295 = vst.msk [vmem:[#allocation2 + $0x2f0] sm:$0xff] %vm300, %v1247
      %1296 = vst.msk [vmem:[#allocation2 + $0x308] sm:$0xff] %vm300, %v1248
      %1297 = vst.msk [vmem:[#allocation2 + $0x320] sm:$0xff] %vm300, %v1249
      %1298 = vst.msk [vmem:[#allocation2 + $0x338] sm:$0xff] %vm300, %v1250
      %1299 = vst.msk [vmem:[#allocation2 + $0x350] sm:$0xff] %vm300, %v1251
      %1300 = vst.msk [vmem:[#allocation2 + $0x368] sm:$0xff] %vm300, %v1252
      %1301 = vst.msk [vmem:[#allocation2 + $0x380] sm:$0xff] %vm300, %v1253
      %1302 = vst.msk [vmem:[#allocation2 + $0x398] sm:$0xff] %vm300, %v1254
      %1303 = vst.msk [vmem:[#allocation2 + $0x3b0] sm:$0xff] %vm300, %v1255
      %1304 = vst.msk [vmem:[#allocation2 + $0x3c8] sm:$0xff] %vm300, %v1256
      %1305 = vst.msk [vmem:[#allocation2 + $0x3e0] sm:$0xff] %vm300, %v1257
      %1306 = vst.msk [vmem:[#allocation2 + $0x3f8] sm:$0xff] %vm300, %v1258
      %1307 = vst.msk [vmem:[#allocation2 + $0x410] sm:$0xff] %vm300, %v1259
      %1308 = vst.msk [vmem:[#allocation2 + $0x428] sm:$0xff] %vm300, %v1260
      %1309 = vst.msk [vmem:[#allocation2 + $0x440] sm:$0xff] %vm300, %v1261
      %1310 = vst.msk [vmem:[#allocation2 + $0x458] sm:$0xff] %vm300, %v1262
      %1311 = vst.msk [vmem:[#allocation2 + $0x470] sm:$0xff] %vm300, %v1263
      %v1312 = vld [vmem:[%s246 + $0x21] sm:$0xff]
      %v1313 = vld [vmem:[%s246 + $0x29] sm:$0xff]
      %v1314 = vld [vmem:[%s246 + $0x31] sm:$0xff]
      %v1315 = vld [vmem:[%s246 + $0x39] sm:$0xff]
      %v1316 = vld [vmem:[%s246 + $0x41] sm:$0xff]
      %v1317 = vld [vmem:[%s246 + $0x49] sm:$0xff]
      %v1318 = vld [vmem:[%s246 + $0x51] sm:$0xff]
      %v1319 = vld [vmem:[%s246 + $0x59] sm:$0xff]
      %v1320 = vld [vmem:[%s246 + $0x61] sm:$0xff]
      %v1321 = vld [vmem:[%s246 + $0x69] sm:$0xff]
      %v1322 = vld [vmem:[%s246 + $0x71] sm:$0xff]
      %v1323 = vld [vmem:[%s246 + $0x79] sm:$0xff]
      %v1324 = vld [vmem:[%s246 + $0x81] sm:$0xff]
      %v1325 = vld [vmem:[%s246 + $0x89] sm:$0xff]
      %v1326 = vld [vmem:[%s246 + $0x91] sm:$0xff]
      %v1327 = vld [vmem:[%s246 + $0x99] sm:$0xff]
      %v1328 = vld [vmem:[%s246 + $0xa1] sm:$0xff]
      %v1329 = vld [vmem:[%s246 + $0xa9] sm:$0xff]
      %v1330 = vld [vmem:[%s246 + $0xb1] sm:$0xff]
      %v1331 = vld [vmem:[%s246 + $0xb9] sm:$0xff]
      %v1332 = vld [vmem:[%s246 + $0xc1] sm:$0xff]
      %v1333 = vld [vmem:[%s246 + $0xc9] sm:$0xff]
      %v1334 = vld [vmem:[%s246 + $0xd1] sm:$0xff]
      %v1335 = vld [vmem:[%s246 + $0xd9] sm:$0xff]
      %v1336 = vld [vmem:[%s246 + $0xe1] sm:$0xff]
      %v1337 = vld [vmem:[%s246 + $0xe9] sm:$0xff]
      %v1338 = vld [vmem:[%s246 + $0xf1] sm:$0xff]
      %v1339 = vld [vmem:[%s246 + $0xf9] sm:$0xff]
      %v1340 = vld [vmem:[%s246 + $0x101] sm:$0xff]
      %v1341 = vld [vmem:[%s246 + $0x109] sm:$0xff]
      %v1342 = vld [vmem:[%s246 + $0x111] sm:$0xff]
      %v1343 = vld [vmem:[%s246 + $0x119] sm:$0xff]
      %v1344 = vld [vmem:[%s246 + $0x121] sm:$0xff]
      %v1345 = vld [vmem:[%s246 + $0x129] sm:$0xff]
      %v1346 = vld [vmem:[%s246 + $0x131] sm:$0xff]
      %v1347 = vld [vmem:[%s246 + $0x139] sm:$0xff]
      %v1348 = vld [vmem:[%s246 + $0x141] sm:$0xff]
      %v1349 = vld [vmem:[%s246 + $0x149] sm:$0xff]
      %v1350 = vld [vmem:[%s246 + $0x151] sm:$0xff]
      %v1351 = vld [vmem:[%s246 + $0x159] sm:$0xff]
      %v1352 = vld [vmem:[%s246 + $0x161] sm:$0xff]
      %v1353 = vld [vmem:[%s246 + $0x169] sm:$0xff]
      %v1354 = vld [vmem:[%s246 + $0x171] sm:$0xff]
      %v1355 = vld [vmem:[%s246 + $0x179] sm:$0xff]
      %v1356 = vld [vmem:[%s246 + $0x181] sm:$0xff]
      %v1357 = vld [vmem:[%s246 + $0x189] sm:$0xff]
      %v1358 = vld [vmem:[%s246 + $0x191] sm:$0xff]
      %v1359 = vld [vmem:[%s246 + $0x199] sm:$0xff]
      %1408 = vrot.lane.b32.xlu0 %v1312, 32
      %v1409 = vpop.permute.xlu0 %1408
      %1410 = vrot.lane.b32.xlu0 %v1313, 32
      %v1411 = vpop.permute.xlu0 %1410
      %1412 = vrot.lane.b32.xlu0 %v1314, 32
      %v1413 = vpop.permute.xlu0 %1412
      %1414 = vrot.lane.b32.xlu0 %v1315, 32
      %v1415 = vpop.permute.xlu0 %1414
      %1416 = vrot.lane.b32.xlu0 %v1316, 32
      %v1417 = vpop.permute.xlu0 %1416
      %1418 = vrot.lane.b32.xlu0 %v1317, 32
      %v1419 = vpop.permute.xlu0 %1418
      %1420 = vrot.lane.b32.xlu0 %v1318, 32
      %v1421 = vpop.permute.xlu0 %1420
      %1422 = vrot.lane.b32.xlu0 %v1319, 32
      %v1423 = vpop.permute.xlu0 %1422
      %1424 = vrot.lane.b32.xlu0 %v1320, 32
      %v1425 = vpop.permute.xlu0 %1424
      %1426 = vrot.lane.b32.xlu0 %v1321, 32
      %v1427 = vpop.permute.xlu0 %1426
      %1428 = vrot.lane.b32.xlu0 %v1322, 32
      %v1429 = vpop.permute.xlu0 %1428
      %1430 = vrot.lane.b32.xlu0 %v1323, 32
      %v1431 = vpop.permute.xlu0 %1430
      %1432 = vrot.lane.b32.xlu0 %v1324, 32
      %v1433 = vpop.permute.xlu0 %1432
      %1434 = vrot.lane.b32.xlu0 %v1325, 32
      %v1435 = vpop.permute.xlu0 %1434
      %1436 = vrot.lane.b32.xlu0 %v1326, 32
      %v1437 = vpop.permute.xlu0 %1436
      %1438 = vrot.lane.b32.xlu0 %v1327, 32
      %v1439 = vpop.permute.xlu0 %1438
      %1440 = vrot.lane.b32.xlu0 %v1328, 32
      %v1441 = vpop.permute.xlu0 %1440
      %1442 = vrot.lane.b32.xlu0 %v1329, 32
      %v1443 = vpop.permute.xlu0 %1442
      %1444 = vrot.lane.b32.xlu0 %v1330, 32
      %v1445 = vpop.permute.xlu0 %1444
      %1446 = vrot.lane.b32.xlu0 %v1331, 32
      %v1447 = vpop.permute.xlu0 %1446
      %1448 = vrot.lane.b32.xlu0 %v1332, 32
      %v1449 = vpop.permute.xlu0 %1448
      %1450 = vrot.lane.b32.xlu0 %v1333, 32
      %v1451 = vpop.permute.xlu0 %1450
      %1452 = vrot.lane.b32.xlu0 %v1334, 32
      %v1453 = vpop.permute.xlu0 %1452
      %1454 = vrot.lane.b32.xlu0 %v1335, 32
      %v1455 = vpop.permute.xlu0 %1454
      %1456 = vrot.lane.b32.xlu0 %v1336, 32
      %v1457 = vpop.permute.xlu0 %1456
      %1458 = vrot.lane.b32.xlu0 %v1337, 32
      %v1459 = vpop.permute.xlu0 %1458
      %1460 = vrot.lane.b32.xlu0 %v1338, 32
      %v1461 = vpop.permute.xlu0 %1460
      %1462 = vrot.lane.b32.xlu0 %v1339, 32
      %v1463 = vpop.permute.xlu0 %1462
      %1464 = vrot.lane.b32.xlu0 %v1340, 32
      %v1465 = vpop.permute.xlu0 %1464
      %1466 = vrot.lane.b32.xlu0 %v1341, 32
      %v1467 = vpop.permute.xlu0 %1466
      %1468 = vrot.lane.b32.xlu0 %v1342, 32
      %v1469 = vpop.permute.xlu0 %1468
      %1470 = vrot.lane.b32.xlu0 %v1343, 32
      %v1471 = vpop.permute.xlu0 %1470
      %1472 = vrot.lane.b32.xlu0 %v1344, 32
      %v1473 = vpop.permute.xlu0 %1472
      %1474 = vrot.lane.b32.xlu0 %v1345, 32
      %v1475 = vpop.permute.xlu0 %1474
      %1476 = vrot.lane.b32.xlu0 %v1346, 32
      %v1477 = vpop.permute.xlu0 %1476
      %1478 = vrot.lane.b32.xlu0 %v1347, 32
      %v1479 = vpop.permute.xlu0 %1478
      %1480 = vrot.lane.b32.xlu0 %v1348, 32
      %v1481 = vpop.permute.xlu0 %1480
      %1482 = vrot.lane.b32.xlu0 %v1349, 32
      %v1483 = vpop.permute.xlu0 %1482
      %1484 = vrot.lane.b32.xlu0 %v1350, 32
      %v1485 = vpop.permute.xlu0 %1484
      %1486 = vrot.lane.b32.xlu0 %v1351, 32
      %v1487 = vpop.permute.xlu0 %1486
      %1488 = vrot.lane.b32.xlu0 %v1352, 32
      %v1489 = vpop.permute.xlu0 %1488
      %1490 = vrot.lane.b32.xlu0 %v1353, 32
      %v1491 = vpop.permute.xlu0 %1490
      %1492 = vrot.lane.b32.xlu0 %v1354, 32
      %v1493 = vpop.permute.xlu0 %1492
      %1494 = vrot.lane.b32.xlu0 %v1355, 32
      %v1495 = vpop.permute.xlu0 %1494
      %1496 = vrot.lane.b32.xlu0 %v1356, 32
      %v1497 = vpop.permute.xlu0 %1496
      %1498 = vrot.lane.b32.xlu0 %v1357, 32
      %v1499 = vpop.permute.xlu0 %1498
      %1500 = vrot.lane.b32.xlu0 %v1358, 32
      %v1501 = vpop.permute.xlu0 %1500
      %1502 = vrot.lane.b32.xlu0 %v1359, 32
      %v1503 = vpop.permute.xlu0 %1502
      %1552 = vst.msk [vmem:[#allocation2 + $0x8] sm:$0xff] %vm589, %v1409
      %1553 = vst.msk [vmem:[#allocation2 + $0x20] sm:$0xff] %vm589, %v1411
      %1554 = vst.msk [vmem:[#allocation2 + $0x38] sm:$0xff] %vm589, %v1413
      %1555 = vst.msk [vmem:[#allocation2 + $0x50] sm:$0xff] %vm589, %v1415
      %1556 = vst.msk [vmem:[#allocation2 + $0x68] sm:$0xff] %vm589, %v1417
      %1557 = vst.msk [vmem:[#allocation2 + $0x80] sm:$0xff] %vm589, %v1419
      %1558 = vst.msk [vmem:[#allocation2 + $0x98] sm:$0xff] %vm589, %v1421
      %1559 = vst.msk [vmem:[#allocation2 + $0xb0] sm:$0xff] %vm589, %v1423
      %1560 = vst.msk [vmem:[#allocation2 + $0xc8] sm:$0xff] %vm589, %v1425
      %1561 = vst.msk [vmem:[#allocation2 + $0xe0] sm:$0xff] %vm589, %v1427
      %1562 = vst.msk [vmem:[#allocation2 + $0xf8] sm:$0xff] %vm589, %v1429
      %1563 = vst.msk [vmem:[#allocation2 + $0x110] sm:$0xff] %vm589, %v1431
      %1564 = vst.msk [vmem:[#allocation2 + $0x128] sm:$0xff] %vm589, %v1433
      %1565 = vst.msk [vmem:[#allocation2 + $0x140] sm:$0xff] %vm589, %v1435
      %1566 = vst.msk [vmem:[#allocation2 + $0x158] sm:$0xff] %vm589, %v1437
      %1567 = vst.msk [vmem:[#allocation2 + $0x170] sm:$0xff] %vm589, %v1439
      %1568 = vst.msk [vmem:[#allocation2 + $0x188] sm:$0xff] %vm589, %v1441
      %1569 = vst.msk [vmem:[#allocation2 + $0x1a0] sm:$0xff] %vm589, %v1443
      %1570 = vst.msk [vmem:[#allocation2 + $0x1b8] sm:$0xff] %vm589, %v1445
      %1571 = vst.msk [vmem:[#allocation2 + $0x1d0] sm:$0xff] %vm589, %v1447
      %1572 = vst.msk [vmem:[#allocation2 + $0x1e8] sm:$0xff] %vm589, %v1449
      %1573 = vst.msk [vmem:[#allocation2 + $0x200] sm:$0xff] %vm589, %v1451
      %1574 = vst.msk [vmem:[#allocation2 + $0x218] sm:$0xff] %vm589, %v1453
      %1575 = vst.msk [vmem:[#allocation2 + $0x230] sm:$0xff] %vm589, %v1455
      %1576 = vst.msk [vmem:[#allocation2 + $0x248] sm:$0xff] %vm589, %v1457
      %1577 = vst.msk [vmem:[#allocation2 + $0x260] sm:$0xff] %vm589, %v1459
      %1578 = vst.msk [vmem:[#allocation2 + $0x278] sm:$0xff] %vm589, %v1461
      %1579 = vst.msk [vmem:[#allocation2 + $0x290] sm:$0xff] %vm589, %v1463
      %1580 = vst.msk [vmem:[#allocation2 + $0x2a8] sm:$0xff] %vm589, %v1465
      %1581 = vst.msk [vmem:[#allocation2 + $0x2c0] sm:$0xff] %vm589, %v1467
      %1582 = vst.msk [vmem:[#allocation2 + $0x2d8] sm:$0xff] %vm589, %v1469
      %1583 = vst.msk [vmem:[#allocation2 + $0x2f0] sm:$0xff] %vm589, %v1471
      %1584 = vst.msk [vmem:[#allocation2 + $0x308] sm:$0xff] %vm589, %v1473
      %1585 = vst.msk [vmem:[#allocation2 + $0x320] sm:$0xff] %vm589, %v1475
      %1586 = vst.msk [vmem:[#allocation2 + $0x338] sm:$0xff] %vm589, %v1477
      %1587 = vst.msk [vmem:[#allocation2 + $0x350] sm:$0xff] %vm589, %v1479
      %1588 = vst.msk [vmem:[#allocation2 + $0x368] sm:$0xff] %vm589, %v1481
      %1589 = vst.msk [vmem:[#allocation2 + $0x380] sm:$0xff] %vm589, %v1483
      %1590 = vst.msk [vmem:[#allocation2 + $0x398] sm:$0xff] %vm589, %v1485
      %1591 = vst.msk [vmem:[#allocation2 + $0x3b0] sm:$0xff] %vm589, %v1487
      %1592 = vst.msk [vmem:[#allocation2 + $0x3c8] sm:$0xff] %vm589, %v1489
      %1593 = vst.msk [vmem:[#allocation2 + $0x3e0] sm:$0xff] %vm589, %v1491
      %1594 = vst.msk [vmem:[#allocation2 + $0x3f8] sm:$0xff] %vm589, %v1493
      %1595 = vst.msk [vmem:[#allocation2 + $0x410] sm:$0xff] %vm589, %v1495
      %1596 = vst.msk [vmem:[#allocation2 + $0x428] sm:$0xff] %vm589, %v1497
      %1597 = vst.msk [vmem:[#allocation2 + $0x440] sm:$0xff] %vm589, %v1499
      %1598 = vst.msk [vmem:[#allocation2 + $0x458] sm:$0xff] %vm589, %v1501
      %1599 = vst.msk [vmem:[#allocation2 + $0x470] sm:$0xff] %vm589, %v1503
      %v1600 = vld [vmem:[%s246 + $0x37] sm:$0xff]
      %v1601 = vld [vmem:[%s246 + $0x3f] sm:$0xff]
      %v1602 = vld [vmem:[%s246 + $0x47] sm:$0xff]
      %v1603 = vld [vmem:[%s246 + $0x4f] sm:$0xff]
      %v1604 = vld [vmem:[%s246 + $0x57] sm:$0xff]
      %v1605 = vld [vmem:[%s246 + $0x5f] sm:$0xff]
      %v1606 = vld [vmem:[%s246 + $0x67] sm:$0xff]
      %v1607 = vld [vmem:[%s246 + $0x6f] sm:$0xff]
      %v1608 = vld [vmem:[%s246 + $0x77] sm:$0xff]
      %v1609 = vld [vmem:[%s246 + $0x7f] sm:$0xff]
      %v1610 = vld [vmem:[%s246 + $0x87] sm:$0xff]
      %v1611 = vld [vmem:[%s246 + $0x8f] sm:$0xff]
      %v1612 = vld [vmem:[%s246 + $0x97] sm:$0xff]
      %v1613 = vld [vmem:[%s246 + $0x9f] sm:$0xff]
      %v1614 = vld [vmem:[%s246 + $0xa7] sm:$0xff]
      %v1615 = vld [vmem:[%s246 + $0xaf] sm:$0xff]
      %v1616 = vld [vmem:[%s246 + $0xb7] sm:$0xff]
      %v1617 = vld [vmem:[%s246 + $0xbf] sm:$0xff]
      %v1618 = vld [vmem:[%s246 + $0xc7] sm:$0xff]
      %v1619 = vld [vmem:[%s246 + $0xcf] sm:$0xff]
      %v1620 = vld [vmem:[%s246 + $0xd7] sm:$0xff]
      %v1621 = vld [vmem:[%s246 + $0xdf] sm:$0xff]
      %v1622 = vld [vmem:[%s246 + $0xe7] sm:$0xff]
      %v1623 = vld [vmem:[%s246 + $0xef] sm:$0xff]
      %v1624 = vld [vmem:[%s246 + $0xf7] sm:$0xff]
      %v1625 = vld [vmem:[%s246 + $0xff] sm:$0xff]
      %v1626 = vld [vmem:[%s246 + $0x107] sm:$0xff]
      %v1627 = vld [vmem:[%s246 + $0x10f] sm:$0xff]
      %v1628 = vld [vmem:[%s246 + $0x117] sm:$0xff]
      %v1629 = vld [vmem:[%s246 + $0x11f] sm:$0xff]
      %v1630 = vld [vmem:[%s246 + $0x127] sm:$0xff]
      %v1631 = vld [vmem:[%s246 + $0x12f] sm:$0xff]
      %v1632 = vld [vmem:[%s246 + $0x137] sm:$0xff]
      %v1633 = vld [vmem:[%s246 + $0x13f] sm:$0xff]
      %v1634 = vld [vmem:[%s246 + $0x147] sm:$0xff]
      %v1635 = vld [vmem:[%s246 + $0x14f] sm:$0xff]
      %v1636 = vld [vmem:[%s246 + $0x157] sm:$0xff]
      %v1637 = vld [vmem:[%s246 + $0x15f] sm:$0xff]
      %v1638 = vld [vmem:[%s246 + $0x167] sm:$0xff]
      %v1639 = vld [vmem:[%s246 + $0x16f] sm:$0xff]
      %v1640 = vld [vmem:[%s246 + $0x177] sm:$0xff]
      %v1641 = vld [vmem:[%s246 + $0x17f] sm:$0xff]
      %v1642 = vld [vmem:[%s246 + $0x187] sm:$0xff]
      %v1643 = vld [vmem:[%s246 + $0x18f] sm:$0xff]
      %v1644 = vld [vmem:[%s246 + $0x197] sm:$0xff]
      %v1645 = vld [vmem:[%s246 + $0x19f] sm:$0xff]
      %v1646 = vld [vmem:[%s246 + $0x1a7] sm:$0xff]
      %v1647 = vld [vmem:[%s246 + $0x1af] sm:$0xff]
      %1696 = vrot.lane.b32.xlu0 %v1600, 64
      %v1697 = vpop.permute.xlu0 %1696
      %1698 = vrot.lane.b32.xlu0 %v1601, 64
      %v1699 = vpop.permute.xlu0 %1698
      %1700 = vrot.lane.b32.xlu0 %v1602, 64
      %v1701 = vpop.permute.xlu0 %1700
      %1702 = vrot.lane.b32.xlu0 %v1603, 64
      %v1703 = vpop.permute.xlu0 %1702
      %1704 = vrot.lane.b32.xlu0 %v1604, 64
      %v1705 = vpop.permute.xlu0 %1704
      %1706 = vrot.lane.b32.xlu0 %v1605, 64
      %v1707 = vpop.permute.xlu0 %1706
      %1708 = vrot.lane.b32.xlu0 %v1606, 64
      %v1709 = vpop.permute.xlu0 %1708
      %1710 = vrot.lane.b32.xlu0 %v1607, 64
      %v1711 = vpop.permute.xlu0 %1710
      %1712 = vrot.lane.b32.xlu0 %v1608, 64
      %v1713 = vpop.permute.xlu0 %1712
      %1714 = vrot.lane.b32.xlu0 %v1609, 64
      %v1715 = vpop.permute.xlu0 %1714
      %1716 = vrot.lane.b32.xlu0 %v1610, 64
      %v1717 = vpop.permute.xlu0 %1716
      %1718 = vrot.lane.b32.xlu0 %v1611, 64
      %v1719 = vpop.permute.xlu0 %1718
      %1720 = vrot.lane.b32.xlu0 %v1612, 64
      %v1721 = vpop.permute.xlu0 %1720
      %1722 = vrot.lane.b32.xlu0 %v1613, 64
      %v1723 = vpop.permute.xlu0 %1722
      %1724 = vrot.lane.b32.xlu0 %v1614, 64
      %v1725 = vpop.permute.xlu0 %1724
      %1726 = vrot.lane.b32.xlu0 %v1615, 64
      %v1727 = vpop.permute.xlu0 %1726
      %1728 = vrot.lane.b32.xlu0 %v1616, 64
      %v1729 = vpop.permute.xlu0 %1728
      %1730 = vrot.lane.b32.xlu0 %v1617, 64
      %v1731 = vpop.permute.xlu0 %1730
      %1732 = vrot.lane.b32.xlu0 %v1618, 64
      %v1733 = vpop.permute.xlu0 %1732
      %1734 = vrot.lane.b32.xlu0 %v1619, 64
      %v1735 = vpop.permute.xlu0 %1734
      %1736 = vrot.lane.b32.xlu0 %v1620, 64
      %v1737 = vpop.permute.xlu0 %1736
      %1738 = vrot.lane.b32.xlu0 %v1621, 64
      %v1739 = vpop.permute.xlu0 %1738
      %1740 = vrot.lane.b32.xlu0 %v1622, 64
      %v1741 = vpop.permute.xlu0 %1740
      %1742 = vrot.lane.b32.xlu0 %v1623, 64
      %v1743 = vpop.permute.xlu0 %1742
      %1744 = vrot.lane.b32.xlu0 %v1624, 64
      %v1745 = vpop.permute.xlu0 %1744
      %1746 = vrot.lane.b32.xlu0 %v1625, 64
      %v1747 = vpop.permute.xlu0 %1746
      %1748 = vrot.lane.b32.xlu0 %v1626, 64
      %v1749 = vpop.permute.xlu0 %1748
      %1750 = vrot.lane.b32.xlu0 %v1627, 64
      %v1751 = vpop.permute.xlu0 %1750
      %1752 = vrot.lane.b32.xlu0 %v1628, 64
      %v1753 = vpop.permute.xlu0 %1752
      %1754 = vrot.lane.b32.xlu0 %v1629, 64
      %v1755 = vpop.permute.xlu0 %1754
      %1756 = vrot.lane.b32.xlu0 %v1630, 64
      %v1757 = vpop.permute.xlu0 %1756
      %1758 = vrot.lane.b32.xlu0 %v1631, 64
      %v1759 = vpop.permute.xlu0 %1758
      %1760 = vrot.lane.b32.xlu0 %v1632, 64
      %v1761 = vpop.permute.xlu0 %1760
      %1762 = vrot.lane.b32.xlu0 %v1633, 64
      %v1763 = vpop.permute.xlu0 %1762
      %1764 = vrot.lane.b32.xlu0 %v1634, 64
      %v1765 = vpop.permute.xlu0 %1764
      %1766 = vrot.lane.b32.xlu0 %v1635, 64
      %v1767 = vpop.permute.xlu0 %1766
      %1768 = vrot.lane.b32.xlu0 %v1636, 64
      %v1769 = vpop.permute.xlu0 %1768
      %1770 = vrot.lane.b32.xlu0 %v1637, 64
      %v1771 = vpop.permute.xlu0 %1770
      %1772 = vrot.lane.b32.xlu0 %v1638, 64
      %v1773 = vpop.permute.xlu0 %1772
      %1774 = vrot.lane.b32.xlu0 %v1639, 64
      %v1775 = vpop.permute.xlu0 %1774
      %1776 = vrot.lane.b32.xlu0 %v1640, 64
      %v1777 = vpop.permute.xlu0 %1776
      %1778 = vrot.lane.b32.xlu0 %v1641, 64
      %v1779 = vpop.permute.xlu0 %1778
      %1780 = vrot.lane.b32.xlu0 %v1642, 64
      %v1781 = vpop.permute.xlu0 %1780
      %1782 = vrot.lane.b32.xlu0 %v1643, 64
      %v1783 = vpop.permute.xlu0 %1782
      %1784 = vrot.lane.b32.xlu0 %v1644, 64
      %v1785 = vpop.permute.xlu0 %1784
      %1786 = vrot.lane.b32.xlu0 %v1645, 64
      %v1787 = vpop.permute.xlu0 %1786
      %1788 = vrot.lane.b32.xlu0 %v1646, 64
      %v1789 = vpop.permute.xlu0 %1788
      %1790 = vrot.lane.b32.xlu0 %v1647, 64
      %v1791 = vpop.permute.xlu0 %1790
      %1840 = vst.msk [vmem:[#allocation2 + $0x8] sm:$0xff] %vm878, %v1697
      %1841 = vst.msk [vmem:[#allocation2 + $0x20] sm:$0xff] %vm878, %v1699
      %1842 = vst.msk [vmem:[#allocation2 + $0x38] sm:$0xff] %vm878, %v1701
      %1843 = vst.msk [vmem:[#allocation2 + $0x50] sm:$0xff] %vm878, %v1703
      %1844 = vst.msk [vmem:[#allocation2 + $0x68] sm:$0xff] %vm878, %v1705
      %1845 = vst.msk [vmem:[#allocation2 + $0x80] sm:$0xff] %vm878, %v1707
      %1846 = vst.msk [vmem:[#allocation2 + $0x98] sm:$0xff] %vm878, %v1709
      %1847 = vst.msk [vmem:[#allocation2 + $0xb0] sm:$0xff] %vm878, %v1711
      %1848 = vst.msk [vmem:[#allocation2 + $0xc8] sm:$0xff] %vm878, %v1713
      %1849 = vst.msk [vmem:[#allocation2 + $0xe0] sm:$0xff] %vm878, %v1715
      %1850 = vst.msk [vmem:[#allocation2 + $0xf8] sm:$0xff] %vm878, %v1717
      %1851 = vst.msk [vmem:[#allocation2 + $0x110] sm:$0xff] %vm878, %v1719
      %1852 = vst.msk [vmem:[#allocation2 + $0x128] sm:$0xff] %vm878, %v1721
      %1853 = vst.msk [vmem:[#allocation2 + $0x140] sm:$0xff] %vm878, %v1723
      %1854 = vst.msk [vmem:[#allocation2 + $0x158] sm:$0xff] %vm878, %v1725
      %1855 = vst.msk [vmem:[#allocation2 + $0x170] sm:$0xff] %vm878, %v1727
      %1856 = vst.msk [vmem:[#allocation2 + $0x188] sm:$0xff] %vm878, %v1729
      %1857 = vst.msk [vmem:[#allocation2 + $0x1a0] sm:$0xff] %vm878, %v1731
      %1858 = vst.msk [vmem:[#allocation2 + $0x1b8] sm:$0xff] %vm878, %v1733
      %1859 = vst.msk [vmem:[#allocation2 + $0x1d0] sm:$0xff] %vm878, %v1735
      %1860 = vst.msk [vmem:[#allocation2 + $0x1e8] sm:$0xff] %vm878, %v1737
      %1861 = vst.msk [vmem:[#allocation2 + $0x200] sm:$0xff] %vm878, %v1739
      %1862 = vst.msk [vmem:[#allocation2 + $0x218] sm:$0xff] %vm878, %v1741
      %1863 = vst.msk [vmem:[#allocation2 + $0x230] sm:$0xff] %vm878, %v1743
      %1864 = vst.msk [vmem:[#allocation2 + $0x248] sm:$0xff] %vm878, %v1745
      %1865 = vst.msk [vmem:[#allocation2 + $0x260] sm:$0xff] %vm878, %v1747
      %1866 = vst.msk [vmem:[#allocation2 + $0x278] sm:$0xff] %vm878, %v1749
      %1867 = vst.msk [vmem:[#allocation2 + $0x290] sm:$0xff] %vm878, %v1751
      %1868 = vst.msk [vmem:[#allocation2 + $0x2a8] sm:$0xff] %vm878, %v1753
      %1869 = vst.msk [vmem:[#allocation2 + $0x2c0] sm:$0xff] %vm878, %v1755
      %1870 = vst.msk [vmem:[#allocation2 + $0x2d8] sm:$0xff] %vm878, %v1757
      %1871 = vst.msk [vmem:[#allocation2 + $0x2f0] sm:$0xff] %vm878, %v1759
      %1872 = vst.msk [vmem:[#allocation2 + $0x308] sm:$0xff] %vm878, %v1761
      %1873 = vst.msk [vmem:[#allocation2 + $0x320] sm:$0xff] %vm878, %v1763
      %1874 = vst.msk [vmem:[#allocation2 + $0x338] sm:$0xff] %vm878, %v1765
      %1875 = vst.msk [vmem:[#allocation2 + $0x350] sm:$0xff] %vm878, %v1767
      %1876 = vst.msk [vmem:[#allocation2 + $0x368] sm:$0xff] %vm878, %v1769
      %1877 = vst.msk [vmem:[#allocation2 + $0x380] sm:$0xff] %vm878, %v1771
      %1878 = vst.msk [vmem:[#allocation2 + $0x398] sm:$0xff] %vm878, %v1773
      %1879 = vst.msk [vmem:[#allocation2 + $0x3b0] sm:$0xff] %vm878, %v1775
      %1880 = vst.msk [vmem:[#allocation2 + $0x3c8] sm:$0xff] %vm878, %v1777
      %1881 = vst.msk [vmem:[#allocation2 + $0x3e0] sm:$0xff] %vm878, %v1779
      %1882 = vst.msk [vmem:[#allocation2 + $0x3f8] sm:$0xff] %vm878, %v1781
      %1883 = vst.msk [vmem:[#allocation2 + $0x410] sm:$0xff] %vm878, %v1783
      %1884 = vst.msk [vmem:[#allocation2 + $0x428] sm:$0xff] %vm878, %v1785
      %1885 = vst.msk [vmem:[#allocation2 + $0x440] sm:$0xff] %vm878, %v1787
      %1886 = vst.msk [vmem:[#allocation2 + $0x458] sm:$0xff] %vm878, %v1789
      %1887 = vst.msk [vmem:[#allocation2 + $0x470] sm:$0xff] %vm878, %v1791
      %v1888 = vld [vmem:[%s246 + $0x38] sm:$0xff]
      %v1889 = vld [vmem:[%s246 + $0x40] sm:$0xff]
      %v1890 = vld [vmem:[%s246 + $0x48] sm:$0xff]
      %v1891 = vld [vmem:[%s246 + $0x50] sm:$0xff]
      %v1892 = vld [vmem:[%s246 + $0x58] sm:$0xff]
      %v1893 = vld [vmem:[%s246 + $0x60] sm:$0xff]
      %v1894 = vld [vmem:[%s246 + $0x68] sm:$0xff]
      %v1895 = vld [vmem:[%s246 + $0x70] sm:$0xff]
      %v1896 = vld [vmem:[%s246 + $0x78] sm:$0xff]
      %v1897 = vld [vmem:[%s246 + $0x80] sm:$0xff]
      %v1898 = vld [vmem:[%s246 + $0x88] sm:$0xff]
      %v1899 = vld [vmem:[%s246 + $0x90] sm:$0xff]
      %v1900 = vld [vmem:[%s246 + $0x98] sm:$0xff]
      %v1901 = vld [vmem:[%s246 + $0xa0] sm:$0xff]
      %v1902 = vld [vmem:[%s246 + $0xa8] sm:$0xff]
      %v1903 = vld [vmem:[%s246 + $0xb0] sm:$0xff]
      %v1904 = vld [vmem:[%s246 + $0xb8] sm:$0xff]
      %v1905 = vld [vmem:[%s246 + $0xc0] sm:$0xff]
      %v1906 = vld [vmem:[%s246 + $0xc8] sm:$0xff]
      %v1907 = vld [vmem:[%s246 + $0xd0] sm:$0xff]
      %v1908 = vld [vmem:[%s246 + $0xd8] sm:$0xff]
      %v1909 = vld [vmem:[%s246 + $0xe0] sm:$0xff]
      %v1910 = vld [vmem:[%s246 + $0xe8] sm:$0xff]
      %v1911 = vld [vmem:[%s246 + $0xf0] sm:$0xff]
      %v1912 = vld [vmem:[%s246 + $0xf8] sm:$0xff]
      %v1913 = vld [vmem:[%s246 + $0x100] sm:$0xff]
      %v1914 = vld [vmem:[%s246 + $0x108] sm:$0xff]
      %v1915 = vld [vmem:[%s246 + $0x110] sm:$0xff]
      %v1916 = vld [vmem:[%s246 + $0x118] sm:$0xff]
      %v1917 = vld [vmem:[%s246 + $0x120] sm:$0xff]
      %v1918 = vld [vmem:[%s246 + $0x128] sm:$0xff]
      %v1919 = vld [vmem:[%s246 + $0x130] sm:$0xff]
      %v1920 = vld [vmem:[%s246 + $0x138] sm:$0xff]
      %v1921 = vld [vmem:[%s246 + $0x140] sm:$0xff]
      %v1922 = vld [vmem:[%s246 + $0x148] sm:$0xff]
      %v1923 = vld [vmem:[%s246 + $0x150] sm:$0xff]
      %v1924 = vld [vmem:[%s246 + $0x158] sm:$0xff]
      %v1925 = vld [vmem:[%s246 + $0x160] sm:$0xff]
      %v1926 = vld [vmem:[%s246 + $0x168] sm:$0xff]
      %v1927 = vld [vmem:[%s246 + $0x170] sm:$0xff]
      %v1928 = vld [vmem:[%s246 + $0x178] sm:$0xff]
      %v1929 = vld [vmem:[%s246 + $0x180] sm:$0xff]
      %v1930 = vld [vmem:[%s246 + $0x188] sm:$0xff]
      %v1931 = vld [vmem:[%s246 + $0x190] sm:$0xff]
      %v1932 = vld [vmem:[%s246 + $0x198] sm:$0xff]
      %v1933 = vld [vmem:[%s246 + $0x1a0] sm:$0xff]
      %v1934 = vld [vmem:[%s246 + $0x1a8] sm:$0xff]
      %v1935 = vld [vmem:[%s246 + $0x1b0] sm:$0xff]
      %1984 = vrot.lane.b32.xlu0 %v1888, 96
      %v1985 = vpop.permute.xlu0 %1984
      %1986 = vrot.lane.b32.xlu0 %v1889, 96
      %v1987 = vpop.permute.xlu0 %1986
      %1988 = vrot.lane.b32.xlu0 %v1890, 96
      %v1989 = vpop.permute.xlu0 %1988
      %1990 = vrot.lane.b32.xlu0 %v1891, 96
      %v1991 = vpop.permute.xlu0 %1990
      %1992 = vrot.lane.b32.xlu0 %v1892, 96
      %v1993 = vpop.permute.xlu0 %1992
      %1994 = vrot.lane.b32.xlu0 %v1893, 96
      %v1995 = vpop.permute.xlu0 %1994
      %1996 = vrot.lane.b32.xlu0 %v1894, 96
      %v1997 = vpop.permute.xlu0 %1996
      %1998 = vrot.lane.b32.xlu0 %v1895, 96
      %v1999 = vpop.permute.xlu0 %1998
      %2000 = vrot.lane.b32.xlu0 %v1896, 96
      %v2001 = vpop.permute.xlu0 %2000
      %2002 = vrot.lane.b32.xlu0 %v1897, 96
      %v2003 = vpop.permute.xlu0 %2002
      %2004 = vrot.lane.b32.xlu0 %v1898, 96
      %v2005 = vpop.permute.xlu0 %2004
      %2006 = vrot.lane.b32.xlu0 %v1899, 96
      %v2007 = vpop.permute.xlu0 %2006
      %2008 = vrot.lane.b32.xlu0 %v1900, 96
      %v2009 = vpop.permute.xlu0 %2008
      %2010 = vrot.lane.b32.xlu0 %v1901, 96
      %v2011 = vpop.permute.xlu0 %2010
      %2012 = vrot.lane.b32.xlu0 %v1902, 96
      %v2013 = vpop.permute.xlu0 %2012
      %2014 = vrot.lane.b32.xlu0 %v1903, 96
      %v2015 = vpop.permute.xlu0 %2014
      %2016 = vrot.lane.b32.xlu0 %v1904, 96
      %v2017 = vpop.permute.xlu0 %2016
      %2018 = vrot.lane.b32.xlu0 %v1905, 96
      %v2019 = vpop.permute.xlu0 %2018
      %2020 = vrot.lane.b32.xlu0 %v1906, 96
      %v2021 = vpop.permute.xlu0 %2020
      %2022 = vrot.lane.b32.xlu0 %v1907, 96
      %v2023 = vpop.permute.xlu0 %2022
      %2024 = vrot.lane.b32.xlu0 %v1908, 96
      %v2025 = vpop.permute.xlu0 %2024
      %2026 = vrot.lane.b32.xlu0 %v1909, 96
      %v2027 = vpop.permute.xlu0 %2026
      %2028 = vrot.lane.b32.xlu0 %v1910, 96
      %v2029 = vpop.permute.xlu0 %2028
      %2030 = vrot.lane.b32.xlu0 %v1911, 96
      %v2031 = vpop.permute.xlu0 %2030
      %2032 = vrot.lane.b32.xlu0 %v1912, 96
      %v2033 = vpop.permute.xlu0 %2032
      %2034 = vrot.lane.b32.xlu0 %v1913, 96
      %v2035 = vpop.permute.xlu0 %2034
      %2036 = vrot.lane.b32.xlu0 %v1914, 96
      %v2037 = vpop.permute.xlu0 %2036
      %2038 = vrot.lane.b32.xlu0 %v1915, 96
      %v2039 = vpop.permute.xlu0 %2038
      %2040 = vrot.lane.b32.xlu0 %v1916, 96
      %v2041 = vpop.permute.xlu0 %2040
      %2042 = vrot.lane.b32.xlu0 %v1917, 96
      %v2043 = vpop.permute.xlu0 %2042
      %2044 = vrot.lane.b32.xlu0 %v1918, 96
      %v2045 = vpop.permute.xlu0 %2044
      %2046 = vrot.lane.b32.xlu0 %v1919, 96
      %v2047 = vpop.permute.xlu0 %2046
      %2048 = vrot.lane.b32.xlu0 %v1920, 96
      %v2049 = vpop.permute.xlu0 %2048
      %2050 = vrot.lane.b32.xlu0 %v1921, 96
      %v2051 = vpop.permute.xlu0 %2050
      %2052 = vrot.lane.b32.xlu0 %v1922, 96
      %v2053 = vpop.permute.xlu0 %2052
      %2054 = vrot.lane.b32.xlu0 %v1923, 96
      %v2055 = vpop.permute.xlu0 %2054
      %2056 = vrot.lane.b32.xlu0 %v1924, 96
      %v2057 = vpop.permute.xlu0 %2056
      %2058 = vrot.lane.b32.xlu0 %v1925, 96
      %v2059 = vpop.permute.xlu0 %2058
      %2060 = vrot.lane.b32.xlu0 %v1926, 96
      %v2061 = vpop.permute.xlu0 %2060
      %2062 = vrot.lane.b32.xlu0 %v1927, 96
      %v2063 = vpop.permute.xlu0 %2062
      %2064 = vrot.lane.b32.xlu0 %v1928, 96
      %v2065 = vpop.permute.xlu0 %2064
      %2066 = vrot.lane.b32.xlu0 %v1929, 96
      %v2067 = vpop.permute.xlu0 %2066
      %2068 = vrot.lane.b32.xlu0 %v1930, 96
      %v2069 = vpop.permute.xlu0 %2068
      %2070 = vrot.lane.b32.xlu0 %v1931, 96
      %v2071 = vpop.permute.xlu0 %2070
      %2072 = vrot.lane.b32.xlu0 %v1932, 96
      %v2073 = vpop.permute.xlu0 %2072
      %2074 = vrot.lane.b32.xlu0 %v1933, 96
      %v2075 = vpop.permute.xlu0 %2074
      %2076 = vrot.lane.b32.xlu0 %v1934, 96
      %v2077 = vpop.permute.xlu0 %2076
      %2078 = vrot.lane.b32.xlu0 %v1935, 96
      %v2079 = vpop.permute.xlu0 %2078
      %2128 = vst.msk [vmem:[#allocation2 + $0x8] sm:$0xff] %vm1167, %v1985
      %2129 = vst.msk [vmem:[#allocation2 + $0x20] sm:$0xff] %vm1167, %v1987
      %2130 = vst.msk [vmem:[#allocation2 + $0x38] sm:$0xff] %vm1167, %v1989
      %2131 = vst.msk [vmem:[#allocation2 + $0x50] sm:$0xff] %vm1167, %v1991
      %2132 = vst.msk [vmem:[#allocation2 + $0x68] sm:$0xff] %vm1167, %v1993
      %2133 = vst.msk [vmem:[#allocation2 + $0x80] sm:$0xff] %vm1167, %v1995
      %2134 = vst.msk [vmem:[#allocation2 + $0x98] sm:$0xff] %vm1167, %v1997
      %2135 = vst.msk [vmem:[#allocation2 + $0xb0] sm:$0xff] %vm1167, %v1999
      %2136 = vst.msk [vmem:[#allocation2 + $0xc8] sm:$0xff] %vm1167, %v2001
      %2137 = vst.msk [vmem:[#allocation2 + $0xe0] sm:$0xff] %vm1167, %v2003
      %2138 = vst.msk [vmem:[#allocation2 + $0xf8] sm:$0xff] %vm1167, %v2005
      %2139 = vst.msk [vmem:[#allocation2 + $0x110] sm:$0xff] %vm1167, %v2007
      %2140 = vst.msk [vmem:[#allocation2 + $0x128] sm:$0xff] %vm1167, %v2009
      %2141 = vst.msk [vmem:[#allocation2 + $0x140] sm:$0xff] %vm1167, %v2011
      %2142 = vst.msk [vmem:[#allocation2 + $0x158] sm:$0xff] %vm1167, %v2013
      %2143 = vst.msk [vmem:[#allocation2 + $0x170] sm:$0xff] %vm1167, %v2015
      %2144 = vst.msk [vmem:[#allocation2 + $0x188] sm:$0xff] %vm1167, %v2017
      %2145 = vst.msk [vmem:[#allocation2 + $0x1a0] sm:$0xff] %vm1167, %v2019
      %2146 = vst.msk [vmem:[#allocation2 + $0x1b8] sm:$0xff] %vm1167, %v2021
      %2147 = vst.msk [vmem:[#allocation2 + $0x1d0] sm:$0xff] %vm1167, %v2023
      %2148 = vst.msk [vmem:[#allocation2 + $0x1e8] sm:$0xff] %vm1167, %v2025
      %2149 = vst.msk [vmem:[#allocation2 + $0x200] sm:$0xff] %vm1167, %v2027
      %2150 = vst.msk [vmem:[#allocation2 + $0x218] sm:$0xff] %vm1167, %v2029
      %2151 = vst.msk [vmem:[#allocation2 + $0x230] sm:$0xff] %vm1167, %v2031
      %2152 = vst.msk [vmem:[#allocation2 + $0x248] sm:$0xff] %vm1167, %v2033
      %2153 = vst.msk [vmem:[#allocation2 + $0x260] sm:$0xff] %vm1167, %v2035
      %2154 = vst.msk [vmem:[#allocation2 + $0x278] sm:$0xff] %vm1167, %v2037
      %2155 = vst.msk [vmem:[#allocation2 + $0x290] sm:$0xff] %vm1167, %v2039
      %2156 = vst.msk [vmem:[#allocation2 + $0x2a8] sm:$0xff] %vm1167, %v2041
      %2157 = vst.msk [vmem:[#allocation2 + $0x2c0] sm:$0xff] %vm1167, %v2043
      %2158 = vst.msk [vmem:[#allocation2 + $0x2d8] sm:$0xff] %vm1167, %v2045
      %2159 = vst.msk [vmem:[#allocation2 + $0x2f0] sm:$0xff] %vm1167, %v2047
      %2160 = vst.msk [vmem:[#allocation2 + $0x308] sm:$0xff] %vm1167, %v2049
      %2161 = vst.msk [vmem:[#allocation2 + $0x320] sm:$0xff] %vm1167, %v2051
      %2162 = vst.msk [vmem:[#allocation2 + $0x338] sm:$0xff] %vm1167, %v2053
      %2163 = vst.msk [vmem:[#allocation2 + $0x350] sm:$0xff] %vm1167, %v2055
      %2164 = vst.msk [vmem:[#allocation2 + $0x368] sm:$0xff] %vm1167, %v2057
      %2165 = vst.msk [vmem:[#allocation2 + $0x380] sm:$0xff] %vm1167, %v2059
      %2166 = vst.msk [vmem:[#allocation2 + $0x398] sm:$0xff] %vm1167, %v2061
      %2167 = vst.msk [vmem:[#allocation2 + $0x3b0] sm:$0xff] %vm1167, %v2063
      %2168 = vst.msk [vmem:[#allocation2 + $0x3c8] sm:$0xff] %vm1167, %v2065
      %2169 = vst.msk [vmem:[#allocation2 + $0x3e0] sm:$0xff] %vm1167, %v2067
      %2170 = vst.msk [vmem:[#allocation2 + $0x3f8] sm:$0xff] %vm1167, %v2069
      %2171 = vst.msk [vmem:[#allocation2 + $0x410] sm:$0xff] %vm1167, %v2071
      %2172 = vst.msk [vmem:[#allocation2 + $0x428] sm:$0xff] %vm1167, %v2073
      %2173 = vst.msk [vmem:[#allocation2 + $0x440] sm:$0xff] %vm1167, %v2075
      %2174 = vst.msk [vmem:[#allocation2 + $0x458] sm:$0xff] %vm1167, %v2077
      %2175 = vst.msk [vmem:[#allocation2 + $0x470] sm:$0xff] %vm1167, %v2079
      %v2176 = vld [vmem:[%s246 + $0x39] sm:$0xff]
      %v2177 = vld [vmem:[%s246 + $0x41] sm:$0xff]
      %v2178 = vld [vmem:[%s246 + $0x49] sm:$0xff]
      %v2179 = vld [vmem:[%s246 + $0x51] sm:$0xff]
      %v2180 = vld [vmem:[%s246 + $0x59] sm:$0xff]
      %v2181 = vld [vmem:[%s246 + $0x61] sm:$0xff]
      %v2182 = vld [vmem:[%s246 + $0x69] sm:$0xff]
      %v2183 = vld [vmem:[%s246 + $0x71] sm:$0xff]
      %v2184 = vld [vmem:[%s246 + $0x79] sm:$0xff]
      %v2185 = vld [vmem:[%s246 + $0x81] sm:$0xff]
      %v2186 = vld [vmem:[%s246 + $0x89] sm:$0xff]
      %v2187 = vld [vmem:[%s246 + $0x91] sm:$0xff]
      %v2188 = vld [vmem:[%s246 + $0x99] sm:$0xff]
      %v2189 = vld [vmem:[%s246 + $0xa1] sm:$0xff]
      %v2190 = vld [vmem:[%s246 + $0xa9] sm:$0xff]
      %v2191 = vld [vmem:[%s246 + $0xb1] sm:$0xff]
      %v2192 = vld [vmem:[%s246 + $0xb9] sm:$0xff]
      %v2193 = vld [vmem:[%s246 + $0xc1] sm:$0xff]
      %v2194 = vld [vmem:[%s246 + $0xc9] sm:$0xff]
      %v2195 = vld [vmem:[%s246 + $0xd1] sm:$0xff]
      %v2196 = vld [vmem:[%s246 + $0xd9] sm:$0xff]
      %v2197 = vld [vmem:[%s246 + $0xe1] sm:$0xff]
      %v2198 = vld [vmem:[%s246 + $0xe9] sm:$0xff]
      %v2199 = vld [vmem:[%s246 + $0xf1] sm:$0xff]
      %v2200 = vld [vmem:[%s246 + $0xf9] sm:$0xff]
      %v2201 = vld [vmem:[%s246 + $0x101] sm:$0xff]
      %v2202 = vld [vmem:[%s246 + $0x109] sm:$0xff]
      %v2203 = vld [vmem:[%s246 + $0x111] sm:$0xff]
      %v2204 = vld [vmem:[%s246 + $0x119] sm:$0xff]
      %v2205 = vld [vmem:[%s246 + $0x121] sm:$0xff]
      %v2206 = vld [vmem:[%s246 + $0x129] sm:$0xff]
      %v2207 = vld [vmem:[%s246 + $0x131] sm:$0xff]
      %v2208 = vld [vmem:[%s246 + $0x139] sm:$0xff]
      %v2209 = vld [vmem:[%s246 + $0x141] sm:$0xff]
      %v2210 = vld [vmem:[%s246 + $0x149] sm:$0xff]
      %v2211 = vld [vmem:[%s246 + $0x151] sm:$0xff]
      %v2212 = vld [vmem:[%s246 + $0x159] sm:$0xff]
      %v2213 = vld [vmem:[%s246 + $0x161] sm:$0xff]
      %v2214 = vld [vmem:[%s246 + $0x169] sm:$0xff]
      %v2215 = vld [vmem:[%s246 + $0x171] sm:$0xff]
      %v2216 = vld [vmem:[%s246 + $0x179] sm:$0xff]
      %v2217 = vld [vmem:[%s246 + $0x181] sm:$0xff]
      %v2218 = vld [vmem:[%s246 + $0x189] sm:$0xff]
      %v2219 = vld [vmem:[%s246 + $0x191] sm:$0xff]
      %v2220 = vld [vmem:[%s246 + $0x199] sm:$0xff]
      %v2221 = vld [vmem:[%s246 + $0x1a1] sm:$0xff]
      %v2222 = vld [vmem:[%s246 + $0x1a9] sm:$0xff]
      %v2223 = vld [vmem:[%s246 + $0x1b1] sm:$0xff]
      %2224 = vst.msk [vmem:[#allocation2 + $0x10] sm:$0xff] %vm300, %v2176
      %2225 = vst.msk [vmem:[#allocation2 + $0x28] sm:$0xff] %vm300, %v2177
      %2226 = vst.msk [vmem:[#allocation2 + $0x40] sm:$0xff] %vm300, %v2178
      %2227 = vst.msk [vmem:[#allocation2 + $0x58] sm:$0xff] %vm300, %v2179
      %2228 = vst.msk [vmem:[#allocation2 + $0x70] sm:$0xff] %vm300, %v2180
      %2229 = vst.msk [vmem:[#allocation2 + $0x88] sm:$0xff] %vm300, %v2181
      %2230 = vst.msk [vmem:[#allocation2 + $0xa0] sm:$0xff] %vm300, %v2182
      %2231 = vst.msk [vmem:[#allocation2 + $0xb8] sm:$0xff] %vm300, %v2183
      %2232 = vst.msk [vmem:[#allocation2 + $0xd0] sm:$0xff] %vm300, %v2184
      %2233 = vst.msk [vmem:[#allocation2 + $0xe8] sm:$0xff] %vm300, %v2185
      %2234 = vst.msk [vmem:[#allocation2 + $0x100] sm:$0xff] %vm300, %v2186
      %2235 = vst.msk [vmem:[#allocation2 + $0x118] sm:$0xff] %vm300, %v2187
      %2236 = vst.msk [vmem:[#allocation2 + $0x130] sm:$0xff] %vm300, %v2188
      %2237 = vst.msk [vmem:[#allocation2 + $0x148] sm:$0xff] %vm300, %v2189
      %2238 = vst.msk [vmem:[#allocation2 + $0x160] sm:$0xff] %vm300, %v2190
      %2239 = vst.msk [vmem:[#allocation2 + $0x178] sm:$0xff] %vm300, %v2191
      %2240 = vst.msk [vmem:[#allocation2 + $0x190] sm:$0xff] %vm300, %v2192
      %2241 = vst.msk [vmem:[#allocation2 + $0x1a8] sm:$0xff] %vm300, %v2193
      %2242 = vst.msk [vmem:[#allocation2 + $0x1c0] sm:$0xff] %vm300, %v2194
      %2243 = vst.msk [vmem:[#allocation2 + $0x1d8] sm:$0xff] %vm300, %v2195
      %2244 = vst.msk [vmem:[#allocation2 + $0x1f0] sm:$0xff] %vm300, %v2196
      %2245 = vst.msk [vmem:[#allocation2 + $0x208] sm:$0xff] %vm300, %v2197
      %2246 = vst.msk [vmem:[#allocation2 + $0x220] sm:$0xff] %vm300, %v2198
      %2247 = vst.msk [vmem:[#allocation2 + $0x238] sm:$0xff] %vm300, %v2199
      %2248 = vst.msk [vmem:[#allocation2 + $0x250] sm:$0xff] %vm300, %v2200
      %2249 = vst.msk [vmem:[#allocation2 + $0x268] sm:$0xff] %vm300, %v2201
      %2250 = vst.msk [vmem:[#allocation2 + $0x280] sm:$0xff] %vm300, %v2202
      %2251 = vst.msk [vmem:[#allocation2 + $0x298] sm:$0xff] %vm300, %v2203
      %2252 = vst.msk [vmem:[#allocation2 + $0x2b0] sm:$0xff] %vm300, %v2204
      %2253 = vst.msk [vmem:[#allocation2 + $0x2c8] sm:$0xff] %vm300, %v2205
      %2254 = vst.msk [vmem:[#allocation2 + $0x2e0] sm:$0xff] %vm300, %v2206
      %2255 = vst.msk [vmem:[#allocation2 + $0x2f8] sm:$0xff] %vm300, %v2207
      %2256 = vst.msk [vmem:[#allocation2 + $0x310] sm:$0xff] %vm300, %v2208
      %2257 = vst.msk [vmem:[#allocation2 + $0x328] sm:$0xff] %vm300, %v2209
      %2258 = vst.msk [vmem:[#allocation2 + $0x340] sm:$0xff] %vm300, %v2210
      %2259 = vst.msk [vmem:[#allocation2 + $0x358] sm:$0xff] %vm300, %v2211
      %2260 = vst.msk [vmem:[#allocation2 + $0x370] sm:$0xff] %vm300, %v2212
      %2261 = vst.msk [vmem:[#allocation2 + $0x388] sm:$0xff] %vm300, %v2213
      %2262 = vst.msk [vmem:[#allocation2 + $0x3a0] sm:$0xff] %vm300, %v2214
      %2263 = vst.msk [vmem:[#allocation2 + $0x3b8] sm:$0xff] %vm300, %v2215
      %2264 = vst.msk [vmem:[#allocation2 + $0x3d0] sm:$0xff] %vm300, %v2216
      %2265 = vst.msk [vmem:[#allocation2 + $0x3e8] sm:$0xff] %vm300, %v2217
      %2266 = vst.msk [vmem:[#allocation2 + $0x400] sm:$0xff] %vm300, %v2218
      %2267 = vst.msk [vmem:[#allocation2 + $0x418] sm:$0xff] %vm300, %v2219
      %2268 = vst.msk [vmem:[#allocation2 + $0x430] sm:$0xff] %vm300, %v2220
      %2269 = vst.msk [vmem:[#allocation2 + $0x448] sm:$0xff] %vm300, %v2221
      %2270 = vst.msk [vmem:[#allocation2 + $0x460] sm:$0xff] %vm300, %v2222
      %2271 = vst.msk [vmem:[#allocation2 + $0x478] sm:$0xff] %vm300, %v2223
      %v2272 = vld [vmem:[#allocation2] sm:$0xff]
      %v2273 = vld [vmem:[#allocation2 + $0x8] sm:$0xff]
      %v2274 = vld [vmem:[#allocation2 + $0x10] sm:$0xff]
      %v2275 = vld [vmem:[#allocation2 + $0x18] sm:$0xff]
      %v2276 = vld [vmem:[#allocation2 + $0x20] sm:$0xff]
      %v2277 = vld [vmem:[#allocation2 + $0x28] sm:$0xff]
      %v2278 = vld [vmem:[#allocation2 + $0x30] sm:$0xff]
      %v2279 = vld [vmem:[#allocation2 + $0x38] sm:$0xff]
      %v2280 = vld [vmem:[#allocation2 + $0x40] sm:$0xff]
      %v2281 = vld [vmem:[#allocation2 + $0x48] sm:$0xff]
      %v2282 = vld [vmem:[#allocation2 + $0x50] sm:$0xff]
      %v2283 = vld [vmem:[#allocation2 + $0x58] sm:$0xff]
      %v2284 = vld [vmem:[#allocation2 + $0x60] sm:$0xff]
      %v2285 = vld [vmem:[#allocation2 + $0x68] sm:$0xff]
      %v2286 = vld [vmem:[#allocation2 + $0x70] sm:$0xff]
      %v2287 = vld [vmem:[#allocation2 + $0x78] sm:$0xff]
      %v2288 = vld [vmem:[#allocation2 + $0x80] sm:$0xff]
      %v2289 = vld [vmem:[#allocation2 + $0x88] sm:$0xff]
      %v2290 = vld [vmem:[#allocation2 + $0x90] sm:$0xff]
      %v2291 = vld [vmem:[#allocation2 + $0x98] sm:$0xff]
      %v2292 = vld [vmem:[#allocation2 + $0xa0] sm:$0xff]
      %v2293 = vld [vmem:[#allocation2 + $0xa8] sm:$0xff]
      %v2294 = vld [vmem:[#allocation2 + $0xb0] sm:$0xff]
      %v2295 = vld [vmem:[#allocation2 + $0xb8] sm:$0xff]
      %v2296 = vld [vmem:[#allocation2 + $0xc0] sm:$0xff]
      %v2297 = vld [vmem:[#allocation2 + $0xc8] sm:$0xff]
      %v2298 = vld [vmem:[#allocation2 + $0xd0] sm:$0xff]
      %v2299 = vld [vmem:[#allocation2 + $0xd8] sm:$0xff]
      %v2300 = vld [vmem:[#allocation2 + $0xe0] sm:$0xff]
      %v2301 = vld [vmem:[#allocation2 + $0xe8] sm:$0xff]
      %v2302 = vld [vmem:[#allocation2 + $0xf0] sm:$0xff]
      %v2303 = vld [vmem:[#allocation2 + $0xf8] sm:$0xff]
      %v2304 = vld [vmem:[#allocation2 + $0x100] sm:$0xff]
      %v2305 = vld [vmem:[#allocation2 + $0x108] sm:$0xff]
      %v2306 = vld [vmem:[#allocation2 + $0x110] sm:$0xff]
      %v2307 = vld [vmem:[#allocation2 + $0x118] sm:$0xff]
      %v2308 = vld [vmem:[#allocation2 + $0x120] sm:$0xff]
      %v2309 = vld [vmem:[#allocation2 + $0x128] sm:$0xff]
      %v2310 = vld [vmem:[#allocation2 + $0x130] sm:$0xff]
      %v2311 = vld [vmem:[#allocation2 + $0x138] sm:$0xff]
      %v2312 = vld [vmem:[#allocation2 + $0x140] sm:$0xff]
      %v2313 = vld [vmem:[#allocation2 + $0x148] sm:$0xff]
      %v2314 = vld [vmem:[#allocation2 + $0x150] sm:$0xff]
      %v2315 = vld [vmem:[#allocation2 + $0x158] sm:$0xff]
      %v2316 = vld [vmem:[#allocation2 + $0x160] sm:$0xff]
      %v2317 = vld [vmem:[#allocation2 + $0x168] sm:$0xff]
      %v2318 = vld [vmem:[#allocation2 + $0x170] sm:$0xff]
      %v2319 = vld [vmem:[#allocation2 + $0x178] sm:$0xff]
      %v2320 = vld [vmem:[#allocation2 + $0x180] sm:$0xff]
      %v2321 = vld [vmem:[#allocation2 + $0x188] sm:$0xff]
      %v2322 = vld [vmem:[#allocation2 + $0x190] sm:$0xff]
      %v2323 = vld [vmem:[#allocation2 + $0x198] sm:$0xff]
      %v2324 = vld [vmem:[#allocation2 + $0x1a0] sm:$0xff]
      %v2325 = vld [vmem:[#allocation2 + $0x1a8] sm:$0xff]
      %v2326 = vld [vmem:[#allocation2 + $0x1b0] sm:$0xff]
      %v2327 = vld [vmem:[#allocation2 + $0x1b8] sm:$0xff]
      %v2328 = vld [vmem:[#allocation2 + $0x1c0] sm:$0xff]
      %v2329 = vld [vmem:[#allocation2 + $0x1c8] sm:$0xff]
      %v2330 = vld [vmem:[#allocation2 + $0x1d0] sm:$0xff]
      %v2331 = vld [vmem:[#allocation2 + $0x1d8] sm:$0xff]
      %v2332 = vld [vmem:[#allocation2 + $0x1e0] sm:$0xff]
      %v2333 = vld [vmem:[#allocation2 + $0x1e8] sm:$0xff]
      %v2334 = vld [vmem:[#allocation2 + $0x1f0] sm:$0xff]
      %v2335 = vld [vmem:[#allocation2 + $0x1f8] sm:$0xff]
      %v2336 = vld [vmem:[#allocation2 + $0x200] sm:$0xff]
      %v2337 = vld [vmem:[#allocation2 + $0x208] sm:$0xff]
      %v2338 = vld [vmem:[#allocation2 + $0x210] sm:$0xff]
      %v2339 = vld [vmem:[#allocation2 + $0x218] sm:$0xff]
      %v2340 = vld [vmem:[#allocation2 + $0x220] sm:$0xff]
      %v2341 = vld [vmem:[#allocation2 + $0x228] sm:$0xff]
      %v2342 = vld [vmem:[#allocation2 + $0x230] sm:$0xff]
      %v2343 = vld [vmem:[#allocation2 + $0x238] sm:$0xff]
      %v2344 = vld [vmem:[#allocation2 + $0x240] sm:$0xff]
      %v2345 = vld [vmem:[#allocation2 + $0x248] sm:$0xff]
      %v2346 = vld [vmem:[#allocation2 + $0x250] sm:$0xff]
      %v2347 = vld [vmem:[#allocation2 + $0x258] sm:$0xff]
      %v2348 = vld [vmem:[#allocation2 + $0x260] sm:$0xff]
      %v2349 = vld [vmem:[#allocation2 + $0x268] sm:$0xff]
      %v2350 = vld [vmem:[#allocation2 + $0x270] sm:$0xff]
      %v2351 = vld [vmem:[#allocation2 + $0x278] sm:$0xff]
      %v2352 = vld [vmem:[#allocation2 + $0x280] sm:$0xff]
      %v2353 = vld [vmem:[#allocation2 + $0x288] sm:$0xff]
      %v2354 = vld [vmem:[#allocation2 + $0x290] sm:$0xff]
      %v2355 = vld [vmem:[#allocation2 + $0x298] sm:$0xff]
      %v2356 = vld [vmem:[#allocation2 + $0x2a0] sm:$0xff]
      %v2357 = vld [vmem:[#allocation2 + $0x2a8] sm:$0xff]
      %v2358 = vld [vmem:[#allocation2 + $0x2b0] sm:$0xff]
      %v2359 = vld [vmem:[#allocation2 + $0x2b8] sm:$0xff]
      %v2360 = vld [vmem:[#allocation2 + $0x2c0] sm:$0xff]
      %v2361 = vld [vmem:[#allocation2 + $0x2c8] sm:$0xff]
      %v2362 = vld [vmem:[#allocation2 + $0x2d0] sm:$0xff]
      %v2363 = vld [vmem:[#allocation2 + $0x2d8] sm:$0xff]
      %v2364 = vld [vmem:[#allocation2 + $0x2e0] sm:$0xff]
      %v2365 = vld [vmem:[#allocation2 + $0x2e8] sm:$0xff]
      %v2366 = vld [vmem:[#allocation2 + $0x2f0] sm:$0xff]
      %v2367 = vld [vmem:[#allocation2 + $0x2f8] sm:$0xff]
      %v2368 = vld [vmem:[#allocation2 + $0x300] sm:$0xff]
      %v2369 = vld [vmem:[#allocation2 + $0x308] sm:$0xff]
      %v2370 = vld [vmem:[#allocation2 + $0x310] sm:$0xff]
      %v2371 = vld [vmem:[#allocation2 + $0x318] sm:$0xff]
      %v2372 = vld [vmem:[#allocation2 + $0x320] sm:$0xff]
      %v2373 = vld [vmem:[#allocation2 + $0x328] sm:$0xff]
      %v2374 = vld [vmem:[#allocation2 + $0x330] sm:$0xff]
      %v2375 = vld [vmem:[#allocation2 + $0x338] sm:$0xff]
      %v2376 = vld [vmem:[#allocation2 + $0x340] sm:$0xff]
      %v2377 = vld [vmem:[#allocation2 + $0x348] sm:$0xff]
      %v2378 = vld [vmem:[#allocation2 + $0x350] sm:$0xff]
      %v2379 = vld [vmem:[#allocation2 + $0x358] sm:$0xff]
      %v2380 = vld [vmem:[#allocation2 + $0x360] sm:$0xff]
      %v2381 = vld [vmem:[#allocation2 + $0x368] sm:$0xff]
      %v2382 = vld [vmem:[#allocation2 + $0x370] sm:$0xff]
      %v2383 = vld [vmem:[#allocation2 + $0x378] sm:$0xff]
      %v2384 = vld [vmem:[#allocation2 + $0x380] sm:$0xff]
      %v2385 = vld [vmem:[#allocation2 + $0x388] sm:$0xff]
      %v2386 = vld [vmem:[#allocation2 + $0x390] sm:$0xff]
      %v2387 = vld [vmem:[#allocation2 + $0x398] sm:$0xff]
      %v2388 = vld [vmem:[#allocation2 + $0x3a0] sm:$0xff]
      %v2389 = vld [vmem:[#allocation2 + $0x3a8] sm:$0xff]
      %v2390 = vld [vmem:[#allocation2 + $0x3b0] sm:$0xff]
      %v2391 = vld [vmem:[#allocation2 + $0x3b8] sm:$0xff]
      %v2392 = vld [vmem:[#allocation2 + $0x3c0] sm:$0xff]
      %v2393 = vld [vmem:[#allocation2 + $0x3c8] sm:$0xff]
      %v2394 = vld [vmem:[#allocation2 + $0x3d0] sm:$0xff]
      %v2395 = vld [vmem:[#allocation2 + $0x3d8] sm:$0xff]
      %v2396 = vld [vmem:[#allocation2 + $0x3e0] sm:$0xff]
      %v2397 = vld [vmem:[#allocation2 + $0x3e8] sm:$0xff]
      %v2398 = vld [vmem:[#allocation2 + $0x3f0] sm:$0xff]
      %v2399 = vld [vmem:[#allocation2 + $0x3f8] sm:$0xff]
      %v2400 = vld [vmem:[#allocation2 + $0x400] sm:$0xff]
      %v2401 = vld [vmem:[#allocation2 + $0x408] sm:$0xff]
      %v2402 = vld [vmem:[#allocation2 + $0x410] sm:$0xff]
      %v2403 = vld [vmem:[#allocation2 + $0x418] sm:$0xff]
      %v2404 = vld [vmem:[#allocation2 + $0x420] sm:$0xff]
      %v2405 = vld [vmem:[#allocation2 + $0x428] sm:$0xff]
      %v2406 = vld [vmem:[#allocation2 + $0x430] sm:$0xff]
      %v2407 = vld [vmem:[#allocation2 + $0x438] sm:$0xff]
      %v2408 = vld [vmem:[#allocation2 + $0x440] sm:$0xff]
      %v2409 = vld [vmem:[#allocation2 + $0x448] sm:$0xff]
      %v2410 = vld [vmem:[#allocation2 + $0x450] sm:$0xff]
      %v2411 = vld [vmem:[#allocation2 + $0x458] sm:$0xff]
      %v2412 = vld [vmem:[#allocation2 + $0x460] sm:$0xff]
      %v2413 = vld [vmem:[#allocation2 + $0x468] sm:$0xff]
      %v2414 = vld [vmem:[#allocation2 + $0x470] sm:$0xff]
      %v2415 = vld [vmem:[#allocation2 + $0x478] sm:$0xff]
      %v2416 = vld [vmem:[%s2] sm:$0xff]
      %v2417 = vld [vmem:[%s2 + $0x8] sm:$0xff]
      %v2418 = vld [vmem:[%s2 + $0x10] sm:$0xff]
      %v2419 = vld [vmem:[%s2 + $0x18] sm:$0xff]
      %v2420 = vld [vmem:[%s2 + $0x20] sm:$0xff]
      %v2421 = vld [vmem:[%s2 + $0x28] sm:$0xff]
      %v2422 = vld [vmem:[%s2 + $0x30] sm:$0xff]
      %v2423 = vld [vmem:[%s2 + $0x38] sm:$0xff]
      %v2424 = vld [vmem:[%s2 + $0x40] sm:$0xff]
      %v2425 = vld [vmem:[%s2 + $0x48] sm:$0xff]
      %v2426 = vld [vmem:[%s2 + $0x50] sm:$0xff]
      %v2427 = vld [vmem:[%s2 + $0x58] sm:$0xff]
      %v2428 = vld [vmem:[%s2 + $0x60] sm:$0xff]
      %v2429 = vld [vmem:[%s2 + $0x68] sm:$0xff]
      %v2430 = vld [vmem:[%s2 + $0x70] sm:$0xff]
      %v2431 = vld [vmem:[%s2 + $0x78] sm:$0xff]
      %v2432 = vld [vmem:[%s2 + $0x80] sm:$0xff]
      %v2433 = vld [vmem:[%s2 + $0x88] sm:$0xff]
      %v2434 = vld [vmem:[%s2 + $0x90] sm:$0xff]
      %v2435 = vld [vmem:[%s2 + $0x98] sm:$0xff]
      %v2436 = vld [vmem:[%s2 + $0xa0] sm:$0xff]
      %v2437 = vld [vmem:[%s2 + $0xa8] sm:$0xff]
      %v2438 = vld [vmem:[%s2 + $0xb0] sm:$0xff]
      %v2439 = vld [vmem:[%s2 + $0xb8] sm:$0xff]
      %v2440 = vld [vmem:[%s2 + $0xc0] sm:$0xff]
      %v2441 = vld [vmem:[%s2 + $0xc8] sm:$0xff]
      %v2442 = vld [vmem:[%s2 + $0xd0] sm:$0xff]
      %v2443 = vld [vmem:[%s2 + $0xd8] sm:$0xff]
      %v2444 = vld [vmem:[%s2 + $0xe0] sm:$0xff]
      %v2445 = vld [vmem:[%s2 + $0xe8] sm:$0xff]
      %v2446 = vld [vmem:[%s2 + $0xf0] sm:$0xff]
      %v2447 = vld [vmem:[%s2 + $0xf8] sm:$0xff]
      %v2448 = vld [vmem:[%s2 + $0x100] sm:$0xff]
      %v2449 = vld [vmem:[%s2 + $0x108] sm:$0xff]
      %v2450 = vld [vmem:[%s2 + $0x110] sm:$0xff]
      %v2451 = vld [vmem:[%s2 + $0x118] sm:$0xff]
      %v2452 = vld [vmem:[%s3] sm:$0x1]
      %v2454 = vlaneseq
      %v2455 = vshrl.u32 %v2454, 7
      %v2456 = vsub.s32 0, %v2455
      %v2457 = vrot.slane %v2452, %v2456
      %v2460 = vsel %vm300, %v2274, 0
      %v2463 = vsel %vm300, %v2277, 0
      %v2466 = vsel %vm300, %v2280, 0
      %v2469 = vsel %vm300, %v2283, 0
      %v2472 = vsel %vm300, %v2286, 0
      %v2475 = vsel %vm300, %v2289, 0
      %v2478 = vsel %vm300, %v2292, 0
      %v2481 = vsel %vm300, %v2295, 0
      %v2484 = vsel %vm300, %v2298, 0
      %v2487 = vsel %vm300, %v2301, 0
      %v2490 = vsel %vm300, %v2304, 0
      %v2493 = vsel %vm300, %v2307, 0
      %v2496 = vsel %vm300, %v2310, 0
      %v2499 = vsel %vm300, %v2313, 0
      %v2502 = vsel %vm300, %v2316, 0
      %v2505 = vsel %vm300, %v2319, 0
      %v2508 = vsel %vm300, %v2322, 0
      %v2511 = vsel %vm300, %v2325, 0
      %v2514 = vsel %vm300, %v2328, 0
      %v2517 = vsel %vm300, %v2331, 0
      %v2520 = vsel %vm300, %v2334, 0
      %v2523 = vsel %vm300, %v2337, 0
      %v2526 = vsel %vm300, %v2340, 0
      %v2529 = vsel %vm300, %v2343, 0
      %v2532 = vsel %vm300, %v2346, 0
      %v2535 = vsel %vm300, %v2349, 0
      %v2538 = vsel %vm300, %v2352, 0
      %v2541 = vsel %vm300, %v2355, 0
      %v2544 = vsel %vm300, %v2358, 0
      %v2547 = vsel %vm300, %v2361, 0
      %v2550 = vsel %vm300, %v2364, 0
      %v2553 = vsel %vm300, %v2367, 0
      %v2556 = vsel %vm300, %v2370, 0
      %v2559 = vsel %vm300, %v2373, 0
      %v2562 = vsel %vm300, %v2376, 0
      %v2565 = vsel %vm300, %v2379, 0
      %v2568 = vsel %vm300, %v2382, 0
      %v2571 = vsel %vm300, %v2385, 0
      %v2574 = vsel %vm300, %v2388, 0
      %v2577 = vsel %vm300, %v2391, 0
      %v2580 = vsel %vm300, %v2394, 0
      %v2583 = vsel %vm300, %v2397, 0
      %v2586 = vsel %vm300, %v2400, 0
      %v2589 = vsel %vm300, %v2403, 0
      %v2592 = vsel %vm300, %v2406, 0
      %v2595 = vsel %vm300, %v2409, 0
      %v2598 = vsel %vm300, %v2412, 0
      %v2601 = vsel %vm300, %v2415, 0
      %2603 = vmatprep.subr.mxu0 0.0
      %2604 = vmatpush1.msra.mxu0 %v2416
      %2605 = vmatprep.subr.mxu0 0.0
      %2606 = vmatpush1.msra.mxu0 %v2417
      %2607 = vmatprep.subr.mxu0 0.0
      %2608 = vmatpush1.msra.mxu0 %v2418
      %2609 = vmatprep.subr.mxu0 0.0
      %2610 = vmatpush1.msra.mxu0 %v2419
      %2611 = vmatprep.subr.mxu0 0.0
      %2612 = vmatpush1.msra.mxu0 %v2420
      %2613 = vmatprep.subr.mxu0 0.0
      %2614 = vmatpush1.msra.mxu0 %v2421
      %2615 = vmatprep.subr.mxu0 0.0
      %2616 = vmatpush1.msra.mxu0 %v2422
      %2617 = vmatprep.subr.mxu0 0.0
      %2618 = vmatpush1.msra.mxu0 %v2423
      %2619 = vmatprep.subr.mxu0 0.0
      %2620 = vmatpush1.msra.mxu0 %v2424
      %2621 = vmatprep.subr.mxu0 0.0
      %2622 = vmatpush1.msra.mxu0 %v2425
      %2623 = vmatprep.subr.mxu0 0.0
      %2624 = vmatpush1.msra.mxu0 %v2426
      %2625 = vmatprep.subr.mxu0 0.0
      %2626 = vmatpush1.msra.mxu0 %v2427
      %2627 = vmatprep.subr.mxu0 0.0
      %2628 = vmatpush1.msra.mxu0 %v2428
      %2629 = vmatprep.subr.mxu0 0.0
      %2630 = vmatpush1.msra.mxu0 %v2429
      %2631 = vmatprep.subr.mxu0 0.0
      %2632 = vmatpush1.msra.mxu0 %v2430
      %2633 = vmatprep.subr.mxu0 0.0
      %2634 = vmatpush1.msra.mxu0 %v2431
      %2635 = vmatprep.subr.mxu0 0.0
      %2636 = vmatpush1.msra.mxu0 %v2432
      %2637 = vmatprep.subr.mxu0 0.0
      %2638 = vmatpush1.msra.mxu0 %v2433
      %2639 = vmatprep.subr.mxu0 0.0
      %2640 = vmatpush1.msra.mxu0 %v2434
      %2641 = vmatprep.subr.mxu0 0.0
      %2642 = vmatpush1.msra.mxu0 %v2435
      %2643 = vmatprep.subr.mxu0 0.0
      %2644 = vmatpush1.msra.mxu0 %v2436
      %2645 = vmatprep.subr.mxu0 0.0
      %2646 = vmatpush1.msra.mxu0 %v2437
      %2647 = vmatprep.subr.mxu0 0.0
      %2648 = vmatpush1.msra.mxu0 %v2438
      %2649 = vmatprep.subr.mxu0 0.0
      %2650 = vmatpush1.msra.mxu0 %v2439
      %2651 = vmatprep.subr.mxu0 0.0
      %2652 = vmatpush1.msra.mxu0 %v2440
      %2653 = vmatprep.subr.mxu0 0.0
      %2654 = vmatpush1.msra.mxu0 %v2441
      %2655 = vmatprep.subr.mxu0 0.0
      %2656 = vmatpush1.msra.mxu0 %v2442
      %2657 = vmatprep.subr.mxu0 0.0
      %2658 = vmatpush1.msra.mxu0 %v2443
      %2659 = vmatprep.subr.mxu0 0.0
      %2660 = vmatpush1.msra.mxu0 %v2444
      %2661 = vmatprep.subr.mxu0 0.0
      %2662 = vmatpush1.msra.mxu0 %v2445
      %2663 = vmatprep.subr.mxu0 0.0
      %2664 = vmatpush1.msra.mxu0 %v2446
      %2665 = vmatprep.subr.mxu0 0.0
      %2666 = vmatpush1.msra.mxu0 %v2447
      %2667 = vmatprep.mubr.f32.mxu0 %v2273
      %2668 = vmatmul.mubr.f32.gmra.mrb[0].mxu0 %v2272
      %v2669 = vpop.f32.mrb[0].mxu0
      %v2670 = vadd.f32 %v2457, %v2669
      %v2671 = vpop.f32.mrb[0].mxu0
      %2672 = vmatprep.mubr.f32.mxu0 %v2276
      %2673 = vmatmul.mubr.f32.gmra.mrb[0].mxu0 %v2275
      %v2674 = vpop.f32.mrb[0].mxu0
      %v2675 = vadd.f32 %v2457, %v2674
      %v2676 = vpop.f32.mrb[0].mxu0
      %2677 = vmatprep.mubr.f32.mxu0 %v2279
      %2678 = vmatmul.mubr.f32.gmra.mrb[0].mxu0 %v2278
      %v2679 = vpop.f32.mrb[0].mxu0
      %v2680 = vadd.f32 %v2457, %v2679
      %v2681 = vpop.f32.mrb[0].mxu0
      %2682 = vmatprep.mubr.f32.mxu0 %v2282
      %2683 = vmatmul.mubr.f32.gmra.mrb[0].mxu0 %v2281
      %v2684 = vpop.f32.mrb[0].mxu0
      %v2685 = vadd.f32 %v2457, %v2684
      %v2686 = vpop.f32.mrb[0].mxu0
      %2687 = vmatprep.mubr.f32.mxu0 %v2285
      %2688 = vmatmul.mubr.f32.gmra.mrb[0].mxu0 %v2284
      %v2689 = vpop.f32.mrb[0].mxu0
      %v2690 = vadd.f32 %v2457, %v2689
      %v2691 = vpop.f32.mrb[0].mxu0
      %2692 = vmatprep.mubr.f32.mxu0 %v2288
      %2693 = vmatmul.mubr.f32.gmra.mrb[0].mxu0 %v2287
      %v2694 = vpop.f32.mrb[0].mxu0
      %v2695 = vadd.f32 %v2457, %v2694
      %v2696 = vpop.f32.mrb[0].mxu0
      %2697 = vmatprep.mubr.f32.mxu0 %v2291
      %2698 = vmatmul.mubr.f32.gmra.mrb[0].mxu0 %v2290
      %v2699 = vpop.f32.mrb[0].mxu0
      %v2700 = vadd.f32 %v2457, %v2699
      %v2701 = vpop.f32.mrb[0].mxu0
      %2702 = vmatprep.mubr.f32.mxu0 %v2294
      %2703 = vmatmul.mubr.f32.gmra.mrb[0].mxu0 %v2293
      %v2704 = vpop.f32.mrb[0].mxu0
      %v2705 = vadd.f32 %v2457, %v2704
      %v2706 = vpop.f32.mrb[0].mxu0
      %2707 = vmatprep.mubr.f32.mxu0 %v2297
      %2708 = vmatmul.mubr.f32.gmra.mrb[0].mxu0 %v2296
      %v2709 = vpop.f32.mrb[0].mxu0
      %v2710 = vadd.f32 %v2457, %v2709
      %v2711 = vpop.f32.mrb[0].mxu0
      %2712 = vmatprep.mubr.f32.mxu0 %v2300
      %2713 = vmatmul.mubr.f32.gmra.mrb[0].mxu0 %v2299
      %v2714 = vpop.f32.mrb[0].mxu0
      %v2715 = vadd.f32 %v2457, %v2714
      %v2716 = vpop.f32.mrb[0].mxu0
      %2717 = vmatprep.mubr.f32.mxu0 %v2303
      %2718 = vmatmul.mubr.f32.gmra.mrb[0].mxu0 %v2302
      %v2719 = vpop.f32.mrb[0].mxu0
      %v2720 = vadd.f32 %v2457, %v2719
      %v2721 = vpop.f32.mrb[0].mxu0
      %2722 = vmatprep.mubr.f32.mxu0 %v2306
      %2723 = vmatmul.mubr.f32.gmra.mrb[0].mxu0 %v2305
      %v2724 = vpop.f32.mrb[0].mxu0
      %v2725 = vadd.f32 %v2457, %v2724
      %v2726 = vpop.f32.mrb[0].mxu0
      %2727 = vmatprep.mubr.f32.mxu0 %v2309
      %2728 = vmatmul.mubr.f32.gmra.mrb[0].mxu0 %v2308
      %v2729 = vpop.f32.mrb[0].mxu0
      %v2730 = vadd.f32 %v2457, %v2729
      %v2731 = vpop.f32.mrb[0].mxu0
      %2732 = vmatprep.mubr.f32.mxu0 %v2312
      %2733 = vmatmul.mubr.f32.gmra.mrb[0].mxu0 %v2311
      %v2734 = vpop.f32.mrb[0].mxu0
      %v2735 = vadd.f32 %v2457, %v2734
      %v2736 = vpop.f32.mrb[0].mxu0
      %2737 = vmatprep.mubr.f32.mxu0 %v2315
      %2738 = vmatmul.mubr.f32.gmra.mrb[0].mxu0 %v2314
      %v2739 = vpop.f32.mrb[0].mxu0
      %v2740 = vadd.f32 %v2457, %v2739
      %v2741 = vpop.f32.mrb[0].mxu0
      %2742 = vmatprep.mubr.f32.mxu0 %v2318
      %2743 = vmatmul.mubr.f32.gmra.mrb[0].mxu0 %v2317
      %v2744 = vpop.f32.mrb[0].mxu0
      %v2745 = vadd.f32 %v2457, %v2744
      %v2746 = vpop.f32.mrb[0].mxu0
      %2747 = vmatprep.mubr.f32.mxu0 %v2321
      %2748 = vmatmul.mubr.f32.gmra.mrb[0].mxu0 %v2320
      %v2749 = vpop.f32.mrb[0].mxu0
      %v2750 = vadd.f32 %v2457, %v2749
      %v2751 = vpop.f32.mrb[0].mxu0
      %2752 = vmatprep.mubr.f32.mxu0 %v2324
      %2753 = vmatmul.mubr.f32.gmra.mrb[0].mxu0 %v2323
      %v2754 = vpop.f32.mrb[0].mxu0
      %v2755 = vadd.f32 %v2457, %v2754
      %v2756 = vpop.f32.mrb[0].mxu0
      %2757 = vmatprep.mubr.f32.mxu0 %v2327
      %2758 = vmatmul.mubr.f32.gmra.mrb[0].mxu0 %v2326
      %v2759 = vpop.f32.mrb[0].mxu0
      %v2760 = vadd.f32 %v2457, %v2759
      %v2761 = vpop.f32.mrb[0].mxu0
      %2762 = vmatprep.mubr.f32.mxu0 %v2330
      %2763 = vmatmul.mubr.f32.gmra.mrb[0].mxu0 %v2329
      %v2764 = vpop.f32.mrb[0].mxu0
      %v2765 = vadd.f32 %v2457, %v2764
      %v2766 = vpop.f32.mrb[0].mxu0
      %2767 = vmatprep.mubr.f32.mxu0 %v2333
      %2768 = vmatmul.mubr.f32.gmra.mrb[0].mxu0 %v2332
      %v2769 = vpop.f32.mrb[0].mxu0
      %v2770 = vadd.f32 %v2457, %v2769
      %v2771 = vpop.f32.mrb[0].mxu0
      %2772 = vmatprep.mubr.f32.mxu0 %v2336
      %2773 = vmatmul.mubr.f32.gmra.mrb[0].mxu0 %v2335
      %v2774 = vpop.f32.mrb[0].mxu0
      %v2775 = vadd.f32 %v2457, %v2774
      %v2776 = vpop.f32.mrb[0].mxu0
      %2777 = vmatprep.mubr.f32.mxu0 %v2339
      %2778 = vmatmul.mubr.f32.gmra.mrb[0].mxu0 %v2338
      %v2779 = vpop.f32.mrb[0].mxu0
      %v2780 = vadd.f32 %v2457, %v2779
      %v2781 = vpop.f32.mrb[0].mxu0
      %2782 = vmatprep.mubr.f32.mxu0 %v2342
      %2783 = vmatmul.mubr.f32.gmra.mrb[0].mxu0 %v2341
      %v2784 = vpop.f32.mrb[0].mxu0
      %v2785 = vadd.f32 %v2457, %v2784
      %v2786 = vpop.f32.mrb[0].mxu0
      %2787 = vmatprep.mubr.f32.mxu0 %v2345
      %2788 = vmatmul.mubr.f32.gmra.mrb[0].mxu0 %v2344
      %v2789 = vpop.f32.mrb[0].mxu0
      %v2790 = vadd.f32 %v2457, %v2789
      %v2791 = vpop.f32.mrb[0].mxu0
      %2792 = vmatprep.mubr.f32.mxu0 %v2348
      %2793 = vmatmul.mubr.f32.gmra.mrb[0].mxu0 %v2347
      %v2794 = vpop.f32.mrb[0].mxu0
      %v2795 = vadd.f32 %v2457, %v2794
      %v2796 = vpop.f32.mrb[0].mxu0
      %2797 = vmatprep.mubr.f32.mxu0 %v2351
      %2798 = vmatmul.mubr.f32.gmra.mrb[0].mxu0 %v2350
      %v2799 = vpop.f32.mrb[0].mxu0
      %v2800 = vadd.f32 %v2457, %v2799
      %v2801 = vpop.f32.mrb[0].mxu0
      %2802 = vmatprep.mubr.f32.mxu0 %v2354
      %2803 = vmatmul.mubr.f32.gmra.mrb[0].mxu0 %v2353
      %v2804 = vpop.f32.mrb[0].mxu0
      %v2805 = vadd.f32 %v2457, %v2804
      %v2806 = vpop.f32.mrb[0].mxu0
      %2807 = vmatprep.mubr.f32.mxu0 %v2357
      %2808 = vmatmul.mubr.f32.gmra.mrb[0].mxu0 %v2356
      %v2809 = vpop.f32.mrb[0].mxu0
      %v2810 = vadd.f32 %v2457, %v2809
      %v2811 = vpop.f32.mrb[0].mxu0
      %2812 = vmatprep.mubr.f32.mxu0 %v2360
      %2813 = vmatmul.mubr.f32.gmra.mrb[0].mxu0 %v2359
      %v2814 = vpop.f32.mrb[0].mxu0
      %v2815 = vadd.f32 %v2457, %v2814
      %v2816 = vpop.f32.mrb[0].mxu0
      %2817 = vmatprep.mubr.f32.mxu0 %v2363
      %2818 = vmatmul.mubr.f32.gmra.mrb[0].mxu0 %v2362
      %v2819 = vpop.f32.mrb[0].mxu0
      %v2820 = vadd.f32 %v2457, %v2819
      %v2821 = vpop.f32.mrb[0].mxu0
      %2822 = vmatprep.mubr.f32.mxu0 %v2366
      %2823 = vmatmul.mubr.f32.gmra.mrb[0].mxu0 %v2365
      %v2824 = vpop.f32.mrb[0].mxu0
      %v2825 = vadd.f32 %v2457, %v2824
      %v2826 = vpop.f32.mrb[0].mxu0
      %2827 = vmatprep.mubr.f32.mxu0 %v2369
      %2828 = vmatmul.mubr.f32.gmra.mrb[0].mxu0 %v2368
      %v2829 = vpop.f32.mrb[0].mxu0
      %v2830 = vadd.f32 %v2457, %v2829
      %v2831 = vpop.f32.mrb[0].mxu0
      %2832 = vmatprep.mubr.f32.mxu0 %v2372
      %2833 = vmatmul.mubr.f32.gmra.mrb[0].mxu0 %v2371
      %v2834 = vpop.f32.mrb[0].mxu0
      %v2835 = vadd.f32 %v2457, %v2834
      %v2836 = vpop.f32.mrb[0].mxu0
      %2837 = vmatprep.mubr.f32.mxu0 %v2375
      %2838 = vmatmul.mubr.f32.gmra.mrb[0].mxu0 %v2374
      %v2839 = vpop.f32.mrb[0].mxu0
      %v2840 = vadd.f32 %v2457, %v2839
      %v2841 = vpop.f32.mrb[0].mxu0
      %2842 = vmatprep.mubr.f32.mxu0 %v2378
      %2843 = vmatmul.mubr.f32.gmra.mrb[0].mxu0 %v2377
      %v2844 = vpop.f32.mrb[0].mxu0
      %v2845 = vadd.f32 %v2457, %v2844
      %v2846 = vpop.f32.mrb[0].mxu0
      %2847 = vmatprep.mubr.f32.mxu0 %v2381
      %2848 = vmatmul.mubr.f32.gmra.mrb[0].mxu0 %v2380
      %v2849 = vpop.f32.mrb[0].mxu0
      %v2850 = vadd.f32 %v2457, %v2849
      %v2851 = vpop.f32.mrb[0].mxu0
      %2852 = vmatprep.mubr.f32.mxu0 %v2384
      %2853 = vmatmul.mubr.f32.gmra.mrb[0].mxu0 %v2383
      %v2854 = vpop.f32.mrb[0].mxu0
      %v2855 = vadd.f32 %v2457, %v2854
      %v2856 = vpop.f32.mrb[0].mxu0
      %2857 = vmatprep.mubr.f32.mxu0 %v2387
      %2858 = vmatmul.mubr.f32.gmra.mrb[0].mxu0 %v2386
      %v2859 = vpop.f32.mrb[0].mxu0
      %v2860 = vadd.f32 %v2457, %v2859
      %v2861 = vpop.f32.mrb[0].mxu0
      %2862 = vmatprep.mubr.f32.mxu0 %v2390
      %2863 = vmatmul.mubr.f32.gmra.mrb[0].mxu0 %v2389
      %v2864 = vpop.f32.mrb[0].mxu0
      %v2865 = vadd.f32 %v2457, %v2864
      %v2866 = vpop.f32.mrb[0].mxu0
      %2867 = vmatprep.mubr.f32.mxu0 %v2393
      %2868 = vmatmul.mubr.f32.gmra.mrb[0].mxu0 %v2392
      %v2869 = vpop.f32.mrb[0].mxu0
      %v2870 = vadd.f32 %v2457, %v2869
      %v2871 = vpop.f32.mrb[0].mxu0
      %2872 = vmatprep.mubr.f32.mxu0 %v2396
      %2873 = vmatmul.mubr.f32.gmra.mrb[0].mxu0 %v2395
      %v2874 = vpop.f32.mrb[0].mxu0
      %v2875 = vadd.f32 %v2457, %v2874
      %v2876 = vpop.f32.mrb[0].mxu0
      %2877 = vmatprep.mubr.f32.mxu0 %v2399
      %2878 = vmatmul.mubr.f32.gmra.mrb[0].mxu0 %v2398
      %v2879 = vpop.f32.mrb[0].mxu0
      %v2880 = vadd.f32 %v2457, %v2879
      %v2881 = vpop.f32.mrb[0].mxu0
      %2882 = vmatprep.mubr.f32.mxu0 %v2402
      %2883 = vmatmul.mubr.f32.gmra.mrb[0].mxu0 %v2401
      %v2884 = vpop.f32.mrb[0].mxu0
      %v2885 = vadd.f32 %v2457, %v2884
      %v2886 = vpop.f32.mrb[0].mxu0
      %2887 = vmatprep.mubr.f32.mxu0 %v2405
      %2888 = vmatmul.mubr.f32.gmra.mrb[0].mxu0 %v2404
      %v2889 = vpop.f32.mrb[0].mxu0
      %v2890 = vadd.f32 %v2457, %v2889
      %v2891 = vpop.f32.mrb[0].mxu0
      %2892 = vmatprep.mubr.f32.mxu0 %v2408
      %2893 = vmatmul.mubr.f32.gmra.mrb[0].mxu0 %v2407
      %v2894 = vpop.f32.mrb[0].mxu0
      %v2895 = vadd.f32 %v2457, %v2894
      %v2896 = vpop.f32.mrb[0].mxu0
      %2897 = vmatprep.mubr.f32.mxu0 %v2411
      %2898 = vmatmul.mubr.f32.gmra.mrb[0].mxu0 %v2410
      %v2899 = vpop.f32.mrb[0].mxu0
      %v2900 = vadd.f32 %v2457, %v2899
      %v2901 = vpop.f32.mrb[0].mxu0
      %2902 = vmatprep.mubr.f32.mxu0 %v2414
      %2903 = vmatmul.mubr.f32.gmra.mrb[0].mxu0 %v2413
      %v2904 = vpop.f32.mrb[0].mxu0
      %v2905 = vadd.f32 %v2457, %v2904
      %v2906 = vpop.f32.mrb[0].mxu0
      %2907 = vdwg.mxu0
      %2908 = vmatprep.subr.mxu0 0.0
      %2909 = vmatpush1.msra.mxu0 %v2448
      %2910 = vmatprep.subr.mxu0 0.0
      %2911 = vmatpush1.msra.mxu0 %v2449
      %2912 = vmatprep.subr.mxu0 0.0
      %2913 = vmatpush1.msra.mxu0 %v2450
      %2914 = vmatprep.subr.mxu0 0.0
      %2915 = vmatpush1.msra.mxu0 %v2451
      %2916 = vmatprep.subr.mxu0 0.0
      %2917 = vmatpush1.msra.mxu0 0.0
      %2918 = vmatprep.subr.mxu0 0.0
      %2919 = vmatpush1.msra.mxu0 0.0
      %2920 = vmatprep.subr.mxu0 0.0
      %2921 = vmatpush1.msra.mxu0 0.0
      %2922 = vmatprep.subr.mxu0 0.0
      %2923 = vmatpush1.msra.mxu0 0.0
      %2924 = vmatprep.subr.mxu0 0.0
      %2925 = vmatpush1.msra.mxu0 0.0
      %2926 = vmatprep.subr.mxu0 0.0
      %2927 = vmatpush1.msra.mxu0 0.0
      %2928 = vmatprep.subr.mxu0 0.0
      %2929 = vmatpush1.msra.mxu0 0.0
      %2930 = vmatprep.subr.mxu0 0.0
      %2931 = vmatpush1.msra.mxu0 0.0
      %2932 = vmatprep.subr.mxu0 0.0
      %2933 = vmatpush1.msra.mxu0 0.0
      %2934 = vmatprep.subr.mxu0 0.0
      %2935 = vmatpush1.msra.mxu0 0.0
      %2936 = vmatprep.subr.mxu0 0.0
      %2937 = vmatpush1.msra.mxu0 0.0
      %2938 = vmatprep.subr.mxu0 0.0
      %2939 = vmatpush1.msra.mxu0 0.0
      %2940 = vmatprep.subr.mxu0 0.0
      %2941 = vmatpush1.msra.mxu0 0.0
      %2942 = vmatprep.subr.mxu0 0.0
      %2943 = vmatpush1.msra.mxu0 0.0
      %2944 = vmatprep.subr.mxu0 0.0
      %2945 = vmatpush1.msra.mxu0 0.0
      %2946 = vmatprep.subr.mxu0 0.0
      %2947 = vmatpush1.msra.mxu0 0.0
      %2948 = vmatprep.subr.mxu0 0.0
      %2949 = vmatpush1.msra.mxu0 0.0
      %2950 = vmatprep.subr.mxu0 0.0
      %2951 = vmatpush1.msra.mxu0 0.0
      %2952 = vmatprep.subr.mxu0 0.0
      %2953 = vmatpush1.msra.mxu0 0.0
      %2954 = vmatprep.subr.mxu0 0.0
      %2955 = vmatpush1.msra.mxu0 0.0
      %2956 = vmatprep.subr.mxu0 0.0
      %2957 = vmatpush1.msra.mxu0 0.0
      %2958 = vmatprep.subr.mxu0 0.0
      %2959 = vmatpush1.msra.mxu0 0.0
      %2960 = vmatprep.subr.mxu0 0.0
      %2961 = vmatpush1.msra.mxu0 0.0
      %2962 = vmatprep.subr.mxu0 0.0
      %2963 = vmatpush1.msra.mxu0 0.0
      %2964 = vmatprep.subr.mxu0 0.0
      %2965 = vmatpush1.msra.mxu0 0.0
      %2966 = vmatprep.subr.mxu0 0.0
      %2967 = vmatpush1.msra.mxu0 0.0
      %2968 = vmatprep.subr.mxu0 0.0
      %2969 = vmatpush1.msra.mxu0 0.0
      %2970 = vmatprep.subr.mxu0 0.0
      %2971 = vmatpush1.msra.mxu0 0.0
      %2972 = vmatprep.mubr.f32.mxu0 0.0
      %2973 = vmatmul.mubr.f32.gmra.mrb[0].mxu0 %v2460
      %v2974 = vpop.f32.mrb[0].mxu0
      %v2975 = vadd.f32 %v2670, %v2974
      %v2976 = vpop.f32.mrb[0].mxu0
      %2977 = vmatprep.mubr.f32.mxu0 0.0
      %2978 = vmatmul.mubr.f32.gmra.mrb[0].mxu0 %v2463
      %v2979 = vpop.f32.mrb[0].mxu0
      %v2980 = vadd.f32 %v2675, %v2979
      %v2981 = vpop.f32.mrb[0].mxu0
      %2982 = vmatprep.mubr.f32.mxu0 0.0
      %2983 = vmatmul.mubr.f32.gmra.mrb[0].mxu0 %v2466
      %v2984 = vpop.f32.mrb[0].mxu0
      %v2985 = vadd.f32 %v2680, %v2984
      %v2986 = vpop.f32.mrb[0].mxu0
      %2987 = vmatprep.mubr.f32.mxu0 0.0
      %2988 = vmatmul.mubr.f32.gmra.mrb[0].mxu0 %v2469
      %v2989 = vpop.f32.mrb[0].mxu0
      %v2990 = vadd.f32 %v2685, %v2989
      %v2991 = vpop.f32.mrb[0].mxu0
      %2992 = vmatprep.mubr.f32.mxu0 0.0
      %2993 = vmatmul.mubr.f32.gmra.mrb[0].mxu0 %v2472
      %v2994 = vpop.f32.mrb[0].mxu0
      %v2995 = vadd.f32 %v2690, %v2994
      %v2996 = vpop.f32.mrb[0].mxu0
      %2997 = vmatprep.mubr.f32.mxu0 0.0
      %2998 = vmatmul.mubr.f32.gmra.mrb[0].mxu0 %v2475
      %v2999 = vpop.f32.mrb[0].mxu0
      %v3000 = vadd.f32 %v2695, %v2999
      %v3001 = vpop.f32.mrb[0].mxu0
      %3002 = vmatprep.mubr.f32.mxu0 0.0
      %3003 = vmatmul.mubr.f32.gmra.mrb[0].mxu0 %v2478
      %v3004 = vpop.f32.mrb[0].mxu0
      %v3005 = vadd.f32 %v2700, %v3004
      %v3006 = vpop.f32.mrb[0].mxu0
      %3007 = vmatprep.mubr.f32.mxu0 0.0
      %3008 = vmatmul.mubr.f32.gmra.mrb[0].mxu0 %v2481
      %v3009 = vpop.f32.mrb[0].mxu0
      %v3010 = vadd.f32 %v2705, %v3009
      %v3011 = vpop.f32.mrb[0].mxu0
      %3012 = vmatprep.mubr.f32.mxu0 0.0
      %3013 = vmatmul.mubr.f32.gmra.mrb[0].mxu0 %v2484
      %v3014 = vpop.f32.mrb[0].mxu0
      %v3015 = vadd.f32 %v2710, %v3014
      %v3016 = vpop.f32.mrb[0].mxu0
      %3017 = vmatprep.mubr.f32.mxu0 0.0
      %3018 = vmatmul.mubr.f32.gmra.mrb[0].mxu0 %v2487
      %v3019 = vpop.f32.mrb[0].mxu0
      %v3020 = vadd.f32 %v2715, %v3019
      %v3021 = vpop.f32.mrb[0].mxu0
      %3022 = vmatprep.mubr.f32.mxu0 0.0
      %3023 = vmatmul.mubr.f32.gmra.mrb[0].mxu0 %v2490
      %v3024 = vpop.f32.mrb[0].mxu0
      %v3025 = vadd.f32 %v2720, %v3024
      %v3026 = vpop.f32.mrb[0].mxu0
      %3027 = vmatprep.mubr.f32.mxu0 0.0
      %3028 = vmatmul.mubr.f32.gmra.mrb[0].mxu0 %v2493
      %v3029 = vpop.f32.mrb[0].mxu0
      %v3030 = vadd.f32 %v2725, %v3029
      %v3031 = vpop.f32.mrb[0].mxu0
      %3032 = vmatprep.mubr.f32.mxu0 0.0
      %3033 = vmatmul.mubr.f32.gmra.mrb[0].mxu0 %v2496
      %v3034 = vpop.f32.mrb[0].mxu0
      %v3035 = vadd.f32 %v2730, %v3034
      %v3036 = vpop.f32.mrb[0].mxu0
      %3037 = vmatprep.mubr.f32.mxu0 0.0
      %3038 = vmatmul.mubr.f32.gmra.mrb[0].mxu0 %v2499
      %v3039 = vpop.f32.mrb[0].mxu0
      %v3040 = vadd.f32 %v2735, %v3039
      %v3041 = vpop.f32.mrb[0].mxu0
      %3042 = vmatprep.mubr.f32.mxu0 0.0
      %3043 = vmatmul.mubr.f32.gmra.mrb[0].mxu0 %v2502
      %v3044 = vpop.f32.mrb[0].mxu0
      %v3045 = vadd.f32 %v2740, %v3044
      %v3046 = vpop.f32.mrb[0].mxu0
      %3047 = vmatprep.mubr.f32.mxu0 0.0
      %3048 = vmatmul.mubr.f32.gmra.mrb[0].mxu0 %v2505
      %v3049 = vpop.f32.mrb[0].mxu0
      %v3050 = vadd.f32 %v2745, %v3049
      %v3051 = vpop.f32.mrb[0].mxu0
      %3052 = vmatprep.mubr.f32.mxu0 0.0
      %3053 = vmatmul.mubr.f32.gmra.mrb[0].mxu0 %v2508
      %v3054 = vpop.f32.mrb[0].mxu0
      %v3055 = vadd.f32 %v2750, %v3054
      %v3056 = vpop.f32.mrb[0].mxu0
      %3057 = vmatprep.mubr.f32.mxu0 0.0
      %3058 = vmatmul.mubr.f32.gmra.mrb[0].mxu0 %v2511
      %v3059 = vpop.f32.mrb[0].mxu0
      %v3060 = vadd.f32 %v2755, %v3059
      %v3061 = vpop.f32.mrb[0].mxu0
      %3062 = vmatprep.mubr.f32.mxu0 0.0
      %3063 = vmatmul.mubr.f32.gmra.mrb[0].mxu0 %v2514
      %v3064 = vpop.f32.mrb[0].mxu0
      %v3065 = vadd.f32 %v2760, %v3064
      %v3066 = vpop.f32.mrb[0].mxu0
      %3067 = vmatprep.mubr.f32.mxu0 0.0
      %3068 = vmatmul.mubr.f32.gmra.mrb[0].mxu0 %v2517
      %v3069 = vpop.f32.mrb[0].mxu0
      %v3070 = vadd.f32 %v2765, %v3069
      %v3071 = vpop.f32.mrb[0].mxu0
      %3072 = vmatprep.mubr.f32.mxu0 0.0
      %3073 = vmatmul.mubr.f32.gmra.mrb[0].mxu0 %v2520
      %v3074 = vpop.f32.mrb[0].mxu0
      %v3075 = vadd.f32 %v2770, %v3074
      %v3076 = vpop.f32.mrb[0].mxu0
      %3077 = vmatprep.mubr.f32.mxu0 0.0
      %3078 = vmatmul.mubr.f32.gmra.mrb[0].mxu0 %v2523
      %v3079 = vpop.f32.mrb[0].mxu0
      %v3080 = vadd.f32 %v2775, %v3079
      %v3081 = vpop.f32.mrb[0].mxu0
      %3082 = vmatprep.mubr.f32.mxu0 0.0
      %3083 = vmatmul.mubr.f32.gmra.mrb[0].mxu0 %v2526
      %v3084 = vpop.f32.mrb[0].mxu0
      %v3085 = vadd.f32 %v2780, %v3084
      %v3086 = vpop.f32.mrb[0].mxu0
      %3087 = vmatprep.mubr.f32.mxu0 0.0
      %3088 = vmatmul.mubr.f32.gmra.mrb[0].mxu0 %v2529
      %v3089 = vpop.f32.mrb[0].mxu0
      %v3090 = vadd.f32 %v2785, %v3089
      %v3091 = vpop.f32.mrb[0].mxu0
      %3092 = vmatprep.mubr.f32.mxu0 0.0
      %3093 = vmatmul.mubr.f32.gmra.mrb[0].mxu0 %v2532
      %v3094 = vpop.f32.mrb[0].mxu0
      %v3095 = vadd.f32 %v2790, %v3094
      %v3096 = vpop.f32.mrb[0].mxu0
      %3097 = vmatprep.mubr.f32.mxu0 0.0
      %3098 = vmatmul.mubr.f32.gmra.mrb[0].mxu0 %v2535
      %v3099 = vpop.f32.mrb[0].mxu0
      %v3100 = vadd.f32 %v2795, %v3099
      %v3101 = vpop.f32.mrb[0].mxu0
      %3102 = vmatprep.mubr.f32.mxu0 0.0
      %3103 = vmatmul.mubr.f32.gmra.mrb[0].mxu0 %v2538
      %v3104 = vpop.f32.mrb[0].mxu0
      %v3105 = vadd.f32 %v2800, %v3104
      %v3106 = vpop.f32.mrb[0].mxu0
      %3107 = vmatprep.mubr.f32.mxu0 0.0
      %3108 = vmatmul.mubr.f32.gmra.mrb[0].mxu0 %v2541
      %v3109 = vpop.f32.mrb[0].mxu0
      %v3110 = vadd.f32 %v2805, %v3109
      %v3111 = vpop.f32.mrb[0].mxu0
      %3112 = vmatprep.mubr.f32.mxu0 0.0
      %3113 = vmatmul.mubr.f32.gmra.mrb[0].mxu0 %v2544
      %v3114 = vpop.f32.mrb[0].mxu0
      %v3115 = vadd.f32 %v2810, %v3114
      %v3116 = vpop.f32.mrb[0].mxu0
      %3117 = vmatprep.mubr.f32.mxu0 0.0
      %3118 = vmatmul.mubr.f32.gmra.mrb[0].mxu0 %v2547
      %v3119 = vpop.f32.mrb[0].mxu0
      %v3120 = vadd.f32 %v2815, %v3119
      %v3121 = vpop.f32.mrb[0].mxu0
      %3122 = vmatprep.mubr.f32.mxu0 0.0
      %3123 = vmatmul.mubr.f32.gmra.mrb[0].mxu0 %v2550
      %v3124 = vpop.f32.mrb[0].mxu0
      %v3125 = vadd.f32 %v2820, %v3124
      %v3126 = vpop.f32.mrb[0].mxu0
      %3127 = vmatprep.mubr.f32.mxu0 0.0
      %3128 = vmatmul.mubr.f32.gmra.mrb[0].mxu0 %v2553
      %v3129 = vpop.f32.mrb[0].mxu0
      %v3130 = vadd.f32 %v2825, %v3129
      %v3131 = vpop.f32.mrb[0].mxu0
      %3132 = vmatprep.mubr.f32.mxu0 0.0
      %3133 = vmatmul.mubr.f32.gmra.mrb[0].mxu0 %v2556
      %v3134 = vpop.f32.mrb[0].mxu0
      %v3135 = vadd.f32 %v2830, %v3134
      %v3136 = vpop.f32.mrb[0].mxu0
      %3137 = vmatprep.mubr.f32.mxu0 0.0
      %3138 = vmatmul.mubr.f32.gmra.mrb[0].mxu0 %v2559
      %v3139 = vpop.f32.mrb[0].mxu0
      %v3140 = vadd.f32 %v2835, %v3139
      %v3141 = vpop.f32.mrb[0].mxu0
      %3142 = vmatprep.mubr.f32.mxu0 0.0
      %3143 = vmatmul.mubr.f32.gmra.mrb[0].mxu0 %v2562
      %v3144 = vpop.f32.mrb[0].mxu0
      %v3145 = vadd.f32 %v2840, %v3144
      %v3146 = vpop.f32.mrb[0].mxu0
      %3147 = vmatprep.mubr.f32.mxu0 0.0
      %3148 = vmatmul.mubr.f32.gmra.mrb[0].mxu0 %v2565
      %v3149 = vpop.f32.mrb[0].mxu0
      %v3150 = vadd.f32 %v2845, %v3149
      %v3151 = vpop.f32.mrb[0].mxu0
      %3152 = vmatprep.mubr.f32.mxu0 0.0
      %3153 = vmatmul.mubr.f32.gmra.mrb[0].mxu0 %v2568
      %v3154 = vpop.f32.mrb[0].mxu0
      %v3155 = vadd.f32 %v2850, %v3154
      %v3156 = vpop.f32.mrb[0].mxu0
      %3157 = vmatprep.mubr.f32.mxu0 0.0
      %3158 = vmatmul.mubr.f32.gmra.mrb[0].mxu0 %v2571
      %v3159 = vpop.f32.mrb[0].mxu0
      %v3160 = vadd.f32 %v2855, %v3159
      %v3161 = vpop.f32.mrb[0].mxu0
      %3162 = vmatprep.mubr.f32.mxu0 0.0
      %3163 = vmatmul.mubr.f32.gmra.mrb[0].mxu0 %v2574
      %v3164 = vpop.f32.mrb[0].mxu0
      %v3165 = vadd.f32 %v2860, %v3164
      %v3166 = vpop.f32.mrb[0].mxu0
      %3167 = vmatprep.mubr.f32.mxu0 0.0
      %3168 = vmatmul.mubr.f32.gmra.mrb[0].mxu0 %v2577
      %v3169 = vpop.f32.mrb[0].mxu0
      %v3170 = vadd.f32 %v2865, %v3169
      %v3171 = vpop.f32.mrb[0].mxu0
      %3172 = vmatprep.mubr.f32.mxu0 0.0
      %3173 = vmatmul.mubr.f32.gmra.mrb[0].mxu0 %v2580
      %v3174 = vpop.f32.mrb[0].mxu0
      %v3175 = vadd.f32 %v2870, %v3174
      %v3176 = vpop.f32.mrb[0].mxu0
      %3177 = vmatprep.mubr.f32.mxu0 0.0
      %3178 = vmatmul.mubr.f32.gmra.mrb[0].mxu0 %v2583
      %v3179 = vpop.f32.mrb[0].mxu0
      %v3180 = vadd.f32 %v2875, %v3179
      %v3181 = vpop.f32.mrb[0].mxu0
      %3182 = vmatprep.mubr.f32.mxu0 0.0
      %3183 = vmatmul.mubr.f32.gmra.mrb[0].mxu0 %v2586
      %v3184 = vpop.f32.mrb[0].mxu0
      %v3185 = vadd.f32 %v2880, %v3184
      %v3186 = vpop.f32.mrb[0].mxu0
      %3187 = vmatprep.mubr.f32.mxu0 0.0
      %3188 = vmatmul.mubr.f32.gmra.mrb[0].mxu0 %v2589
      %v3189 = vpop.f32.mrb[0].mxu0
      %v3190 = vadd.f32 %v2885, %v3189
      %v3191 = vpop.f32.mrb[0].mxu0
      %3192 = vmatprep.mubr.f32.mxu0 0.0
      %3193 = vmatmul.mubr.f32.gmra.mrb[0].mxu0 %v2592
      %v3194 = vpop.f32.mrb[0].mxu0
      %v3195 = vadd.f32 %v2890, %v3194
      %v3196 = vpop.f32.mrb[0].mxu0
      %3197 = vmatprep.mubr.f32.mxu0 0.0
      %3198 = vmatmul.mubr.f32.gmra.mrb[0].mxu0 %v2595
      %v3199 = vpop.f32.mrb[0].mxu0
      %v3200 = vadd.f32 %v2895, %v3199
      %v3201 = vpop.f32.mrb[0].mxu0
      %3202 = vmatprep.mubr.f32.mxu0 0.0
      %3203 = vmatmul.mubr.f32.gmra.mrb[0].mxu0 %v2598
      %v3204 = vpop.f32.mrb[0].mxu0
      %v3205 = vadd.f32 %v2900, %v3204
      %v3206 = vpop.f32.mrb[0].mxu0
      %3207 = vmatprep.mubr.f32.mxu0 0.0
      %3208 = vmatmul.mubr.f32.gmra.mrb[0].mxu0 %v2601
      %v3209 = vpop.f32.mrb[0].mxu0
      %v3210 = vadd.f32 %v2905, %v3209
      %v3211 = vpop.f32.mrb[0].mxu0
      %3212 = vdwg.mxu0
      %v3213 = vmax.f32 %v2975, 0.0
      %v3214 = vmax.f32 %v2980, 0.0
      %v3215 = vmax.f32 %v2985, 0.0
      %v3216 = vmax.f32 %v2990, 0.0
      %v3217 = vmax.f32 %v2995, 0.0
      %v3218 = vmax.f32 %v3000, 0.0
      %v3219 = vmax.f32 %v3005, 0.0
      %v3220 = vmax.f32 %v3010, 0.0
      %v3221 = vmax.f32 %v3015, 0.0
      %v3222 = vmax.f32 %v3020, 0.0
      %v3223 = vmax.f32 %v3025, 0.0
      %v3224 = vmax.f32 %v3030, 0.0
      %v3225 = vmax.f32 %v3035, 0.0
      %v3226 = vmax.f32 %v3040, 0.0
      %v3227 = vmax.f32 %v3045, 0.0
      %v3228 = vmax.f32 %v3050, 0.0
      %v3229 = vmax.f32 %v3055, 0.0
      %v3230 = vmax.f32 %v3060, 0.0
      %v3231 = vmax.f32 %v3065, 0.0
      %v3232 = vmax.f32 %v3070, 0.0
      %v3233 = vmax.f32 %v3075, 0.0
      %v3234 = vmax.f32 %v3080, 0.0
      %v3235 = vmax.f32 %v3085, 0.0
      %v3236 = vmax.f32 %v3090, 0.0
      %v3237 = vmax.f32 %v3095, 0.0
      %v3238 = vmax.f32 %v3100, 0.0
      %v3239 = vmax.f32 %v3105, 0.0
      %v3240 = vmax.f32 %v3110, 0.0
      %v3241 = vmax.f32 %v3115, 0.0
      %v3242 = vmax.f32 %v3120, 0.0
      %v3243 = vmax.f32 %v3125, 0.0
      %v3244 = vmax.f32 %v3130, 0.0
      %v3245 = vmax.f32 %v3135, 0.0
      %v3246 = vmax.f32 %v3140, 0.0
      %v3247 = vmax.f32 %v3145, 0.0
      %v3248 = vmax.f32 %v3150, 0.0
      %v3249 = vmax.f32 %v3155, 0.0
      %v3250 = vmax.f32 %v3160, 0.0
      %v3251 = vmax.f32 %v3165, 0.0
      %v3252 = vmax.f32 %v3170, 0.0
      %v3253 = vmax.f32 %v3175, 0.0
      %v3254 = vmax.f32 %v3180, 0.0
      %v3255 = vmax.f32 %v3185, 0.0
      %v3256 = vmax.f32 %v3190, 0.0
      %v3257 = vmax.f32 %v3195, 0.0
      %v3258 = vmax.f32 %v3200, 0.0
      %v3259 = vmax.f32 %v3205, 0.0
      %v3260 = vmax.f32 %v3210, 0.0
      %v3261 = vld [vmem:[%s1] sm:$0xff]
      %v3262 = vld [vmem:[%s1 + $0x8] sm:$0xff]
      %v3263 = vld [vmem:[%s1 + $0x10] sm:$0xff]
      %v3264 = vld [vmem:[%s1 + $0x18] sm:$0xff]
      %v3265 = vld [vmem:[%s1 + $0x20] sm:$0xff]
      %v3266 = vld [vmem:[%s1 + $0x28] sm:$0xff]
      %v3267 = vld [vmem:[%s1 + $0x30] sm:$0xff]
      %v3268 = vld [vmem:[%s1 + $0x38] sm:$0xff]
      %v3269 = vld [vmem:[%s1 + $0x40] sm:$0xff]
      %v3270 = vld [vmem:[%s1 + $0x48] sm:$0xff]
      %v3271 = vld [vmem:[%s1 + $0x50] sm:$0xff]
      %v3272 = vld [vmem:[%s1 + $0x58] sm:$0xff]
      %v3273 = vld [vmem:[%s1 + $0x60] sm:$0xff]
      %v3274 = vld [vmem:[%s1 + $0x68] sm:$0xff]
      %v3275 = vld [vmem:[%s1 + $0x70] sm:$0xff]
      %v3276 = vld [vmem:[%s1 + $0x78] sm:$0xff]
      %v3277 = vld [vmem:[%s1 + $0x80] sm:$0xff]
      %v3278 = vld [vmem:[%s1 + $0x88] sm:$0xff]
      %v3279 = vld [vmem:[%s1 + $0x90] sm:$0xff]
      %v3280 = vld [vmem:[%s1 + $0x98] sm:$0xff]
      %v3281 = vld [vmem:[%s1 + $0xa0] sm:$0xff]
      %v3282 = vld [vmem:[%s1 + $0xa8] sm:$0xff]
      %v3283 = vld [vmem:[%s1 + $0xb0] sm:$0xff]
      %v3284 = vld [vmem:[%s1 + $0xb8] sm:$0xff]
      %v3285 = vld [vmem:[%s1 + $0xc0] sm:$0xff]
      %v3286 = vld [vmem:[%s1 + $0xc8] sm:$0xff]
      %v3287 = vld [vmem:[%s1 + $0xd0] sm:$0xff]
      %v3288 = vld [vmem:[%s1 + $0xd8] sm:$0xff]
      %v3289 = vld [vmem:[%s1 + $0xe0] sm:$0xff]
      %v3290 = vld [vmem:[%s1 + $0xe8] sm:$0xff]
      %v3291 = vld [vmem:[%s1 + $0xf0] sm:$0xff]
      %v3292 = vld [vmem:[%s1 + $0xf8] sm:$0xff]
      %v3293 = vld [vmem:[%s1 + $0x100] sm:$0xff]
      %v3294 = vld [vmem:[%s1 + $0x108] sm:$0xff]
      %v3295 = vld [vmem:[%s1 + $0x110] sm:$0xff]
      %v3296 = vld [vmem:[%s1 + $0x118] sm:$0xff]
      %v3297 = vld [vmem:[%s1 + $0x120] sm:$0xff]
      %v3298 = vld [vmem:[%s1 + $0x128] sm:$0xff]
      %v3299 = vld [vmem:[%s1 + $0x130] sm:$0xff]
      %v3300 = vld [vmem:[%s1 + $0x138] sm:$0xff]
      %v3301 = vld [vmem:[%s1 + $0x140] sm:$0xff]
      %v3302 = vld [vmem:[%s1 + $0x148] sm:$0xff]
      %v3303 = vld [vmem:[%s1 + $0x150] sm:$0xff]
      %v3304 = vld [vmem:[%s1 + $0x158] sm:$0xff]
      %v3305 = vld [vmem:[%s1 + $0x160] sm:$0xff]
      %v3306 = vld [vmem:[%s1 + $0x168] sm:$0xff]
      %v3307 = vld [vmem:[%s1 + $0x170] sm:$0xff]
      %v3308 = vld [vmem:[%s1 + $0x178] sm:$0xff]
      %3310 = vset.pattern.permute.xlu0 0
      %3311 = vperm.xlu0 %3310, %v3261
      %v3312 = vpop.permute.xlu0 %3311
      %3315 = vset.pattern.permute.xlu0 0
      %3316 = vperm.xlu0 %3315, %v3262
      %v3317 = vpop.permute.xlu0 %3316
      %3320 = vset.pattern.permute.xlu0 0
      %3321 = vperm.xlu0 %3320, %v3263
      %v3322 = vpop.permute.xlu0 %3321
      %3325 = vset.pattern.permute.xlu0 0
      %3326 = vperm.xlu0 %3325, %v3264
      %v3327 = vpop.permute.xlu0 %3326
      %3330 = vset.pattern.permute.xlu0 0
      %3331 = vperm.xlu0 %3330, %v3265
      %v3332 = vpop.permute.xlu0 %3331
      %3335 = vset.pattern.permute.xlu0 0
      %3336 = vperm.xlu0 %3335, %v3266
      %v3337 = vpop.permute.xlu0 %3336
      %3340 = vset.pattern.permute.xlu0 0
      %3341 = vperm.xlu0 %3340, %v3267
      %v3342 = vpop.permute.xlu0 %3341
      %3345 = vset.pattern.permute.xlu0 0
      %3346 = vperm.xlu0 %3345, %v3268
      %v3347 = vpop.permute.xlu0 %3346
      %3350 = vset.pattern.permute.xlu0 0
      %3351 = vperm.xlu0 %3350, %v3269
      %v3352 = vpop.permute.xlu0 %3351
      %3355 = vset.pattern.permute.xlu0 0
      %3356 = vperm.xlu0 %3355, %v3270
      %v3357 = vpop.permute.xlu0 %3356
      %3360 = vset.pattern.permute.xlu0 0
      %3361 = vperm.xlu0 %3360, %v3271
      %v3362 = vpop.permute.xlu0 %3361
      %3365 = vset.pattern.permute.xlu0 0
      %3366 = vperm.xlu0 %3365, %v3272
      %v3367 = vpop.permute.xlu0 %3366
      %3370 = vset.pattern.permute.xlu0 0
      %3371 = vperm.xlu0 %3370, %v3273
      %v3372 = vpop.permute.xlu0 %3371
      %3375 = vset.pattern.permute.xlu0 0
      %3376 = vperm.xlu0 %3375, %v3274
      %v3377 = vpop.permute.xlu0 %3376
      %3380 = vset.pattern.permute.xlu0 0
      %3381 = vperm.xlu0 %3380, %v3275
      %v3382 = vpop.permute.xlu0 %3381
      %3385 = vset.pattern.permute.xlu0 0
      %3386 = vperm.xlu0 %3385, %v3276
      %v3387 = vpop.permute.xlu0 %3386
      %3390 = vset.pattern.permute.xlu0 0
      %3391 = vperm.xlu0 %3390, %v3277
      %v3392 = vpop.permute.xlu0 %3391
      %3395 = vset.pattern.permute.xlu0 0
      %3396 = vperm.xlu0 %3395, %v3278
      %v3397 = vpop.permute.xlu0 %3396
      %3400 = vset.pattern.permute.xlu0 0
      %3401 = vperm.xlu0 %3400, %v3279
      %v3402 = vpop.permute.xlu0 %3401
      %3405 = vset.pattern.permute.xlu0 0
      %3406 = vperm.xlu0 %3405, %v3280
      %v3407 = vpop.permute.xlu0 %3406
      %3410 = vset.pattern.permute.xlu0 0
      %3411 = vperm.xlu0 %3410, %v3281
      %v3412 = vpop.permute.xlu0 %3411
      %3415 = vset.pattern.permute.xlu0 0
      %3416 = vperm.xlu0 %3415, %v3282
      %v3417 = vpop.permute.xlu0 %3416
      %3420 = vset.pattern.permute.xlu0 0
      %3421 = vperm.xlu0 %3420, %v3283
      %v3422 = vpop.permute.xlu0 %3421
      %3425 = vset.pattern.permute.xlu0 0
      %3426 = vperm.xlu0 %3425, %v3284
      %v3427 = vpop.permute.xlu0 %3426
      %3430 = vset.pattern.permute.xlu0 0
      %3431 = vperm.xlu0 %3430, %v3285
      %v3432 = vpop.permute.xlu0 %3431
      %3435 = vset.pattern.permute.xlu0 0
      %3436 = vperm.xlu0 %3435, %v3286
      %v3437 = vpop.permute.xlu0 %3436
      %3440 = vset.pattern.permute.xlu0 0
      %3441 = vperm.xlu0 %3440, %v3287
      %v3442 = vpop.permute.xlu0 %3441
      %3445 = vset.pattern.permute.xlu0 0
      %3446 = vperm.xlu0 %3445, %v3288
      %v3447 = vpop.permute.xlu0 %3446
      %3450 = vset.pattern.permute.xlu0 0
      %3451 = vperm.xlu0 %3450, %v3289
      %v3452 = vpop.permute.xlu0 %3451
      %3455 = vset.pattern.permute.xlu0 0
      %3456 = vperm.xlu0 %3455, %v3290
      %v3457 = vpop.permute.xlu0 %3456
      %3460 = vset.pattern.permute.xlu0 0
      %3461 = vperm.xlu0 %3460, %v3291
      %v3462 = vpop.permute.xlu0 %3461
      %3465 = vset.pattern.permute.xlu0 0
      %3466 = vperm.xlu0 %3465, %v3292
      %v3467 = vpop.permute.xlu0 %3466
      %3470 = vset.pattern.permute.xlu0 0
      %3471 = vperm.xlu0 %3470, %v3293
      %v3472 = vpop.permute.xlu0 %3471
      %3475 = vset.pattern.permute.xlu0 0
      %3476 = vperm.xlu0 %3475, %v3294
      %v3477 = vpop.permute.xlu0 %3476
      %3480 = vset.pattern.permute.xlu0 0
      %3481 = vperm.xlu0 %3480, %v3295
      %v3482 = vpop.permute.xlu0 %3481
      %3485 = vset.pattern.permute.xlu0 0
      %3486 = vperm.xlu0 %3485, %v3296
      %v3487 = vpop.permute.xlu0 %3486
      %3490 = vset.pattern.permute.xlu0 0
      %3491 = vperm.xlu0 %3490, %v3297
      %v3492 = vpop.permute.xlu0 %3491
      %3495 = vset.pattern.permute.xlu0 0
      %3496 = vperm.xlu0 %3495, %v3298
      %v3497 = vpop.permute.xlu0 %3496
      %3500 = vset.pattern.permute.xlu0 0
      %3501 = vperm.xlu0 %3500, %v3299
      %v3502 = vpop.permute.xlu0 %3501
      %3505 = vset.pattern.permute.xlu0 0
      %3506 = vperm.xlu0 %3505, %v3300
      %v3507 = vpop.permute.xlu0 %3506
      %3510 = vset.pattern.permute.xlu0 0
      %3511 = vperm.xlu0 %3510, %v3301
      %v3512 = vpop.permute.xlu0 %3511
      %3515 = vset.pattern.permute.xlu0 0
      %3516 = vperm.xlu0 %3515, %v3302
      %v3517 = vpop.permute.xlu0 %3516
      %3520 = vset.pattern.permute.xlu0 0
      %3521 = vperm.xlu0 %3520, %v3303
      %v3522 = vpop.permute.xlu0 %3521
      %3525 = vset.pattern.permute.xlu0 0
      %3526 = vperm.xlu0 %3525, %v3304
      %v3527 = vpop.permute.xlu0 %3526
      %3530 = vset.pattern.permute.xlu0 0
      %3531 = vperm.xlu0 %3530, %v3305
      %v3532 = vpop.permute.xlu0 %3531
      %3535 = vset.pattern.permute.xlu0 0
      %3536 = vperm.xlu0 %3535, %v3306
      %v3537 = vpop.permute.xlu0 %3536
      %3540 = vset.pattern.permute.xlu0 0
      %3541 = vperm.xlu0 %3540, %v3307
      %v3542 = vpop.permute.xlu0 %3541
      %3545 = vset.pattern.permute.xlu0 0
      %3546 = vperm.xlu0 %3545, %v3308
      %v3547 = vpop.permute.xlu0 %3546
      %v3549 = vmul.f32 %v3213, %v3312
      %v3550 = vmul.f32 %v3214, %v3317
      %v3551 = vmul.f32 %v3215, %v3322
      %v3552 = vmul.f32 %v3216, %v3327
      %v3553 = vmul.f32 %v3217, %v3332
      %v3554 = vmul.f32 %v3218, %v3337
      %v3555 = vmul.f32 %v3219, %v3342
      %v3556 = vmul.f32 %v3220, %v3347
      %v3557 = vmul.f32 %v3221, %v3352
      %v3558 = vmul.f32 %v3222, %v3357
      %v3559 = vmul.f32 %v3223, %v3362
      %v3560 = vmul.f32 %v3224, %v3367
      %v3561 = vmul.f32 %v3225, %v3372
      %v3562 = vmul.f32 %v3226, %v3377
      %v3563 = vmul.f32 %v3227, %v3382
      %v3564 = vmul.f32 %v3228, %v3387
      %v3565 = vmul.f32 %v3229, %v3392
      %v3566 = vmul.f32 %v3230, %v3397
      %v3567 = vmul.f32 %v3231, %v3402
      %v3568 = vmul.f32 %v3232, %v3407
      %v3569 = vmul.f32 %v3233, %v3412
      %v3570 = vmul.f32 %v3234, %v3417
      %v3571 = vmul.f32 %v3235, %v3422
      %v3572 = vmul.f32 %v3236, %v3427
      %v3573 = vmul.f32 %v3237, %v3432
      %v3574 = vmul.f32 %v3238, %v3437
      %v3575 = vmul.f32 %v3239, %v3442
      %v3576 = vmul.f32 %v3240, %v3447
      %v3577 = vmul.f32 %v3241, %v3452
      %v3578 = vmul.f32 %v3242, %v3457
      %v3579 = vmul.f32 %v3243, %v3462
      %v3580 = vmul.f32 %v3244, %v3467
      %v3581 = vmul.f32 %v3245, %v3472
      %v3582 = vmul.f32 %v3246, %v3477
      %v3583 = vmul.f32 %v3247, %v3482
      %v3584 = vmul.f32 %v3248, %v3487
      %v3585 = vmul.f32 %v3249, %v3492
      %v3586 = vmul.f32 %v3250, %v3497
      %v3587 = vmul.f32 %v3251, %v3502
      %v3588 = vmul.f32 %v3252, %v3507
      %v3589 = vmul.f32 %v3253, %v3512
      %v3590 = vmul.f32 %v3254, %v3517
      %v3591 = vmul.f32 %v3255, %v3522
      %v3592 = vmul.f32 %v3256, %v3527
      %v3593 = vmul.f32 %v3257, %v3532
      %v3594 = vmul.f32 %v3258, %v3537
      %v3595 = vmul.f32 %v3259, %v3542
      %v3596 = vmul.f32 %v3260, %v3547
      %vm3643 = vcmask 1040384
      %v3644 = vrot.slane 0.0, 7
      %v3645 = vsel %vm3643, %v3644, %v3644
      %v3646 = vrot.slane %v3549, 7
      %v3647 = vsel %vm3643, %v3644, %v3646
      %v3648 = vrot.slane %v3550, 7
      %v3649 = vsel %vm3643, %v3646, %v3648
      %v3650 = vrot.slane %v3551, 7
      %v3651 = vsel %vm3643, %v3648, %v3650
      %v3652 = vrot.slane %v3552, 7
      %v3653 = vsel %vm3643, %v3650, %v3652
      %v3654 = vrot.slane %v3553, 7
      %v3655 = vsel %vm3643, %v3652, %v3654
      %v3656 = vrot.slane %v3554, 7
      %v3657 = vsel %vm3643, %v3654, %v3656
      %v3658 = vrot.slane %v3555, 7
      %v3659 = vsel %vm3643, %v3656, %v3658
      %v3660 = vrot.slane %v3556, 7
      %v3661 = vsel %vm3643, %v3658, %v3660
      %v3662 = vrot.slane %v3557, 7
      %v3663 = vsel %vm3643, %v3660, %v3662
      %v3664 = vrot.slane %v3558, 7
      %v3665 = vsel %vm3643, %v3662, %v3664
      %v3666 = vrot.slane %v3559, 7
      %v3667 = vsel %vm3643, %v3664, %v3666
      %v3668 = vrot.slane %v3560, 7
      %v3669 = vsel %vm3643, %v3666, %v3668
      %v3670 = vrot.slane %v3561, 7
      %v3671 = vsel %vm3643, %v3668, %v3670
      %v3672 = vrot.slane %v3562, 7
      %v3673 = vsel %vm3643, %v3670, %v3672
      %v3674 = vrot.slane %v3563, 7
      %v3675 = vsel %vm3643, %v3672, %v3674
      %v3676 = vrot.slane %v3564, 7
      %v3677 = vsel %vm3643, %v3674, %v3676
      %v3678 = vrot.slane %v3565, 7
      %v3679 = vsel %vm3643, %v3676, %v3678
      %v3680 = vrot.slane %v3566, 7
      %v3681 = vsel %vm3643, %v3678, %v3680
      %v3682 = vrot.slane %v3567, 7
      %v3683 = vsel %vm3643, %v3680, %v3682
      %v3684 = vrot.slane %v3568, 7
      %v3685 = vsel %vm3643, %v3682, %v3684
      %v3686 = vrot.slane %v3569, 7
      %v3687 = vsel %vm3643, %v3684, %v3686
      %v3688 = vrot.slane %v3570, 7
      %v3689 = vsel %vm3643, %v3686, %v3688
      %v3690 = vrot.slane %v3571, 7
      %v3691 = vsel %vm3643, %v3688, %v3690
      %v3692 = vrot.slane %v3572, 7
      %v3693 = vsel %vm3643, %v3690, %v3692
      %v3694 = vrot.slane %v3573, 7
      %v3695 = vsel %vm3643, %v3692, %v3694
      %v3696 = vrot.slane %v3574, 7
      %v3697 = vsel %vm3643, %v3694, %v3696
      %v3698 = vrot.slane %v3575, 7
      %v3699 = vsel %vm3643, %v3696, %v3698
      %v3700 = vrot.slane %v3576, 7
      %v3701 = vsel %vm3643, %v3698, %v3700
      %v3702 = vrot.slane %v3577, 7
      %v3703 = vsel %vm3643, %v3700, %v3702
      %v3704 = vrot.slane %v3578, 7
      %v3705 = vsel %vm3643, %v3702, %v3704
      %v3706 = vrot.slane %v3579, 7
      %v3707 = vsel %vm3643, %v3704, %v3706
      %v3708 = vrot.slane %v3580, 7
      %v3709 = vsel %vm3643, %v3706, %v3708
      %v3710 = vrot.slane %v3581, 7
      %v3711 = vsel %vm3643, %v3708, %v3710
      %v3712 = vrot.slane %v3582, 7
      %v3713 = vsel %vm3643, %v3710, %v3712
      %v3714 = vrot.slane %v3583, 7
      %v3715 = vsel %vm3643, %v3712, %v3714
      %v3716 = vrot.slane %v3584, 7
      %v3717 = vsel %vm3643, %v3714, %v3716
      %v3718 = vrot.slane %v3585, 7
      %v3719 = vsel %vm3643, %v3716, %v3718
      %v3720 = vrot.slane %v3586, 7
      %v3721 = vsel %vm3643, %v3718, %v3720
      %v3722 = vrot.slane %v3587, 7
      %v3723 = vsel %vm3643, %v3720, %v3722
      %v3724 = vrot.slane %v3588, 7
      %v3725 = vsel %vm3643, %v3722, %v3724
      %v3726 = vrot.slane %v3589, 7
      %v3727 = vsel %vm3643, %v3724, %v3726
      %v3728 = vrot.slane %v3590, 7
      %v3729 = vsel %vm3643, %v3726, %v3728
      %v3730 = vrot.slane %v3591, 7
      %v3731 = vsel %vm3643, %v3728, %v3730
      %v3732 = vrot.slane %v3592, 7
      %v3733 = vsel %vm3643, %v3730, %v3732
      %v3734 = vrot.slane %v3593, 7
      %v3735 = vsel %vm3643, %v3732, %v3734
      %3782 = vst.msk [vmem:[#allocation2] sm:$0xff] %vm300, %v3645
      %3783 = vst.msk [vmem:[#allocation2 + $0x18] sm:$0xff] %vm300, %v3645
      %3784 = vst.msk [vmem:[#allocation2 + $0x30] sm:$0xff] %vm300, %v3645
      %3785 = vst.msk [vmem:[#allocation2 + $0x48] sm:$0xff] %vm300, %v3647
      %3786 = vst.msk [vmem:[#allocation2 + $0x60] sm:$0xff] %vm300, %v3649
      %3787 = vst.msk [vmem:[#allocation2 + $0x78] sm:$0xff] %vm300, %v3651
      %3788 = vst.msk [vmem:[#allocation2 + $0x90] sm:$0xff] %vm300, %v3653
      %3789 = vst.msk [vmem:[#allocation2 + $0xa8] sm:$0xff] %vm300, %v3655
      %3790 = vst.msk [vmem:[#allocation2 + $0xc0] sm:$0xff] %vm300, %v3657
      %3791 = vst.msk [vmem:[#allocation2 + $0xd8] sm:$0xff] %vm300, %v3659
      %3792 = vst.msk [vmem:[#allocation2 + $0xf0] sm:$0xff] %vm300, %v3661
      %3793 = vst.msk [vmem:[#allocation2 + $0x108] sm:$0xff] %vm300, %v3663
      %3794 = vst.msk [vmem:[#allocation2 + $0x120] sm:$0xff] %vm300, %v3665
      %3795 = vst.msk [vmem:[#allocation2 + $0x138] sm:$0xff] %vm300, %v3667
      %3796 = vst.msk [vmem:[#allocation2 + $0x150] sm:$0xff] %vm300, %v3669
      %3797 = vst.msk [vmem:[#allocation2 + $0x168] sm:$0xff] %vm300, %v3671
      %3798 = vst.msk [vmem:[#allocation2 + $0x180] sm:$0xff] %vm300, %v3673
      %3799 = vst.msk [vmem:[#allocation2 + $0x198] sm:$0xff] %vm300, %v3675
      %3800 = vst.msk [vmem:[#allocation2 + $0x1b0] sm:$0xff] %vm300, %v3677
      %3801 = vst.msk [vmem:[#allocation2 + $0x1c8] sm:$0xff] %vm300, %v3679
      %3802 = vst.msk [vmem:[#allocation2 + $0x1e0] sm:$0xff] %vm300, %v3681
      %3803 = vst.msk [vmem:[#allocation2 + $0x1f8] sm:$0xff] %vm300, %v3683
      %3804 = vst.msk [vmem:[#allocation2 + $0x210] sm:$0xff] %vm300, %v3685
      %3805 = vst.msk [vmem:[#allocation2 + $0x228] sm:$0xff] %vm300, %v3687
      %3806 = vst.msk [vmem:[#allocation2 + $0x240] sm:$0xff] %vm300, %v3689
      %3807 = vst.msk [vmem:[#allocation2 + $0x258] sm:$0xff] %vm300, %v3691
      %3808 = vst.msk [vmem:[#allocation2 + $0x270] sm:$0xff] %vm300, %v3693
      %3809 = vst.msk [vmem:[#allocation2 + $0x288] sm:$0xff] %vm300, %v3695
      %3810 = vst.msk [vmem:[#allocation2 + $0x2a0] sm:$0xff] %vm300, %v3697
      %3811 = vst.msk [vmem:[#allocation2 + $0x2b8] sm:$0xff] %vm300, %v3699
      %3812 = vst.msk [vmem:[#allocation2 + $0x2d0] sm:$0xff] %vm300, %v3701
      %3813 = vst.msk [vmem:[#allocation2 + $0x2e8] sm:$0xff] %vm300, %v3703
      %3814 = vst.msk [vmem:[#allocation2 + $0x300] sm:$0xff] %vm300, %v3705
      %3815 = vst.msk [vmem:[#allocation2 + $0x318] sm:$0xff] %vm300, %v3707
      %3816 = vst.msk [vmem:[#allocation2 + $0x330] sm:$0xff] %vm300, %v3709
      %3817 = vst.msk [vmem:[#allocation2 + $0x348] sm:$0xff] %vm300, %v3711
      %3818 = vst.msk [vmem:[#allocation2 + $0x360] sm:$0xff] %vm300, %v3713
      %3819 = vst.msk [vmem:[#allocation2 + $0x378] sm:$0xff] %vm300, %v3715
      %3820 = vst.msk [vmem:[#allocation2 + $0x390] sm:$0xff] %vm300, %v3717
      %3821 = vst.msk [vmem:[#allocation2 + $0x3a8] sm:$0xff] %vm300, %v3719
      %3822 = vst.msk [vmem:[#allocation2 + $0x3c0] sm:$0xff] %vm300, %v3721
      %3823 = vst.msk [vmem:[#allocation2 + $0x3d8] sm:$0xff] %vm300, %v3723
      %3824 = vst.msk [vmem:[#allocation2 + $0x3f0] sm:$0xff] %vm300, %v3725
      %3825 = vst.msk [vmem:[#allocation2 + $0x408] sm:$0xff] %vm300, %v3727
      %3826 = vst.msk [vmem:[#allocation2 + $0x420] sm:$0xff] %vm300, %v3729
      %3827 = vst.msk [vmem:[#allocation2 + $0x438] sm:$0xff] %vm300, %v3731
      %3828 = vst.msk [vmem:[#allocation2 + $0x450] sm:$0xff] %vm300, %v3733
      %3829 = vst.msk [vmem:[#allocation2 + $0x468] sm:$0xff] %vm300, %v3735
      %3830 = vrot.lane.b32.xlu0 0.0, 32
      %v3831 = vpop.permute.xlu0 %3830
      %3832 = vrot.lane.b32.xlu0 %v3549, 32
      %v3833 = vpop.permute.xlu0 %3832
      %3834 = vrot.lane.b32.xlu0 %v3550, 32
      %v3835 = vpop.permute.xlu0 %3834
      %3836 = vrot.lane.b32.xlu0 %v3551, 32
      %v3837 = vpop.permute.xlu0 %3836
      %3838 = vrot.lane.b32.xlu0 %v3552, 32
      %v3839 = vpop.permute.xlu0 %3838
      %3840 = vrot.lane.b32.xlu0 %v3553, 32
      %v3841 = vpop.permute.xlu0 %3840
      %3842 = vrot.lane.b32.xlu0 %v3554, 32
      %v3843 = vpop.permute.xlu0 %3842
      %3844 = vrot.lane.b32.xlu0 %v3555, 32
      %v3845 = vpop.permute.xlu0 %3844
      %3846 = vrot.lane.b32.xlu0 %v3556, 32
      %v3847 = vpop.permute.xlu0 %3846
      %3848 = vrot.lane.b32.xlu0 %v3557, 32
      %v3849 = vpop.permute.xlu0 %3848
      %3850 = vrot.lane.b32.xlu0 %v3558, 32
      %v3851 = vpop.permute.xlu0 %3850
      %3852 = vrot.lane.b32.xlu0 %v3559, 32
      %v3853 = vpop.permute.xlu0 %3852
      %3854 = vrot.lane.b32.xlu0 %v3560, 32
      %v3855 = vpop.permute.xlu0 %3854
      %3856 = vrot.lane.b32.xlu0 %v3561, 32
      %v3857 = vpop.permute.xlu0 %3856
      %3858 = vrot.lane.b32.xlu0 %v3562, 32
      %v3859 = vpop.permute.xlu0 %3858
      %3860 = vrot.lane.b32.xlu0 %v3563, 32
      %v3861 = vpop.permute.xlu0 %3860
      %3862 = vrot.lane.b32.xlu0 %v3564, 32
      %v3863 = vpop.permute.xlu0 %3862
      %3864 = vrot.lane.b32.xlu0 %v3565, 32
      %v3865 = vpop.permute.xlu0 %3864
      %3866 = vrot.lane.b32.xlu0 %v3566, 32
      %v3867 = vpop.permute.xlu0 %3866
      %3868 = vrot.lane.b32.xlu0 %v3567, 32
      %v3869 = vpop.permute.xlu0 %3868
      %3870 = vrot.lane.b32.xlu0 %v3568, 32
      %v3871 = vpop.permute.xlu0 %3870
      %3872 = vrot.lane.b32.xlu0 %v3569, 32
      %v3873 = vpop.permute.xlu0 %3872
      %3874 = vrot.lane.b32.xlu0 %v3570, 32
      %v3875 = vpop.permute.xlu0 %3874
      %3876 = vrot.lane.b32.xlu0 %v3571, 32
      %v3877 = vpop.permute.xlu0 %3876
      %3878 = vrot.lane.b32.xlu0 %v3572, 32
      %v3879 = vpop.permute.xlu0 %3878
      %3880 = vrot.lane.b32.xlu0 %v3573, 32
      %v3881 = vpop.permute.xlu0 %3880
      %3882 = vrot.lane.b32.xlu0 %v3574, 32
      %v3883 = vpop.permute.xlu0 %3882
      %3884 = vrot.lane.b32.xlu0 %v3575, 32
      %v3885 = vpop.permute.xlu0 %3884
      %3886 = vrot.lane.b32.xlu0 %v3576, 32
      %v3887 = vpop.permute.xlu0 %3886
      %3888 = vrot.lane.b32.xlu0 %v3577, 32
      %v3889 = vpop.permute.xlu0 %3888
      %3890 = vrot.lane.b32.xlu0 %v3578, 32
      %v3891 = vpop.permute.xlu0 %3890
      %3892 = vrot.lane.b32.xlu0 %v3579, 32
      %v3893 = vpop.permute.xlu0 %3892
      %3894 = vrot.lane.b32.xlu0 %v3580, 32
      %v3895 = vpop.permute.xlu0 %3894
      %3896 = vrot.lane.b32.xlu0 %v3581, 32
      %v3897 = vpop.permute.xlu0 %3896
      %3898 = vrot.lane.b32.xlu0 %v3582, 32
      %v3899 = vpop.permute.xlu0 %3898
      %3900 = vrot.lane.b32.xlu0 %v3583, 32
      %v3901 = vpop.permute.xlu0 %3900
      %3902 = vrot.lane.b32.xlu0 %v3584, 32
      %v3903 = vpop.permute.xlu0 %3902
      %3904 = vrot.lane.b32.xlu0 %v3585, 32
      %v3905 = vpop.permute.xlu0 %3904
      %3906 = vrot.lane.b32.xlu0 %v3586, 32
      %v3907 = vpop.permute.xlu0 %3906
      %3908 = vrot.lane.b32.xlu0 %v3587, 32
      %v3909 = vpop.permute.xlu0 %3908
      %3910 = vrot.lane.b32.xlu0 %v3588, 32
      %v3911 = vpop.permute.xlu0 %3910
      %3912 = vrot.lane.b32.xlu0 %v3589, 32
      %v3913 = vpop.permute.xlu0 %3912
      %3914 = vrot.lane.b32.xlu0 %v3590, 32
      %v3915 = vpop.permute.xlu0 %3914
      %3916 = vrot.lane.b32.xlu0 %v3591, 32
      %v3917 = vpop.permute.xlu0 %3916
      %3918 = vrot.lane.b32.xlu0 %v3592, 32
      %v3919 = vpop.permute.xlu0 %3918
      %3920 = vrot.lane.b32.xlu0 %v3593, 32
      %v3921 = vpop.permute.xlu0 %3920
      %3968 = vst.msk [vmem:[#allocation2] sm:$0xff] %vm589, %v3831
      %3969 = vst.msk [vmem:[#allocation2 + $0x18] sm:$0xff] %vm589, %v3831
      %3970 = vst.msk [vmem:[#allocation2 + $0x30] sm:$0xff] %vm589, %v3831
      %3971 = vst.msk [vmem:[#allocation2 + $0x48] sm:$0xff] %vm589, %v3833
      %3972 = vst.msk [vmem:[#allocation2 + $0x60] sm:$0xff] %vm589, %v3835
      %3973 = vst.msk [vmem:[#allocation2 + $0x78] sm:$0xff] %vm589, %v3837
      %3974 = vst.msk [vmem:[#allocation2 + $0x90] sm:$0xff] %vm589, %v3839
      %3975 = vst.msk [vmem:[#allocation2 + $0xa8] sm:$0xff] %vm589, %v3841
      %3976 = vst.msk [vmem:[#allocation2 + $0xc0] sm:$0xff] %vm589, %v3843
      %3977 = vst.msk [vmem:[#allocation2 + $0xd8] sm:$0xff] %vm589, %v3845
      %3978 = vst.msk [vmem:[#allocation2 + $0xf0] sm:$0xff] %vm589, %v3847
      %3979 = vst.msk [vmem:[#allocation2 + $0x108] sm:$0xff] %vm589, %v3849
      %3980 = vst.msk [vmem:[#allocation2 + $0x120] sm:$0xff] %vm589, %v3851
      %3981 = vst.msk [vmem:[#allocation2 + $0x138] sm:$0xff] %vm589, %v3853
      %3982 = vst.msk [vmem:[#allocation2 + $0x150] sm:$0xff] %vm589, %v3855
      %3983 = vst.msk [vmem:[#allocation2 + $0x168] sm:$0xff] %vm589, %v3857
      %3984 = vst.msk [vmem:[#allocation2 + $0x180] sm:$0xff] %vm589, %v3859
      %3985 = vst.msk [vmem:[#allocation2 + $0x198] sm:$0xff] %vm589, %v3861
      %3986 = vst.msk [vmem:[#allocation2 + $0x1b0] sm:$0xff] %vm589, %v3863
      %3987 = vst.msk [vmem:[#allocation2 + $0x1c8] sm:$0xff] %vm589, %v3865
      %3988 = vst.msk [vmem:[#allocation2 + $0x1e0] sm:$0xff] %vm589, %v3867
      %3989 = vst.msk [vmem:[#allocation2 + $0x1f8] sm:$0xff] %vm589, %v3869
      %3990 = vst.msk [vmem:[#allocation2 + $0x210] sm:$0xff] %vm589, %v3871
      %3991 = vst.msk [vmem:[#allocation2 + $0x228] sm:$0xff] %vm589, %v3873
      %3992 = vst.msk [vmem:[#allocation2 + $0x240] sm:$0xff] %vm589, %v3875
      %3993 = vst.msk [vmem:[#allocation2 + $0x258] sm:$0xff] %vm589, %v3877
      %3994 = vst.msk [vmem:[#allocation2 + $0x270] sm:$0xff] %vm589, %v3879
      %3995 = vst.msk [vmem:[#allocation2 + $0x288] sm:$0xff] %vm589, %v3881
      %3996 = vst.msk [vmem:[#allocation2 + $0x2a0] sm:$0xff] %vm589, %v3883
      %3997 = vst.msk [vmem:[#allocation2 + $0x2b8] sm:$0xff] %vm589, %v3885
      %3998 = vst.msk [vmem:[#allocation2 + $0x2d0] sm:$0xff] %vm589, %v3887
      %3999 = vst.msk [vmem:[#allocation2 + $0x2e8] sm:$0xff] %vm589, %v3889
      %4000 = vst.msk [vmem:[#allocation2 + $0x300] sm:$0xff] %vm589, %v3891
      %4001 = vst.msk [vmem:[#allocation2 + $0x318] sm:$0xff] %vm589, %v3893
      %4002 = vst.msk [vmem:[#allocation2 + $0x330] sm:$0xff] %vm589, %v3895
      %4003 = vst.msk [vmem:[#allocation2 + $0x348] sm:$0xff] %vm589, %v3897
      %4004 = vst.msk [vmem:[#allocation2 + $0x360] sm:$0xff] %vm589, %v3899
      %4005 = vst.msk [vmem:[#allocation2 + $0x378] sm:$0xff] %vm589, %v3901
      %4006 = vst.msk [vmem:[#allocation2 + $0x390] sm:$0xff] %vm589, %v3903
      %4007 = vst.msk [vmem:[#allocation2 + $0x3a8] sm:$0xff] %vm589, %v3905
      %4008 = vst.msk [vmem:[#allocation2 + $0x3c0] sm:$0xff] %vm589, %v3907
      %4009 = vst.msk [vmem:[#allocation2 + $0x3d8] sm:$0xff] %vm589, %v3909
      %4010 = vst.msk [vmem:[#allocation2 + $0x3f0] sm:$0xff] %vm589, %v3911
      %4011 = vst.msk [vmem:[#allocation2 + $0x408] sm:$0xff] %vm589, %v3913
      %4012 = vst.msk [vmem:[#allocation2 + $0x420] sm:$0xff] %vm589, %v3915
      %4013 = vst.msk [vmem:[#allocation2 + $0x438] sm:$0xff] %vm589, %v3917
      %4014 = vst.msk [vmem:[#allocation2 + $0x450] sm:$0xff] %vm589, %v3919
      %4015 = vst.msk [vmem:[#allocation2 + $0x468] sm:$0xff] %vm589, %v3921
      %vm4017 = vcmask 1046528
      %v4018 = vrot.slane 0.0, 1
      %v4019 = vsel %vm4017, %v4018, %v4018
      %v4020 = vrot.slane %v3549, 1
      %v4021 = vsel %vm4017, %v4018, %v4020
      %v4022 = vrot.slane %v3550, 1
      %v4023 = vsel %vm4017, %v4020, %v4022
      %v4024 = vrot.slane %v3551, 1
      %v4025 = vsel %vm4017, %v4022, %v4024
      %v4026 = vrot.slane %v3552, 1
      %v4027 = vsel %vm4017, %v4024, %v4026
      %v4028 = vrot.slane %v3553, 1
      %v4029 = vsel %vm4017, %v4026, %v4028
      %v4030 = vrot.slane %v3554, 1
      %v4031 = vsel %vm4017, %v4028, %v4030
      %v4032 = vrot.slane %v3555, 1
      %v4033 = vsel %vm4017, %v4030, %v4032
      %v4034 = vrot.slane %v3556, 1
      %v4035 = vsel %vm4017, %v4032, %v4034
      %v4036 = vrot.slane %v3557, 1
      %v4037 = vsel %vm4017, %v4034, %v4036
      %v4038 = vrot.slane %v3558, 1
      %v4039 = vsel %vm4017, %v4036, %v4038
      %v4040 = vrot.slane %v3559, 1
      %v4041 = vsel %vm4017, %v4038, %v4040
      %v4042 = vrot.slane %v3560, 1
      %v4043 = vsel %vm4017, %v4040, %v4042
      %v4044 = vrot.slane %v3561, 1
      %v4045 = vsel %vm4017, %v4042, %v4044
      %v4046 = vrot.slane %v3562, 1
      %v4047 = vsel %vm4017, %v4044, %v4046
      %v4048 = vrot.slane %v3563, 1
      %v4049 = vsel %vm4017, %v4046, %v4048
      %v4050 = vrot.slane %v3564, 1
      %v4051 = vsel %vm4017, %v4048, %v4050
      %v4052 = vrot.slane %v3565, 1
      %v4053 = vsel %vm4017, %v4050, %v4052
      %v4054 = vrot.slane %v3566, 1
      %v4055 = vsel %vm4017, %v4052, %v4054
      %v4056 = vrot.slane %v3567, 1
      %v4057 = vsel %vm4017, %v4054, %v4056
      %v4058 = vrot.slane %v3568, 1
      %v4059 = vsel %vm4017, %v4056, %v4058
      %v4060 = vrot.slane %v3569, 1
      %v4061 = vsel %vm4017, %v4058, %v4060
      %v4062 = vrot.slane %v3570, 1
      %v4063 = vsel %vm4017, %v4060, %v4062
      %v4064 = vrot.slane %v3571, 1
      %v4065 = vsel %vm4017, %v4062, %v4064
      %v4066 = vrot.slane %v3572, 1
      %v4067 = vsel %vm4017, %v4064, %v4066
      %v4068 = vrot.slane %v3573, 1
      %v4069 = vsel %vm4017, %v4066, %v4068
      %v4070 = vrot.slane %v3574, 1
      %v4071 = vsel %vm4017, %v4068, %v4070
      %v4072 = vrot.slane %v3575, 1
      %v4073 = vsel %vm4017, %v4070, %v4072
      %v4074 = vrot.slane %v3576, 1
      %v4075 = vsel %vm4017, %v4072, %v4074
      %v4076 = vrot.slane %v3577, 1
      %v4077 = vsel %vm4017, %v4074, %v4076
      %v4078 = vrot.slane %v3578, 1
      %v4079 = vsel %vm4017, %v4076, %v4078
      %v4080 = vrot.slane %v3579, 1
      %v4081 = vsel %vm4017, %v4078, %v4080
      %v4082 = vrot.slane %v3580, 1
      %v4083 = vsel %vm4017, %v4080, %v4082
      %v4084 = vrot.slane %v3581, 1
      %v4085 = vsel %vm4017, %v4082, %v4084
      %v4086 = vrot.slane %v3582, 1
      %v4087 = vsel %vm4017, %v4084, %v4086
      %v4088 = vrot.slane %v3583, 1
      %v4089 = vsel %vm4017, %v4086, %v4088
      %v4090 = vrot.slane %v3584, 1
      %v4091 = vsel %vm4017, %v4088, %v4090
      %v4092 = vrot.slane %v3585, 1
      %v4093 = vsel %vm4017, %v4090, %v4092
      %v4094 = vrot.slane %v3586, 1
      %v4095 = vsel %vm4017, %v4092, %v4094
      %v4096 = vrot.slane %v3587, 1
      %v4097 = vsel %vm4017, %v4094, %v4096
      %v4098 = vrot.slane %v3588, 1
      %v4099 = vsel %vm4017, %v4096, %v4098
      %v4100 = vrot.slane %v3589, 1
      %v4101 = vsel %vm4017, %v4098, %v4100
      %v4102 = vrot.slane %v3590, 1
      %v4103 = vsel %vm4017, %v4100, %v4102
      %v4104 = vrot.slane %v3591, 1
      %v4105 = vsel %vm4017, %v4102, %v4104
      %v4106 = vrot.slane %v3592, 1
      %v4107 = vsel %vm4017, %v4104, %v4106
      %v4108 = vrot.slane %v3593, 1
      %v4109 = vsel %vm4017, %v4106, %v4108
      %v4110 = vrot.slane %v3594, 1
      %v4111 = vsel %vm4017, %v4108, %v4110
      %4112 = vrot.lane.b32.xlu0 %v4019, 64
      %v4113 = vpop.permute.xlu0 %4112
      %4114 = vrot.lane.b32.xlu0 %v4021, 64
      %v4115 = vpop.permute.xlu0 %4114
      %4116 = vrot.lane.b32.xlu0 %v4023, 64
      %v4117 = vpop.permute.xlu0 %4116
      %4118 = vrot.lane.b32.xlu0 %v4025, 64
      %v4119 = vpop.permute.xlu0 %4118
      %4120 = vrot.lane.b32.xlu0 %v4027, 64
      %v4121 = vpop.permute.xlu0 %4120
      %4122 = vrot.lane.b32.xlu0 %v4029, 64
      %v4123 = vpop.permute.xlu0 %4122
      %4124 = vrot.lane.b32.xlu0 %v4031, 64
      %v4125 = vpop.permute.xlu0 %4124
      %4126 = vrot.lane.b32.xlu0 %v4033, 64
      %v4127 = vpop.permute.xlu0 %4126
      %4128 = vrot.lane.b32.xlu0 %v4035, 64
      %v4129 = vpop.permute.xlu0 %4128
      %4130 = vrot.lane.b32.xlu0 %v4037, 64
      %v4131 = vpop.permute.xlu0 %4130
      %4132 = vrot.lane.b32.xlu0 %v4039, 64
      %v4133 = vpop.permute.xlu0 %4132
      %4134 = vrot.lane.b32.xlu0 %v4041, 64
      %v4135 = vpop.permute.xlu0 %4134
      %4136 = vrot.lane.b32.xlu0 %v4043, 64
      %v4137 = vpop.permute.xlu0 %4136
      %4138 = vrot.lane.b32.xlu0 %v4045, 64
      %v4139 = vpop.permute.xlu0 %4138
      %4140 = vrot.lane.b32.xlu0 %v4047, 64
      %v4141 = vpop.permute.xlu0 %4140
      %4142 = vrot.lane.b32.xlu0 %v4049, 64
      %v4143 = vpop.permute.xlu0 %4142
      %4144 = vrot.lane.b32.xlu0 %v4051, 64
      %v4145 = vpop.permute.xlu0 %4144
      %4146 = vrot.lane.b32.xlu0 %v4053, 64
      %v4147 = vpop.permute.xlu0 %4146
      %4148 = vrot.lane.b32.xlu0 %v4055, 64
      %v4149 = vpop.permute.xlu0 %4148
      %4150 = vrot.lane.b32.xlu0 %v4057, 64
      %v4151 = vpop.permute.xlu0 %4150
      %4152 = vrot.lane.b32.xlu0 %v4059, 64
      %v4153 = vpop.permute.xlu0 %4152
      %4154 = vrot.lane.b32.xlu0 %v4061, 64
      %v4155 = vpop.permute.xlu0 %4154
      %4156 = vrot.lane.b32.xlu0 %v4063, 64
      %v4157 = vpop.permute.xlu0 %4156
      %4158 = vrot.lane.b32.xlu0 %v4065, 64
      %v4159 = vpop.permute.xlu0 %4158
      %4160 = vrot.lane.b32.xlu0 %v4067, 64
      %v4161 = vpop.permute.xlu0 %4160
      %4162 = vrot.lane.b32.xlu0 %v4069, 64
      %v4163 = vpop.permute.xlu0 %4162
      %4164 = vrot.lane.b32.xlu0 %v4071, 64
      %v4165 = vpop.permute.xlu0 %4164
      %4166 = vrot.lane.b32.xlu0 %v4073, 64
      %v4167 = vpop.permute.xlu0 %4166
      %4168 = vrot.lane.b32.xlu0 %v4075, 64
      %v4169 = vpop.permute.xlu0 %4168
      %4170 = vrot.lane.b32.xlu0 %v4077, 64
      %v4171 = vpop.permute.xlu0 %4170
      %4172 = vrot.lane.b32.xlu0 %v4079, 64
      %v4173 = vpop.permute.xlu0 %4172
      %4174 = vrot.lane.b32.xlu0 %v4081, 64
      %v4175 = vpop.permute.xlu0 %4174
      %4176 = vrot.lane.b32.xlu0 %v4083, 64
      %v4177 = vpop.permute.xlu0 %4176
      %4178 = vrot.lane.b32.xlu0 %v4085, 64
      %v4179 = vpop.permute.xlu0 %4178
      %4180 = vrot.lane.b32.xlu0 %v4087, 64
      %v4181 = vpop.permute.xlu0 %4180
      %4182 = vrot.lane.b32.xlu0 %v4089, 64
      %v4183 = vpop.permute.xlu0 %4182
      %4184 = vrot.lane.b32.xlu0 %v4091, 64
      %v4185 = vpop.permute.xlu0 %4184
      %4186 = vrot.lane.b32.xlu0 %v4093, 64
      %v4187 = vpop.permute.xlu0 %4186
      %4188 = vrot.lane.b32.xlu0 %v4095, 64
      %v4189 = vpop.permute.xlu0 %4188
      %4190 = vrot.lane.b32.xlu0 %v4097, 64
      %v4191 = vpop.permute.xlu0 %4190
      %4192 = vrot.lane.b32.xlu0 %v4099, 64
      %v4193 = vpop.permute.xlu0 %4192
      %4194 = vrot.lane.b32.xlu0 %v4101, 64
      %v4195 = vpop.permute.xlu0 %4194
      %4196 = vrot.lane.b32.xlu0 %v4103, 64
      %v4197 = vpop.permute.xlu0 %4196
      %4198 = vrot.lane.b32.xlu0 %v4105, 64
      %v4199 = vpop.permute.xlu0 %4198
      %4200 = vrot.lane.b32.xlu0 %v4107, 64
      %v4201 = vpop.permute.xlu0 %4200
      %4202 = vrot.lane.b32.xlu0 %v4109, 64
      %v4203 = vpop.permute.xlu0 %4202
      %4204 = vrot.lane.b32.xlu0 %v4111, 64
      %v4205 = vpop.permute.xlu0 %4204
      %4253 = vst.msk [vmem:[#allocation2] sm:$0xff] %vm878, %v4113
      %4254 = vst.msk [vmem:[#allocation2 + $0x18] sm:$0xff] %vm878, %v4113
      %4255 = vst.msk [vmem:[#allocation2 + $0x30] sm:$0xff] %vm878, %v4115
      %4256 = vst.msk [vmem:[#allocation2 + $0x48] sm:$0xff] %vm878, %v4117
      %4257 = vst.msk [vmem:[#allocation2 + $0x60] sm:$0xff] %vm878, %v4119
      %4258 = vst.msk [vmem:[#allocation2 + $0x78] sm:$0xff] %vm878, %v4121
      %4259 = vst.msk [vmem:[#allocation2 + $0x90] sm:$0xff] %vm878, %v4123
      %4260 = vst.msk [vmem:[#allocation2 + $0xa8] sm:$0xff] %vm878, %v4125
      %4261 = vst.msk [vmem:[#allocation2 + $0xc0] sm:$0xff] %vm878, %v4127
      %4262 = vst.msk [vmem:[#allocation2 + $0xd8] sm:$0xff] %vm878, %v4129
      %4263 = vst.msk [vmem:[#allocation2 + $0xf0] sm:$0xff] %vm878, %v4131
      %4264 = vst.msk [vmem:[#allocation2 + $0x108] sm:$0xff] %vm878, %v4133
      %4265 = vst.msk [vmem:[#allocation2 + $0x120] sm:$0xff] %vm878, %v4135
      %4266 = vst.msk [vmem:[#allocation2 + $0x138] sm:$0xff] %vm878, %v4137
      %4267 = vst.msk [vmem:[#allocation2 + $0x150] sm:$0xff] %vm878, %v4139
      %4268 = vst.msk [vmem:[#allocation2 + $0x168] sm:$0xff] %vm878, %v4141
      %4269 = vst.msk [vmem:[#allocation2 + $0x180] sm:$0xff] %vm878, %v4143
      %4270 = vst.msk [vmem:[#allocation2 + $0x198] sm:$0xff] %vm878, %v4145
      %4271 = vst.msk [vmem:[#allocation2 + $0x1b0] sm:$0xff] %vm878, %v4147
      %4272 = vst.msk [vmem:[#allocation2 + $0x1c8] sm:$0xff] %vm878, %v4149
      %4273 = vst.msk [vmem:[#allocation2 + $0x1e0] sm:$0xff] %vm878, %v4151
      %4274 = vst.msk [vmem:[#allocation2 + $0x1f8] sm:$0xff] %vm878, %v4153
      %4275 = vst.msk [vmem:[#allocation2 + $0x210] sm:$0xff] %vm878, %v4155
      %4276 = vst.msk [vmem:[#allocation2 + $0x228] sm:$0xff] %vm878, %v4157
      %4277 = vst.msk [vmem:[#allocation2 + $0x240] sm:$0xff] %vm878, %v4159
      %4278 = vst.msk [vmem:[#allocation2 + $0x258] sm:$0xff] %vm878, %v4161
      %4279 = vst.msk [vmem:[#allocation2 + $0x270] sm:$0xff] %vm878, %v4163
      %4280 = vst.msk [vmem:[#allocation2 + $0x288] sm:$0xff] %vm878, %v4165
      %4281 = vst.msk [vmem:[#allocation2 + $0x2a0] sm:$0xff] %vm878, %v4167
      %4282 = vst.msk [vmem:[#allocation2 + $0x2b8] sm:$0xff] %vm878, %v4169
      %4283 = vst.msk [vmem:[#allocation2 + $0x2d0] sm:$0xff] %vm878, %v4171
      %4284 = vst.msk [vmem:[#allocation2 + $0x2e8] sm:$0xff] %vm878, %v4173
      %4285 = vst.msk [vmem:[#allocation2 + $0x300] sm:$0xff] %vm878, %v4175
      %4286 = vst.msk [vmem:[#allocation2 + $0x318] sm:$0xff] %vm878, %v4177
      %4287 = vst.msk [vmem:[#allocation2 + $0x330] sm:$0xff] %vm878, %v4179
      %4288 = vst.msk [vmem:[#allocation2 + $0x348] sm:$0xff] %vm878, %v4181
      %4289 = vst.msk [vmem:[#allocation2 + $0x360] sm:$0xff] %vm878, %v4183
      %4290 = vst.msk [vmem:[#allocation2 + $0x378] sm:$0xff] %vm878, %v4185
      %4291 = vst.msk [vmem:[#allocation2 + $0x390] sm:$0xff] %vm878, %v4187
      %4292 = vst.msk [vmem:[#allocation2 + $0x3a8] sm:$0xff] %vm878, %v4189
      %4293 = vst.msk [vmem:[#allocation2 + $0x3c0] sm:$0xff] %vm878, %v4191
      %4294 = vst.msk [vmem:[#allocation2 + $0x3d8] sm:$0xff] %vm878, %v4193
      %4295 = vst.msk [vmem:[#allocation2 + $0x3f0] sm:$0xff] %vm878, %v4195
      %4296 = vst.msk [vmem:[#allocation2 + $0x408] sm:$0xff] %vm878, %v4197
      %4297 = vst.msk [vmem:[#allocation2 + $0x420] sm:$0xff] %vm878, %v4199
      %4298 = vst.msk [vmem:[#allocation2 + $0x438] sm:$0xff] %vm878, %v4201
      %4299 = vst.msk [vmem:[#allocation2 + $0x450] sm:$0xff] %vm878, %v4203
      %4300 = vst.msk [vmem:[#allocation2 + $0x468] sm:$0xff] %vm878, %v4205
      %v4303 = vrot.slane %v3594, 7
      %v4304 = vsel %vm3643, %v3734, %v4303
      %v4305 = vrot.slane %v3595, 7
      %v4306 = vsel %vm3643, %v4303, %v4305
      %v4307 = vrot.slane %v3596, 7
      %v4308 = vsel %vm3643, %v4305, %v4307
      %4309 = vrot.lane.b32.xlu0 %v3647, 96
      %v4310 = vpop.permute.xlu0 %4309
      %4311 = vrot.lane.b32.xlu0 %v3649, 96
      %v4312 = vpop.permute.xlu0 %4311
      %4313 = vrot.lane.b32.xlu0 %v3651, 96
      %v4314 = vpop.permute.xlu0 %4313
      %4315 = vrot.lane.b32.xlu0 %v3653, 96
      %v4316 = vpop.permute.xlu0 %4315
      %4317 = vrot.lane.b32.xlu0 %v3655, 96
      %v4318 = vpop.permute.xlu0 %4317
      %4319 = vrot.lane.b32.xlu0 %v3657, 96
      %v4320 = vpop.permute.xlu0 %4319
      %4321 = vrot.lane.b32.xlu0 %v3659, 96
      %v4322 = vpop.permute.xlu0 %4321
      %4323 = vrot.lane.b32.xlu0 %v3661, 96
      %v4324 = vpop.permute.xlu0 %4323
      %4325 = vrot.lane.b32.xlu0 %v3663, 96
      %v4326 = vpop.permute.xlu0 %4325
      %4327 = vrot.lane.b32.xlu0 %v3665, 96
      %v4328 = vpop.permute.xlu0 %4327
      %4329 = vrot.lane.b32.xlu0 %v3667, 96
      %v4330 = vpop.permute.xlu0 %4329
      %4331 = vrot.lane.b32.xlu0 %v3669, 96
      %v4332 = vpop.permute.xlu0 %4331
      %4333 = vrot.lane.b32.xlu0 %v3671, 96
      %v4334 = vpop.permute.xlu0 %4333
      %4335 = vrot.lane.b32.xlu0 %v3673, 96
      %v4336 = vpop.permute.xlu0 %4335
      %4337 = vrot.lane.b32.xlu0 %v3675, 96
      %v4338 = vpop.permute.xlu0 %4337
      %4339 = vrot.lane.b32.xlu0 %v3677, 96
      %v4340 = vpop.permute.xlu0 %4339
      %4341 = vrot.lane.b32.xlu0 %v3679, 96
      %v4342 = vpop.permute.xlu0 %4341
      %4343 = vrot.lane.b32.xlu0 %v3681, 96
      %v4344 = vpop.permute.xlu0 %4343
      %4345 = vrot.lane.b32.xlu0 %v3683, 96
      %v4346 = vpop.permute.xlu0 %4345
      %4347 = vrot.lane.b32.xlu0 %v3685, 96
      %v4348 = vpop.permute.xlu0 %4347
      %4349 = vrot.lane.b32.xlu0 %v3687, 96
      %v4350 = vpop.permute.xlu0 %4349
      %4351 = vrot.lane.b32.xlu0 %v3689, 96
      %v4352 = vpop.permute.xlu0 %4351
      %4353 = vrot.lane.b32.xlu0 %v3691, 96
      %v4354 = vpop.permute.xlu0 %4353
      %4355 = vrot.lane.b32.xlu0 %v3693, 96
      %v4356 = vpop.permute.xlu0 %4355
      %4357 = vrot.lane.b32.xlu0 %v3695, 96
      %v4358 = vpop.permute.xlu0 %4357
      %4359 = vrot.lane.b32.xlu0 %v3697, 96
      %v4360 = vpop.permute.xlu0 %4359
      %4361 = vrot.lane.b32.xlu0 %v3699, 96
      %v4362 = vpop.permute.xlu0 %4361
      %4363 = vrot.lane.b32.xlu0 %v3701, 96
      %v4364 = vpop.permute.xlu0 %4363
      %4365 = vrot.lane.b32.xlu0 %v3703, 96
      %v4366 = vpop.permute.xlu0 %4365
      %4367 = vrot.lane.b32.xlu0 %v3705, 96
      %v4368 = vpop.permute.xlu0 %4367
      %4369 = vrot.lane.b32.xlu0 %v3707, 96
      %v4370 = vpop.permute.xlu0 %4369
      %4371 = vrot.lane.b32.xlu0 %v3709, 96
      %v4372 = vpop.permute.xlu0 %4371
      %4373 = vrot.lane.b32.xlu0 %v3711, 96
      %v4374 = vpop.permute.xlu0 %4373
      %4375 = vrot.lane.b32.xlu0 %v3713, 96
      %v4376 = vpop.permute.xlu0 %4375
      %4377 = vrot.lane.b32.xlu0 %v3715, 96
      %v4378 = vpop.permute.xlu0 %4377
      %4379 = vrot.lane.b32.xlu0 %v3717, 96
      %v4380 = vpop.permute.xlu0 %4379
      %4381 = vrot.lane.b32.xlu0 %v3719, 96
      %v4382 = vpop.permute.xlu0 %4381
      %4383 = vrot.lane.b32.xlu0 %v3721, 96
      %v4384 = vpop.permute.xlu0 %4383
      %4385 = vrot.lane.b32.xlu0 %v3723, 96
      %v4386 = vpop.permute.xlu0 %4385
      %4387 = vrot.lane.b32.xlu0 %v3725, 96
      %v4388 = vpop.permute.xlu0 %4387
      %4389 = vrot.lane.b32.xlu0 %v3727, 96
      %v4390 = vpop.permute.xlu0 %4389
      %4391 = vrot.lane.b32.xlu0 %v3729, 96
      %v4392 = vpop.permute.xlu0 %4391
      %4393 = vrot.lane.b32.xlu0 %v3731, 96
      %v4394 = vpop.permute.xlu0 %4393
      %4395 = vrot.lane.b32.xlu0 %v3733, 96
      %v4396 = vpop.permute.xlu0 %4395
      %4397 = vrot.lane.b32.xlu0 %v3735, 96
      %v4398 = vpop.permute.xlu0 %4397
      %4399 = vrot.lane.b32.xlu0 %v4304, 96
      %v4400 = vpop.permute.xlu0 %4399
      %4401 = vrot.lane.b32.xlu0 %v4306, 96
      %v4402 = vpop.permute.xlu0 %4401
      %4403 = vrot.lane.b32.xlu0 %v4308, 96
      %v4404 = vpop.permute.xlu0 %4403
      %4453 = vst.msk [vmem:[#allocation2] sm:$0xff] %vm1167, %v4310
      %4454 = vst.msk [vmem:[#allocation2 + $0x18] sm:$0xff] %vm1167, %v4312
      %4455 = vst.msk [vmem:[#allocation2 + $0x30] sm:$0xff] %vm1167, %v4314
      %4456 = vst.msk [vmem:[#allocation2 + $0x48] sm:$0xff] %vm1167, %v4316
      %4457 = vst.msk [vmem:[#allocation2 + $0x60] sm:$0xff] %vm1167, %v4318
      %4458 = vst.msk [vmem:[#allocation2 + $0x78] sm:$0xff] %vm1167, %v4320
      %4459 = vst.msk [vmem:[#allocation2 + $0x90] sm:$0xff] %vm1167, %v4322
      %4460 = vst.msk [vmem:[#allocation2 + $0xa8] sm:$0xff] %vm1167, %v4324
      %4461 = vst.msk [vmem:[#allocation2 + $0xc0] sm:$0xff] %vm1167, %v4326
      %4462 = vst.msk [vmem:[#allocation2 + $0xd8] sm:$0xff] %vm1167, %v4328
      %4463 = vst.msk [vmem:[#allocation2 + $0xf0] sm:$0xff] %vm1167, %v4330
      %4464 = vst.msk [vmem:[#allocation2 + $0x108] sm:$0xff] %vm1167, %v4332
      %4465 = vst.msk [vmem:[#allocation2 + $0x120] sm:$0xff] %vm1167, %v4334
      %4466 = vst.msk [vmem:[#allocation2 + $0x138] sm:$0xff] %vm1167, %v4336
      %4467 = vst.msk [vmem:[#allocation2 + $0x150] sm:$0xff] %vm1167, %v4338
      %4468 = vst.msk [vmem:[#allocation2 + $0x168] sm:$0xff] %vm1167, %v4340
      %4469 = vst.msk [vmem:[#allocation2 + $0x180] sm:$0xff] %vm1167, %v4342
      %4470 = vst.msk [vmem:[#allocation2 + $0x198] sm:$0xff] %vm1167, %v4344
      %4471 = vst.msk [vmem:[#allocation2 + $0x1b0] sm:$0xff] %vm1167, %v4346
      %4472 = vst.msk [vmem:[#allocation2 + $0x1c8] sm:$0xff] %vm1167, %v4348
      %4473 = vst.msk [vmem:[#allocation2 + $0x1e0] sm:$0xff] %vm1167, %v4350
      %4474 = vst.msk [vmem:[#allocation2 + $0x1f8] sm:$0xff] %vm1167, %v4352
      %4475 = vst.msk [vmem:[#allocation2 + $0x210] sm:$0xff] %vm1167, %v4354
      %4476 = vst.msk [vmem:[#allocation2 + $0x228] sm:$0xff] %vm1167, %v4356
      %4477 = vst.msk [vmem:[#allocation2 + $0x240] sm:$0xff] %vm1167, %v4358
      %4478 = vst.msk [vmem:[#allocation2 + $0x258] sm:$0xff] %vm1167, %v4360
      %4479 = vst.msk [vmem:[#allocation2 + $0x270] sm:$0xff] %vm1167, %v4362
      %4480 = vst.msk [vmem:[#allocation2 + $0x288] sm:$0xff] %vm1167, %v4364
      %4481 = vst.msk [vmem:[#allocation2 + $0x2a0] sm:$0xff] %vm1167, %v4366
      %4482 = vst.msk [vmem:[#allocation2 + $0x2b8] sm:$0xff] %vm1167, %v4368
      %4483 = vst.msk [vmem:[#allocation2 + $0x2d0] sm:$0xff] %vm1167, %v4370
      %4484 = vst.msk [vmem:[#allocation2 + $0x2e8] sm:$0xff] %vm1167, %v4372
      %4485 = vst.msk [vmem:[#allocation2 + $0x300] sm:$0xff] %vm1167, %v4374
      %4486 = vst.msk [vmem:[#allocation2 + $0x318] sm:$0xff] %vm1167, %v4376
      %4487 = vst.msk [vmem:[#allocation2 + $0x330] sm:$0xff] %vm1167, %v4378
      %4488 = vst.msk [vmem:[#allocation2 + $0x348] sm:$0xff] %vm1167, %v4380
      %4489 = vst.msk [vmem:[#allocation2 + $0x360] sm:$0xff] %vm1167, %v4382
      %4490 = vst.msk [vmem:[#allocation2 + $0x378] sm:$0xff] %vm1167, %v4384
      %4491 = vst.msk [vmem:[#allocation2 + $0x390] sm:$0xff] %vm1167, %v4386
      %4492 = vst.msk [vmem:[#allocation2 + $0x3a8] sm:$0xff] %vm1167, %v4388
      %4493 = vst.msk [vmem:[#allocation2 + $0x3c0] sm:$0xff] %vm1167, %v4390
      %4494 = vst.msk [vmem:[#allocation2 + $0x3d8] sm:$0xff] %vm1167, %v4392
      %4495 = vst.msk [vmem:[#allocation2 + $0x3f0] sm:$0xff] %vm1167, %v4394
      %4496 = vst.msk [vmem:[#allocation2 + $0x408] sm:$0xff] %vm1167, %v4396
      %4497 = vst.msk [vmem:[#allocation2 + $0x420] sm:$0xff] %vm1167, %v4398
      %4498 = vst.msk [vmem:[#allocation2 + $0x438] sm:$0xff] %vm1167, %v4400
      %4499 = vst.msk [vmem:[#allocation2 + $0x450] sm:$0xff] %vm1167, %v4402
      %4500 = vst.msk [vmem:[#allocation2 + $0x468] sm:$0xff] %vm1167, %v4404
      %4501 = vst.msk [vmem:[#allocation2 + $0x8] sm:$0xff] %vm300, %v3549
      %4502 = vst.msk [vmem:[#allocation2 + $0x20] sm:$0xff] %vm300, %v3550
      %4503 = vst.msk [vmem:[#allocation2 + $0x38] sm:$0xff] %vm300, %v3551
      %4504 = vst.msk [vmem:[#allocation2 + $0x50] sm:$0xff] %vm300, %v3552
      %4505 = vst.msk [vmem:[#allocation2 + $0x68] sm:$0xff] %vm300, %v3553
      %4506 = vst.msk [vmem:[#allocation2 + $0x80] sm:$0xff] %vm300, %v3554
      %4507 = vst.msk [vmem:[#allocation2 + $0x98] sm:$0xff] %vm300, %v3555
      %4508 = vst.msk [vmem:[#allocation2 + $0xb0] sm:$0xff] %vm300, %v3556
      %4509 = vst.msk [vmem:[#allocation2 + $0xc8] sm:$0xff] %vm300, %v3557
      %4510 = vst.msk [vmem:[#allocation2 + $0xe0] sm:$0xff] %vm300, %v3558
      %4511 = vst.msk [vmem:[#allocation2 + $0xf8] sm:$0xff] %vm300, %v3559
      %4512 = vst.msk [vmem:[#allocation2 + $0x110] sm:$0xff] %vm300, %v3560
      %4513 = vst.msk [vmem:[#allocation2 + $0x128] sm:$0xff] %vm300, %v3561
      %4514 = vst.msk [vmem:[#allocation2 + $0x140] sm:$0xff] %vm300, %v3562
      %4515 = vst.msk [vmem:[#allocation2 + $0x158] sm:$0xff] %vm300, %v3563
      %4516 = vst.msk [vmem:[#allocation2 + $0x170] sm:$0xff] %vm300, %v3564
      %4517 = vst.msk [vmem:[#allocation2 + $0x188] sm:$0xff] %vm300, %v3565
      %4518 = vst.msk [vmem:[#allocation2 + $0x1a0] sm:$0xff] %vm300, %v3566
      %4519 = vst.msk [vmem:[#allocation2 + $0x1b8] sm:$0xff] %vm300, %v3567
      %4520 = vst.msk [vmem:[#allocation2 + $0x1d0] sm:$0xff] %vm300, %v3568
      %4521 = vst.msk [vmem:[#allocation2 + $0x1e8] sm:$0xff] %vm300, %v3569
      %4522 = vst.msk [vmem:[#allocation2 + $0x200] sm:$0xff] %vm300, %v3570
      %4523 = vst.msk [vmem:[#allocation2 + $0x218] sm:$0xff] %vm300, %v3571
      %4524 = vst.msk [vmem:[#allocation2 + $0x230] sm:$0xff] %vm300, %v3572
      %4525 = vst.msk [vmem:[#allocation2 + $0x248] sm:$0xff] %vm300, %v3573
      %4526 = vst.msk [vmem:[#allocation2 + $0x260] sm:$0xff] %vm300, %v3574
      %4527 = vst.msk [vmem:[#allocation2 + $0x278] sm:$0xff] %vm300, %v3575
      %4528 = vst.msk [vmem:[#allocation2 + $0x290] sm:$0xff] %vm300, %v3576
      %4529 = vst.msk [vmem:[#allocation2 + $0x2a8] sm:$0xff] %vm300, %v3577
      %4530 = vst.msk [vmem:[#allocation2 + $0x2c0] sm:$0xff] %vm300, %v3578
      %4531 = vst.msk [vmem:[#allocation2 + $0x2d8] sm:$0xff] %vm300, %v3579
      %4532 = vst.msk [vmem:[#allocation2 + $0x2f0] sm:$0xff] %vm300, %v3580
      %4533 = vst.msk [vmem:[#allocation2 + $0x308] sm:$0xff] %vm300, %v3581
      %4534 = vst.msk [vmem:[#allocation2 + $0x320] sm:$0xff] %vm300, %v3582
      %4535 = vst.msk [vmem:[#allocation2 + $0x338] sm:$0xff] %vm300, %v3583
      %4536 = vst.msk [vmem:[#allocation2 + $0x350] sm:$0xff] %vm300, %v3584
      %4537 = vst.msk [vmem:[#allocation2 + $0x368] sm:$0xff] %vm300, %v3585
      %4538 = vst.msk [vmem:[#allocation2 + $0x380] sm:$0xff] %vm300, %v3586
      %4539 = vst.msk [vmem:[#allocation2 + $0x398] sm:$0xff] %vm300, %v3587
      %4540 = vst.msk [vmem:[#allocation2 + $0x3b0] sm:$0xff] %vm300, %v3588
      %4541 = vst.msk [vmem:[#allocation2 + $0x3c8] sm:$0xff] %vm300, %v3589
      %4542 = vst.msk [vmem:[#allocation2 + $0x3e0] sm:$0xff] %vm300, %v3590
      %4543 = vst.msk [vmem:[#allocation2 + $0x3f8] sm:$0xff] %vm300, %v3591
      %4544 = vst.msk [vmem:[#allocation2 + $0x410] sm:$0xff] %vm300, %v3592
      %4545 = vst.msk [vmem:[#allocation2 + $0x428] sm:$0xff] %vm300, %v3593
      %4546 = vst.msk [vmem:[#allocation2 + $0x440] sm:$0xff] %vm300, %v3594
      %4547 = vst.msk [vmem:[#allocation2 + $0x458] sm:$0xff] %vm300, %v3595
      %4548 = vst.msk [vmem:[#allocation2 + $0x470] sm:$0xff] %vm300, %v3596
      %v4549 = vrot.slane %v3595, 1
      %v4550 = vsel %vm4017, %v4110, %v4549
      %v4551 = vrot.slane %v3596, 1
      %v4552 = vsel %vm4017, %v4549, %v4551
      %v4553 = vsel %vm4017, %v4551, %v4018
      %4554 = vrot.lane.b32.xlu0 %v4023, 32
      %v4555 = vpop.permute.xlu0 %4554
      %4556 = vrot.lane.b32.xlu0 %v4025, 32
      %v4557 = vpop.permute.xlu0 %4556
      %4558 = vrot.lane.b32.xlu0 %v4027, 32
      %v4559 = vpop.permute.xlu0 %4558
      %4560 = vrot.lane.b32.xlu0 %v4029, 32
      %v4561 = vpop.permute.xlu0 %4560
      %4562 = vrot.lane.b32.xlu0 %v4031, 32
      %v4563 = vpop.permute.xlu0 %4562
      %4564 = vrot.lane.b32.xlu0 %v4033, 32
      %v4565 = vpop.permute.xlu0 %4564
      %4566 = vrot.lane.b32.xlu0 %v4035, 32
      %v4567 = vpop.permute.xlu0 %4566
      %4568 = vrot.lane.b32.xlu0 %v4037, 32
      %v4569 = vpop.permute.xlu0 %4568
      %4570 = vrot.lane.b32.xlu0 %v4039, 32
      %v4571 = vpop.permute.xlu0 %4570
      %4572 = vrot.lane.b32.xlu0 %v4041, 32
      %v4573 = vpop.permute.xlu0 %4572
      %4574 = vrot.lane.b32.xlu0 %v4043, 32
      %v4575 = vpop.permute.xlu0 %4574
      %4576 = vrot.lane.b32.xlu0 %v4045, 32
      %v4577 = vpop.permute.xlu0 %4576
      %4578 = vrot.lane.b32.xlu0 %v4047, 32
      %v4579 = vpop.permute.xlu0 %4578
      %4580 = vrot.lane.b32.xlu0 %v4049, 32
      %v4581 = vpop.permute.xlu0 %4580
      %4582 = vrot.lane.b32.xlu0 %v4051, 32
      %v4583 = vpop.permute.xlu0 %4582
      %4584 = vrot.lane.b32.xlu0 %v4053, 32
      %v4585 = vpop.permute.xlu0 %4584
      %4586 = vrot.lane.b32.xlu0 %v4055, 32
      %v4587 = vpop.permute.xlu0 %4586
      %4588 = vrot.lane.b32.xlu0 %v4057, 32
      %v4589 = vpop.permute.xlu0 %4588
      %4590 = vrot.lane.b32.xlu0 %v4059, 32
      %v4591 = vpop.permute.xlu0 %4590
      %4592 = vrot.lane.b32.xlu0 %v4061, 32
      %v4593 = vpop.permute.xlu0 %4592
      %4594 = vrot.lane.b32.xlu0 %v4063, 32
      %v4595 = vpop.permute.xlu0 %4594
      %4596 = vrot.lane.b32.xlu0 %v4065, 32
      %v4597 = vpop.permute.xlu0 %4596
      %4598 = vrot.lane.b32.xlu0 %v4067, 32
      %v4599 = vpop.permute.xlu0 %4598
      %4600 = vrot.lane.b32.xlu0 %v4069, 32
      %v4601 = vpop.permute.xlu0 %4600
      %4602 = vrot.lane.b32.xlu0 %v4071, 32
      %v4603 = vpop.permute.xlu0 %4602
      %4604 = vrot.lane.b32.xlu0 %v4073, 32
      %v4605 = vpop.permute.xlu0 %4604
      %4606 = vrot.lane.b32.xlu0 %v4075, 32
      %v4607 = vpop.permute.xlu0 %4606
      %4608 = vrot.lane.b32.xlu0 %v4077, 32
      %v4609 = vpop.permute.xlu0 %4608
      %4610 = vrot.lane.b32.xlu0 %v4079, 32
      %v4611 = vpop.permute.xlu0 %4610
      %4612 = vrot.lane.b32.xlu0 %v4081, 32
      %v4613 = vpop.permute.xlu0 %4612
      %4614 = vrot.lane.b32.xlu0 %v4083, 32
      %v4615 = vpop.permute.xlu0 %4614
      %4616 = vrot.lane.b32.xlu0 %v4085, 32
      %v4617 = vpop.permute.xlu0 %4616
      %4618 = vrot.lane.b32.xlu0 %v4087, 32
      %v4619 = vpop.permute.xlu0 %4618
      %4620 = vrot.lane.b32.xlu0 %v4089, 32
      %v4621 = vpop.permute.xlu0 %4620
      %4622 = vrot.lane.b32.xlu0 %v4091, 32
      %v4623 = vpop.permute.xlu0 %4622
      %4624 = vrot.lane.b32.xlu0 %v4093, 32
      %v4625 = vpop.permute.xlu0 %4624
      %4626 = vrot.lane.b32.xlu0 %v4095, 32
      %v4627 = vpop.permute.xlu0 %4626
      %4628 = vrot.lane.b32.xlu0 %v4097, 32
      %v4629 = vpop.permute.xlu0 %4628
      %4630 = vrot.lane.b32.xlu0 %v4099, 32
      %v4631 = vpop.permute.xlu0 %4630
      %4632 = vrot.lane.b32.xlu0 %v4101, 32
      %v4633 = vpop.permute.xlu0 %4632
      %4634 = vrot.lane.b32.xlu0 %v4103, 32
      %v4635 = vpop.permute.xlu0 %4634
      %4636 = vrot.lane.b32.xlu0 %v4105, 32
      %v4637 = vpop.permute.xlu0 %4636
      %4638 = vrot.lane.b32.xlu0 %v4107, 32
      %v4639 = vpop.permute.xlu0 %4638
      %4640 = vrot.lane.b32.xlu0 %v4109, 32
      %v4641 = vpop.permute.xlu0 %4640
      %4642 = vrot.lane.b32.xlu0 %v4111, 32
      %v4643 = vpop.permute.xlu0 %4642
      %4644 = vrot.lane.b32.xlu0 %v4550, 32
      %v4645 = vpop.permute.xlu0 %4644
      %4646 = vrot.lane.b32.xlu0 %v4552, 32
      %v4647 = vpop.permute.xlu0 %4646
      %4648 = vrot.lane.b32.xlu0 %v4553, 32
      %v4649 = vpop.permute.xlu0 %4648
      %4698 = vst.msk [vmem:[#allocation2 + $0x8] sm:$0xff] %vm589, %v4555
      %4699 = vst.msk [vmem:[#allocation2 + $0x20] sm:$0xff] %vm589, %v4557
      %4700 = vst.msk [vmem:[#allocation2 + $0x38] sm:$0xff] %vm589, %v4559
      %4701 = vst.msk [vmem:[#allocation2 + $0x50] sm:$0xff] %vm589, %v4561
      %4702 = vst.msk [vmem:[#allocation2 + $0x68] sm:$0xff] %vm589, %v4563
      %4703 = vst.msk [vmem:[#allocation2 + $0x80] sm:$0xff] %vm589, %v4565
      %4704 = vst.msk [vmem:[#allocation2 + $0x98] sm:$0xff] %vm589, %v4567
      %4705 = vst.msk [vmem:[#allocation2 + $0xb0] sm:$0xff] %vm589, %v4569
      %4706 = vst.msk [vmem:[#allocation2 + $0xc8] sm:$0xff] %vm589, %v4571
      %4707 = vst.msk [vmem:[#allocation2 + $0xe0] sm:$0xff] %vm589, %v4573
      %4708 = vst.msk [vmem:[#allocation2 + $0xf8] sm:$0xff] %vm589, %v4575
      %4709 = vst.msk [vmem:[#allocation2 + $0x110] sm:$0xff] %vm589, %v4577
      %4710 = vst.msk [vmem:[#allocation2 + $0x128] sm:$0xff] %vm589, %v4579
      %4711 = vst.msk [vmem:[#allocation2 + $0x140] sm:$0xff] %vm589, %v4581
      %4712 = vst.msk [vmem:[#allocation2 + $0x158] sm:$0xff] %vm589, %v4583
      %4713 = vst.msk [vmem:[#allocation2 + $0x170] sm:$0xff] %vm589, %v4585
      %4714 = vst.msk [vmem:[#allocation2 + $0x188] sm:$0xff] %vm589, %v4587
      %4715 = vst.msk [vmem:[#allocation2 + $0x1a0] sm:$0xff] %vm589, %v4589
      %4716 = vst.msk [vmem:[#allocation2 + $0x1b8] sm:$0xff] %vm589, %v4591
      %4717 = vst.msk [vmem:[#allocation2 + $0x1d0] sm:$0xff] %vm589, %v4593
      %4718 = vst.msk [vmem:[#allocation2 + $0x1e8] sm:$0xff] %vm589, %v4595
      %4719 = vst.msk [vmem:[#allocation2 + $0x200] sm:$0xff] %vm589, %v4597
      %4720 = vst.msk [vmem:[#allocation2 + $0x218] sm:$0xff] %vm589, %v4599
      %4721 = vst.msk [vmem:[#allocation2 + $0x230] sm:$0xff] %vm589, %v4601
      %4722 = vst.msk [vmem:[#allocation2 + $0x248] sm:$0xff] %vm589, %v4603
      %4723 = vst.msk [vmem:[#allocation2 + $0x260] sm:$0xff] %vm589, %v4605
      %4724 = vst.msk [vmem:[#allocation2 + $0x278] sm:$0xff] %vm589, %v4607
      %4725 = vst.msk [vmem:[#allocation2 + $0x290] sm:$0xff] %vm589, %v4609
      %4726 = vst.msk [vmem:[#allocation2 + $0x2a8] sm:$0xff] %vm589, %v4611
      %4727 = vst.msk [vmem:[#allocation2 + $0x2c0] sm:$0xff] %vm589, %v4613
      %4728 = vst.msk [vmem:[#allocation2 + $0x2d8] sm:$0xff] %vm589, %v4615
      %4729 = vst.msk [vmem:[#allocation2 + $0x2f0] sm:$0xff] %vm589, %v4617
      %4730 = vst.msk [vmem:[#allocation2 + $0x308] sm:$0xff] %vm589, %v4619
      %4731 = vst.msk [vmem:[#allocation2 + $0x320] sm:$0xff] %vm589, %v4621
      %4732 = vst.msk [vmem:[#allocation2 + $0x338] sm:$0xff] %vm589, %v4623
      %4733 = vst.msk [vmem:[#allocation2 + $0x350] sm:$0xff] %vm589, %v4625
      %4734 = vst.msk [vmem:[#allocation2 + $0x368] sm:$0xff] %vm589, %v4627
      %4735 = vst.msk [vmem:[#allocation2 + $0x380] sm:$0xff] %vm589, %v4629
      %4736 = vst.msk [vmem:[#allocation2 + $0x398] sm:$0xff] %vm589, %v4631
      %4737 = vst.msk [vmem:[#allocation2 + $0x3b0] sm:$0xff] %vm589, %v4633
      %4738 = vst.msk [vmem:[#allocation2 + $0x3c8] sm:$0xff] %vm589, %v4635
      %4739 = vst.msk [vmem:[#allocation2 + $0x3e0] sm:$0xff] %vm589, %v4637
      %4740 = vst.msk [vmem:[#allocation2 + $0x3f8] sm:$0xff] %vm589, %v4639
      %4741 = vst.msk [vmem:[#allocation2 + $0x410] sm:$0xff] %vm589, %v4641
      %4742 = vst.msk [vmem:[#allocation2 + $0x428] sm:$0xff] %vm589, %v4643
      %4743 = vst.msk [vmem:[#allocation2 + $0x440] sm:$0xff] %vm589, %v4645
      %4744 = vst.msk [vmem:[#allocation2 + $0x458] sm:$0xff] %vm589, %v4647
      %4745 = vst.msk [vmem:[#allocation2 + $0x470] sm:$0xff] %vm589, %v4649
      %v4746 = vsel %vm3643, %v4307, %v3644
      %4747 = vrot.lane.b32.xlu0 %v3653, 64
      %v4748 = vpop.permute.xlu0 %4747
      %4749 = vrot.lane.b32.xlu0 %v3655, 64
      %v4750 = vpop.permute.xlu0 %4749
      %4751 = vrot.lane.b32.xlu0 %v3657, 64
      %v4752 = vpop.permute.xlu0 %4751
      %4753 = vrot.lane.b32.xlu0 %v3659, 64
      %v4754 = vpop.permute.xlu0 %4753
      %4755 = vrot.lane.b32.xlu0 %v3661, 64
      %v4756 = vpop.permute.xlu0 %4755
      %4757 = vrot.lane.b32.xlu0 %v3663, 64
      %v4758 = vpop.permute.xlu0 %4757
      %4759 = vrot.lane.b32.xlu0 %v3665, 64
      %v4760 = vpop.permute.xlu0 %4759
      %4761 = vrot.lane.b32.xlu0 %v3667, 64
      %v4762 = vpop.permute.xlu0 %4761
      %4763 = vrot.lane.b32.xlu0 %v3669, 64
      %v4764 = vpop.permute.xlu0 %4763
      %4765 = vrot.lane.b32.xlu0 %v3671, 64
      %v4766 = vpop.permute.xlu0 %4765
      %4767 = vrot.lane.b32.xlu0 %v3673, 64
      %v4768 = vpop.permute.xlu0 %4767
      %4769 = vrot.lane.b32.xlu0 %v3675, 64
      %v4770 = vpop.permute.xlu0 %4769
      %4771 = vrot.lane.b32.xlu0 %v3677, 64
      %v4772 = vpop.permute.xlu0 %4771
      %4773 = vrot.lane.b32.xlu0 %v3679, 64
      %v4774 = vpop.permute.xlu0 %4773
      %4775 = vrot.lane.b32.xlu0 %v3681, 64
      %v4776 = vpop.permute.xlu0 %4775
      %4777 = vrot.lane.b32.xlu0 %v3683, 64
      %v4778 = vpop.permute.xlu0 %4777
      %4779 = vrot.lane.b32.xlu0 %v3685, 64
      %v4780 = vpop.permute.xlu0 %4779
      %4781 = vrot.lane.b32.xlu0 %v3687, 64
      %v4782 = vpop.permute.xlu0 %4781
      %4783 = vrot.lane.b32.xlu0 %v3689, 64
      %v4784 = vpop.permute.xlu0 %4783
      %4785 = vrot.lane.b32.xlu0 %v3691, 64
      %v4786 = vpop.permute.xlu0 %4785
      %4787 = vrot.lane.b32.xlu0 %v3693, 64
      %v4788 = vpop.permute.xlu0 %4787
      %4789 = vrot.lane.b32.xlu0 %v3695, 64
      %v4790 = vpop.permute.xlu0 %4789
      %4791 = vrot.lane.b32.xlu0 %v3697, 64
      %v4792 = vpop.permute.xlu0 %4791
      %4793 = vrot.lane.b32.xlu0 %v3699, 64
      %v4794 = vpop.permute.xlu0 %4793
      %4795 = vrot.lane.b32.xlu0 %v3701, 64
      %v4796 = vpop.permute.xlu0 %4795
      %4797 = vrot.lane.b32.xlu0 %v3703, 64
      %v4798 = vpop.permute.xlu0 %4797
      %4799 = vrot.lane.b32.xlu0 %v3705, 64
      %v4800 = vpop.permute.xlu0 %4799
      %4801 = vrot.lane.b32.xlu0 %v3707, 64
      %v4802 = vpop.permute.xlu0 %4801
      %4803 = vrot.lane.b32.xlu0 %v3709, 64
      %v4804 = vpop.permute.xlu0 %4803
      %4805 = vrot.lane.b32.xlu0 %v3711, 64
      %v4806 = vpop.permute.xlu0 %4805
      %4807 = vrot.lane.b32.xlu0 %v3713, 64
      %v4808 = vpop.permute.xlu0 %4807
      %4809 = vrot.lane.b32.xlu0 %v3715, 64
      %v4810 = vpop.permute.xlu0 %4809
      %4811 = vrot.lane.b32.xlu0 %v3717, 64
      %v4812 = vpop.permute.xlu0 %4811
      %4813 = vrot.lane.b32.xlu0 %v3719, 64
      %v4814 = vpop.permute.xlu0 %4813
      %4815 = vrot.lane.b32.xlu0 %v3721, 64
      %v4816 = vpop.permute.xlu0 %4815
      %4817 = vrot.lane.b32.xlu0 %v3723, 64
      %v4818 = vpop.permute.xlu0 %4817
      %4819 = vrot.lane.b32.xlu0 %v3725, 64
      %v4820 = vpop.permute.xlu0 %4819
      %4821 = vrot.lane.b32.xlu0 %v3727, 64
      %v4822 = vpop.permute.xlu0 %4821
      %4823 = vrot.lane.b32.xlu0 %v3729, 64
      %v4824 = vpop.permute.xlu0 %4823
      %4825 = vrot.lane.b32.xlu0 %v3731, 64
      %v4826 = vpop.permute.xlu0 %4825
      %4827 = vrot.lane.b32.xlu0 %v3733, 64
      %v4828 = vpop.permute.xlu0 %4827
      %4829 = vrot.lane.b32.xlu0 %v3735, 64
      %v4830 = vpop.permute.xlu0 %4829
      %4831 = vrot.lane.b32.xlu0 %v4304, 64
      %v4832 = vpop.permute.xlu0 %4831
      %4833 = vrot.lane.b32.xlu0 %v4306, 64
      %v4834 = vpop.permute.xlu0 %4833
      %4835 = vrot.lane.b32.xlu0 %v4308, 64
      %v4836 = vpop.permute.xlu0 %4835
      %4837 = vrot.lane.b32.xlu0 %v4746, 64
      %v4838 = vpop.permute.xlu0 %4837
      %4839 = vrot.lane.b32.xlu0 %v3645, 64
      %v4840 = vpop.permute.xlu0 %4839
      %4888 = vst.msk [vmem:[#allocation2 + $0x8] sm:$0xff] %vm878, %v4748
      %4889 = vst.msk [vmem:[#allocation2 + $0x20] sm:$0xff] %vm878, %v4750
      %4890 = vst.msk [vmem:[#allocation2 + $0x38] sm:$0xff] %vm878, %v4752
      %4891 = vst.msk [vmem:[#allocation2 + $0x50] sm:$0xff] %vm878, %v4754
      %4892 = vst.msk [vmem:[#allocation2 + $0x68] sm:$0xff] %vm878, %v4756
      %4893 = vst.msk [vmem:[#allocation2 + $0x80] sm:$0xff] %vm878, %v4758
      %4894 = vst.msk [vmem:[#allocation2 + $0x98] sm:$0xff] %vm878, %v4760
      %4895 = vst.msk [vmem:[#allocation2 + $0xb0] sm:$0xff] %vm878, %v4762
      %4896 = vst.msk [vmem:[#allocation2 + $0xc8] sm:$0xff] %vm878, %v4764
      %4897 = vst.msk [vmem:[#allocation2 + $0xe0] sm:$0xff] %vm878, %v4766
      %4898 = vst.msk [vmem:[#allocation2 + $0xf8] sm:$0xff] %vm878, %v4768
      %4899 = vst.msk [vmem:[#allocation2 + $0x110] sm:$0xff] %vm878, %v4770
      %4900 = vst.msk [vmem:[#allocation2 + $0x128] sm:$0xff] %vm878, %v4772
      %4901 = vst.msk [vmem:[#allocation2 + $0x140] sm:$0xff] %vm878, %v4774
      %4902 = vst.msk [vmem:[#allocation2 + $0x158] sm:$0xff] %vm878, %v4776
      %4903 = vst.msk [vmem:[#allocation2 + $0x170] sm:$0xff] %vm878, %v4778
      %4904 = vst.msk [vmem:[#allocation2 + $0x188] sm:$0xff] %vm878, %v4780
      %4905 = vst.msk [vmem:[#allocation2 + $0x1a0] sm:$0xff] %vm878, %v4782
      %4906 = vst.msk [vmem:[#allocation2 + $0x1b8] sm:$0xff] %vm878, %v4784
      %4907 = vst.msk [vmem:[#allocation2 + $0x1d0] sm:$0xff] %vm878, %v4786
      %4908 = vst.msk [vmem:[#allocation2 + $0x1e8] sm:$0xff] %vm878, %v4788
      %4909 = vst.msk [vmem:[#allocation2 + $0x200] sm:$0xff] %vm878, %v4790
      %4910 = vst.msk [vmem:[#allocation2 + $0x218] sm:$0xff] %vm878, %v4792
      %4911 = vst.msk [vmem:[#allocation2 + $0x230] sm:$0xff] %vm878, %v4794
      %4912 = vst.msk [vmem:[#allocation2 + $0x248] sm:$0xff] %vm878, %v4796
      %4913 = vst.msk [vmem:[#allocation2 + $0x260] sm:$0xff] %vm878, %v4798
      %4914 = vst.msk [vmem:[#allocation2 + $0x278] sm:$0xff] %vm878, %v4800
      %4915 = vst.msk [vmem:[#allocation2 + $0x290] sm:$0xff] %vm878, %v4802
      %4916 = vst.msk [vmem:[#allocation2 + $0x2a8] sm:$0xff] %vm878, %v4804
      %4917 = vst.msk [vmem:[#allocation2 + $0x2c0] sm:$0xff] %vm878, %v4806
      %4918 = vst.msk [vmem:[#allocation2 + $0x2d8] sm:$0xff] %vm878, %v4808
      %4919 = vst.msk [vmem:[#allocation2 + $0x2f0] sm:$0xff] %vm878, %v4810
      %4920 = vst.msk [vmem:[#allocation2 + $0x308] sm:$0xff] %vm878, %v4812
      %4921 = vst.msk [vmem:[#allocation2 + $0x320] sm:$0xff] %vm878, %v4814
      %4922 = vst.msk [vmem:[#allocation2 + $0x338] sm:$0xff] %vm878, %v4816
      %4923 = vst.msk [vmem:[#allocation2 + $0x350] sm:$0xff] %vm878, %v4818
      %4924 = vst.msk [vmem:[#allocation2 + $0x368] sm:$0xff] %vm878, %v4820
      %4925 = vst.msk [vmem:[#allocation2 + $0x380] sm:$0xff] %vm878, %v4822
      %4926 = vst.msk [vmem:[#allocation2 + $0x398] sm:$0xff] %vm878, %v4824
      %4927 = vst.msk [vmem:[#allocation2 + $0x3b0] sm:$0xff] %vm878, %v4826
      %4928 = vst.msk [vmem:[#allocation2 + $0x3c8] sm:$0xff] %vm878, %v4828
      %4929 = vst.msk [vmem:[#allocation2 + $0x3e0] sm:$0xff] %vm878, %v4830
      %4930 = vst.msk [vmem:[#allocation2 + $0x3f8] sm:$0xff] %vm878, %v4832
      %4931 = vst.msk [vmem:[#allocation2 + $0x410] sm:$0xff] %vm878, %v4834
      %4932 = vst.msk [vmem:[#allocation2 + $0x428] sm:$0xff] %vm878, %v4836
      %4933 = vst.msk [vmem:[#allocation2 + $0x440] sm:$0xff] %vm878, %v4838
      %4934 = vst.msk [vmem:[#allocation2 + $0x458] sm:$0xff] %vm878, %v4840
      %4935 = vst.msk [vmem:[#allocation2 + $0x470] sm:$0xff] %vm878, %v4840
      %4936 = vrot.lane.b32.xlu0 %v3552, 96
      %v4937 = vpop.permute.xlu0 %4936
      %4938 = vrot.lane.b32.xlu0 %v3553, 96
      %v4939 = vpop.permute.xlu0 %4938
      %4940 = vrot.lane.b32.xlu0 %v3554, 96
      %v4941 = vpop.permute.xlu0 %4940
      %4942 = vrot.lane.b32.xlu0 %v3555, 96
      %v4943 = vpop.permute.xlu0 %4942
      %4944 = vrot.lane.b32.xlu0 %v3556, 96
      %v4945 = vpop.permute.xlu0 %4944
      %4946 = vrot.lane.b32.xlu0 %v3557, 96
      %v4947 = vpop.permute.xlu0 %4946
      %4948 = vrot.lane.b32.xlu0 %v3558, 96
      %v4949 = vpop.permute.xlu0 %4948
      %4950 = vrot.lane.b32.xlu0 %v3559, 96
      %v4951 = vpop.permute.xlu0 %4950
      %4952 = vrot.lane.b32.xlu0 %v3560, 96
      %v4953 = vpop.permute.xlu0 %4952
      %4954 = vrot.lane.b32.xlu0 %v3561, 96
      %v4955 = vpop.permute.xlu0 %4954
      %4956 = vrot.lane.b32.xlu0 %v3562, 96
      %v4957 = vpop.permute.xlu0 %4956
      %4958 = vrot.lane.b32.xlu0 %v3563, 96
      %v4959 = vpop.permute.xlu0 %4958
      %4960 = vrot.lane.b32.xlu0 %v3564, 96
      %v4961 = vpop.permute.xlu0 %4960
      %4962 = vrot.lane.b32.xlu0 %v3565, 96
      %v4963 = vpop.permute.xlu0 %4962
      %4964 = vrot.lane.b32.xlu0 %v3566, 96
      %v4965 = vpop.permute.xlu0 %4964
      %4966 = vrot.lane.b32.xlu0 %v3567, 96
      %v4967 = vpop.permute.xlu0 %4966
      %4968 = vrot.lane.b32.xlu0 %v3568, 96
      %v4969 = vpop.permute.xlu0 %4968
      %4970 = vrot.lane.b32.xlu0 %v3569, 96
      %v4971 = vpop.permute.xlu0 %4970
      %4972 = vrot.lane.b32.xlu0 %v3570, 96
      %v4973 = vpop.permute.xlu0 %4972
      %4974 = vrot.lane.b32.xlu0 %v3571, 96
      %v4975 = vpop.permute.xlu0 %4974
      %4976 = vrot.lane.b32.xlu0 %v3572, 96
      %v4977 = vpop.permute.xlu0 %4976
      %4978 = vrot.lane.b32.xlu0 %v3573, 96
      %v4979 = vpop.permute.xlu0 %4978
      %4980 = vrot.lane.b32.xlu0 %v3574, 96
      %v4981 = vpop.permute.xlu0 %4980
      %4982 = vrot.lane.b32.xlu0 %v3575, 96
      %v4983 = vpop.permute.xlu0 %4982
      %4984 = vrot.lane.b32.xlu0 %v3576, 96
      %v4985 = vpop.permute.xlu0 %4984
      %4986 = vrot.lane.b32.xlu0 %v3577, 96
      %v4987 = vpop.permute.xlu0 %4986
      %4988 = vrot.lane.b32.xlu0 %v3578, 96
      %v4989 = vpop.permute.xlu0 %4988
      %4990 = vrot.lane.b32.xlu0 %v3579, 96
      %v4991 = vpop.permute.xlu0 %4990
      %4992 = vrot.lane.b32.xlu0 %v3580, 96
      %v4993 = vpop.permute.xlu0 %4992
      %4994 = vrot.lane.b32.xlu0 %v3581, 96
      %v4995 = vpop.permute.xlu0 %4994
      %4996 = vrot.lane.b32.xlu0 %v3582, 96
      %v4997 = vpop.permute.xlu0 %4996
      %4998 = vrot.lane.b32.xlu0 %v3583, 96
      %v4999 = vpop.permute.xlu0 %4998
      %5000 = vrot.lane.b32.xlu0 %v3584, 96
      %v5001 = vpop.permute.xlu0 %5000
      %5002 = vrot.lane.b32.xlu0 %v3585, 96
      %v5003 = vpop.permute.xlu0 %5002
      %5004 = vrot.lane.b32.xlu0 %v3586, 96
      %v5005 = vpop.permute.xlu0 %5004
      %5006 = vrot.lane.b32.xlu0 %v3587, 96
      %v5007 = vpop.permute.xlu0 %5006
      %5008 = vrot.lane.b32.xlu0 %v3588, 96
      %v5009 = vpop.permute.xlu0 %5008
      %5010 = vrot.lane.b32.xlu0 %v3589, 96
      %v5011 = vpop.permute.xlu0 %5010
      %5012 = vrot.lane.b32.xlu0 %v3590, 96
      %v5013 = vpop.permute.xlu0 %5012
      %5014 = vrot.lane.b32.xlu0 %v3591, 96
      %v5015 = vpop.permute.xlu0 %5014
      %5016 = vrot.lane.b32.xlu0 %v3592, 96
      %v5017 = vpop.permute.xlu0 %5016
      %5018 = vrot.lane.b32.xlu0 %v3593, 96
      %v5019 = vpop.permute.xlu0 %5018
      %5020 = vrot.lane.b32.xlu0 %v3594, 96
      %v5021 = vpop.permute.xlu0 %5020
      %5022 = vrot.lane.b32.xlu0 %v3595, 96
      %v5023 = vpop.permute.xlu0 %5022
      %5024 = vrot.lane.b32.xlu0 %v3596, 96
      %v5025 = vpop.permute.xlu0 %5024
      %5026 = vrot.lane.b32.xlu0 0.0, 96
      %v5027 = vpop.permute.xlu0 %5026
      %5074 = vst.msk [vmem:[#allocation2 + $0x8] sm:$0xff] %vm1167, %v4937
      %5075 = vst.msk [vmem:[#allocation2 + $0x20] sm:$0xff] %vm1167, %v4939
      %5076 = vst.msk [vmem:[#allocation2 + $0x38] sm:$0xff] %vm1167, %v4941
      %5077 = vst.msk [vmem:[#allocation2 + $0x50] sm:$0xff] %vm1167, %v4943
      %5078 = vst.msk [vmem:[#allocation2 + $0x68] sm:$0xff] %vm1167, %v4945
      %5079 = vst.msk [vmem:[#allocation2 + $0x80] sm:$0xff] %vm1167, %v4947
      %5080 = vst.msk [vmem:[#allocation2 + $0x98] sm:$0xff] %vm1167, %v4949
      %5081 = vst.msk [vmem:[#allocation2 + $0xb0] sm:$0xff] %vm1167, %v4951
      %5082 = vst.msk [vmem:[#allocation2 + $0xc8] sm:$0xff] %vm1167, %v4953
      %5083 = vst.msk [vmem:[#allocation2 + $0xe0] sm:$0xff] %vm1167, %v4955
      %5084 = vst.msk [vmem:[#allocation2 + $0xf8] sm:$0xff] %vm1167, %v4957
      %5085 = vst.msk [vmem:[#allocation2 + $0x110] sm:$0xff] %vm1167, %v4959
      %5086 = vst.msk [vmem:[#allocation2 + $0x128] sm:$0xff] %vm1167, %v4961
      %5087 = vst.msk [vmem:[#allocation2 + $0x140] sm:$0xff] %vm1167, %v4963
      %5088 = vst.msk [vmem:[#allocation2 + $0x158] sm:$0xff] %vm1167, %v4965
      %5089 = vst.msk [vmem:[#allocation2 + $0x170] sm:$0xff] %vm1167, %v4967
      %5090 = vst.msk [vmem:[#allocation2 + $0x188] sm:$0xff] %vm1167, %v4969
      %5091 = vst.msk [vmem:[#allocation2 + $0x1a0] sm:$0xff] %vm1167, %v4971
      %5092 = vst.msk [vmem:[#allocation2 + $0x1b8] sm:$0xff] %vm1167, %v4973
      %5093 = vst.msk [vmem:[#allocation2 + $0x1d0] sm:$0xff] %vm1167, %v4975
      %5094 = vst.msk [vmem:[#allocation2 + $0x1e8] sm:$0xff] %vm1167, %v4977
      %5095 = vst.msk [vmem:[#allocation2 + $0x200] sm:$0xff] %vm1167, %v4979
      %5096 = vst.msk [vmem:[#allocation2 + $0x218] sm:$0xff] %vm1167, %v4981
      %5097 = vst.msk [vmem:[#allocation2 + $0x230] sm:$0xff] %vm1167, %v4983
      %5098 = vst.msk [vmem:[#allocation2 + $0x248] sm:$0xff] %vm1167, %v4985
      %5099 = vst.msk [vmem:[#allocation2 + $0x260] sm:$0xff] %vm1167, %v4987
      %5100 = vst.msk [vmem:[#allocation2 + $0x278] sm:$0xff] %vm1167, %v4989
      %5101 = vst.msk [vmem:[#allocation2 + $0x290] sm:$0xff] %vm1167, %v4991
      %5102 = vst.msk [vmem:[#allocation2 + $0x2a8] sm:$0xff] %vm1167, %v4993
      %5103 = vst.msk [vmem:[#allocation2 + $0x2c0] sm:$0xff] %vm1167, %v4995
      %5104 = vst.msk [vmem:[#allocation2 + $0x2d8] sm:$0xff] %vm1167, %v4997
      %5105 = vst.msk [vmem:[#allocation2 + $0x2f0] sm:$0xff] %vm1167, %v4999
      %5106 = vst.msk [vmem:[#allocation2 + $0x308] sm:$0xff] %vm1167, %v5001
      %5107 = vst.msk [vmem:[#allocation2 + $0x320] sm:$0xff] %vm1167, %v5003
      %5108 = vst.msk [vmem:[#allocation2 + $0x338] sm:$0xff] %vm1167, %v5005
      %5109 = vst.msk [vmem:[#allocation2 + $0x350] sm:$0xff] %vm1167, %v5007
      %5110 = vst.msk [vmem:[#allocation2 + $0x368] sm:$0xff] %vm1167, %v5009
      %5111 = vst.msk [vmem:[#allocation2 + $0x380] sm:$0xff] %vm1167, %v5011
      %5112 = vst.msk [vmem:[#allocation2 + $0x398] sm:$0xff] %vm1167, %v5013
      %5113 = vst.msk [vmem:[#allocation2 + $0x3b0] sm:$0xff] %vm1167, %v5015
      %5114 = vst.msk [vmem:[#allocation2 + $0x3c8] sm:$0xff] %vm1167, %v5017
      %5115 = vst.msk [vmem:[#allocation2 + $0x3e0] sm:$0xff] %vm1167, %v5019
      %5116 = vst.msk [vmem:[#allocation2 + $0x3f8] sm:$0xff] %vm1167, %v5021
      %5117 = vst.msk [vmem:[#allocation2 + $0x410] sm:$0xff] %vm1167, %v5023
      %5118 = vst.msk [vmem:[#allocation2 + $0x428] sm:$0xff] %vm1167, %v5025
      %5119 = vst.msk [vmem:[#allocation2 + $0x440] sm:$0xff] %vm1167, %v5027
      %5120 = vst.msk [vmem:[#allocation2 + $0x458] sm:$0xff] %vm1167, %v5027
      %5121 = vst.msk [vmem:[#allocation2 + $0x470] sm:$0xff] %vm1167, %v5027
      %5168 = vst.msk [vmem:[#allocation2 + $0x10] sm:$0xff] %vm300, %v4029
      %5169 = vst.msk [vmem:[#allocation2 + $0x28] sm:$0xff] %vm300, %v4031
      %5170 = vst.msk [vmem:[#allocation2 + $0x40] sm:$0xff] %vm300, %v4033
      %5171 = vst.msk [vmem:[#allocation2 + $0x58] sm:$0xff] %vm300, %v4035
      %5172 = vst.msk [vmem:[#allocation2 + $0x70] sm:$0xff] %vm300, %v4037
      %5173 = vst.msk [vmem:[#allocation2 + $0x88] sm:$0xff] %vm300, %v4039
      %5174 = vst.msk [vmem:[#allocation2 + $0xa0] sm:$0xff] %vm300, %v4041
      %5175 = vst.msk [vmem:[#allocation2 + $0xb8] sm:$0xff] %vm300, %v4043
      %5176 = vst.msk [vmem:[#allocation2 + $0xd0] sm:$0xff] %vm300, %v4045
      %5177 = vst.msk [vmem:[#allocation2 + $0xe8] sm:$0xff] %vm300, %v4047
      %5178 = vst.msk [vmem:[#allocation2 + $0x100] sm:$0xff] %vm300, %v4049
      %5179 = vst.msk [vmem:[#allocation2 + $0x118] sm:$0xff] %vm300, %v4051
      %5180 = vst.msk [vmem:[#allocation2 + $0x130] sm:$0xff] %vm300, %v4053
      %5181 = vst.msk [vmem:[#allocation2 + $0x148] sm:$0xff] %vm300, %v4055
      %5182 = vst.msk [vmem:[#allocation2 + $0x160] sm:$0xff] %vm300, %v4057
      %5183 = vst.msk [vmem:[#allocation2 + $0x178] sm:$0xff] %vm300, %v4059
      %5184 = vst.msk [vmem:[#allocation2 + $0x190] sm:$0xff] %vm300, %v4061
      %5185 = vst.msk [vmem:[#allocation2 + $0x1a8] sm:$0xff] %vm300, %v4063
      %5186 = vst.msk [vmem:[#allocation2 + $0x1c0] sm:$0xff] %vm300, %v4065
      %5187 = vst.msk [vmem:[#allocation2 + $0x1d8] sm:$0xff] %vm300, %v4067
      %5188 = vst.msk [vmem:[#allocation2 + $0x1f0] sm:$0xff] %vm300, %v4069
      %5189 = vst.msk [vmem:[#allocation2 + $0x208] sm:$0xff] %vm300, %v4071
      %5190 = vst.msk [vmem:[#allocation2 + $0x220] sm:$0xff] %vm300, %v4073
      %5191 = vst.msk [vmem:[#allocation2 + $0x238] sm:$0xff] %vm300, %v4075
      %5192 = vst.msk [vmem:[#allocation2 + $0x250] sm:$0xff] %vm300, %v4077
      %5193 = vst.msk [vmem:[#allocation2 + $0x268] sm:$0xff] %vm300, %v4079
      %5194 = vst.msk [vmem:[#allocation2 + $0x280] sm:$0xff] %vm300, %v4081
      %5195 = vst.msk [vmem:[#allocation2 + $0x298] sm:$0xff] %vm300, %v4083
      %5196 = vst.msk [vmem:[#allocation2 + $0x2b0] sm:$0xff] %vm300, %v4085
      %5197 = vst.msk [vmem:[#allocation2 + $0x2c8] sm:$0xff] %vm300, %v4087
      %5198 = vst.msk [vmem:[#allocation2 + $0x2e0] sm:$0xff] %vm300, %v4089
      %5199 = vst.msk [vmem:[#allocation2 + $0x2f8] sm:$0xff] %vm300, %v4091
      %5200 = vst.msk [vmem:[#allocation2 + $0x310] sm:$0xff] %vm300, %v4093
      %5201 = vst.msk [vmem:[#allocation2 + $0x328] sm:$0xff] %vm300, %v4095
      %5202 = vst.msk [vmem:[#allocation2 + $0x340] sm:$0xff] %vm300, %v4097
      %5203 = vst.msk [vmem:[#allocation2 + $0x358] sm:$0xff] %vm300, %v4099
      %5204 = vst.msk [vmem:[#allocation2 + $0x370] sm:$0xff] %vm300, %v4101
      %5205 = vst.msk [vmem:[#allocation2 + $0x388] sm:$0xff] %vm300, %v4103
      %5206 = vst.msk [vmem:[#allocation2 + $0x3a0] sm:$0xff] %vm300, %v4105
      %5207 = vst.msk [vmem:[#allocation2 + $0x3b8] sm:$0xff] %vm300, %v4107
      %5208 = vst.msk [vmem:[#allocation2 + $0x3d0] sm:$0xff] %vm300, %v4109
      %5209 = vst.msk [vmem:[#allocation2 + $0x3e8] sm:$0xff] %vm300, %v4111
      %5210 = vst.msk [vmem:[#allocation2 + $0x400] sm:$0xff] %vm300, %v4550
      %5211 = vst.msk [vmem:[#allocation2 + $0x418] sm:$0xff] %vm300, %v4552
      %5212 = vst.msk [vmem:[#allocation2 + $0x430] sm:$0xff] %vm300, %v4553
      %5213 = vst.msk [vmem:[#allocation2 + $0x448] sm:$0xff] %vm300, %v4019
      %5214 = vst.msk [vmem:[#allocation2 + $0x460] sm:$0xff] %vm300, %v4019
      %5215 = vst.msk [vmem:[#allocation2 + $0x478] sm:$0xff] %vm300, %v4019
      %v5216 = vld [vmem:[%s246 + $0x20] sm:$0xff]
      %v5217 = vld [vmem:[%s246 + $0x28] sm:$0xff]
      %v5218 = vld [vmem:[%s246 + $0x30] sm:$0xff]
      %v5219 = vld [vmem:[%s246 + $0x38] sm:$0xff]
      %v5220 = vld [vmem:[%s246 + $0x40] sm:$0xff]
      %v5221 = vld [vmem:[%s246 + $0x48] sm:$0xff]
      %v5222 = vld [vmem:[%s246 + $0x50] sm:$0xff]
      %v5223 = vld [vmem:[%s246 + $0x58] sm:$0xff]
      %v5224 = vld [vmem:[%s246 + $0x60] sm:$0xff]
      %v5225 = vld [vmem:[%s246 + $0x68] sm:$0xff]
      %v5226 = vld [vmem:[%s246 + $0x70] sm:$0xff]
      %v5227 = vld [vmem:[%s246 + $0x78] sm:$0xff]
      %v5228 = vld [vmem:[%s246 + $0x80] sm:$0xff]
      %v5229 = vld [vmem:[%s246 + $0x88] sm:$0xff]
      %v5230 = vld [vmem:[%s246 + $0x90] sm:$0xff]
      %v5231 = vld [vmem:[%s246 + $0x98] sm:$0xff]
      %v5232 = vld [vmem:[%s246 + $0xa0] sm:$0xff]
      %v5233 = vld [vmem:[%s246 + $0xa8] sm:$0xff]
      %v5234 = vld [vmem:[%s246 + $0xb0] sm:$0xff]
      %v5235 = vld [vmem:[%s246 + $0xb8] sm:$0xff]
      %v5236 = vld [vmem:[%s246 + $0xc0] sm:$0xff]
      %v5237 = vld [vmem:[%s246 + $0xc8] sm:$0xff]
      %v5238 = vld [vmem:[%s246 + $0xd0] sm:$0xff]
      %v5239 = vld [vmem:[%s246 + $0xd8] sm:$0xff]
      %v5240 = vld [vmem:[%s246 + $0xe0] sm:$0xff]
      %v5241 = vld [vmem:[%s246 + $0xe8] sm:$0xff]
      %v5242 = vld [vmem:[%s246 + $0xf0] sm:$0xff]
      %v5243 = vld [vmem:[%s246 + $0xf8] sm:$0xff]
      %v5244 = vld [vmem:[%s246 + $0x100] sm:$0xff]
      %v5245 = vld [vmem:[%s246 + $0x108] sm:$0xff]
      %v5246 = vld [vmem:[%s246 + $0x110] sm:$0xff]
      %v5247 = vld [vmem:[%s246 + $0x118] sm:$0xff]
      %v5248 = vld [vmem:[%s246 + $0x120] sm:$0xff]
      %v5249 = vld [vmem:[%s246 + $0x128] sm:$0xff]
      %v5250 = vld [vmem:[%s246 + $0x130] sm:$0xff]
      %v5251 = vld [vmem:[%s246 + $0x138] sm:$0xff]
      %v5252 = vld [vmem:[%s246 + $0x140] sm:$0xff]
      %v5253 = vld [vmem:[%s246 + $0x148] sm:$0xff]
      %v5254 = vld [vmem:[%s246 + $0x150] sm:$0xff]
      %v5255 = vld [vmem:[%s246 + $0x158] sm:$0xff]
      %v5256 = vld [vmem:[%s246 + $0x160] sm:$0xff]
      %v5257 = vld [vmem:[%s246 + $0x168] sm:$0xff]
      %v5258 = vld [vmem:[%s246 + $0x170] sm:$0xff]
      %v5259 = vld [vmem:[%s246 + $0x178] sm:$0xff]
      %v5260 = vld [vmem:[%s246 + $0x180] sm:$0xff]
      %v5261 = vld [vmem:[%s246 + $0x188] sm:$0xff]
      %v5262 = vld [vmem:[%s246 + $0x190] sm:$0xff]
      %v5263 = vld [vmem:[%s246 + $0x198] sm:$0xff]
      %v5264 = vld [vmem:[#allocation2] sm:$0xff]
      %v5265 = vld [vmem:[#allocation2 + $0x8] sm:$0xff]
      %v5266 = vld [vmem:[#allocation2 + $0x10] sm:$0xff]
      %v5267 = vld [vmem:[#allocation2 + $0x18] sm:$0xff]
      %v5268 = vld [vmem:[#allocation2 + $0x20] sm:$0xff]
      %v5269 = vld [vmem:[#allocation2 + $0x28] sm:$0xff]
      %v5270 = vld [vmem:[#allocation2 + $0x30] sm:$0xff]
      %v5271 = vld [vmem:[#allocation2 + $0x38] sm:$0xff]
      %v5272 = vld [vmem:[#allocation2 + $0x40] sm:$0xff]
      %v5273 = vld [vmem:[#allocation2 + $0x48] sm:$0xff]
      %v5274 = vld [vmem:[#allocation2 + $0x50] sm:$0xff]
      %v5275 = vld [vmem:[#allocation2 + $0x58] sm:$0xff]
      %v5276 = vld [vmem:[#allocation2 + $0x60] sm:$0xff]
      %v5277 = vld [vmem:[#allocation2 + $0x68] sm:$0xff]
      %v5278 = vld [vmem:[#allocation2 + $0x70] sm:$0xff]
      %v5279 = vld [vmem:[#allocation2 + $0x78] sm:$0xff]
      %v5280 = vld [vmem:[#allocation2 + $0x80] sm:$0xff]
      %v5281 = vld [vmem:[#allocation2 + $0x88] sm:$0xff]
      %v5282 = vld [vmem:[#allocation2 + $0x90] sm:$0xff]
      %v5283 = vld [vmem:[#allocation2 + $0x98] sm:$0xff]
      %v5284 = vld [vmem:[#allocation2 + $0xa0] sm:$0xff]
      %v5285 = vld [vmem:[#allocation2 + $0xa8] sm:$0xff]
      %v5286 = vld [vmem:[#allocation2 + $0xb0] sm:$0xff]
      %v5287 = vld [vmem:[#allocation2 + $0xb8] sm:$0xff]
      %v5288 = vld [vmem:[#allocation2 + $0xc0] sm:$0xff]
      %v5289 = vld [vmem:[#allocation2 + $0xc8] sm:$0xff]
      %v5290 = vld [vmem:[#allocation2 + $0xd0] sm:$0xff]
      %v5291 = vld [vmem:[#allocation2 + $0xd8] sm:$0xff]
      %v5292 = vld [vmem:[#allocation2 + $0xe0] sm:$0xff]
      %v5293 = vld [vmem:[#allocation2 + $0xe8] sm:$0xff]
      %v5294 = vld [vmem:[#allocation2 + $0xf0] sm:$0xff]
      %v5295 = vld [vmem:[#allocation2 + $0xf8] sm:$0xff]
      %v5296 = vld [vmem:[#allocation2 + $0x100] sm:$0xff]
      %v5297 = vld [vmem:[#allocation2 + $0x108] sm:$0xff]
      %v5298 = vld [vmem:[#allocation2 + $0x110] sm:$0xff]
      %v5299 = vld [vmem:[#allocation2 + $0x118] sm:$0xff]
      %v5300 = vld [vmem:[#allocation2 + $0x120] sm:$0xff]
      %v5301 = vld [vmem:[#allocation2 + $0x128] sm:$0xff]
      %v5302 = vld [vmem:[#allocation2 + $0x130] sm:$0xff]
      %v5303 = vld [vmem:[#allocation2 + $0x138] sm:$0xff]
      %v5304 = vld [vmem:[#allocation2 + $0x140] sm:$0xff]
      %v5305 = vld [vmem:[#allocation2 + $0x148] sm:$0xff]
      %v5306 = vld [vmem:[#allocation2 + $0x150] sm:$0xff]
      %v5307 = vld [vmem:[#allocation2 + $0x158] sm:$0xff]
      %v5308 = vld [vmem:[#allocation2 + $0x160] sm:$0xff]
      %v5309 = vld [vmem:[#allocation2 + $0x168] sm:$0xff]
      %v5310 = vld [vmem:[#allocation2 + $0x170] sm:$0xff]
      %v5311 = vld [vmem:[#allocation2 + $0x178] sm:$0xff]
      %v5312 = vld [vmem:[#allocation2 + $0x180] sm:$0xff]
      %v5313 = vld [vmem:[#allocation2 + $0x188] sm:$0xff]
      %v5314 = vld [vmem:[#allocation2 + $0x190] sm:$0xff]
      %v5315 = vld [vmem:[#allocation2 + $0x198] sm:$0xff]
      %v5316 = vld [vmem:[#allocation2 + $0x1a0] sm:$0xff]
      %v5317 = vld [vmem:[#allocation2 + $0x1a8] sm:$0xff]
      %v5318 = vld [vmem:[#allocation2 + $0x1b0] sm:$0xff]
      %v5319 = vld [vmem:[#allocation2 + $0x1b8] sm:$0xff]
      %v5320 = vld [vmem:[#allocation2 + $0x1c0] sm:$0xff]
      %v5321 = vld [vmem:[#allocation2 + $0x1c8] sm:$0xff]
      %v5322 = vld [vmem:[#allocation2 + $0x1d0] sm:$0xff]
      %v5323 = vld [vmem:[#allocation2 + $0x1d8] sm:$0xff]
      %v5324 = vld [vmem:[#allocation2 + $0x1e0] sm:$0xff]
      %v5325 = vld [vmem:[#allocation2 + $0x1e8] sm:$0xff]
      %v5326 = vld [vmem:[#allocation2 + $0x1f0] sm:$0xff]
      %v5327 = vld [vmem:[#allocation2 + $0x1f8] sm:$0xff]
      %v5328 = vld [vmem:[#allocation2 + $0x200] sm:$0xff]
      %v5329 = vld [vmem:[#allocation2 + $0x208] sm:$0xff]
      %v5330 = vld [vmem:[#allocation2 + $0x210] sm:$0xff]
      %v5331 = vld [vmem:[#allocation2 + $0x218] sm:$0xff]
      %v5332 = vld [vmem:[#allocation2 + $0x220] sm:$0xff]
      %v5333 = vld [vmem:[#allocation2 + $0x228] sm:$0xff]
      %v5334 = vld [vmem:[#allocation2 + $0x230] sm:$0xff]
      %v5335 = vld [vmem:[#allocation2 + $0x238] sm:$0xff]
      %v5336 = vld [vmem:[#allocation2 + $0x240] sm:$0xff]
      %v5337 = vld [vmem:[#allocation2 + $0x248] sm:$0xff]
      %v5338 = vld [vmem:[#allocation2 + $0x250] sm:$0xff]
      %v5339 = vld [vmem:[#allocation2 + $0x258] sm:$0xff]
      %v5340 = vld [vmem:[#allocation2 + $0x260] sm:$0xff]
      %v5341 = vld [vmem:[#allocation2 + $0x268] sm:$0xff]
      %v5342 = vld [vmem:[#allocation2 + $0x270] sm:$0xff]
      %v5343 = vld [vmem:[#allocation2 + $0x278] sm:$0xff]
      %v5344 = vld [vmem:[#allocation2 + $0x280] sm:$0xff]
      %v5345 = vld [vmem:[#allocation2 + $0x288] sm:$0xff]
      %v5346 = vld [vmem:[#allocation2 + $0x290] sm:$0xff]
      %v5347 = vld [vmem:[#allocation2 + $0x298] sm:$0xff]
      %v5348 = vld [vmem:[#allocation2 + $0x2a0] sm:$0xff]
      %v5349 = vld [vmem:[#allocation2 + $0x2a8] sm:$0xff]
      %v5350 = vld [vmem:[#allocation2 + $0x2b0] sm:$0xff]
      %v5351 = vld [vmem:[#allocation2 + $0x2b8] sm:$0xff]
      %v5352 = vld [vmem:[#allocation2 + $0x2c0] sm:$0xff]
      %v5353 = vld [vmem:[#allocation2 + $0x2c8] sm:$0xff]
      %v5354 = vld [vmem:[#allocation2 + $0x2d0] sm:$0xff]
      %v5355 = vld [vmem:[#allocation2 + $0x2d8] sm:$0xff]
      %v5356 = vld [vmem:[#allocation2 + $0x2e0] sm:$0xff]
      %v5357 = vld [vmem:[#allocation2 + $0x2e8] sm:$0xff]
      %v5358 = vld [vmem:[#allocation2 + $0x2f0] sm:$0xff]
      %v5359 = vld [vmem:[#allocation2 + $0x2f8] sm:$0xff]
      %v5360 = vld [vmem:[#allocation2 + $0x300] sm:$0xff]
      %v5361 = vld [vmem:[#allocation2 + $0x308] sm:$0xff]
      %v5362 = vld [vmem:[#allocation2 + $0x310] sm:$0xff]
      %v5363 = vld [vmem:[#allocation2 + $0x318] sm:$0xff]
      %v5364 = vld [vmem:[#allocation2 + $0x320] sm:$0xff]
      %v5365 = vld [vmem:[#allocation2 + $0x328] sm:$0xff]
      %v5366 = vld [vmem:[#allocation2 + $0x330] sm:$0xff]
      %v5367 = vld [vmem:[#allocation2 + $0x338] sm:$0xff]
      %v5368 = vld [vmem:[#allocation2 + $0x340] sm:$0xff]
      %v5369 = vld [vmem:[#allocation2 + $0x348] sm:$0xff]
      %v5370 = vld [vmem:[#allocation2 + $0x350] sm:$0xff]
      %v5371 = vld [vmem:[#allocation2 + $0x358] sm:$0xff]
      %v5372 = vld [vmem:[#allocation2 + $0x360] sm:$0xff]
      %v5373 = vld [vmem:[#allocation2 + $0x368] sm:$0xff]
      %v5374 = vld [vmem:[#allocation2 + $0x370] sm:$0xff]
      %v5375 = vld [vmem:[#allocation2 + $0x378] sm:$0xff]
      %v5376 = vld [vmem:[#allocation2 + $0x380] sm:$0xff]
      %v5377 = vld [vmem:[#allocation2 + $0x388] sm:$0xff]
      %v5378 = vld [vmem:[#allocation2 + $0x390] sm:$0xff]
      %v5379 = vld [vmem:[#allocation2 + $0x398] sm:$0xff]
      %v5380 = vld [vmem:[#allocation2 + $0x3a0] sm:$0xff]
      %v5381 = vld [vmem:[#allocation2 + $0x3a8] sm:$0xff]
      %v5382 = vld [vmem:[#allocation2 + $0x3b0] sm:$0xff]
      %v5383 = vld [vmem:[#allocation2 + $0x3b8] sm:$0xff]
      %v5384 = vld [vmem:[#allocation2 + $0x3c0] sm:$0xff]
      %v5385 = vld [vmem:[#allocation2 + $0x3c8] sm:$0xff]
      %v5386 = vld [vmem:[#allocation2 + $0x3d0] sm:$0xff]
      %v5387 = vld [vmem:[#allocation2 + $0x3d8] sm:$0xff]
      %v5388 = vld [vmem:[#allocation2 + $0x3e0] sm:$0xff]
      %v5389 = vld [vmem:[#allocation2 + $0x3e8] sm:$0xff]
      %v5390 = vld [vmem:[#allocation2 + $0x3f0] sm:$0xff]
      %v5391 = vld [vmem:[#allocation2 + $0x3f8] sm:$0xff]
      %v5392 = vld [vmem:[#allocation2 + $0x400] sm:$0xff]
      %v5393 = vld [vmem:[#allocation2 + $0x408] sm:$0xff]
      %v5394 = vld [vmem:[#allocation2 + $0x410] sm:$0xff]
      %v5395 = vld [vmem:[#allocation2 + $0x418] sm:$0xff]
      %v5396 = vld [vmem:[#allocation2 + $0x420] sm:$0xff]
      %v5397 = vld [vmem:[#allocation2 + $0x428] sm:$0xff]
      %v5398 = vld [vmem:[#allocation2 + $0x430] sm:$0xff]
      %v5399 = vld [vmem:[#allocation2 + $0x438] sm:$0xff]
      %v5400 = vld [vmem:[#allocation2 + $0x440] sm:$0xff]
      %v5401 = vld [vmem:[#allocation2 + $0x448] sm:$0xff]
      %v5402 = vld [vmem:[#allocation2 + $0x450] sm:$0xff]
      %v5403 = vld [vmem:[#allocation2 + $0x458] sm:$0xff]
      %v5404 = vld [vmem:[#allocation2 + $0x460] sm:$0xff]
      %v5405 = vld [vmem:[#allocation2 + $0x468] sm:$0xff]
      %v5406 = vld [vmem:[#allocation2 + $0x470] sm:$0xff]
      %v5407 = vld [vmem:[#allocation2 + $0x478] sm:$0xff]
      %v5408 = vld [vmem:[%s4] sm:$0xff]
      %v5409 = vld [vmem:[%s4 + $0x8] sm:$0xff]
      %v5410 = vld [vmem:[%s4 + $0x10] sm:$0xff]
      %v5411 = vld [vmem:[%s4 + $0x18] sm:$0xff]
      %v5412 = vld [vmem:[%s4 + $0x20] sm:$0xff]
      %v5413 = vld [vmem:[%s4 + $0x28] sm:$0xff]
      %v5414 = vld [vmem:[%s4 + $0x30] sm:$0xff]
      %v5415 = vld [vmem:[%s4 + $0x38] sm:$0xff]
      %v5416 = vld [vmem:[%s4 + $0x40] sm:$0xff]
      %v5417 = vld [vmem:[%s4 + $0x48] sm:$0xff]
      %v5418 = vld [vmem:[%s4 + $0x50] sm:$0xff]
      %v5419 = vld [vmem:[%s4 + $0x58] sm:$0xff]
      %v5420 = vld [vmem:[%s4 + $0x60] sm:$0xff]
      %v5421 = vld [vmem:[%s4 + $0x68] sm:$0xff]
      %v5422 = vld [vmem:[%s4 + $0x70] sm:$0xff]
      %v5423 = vld [vmem:[%s4 + $0x78] sm:$0xff]
      %v5424 = vld [vmem:[%s4 + $0x80] sm:$0xff]
      %v5425 = vld [vmem:[%s4 + $0x88] sm:$0xff]
      %v5426 = vld [vmem:[%s4 + $0x90] sm:$0xff]
      %v5427 = vld [vmem:[%s4 + $0x98] sm:$0xff]
      %v5428 = vld [vmem:[%s4 + $0xa0] sm:$0xff]
      %v5429 = vld [vmem:[%s4 + $0xa8] sm:$0xff]
      %v5430 = vld [vmem:[%s4 + $0xb0] sm:$0xff]
      %v5431 = vld [vmem:[%s4 + $0xb8] sm:$0xff]
      %v5432 = vld [vmem:[%s4 + $0xc0] sm:$0xff]
      %v5433 = vld [vmem:[%s4 + $0xc8] sm:$0xff]
      %v5434 = vld [vmem:[%s4 + $0xd0] sm:$0xff]
      %v5435 = vld [vmem:[%s4 + $0xd8] sm:$0xff]
      %v5436 = vld [vmem:[%s4 + $0xe0] sm:$0xff]
      %v5437 = vld [vmem:[%s4 + $0xe8] sm:$0xff]
      %v5438 = vld [vmem:[%s4 + $0xf0] sm:$0xff]
      %v5439 = vld [vmem:[%s4 + $0xf8] sm:$0xff]
      %v5440 = vld [vmem:[%s4 + $0x100] sm:$0xff]
      %v5441 = vld [vmem:[%s4 + $0x108] sm:$0xff]
      %v5442 = vld [vmem:[%s4 + $0x110] sm:$0xff]
      %v5443 = vld [vmem:[%s4 + $0x118] sm:$0xff]
      %v5444 = vld [vmem:[%s5] sm:$0x1]
      %v5446 = vlaneseq
      %v5447 = vshrl.u32 %v5446, 7
      %v5448 = vsub.s32 0, %v5447
      %v5449 = vrot.slane %v5444, %v5448
      %v5452 = vsel %vm300, %v5266, 0
      %v5455 = vsel %vm300, %v5269, 0
      %v5458 = vsel %vm300, %v5272, 0
      %v5461 = vsel %vm300, %v5275, 0
      %v5464 = vsel %vm300, %v5278, 0
      %v5467 = vsel %vm300, %v5281, 0
      %v5470 = vsel %vm300, %v5284, 0
      %v5473 = vsel %vm300, %v5287, 0
      %v5476 = vsel %vm300, %v5290, 0
      %v5479 = vsel %vm300, %v5293, 0
      %v5482 = vsel %vm300, %v5296, 0
      %v5485 = vsel %vm300, %v5299, 0
      %v5488 = vsel %vm300, %v5302, 0
      %v5491 = vsel %vm300, %v5305, 0
      %v5494 = vsel %vm300, %v5308, 0
      %v5497 = vsel %vm300, %v5311, 0
      %v5500 = vsel %vm300, %v5314, 0
      %v5503 = vsel %vm300, %v5317, 0
      %v5506 = vsel %vm300, %v5320, 0
      %v5509 = vsel %vm300, %v5323, 0
      %v5512 = vsel %vm300, %v5326, 0
      %v5515 = vsel %vm300, %v5329, 0
      %v5518 = vsel %vm300, %v5332, 0
      %v5521 = vsel %vm300, %v5335, 0
      %v5524 = vsel %vm300, %v5338, 0
      %v5527 = vsel %vm300, %v5341, 0
      %v5530 = vsel %vm300, %v5344, 0
      %v5533 = vsel %vm300, %v5347, 0
      %v5536 = vsel %vm300, %v5350, 0
      %v5539 = vsel %vm300, %v5353, 0
      %v5542 = vsel %vm300, %v5356, 0
      %v5545 = vsel %vm300, %v5359, 0
      %v5548 = vsel %vm300, %v5362, 0
      %v5551 = vsel %vm300, %v5365, 0
      %v5554 = vsel %vm300, %v5368, 0
      %v5557 = vsel %vm300, %v5371, 0
      %v5560 = vsel %vm300, %v5374, 0
      %v5563 = vsel %vm300, %v5377, 0
      %v5566 = vsel %vm300, %v5380, 0
      %v5569 = vsel %vm300, %v5383, 0
      %v5572 = vsel %vm300, %v5386, 0
      %v5575 = vsel %vm300, %v5389, 0
      %v5578 = vsel %vm300, %v5392, 0
      %v5581 = vsel %vm300, %v5395, 0
      %v5584 = vsel %vm300, %v5398, 0
      %v5587 = vsel %vm300, %v5401, 0
      %v5590 = vsel %vm300, %v5404, 0
      %v5593 = vsel %vm300, %v5407, 0
      %5595 = vmatprep.subr.mxu0 0.0
      %5596 = vmatpush1.msra.mxu0 %v5408
      %5597 = vmatprep.subr.mxu0 0.0
      %5598 = vmatpush1.msra.mxu0 %v5409
      %5599 = vmatprep.subr.mxu0 0.0
      %5600 = vmatpush1.msra.mxu0 %v5410
      %5601 = vmatprep.subr.mxu0 0.0
      %5602 = vmatpush1.msra.mxu0 %v5411
      %5603 = vmatprep.subr.mxu0 0.0
      %5604 = vmatpush1.msra.mxu0 %v5412
      %5605 = vmatprep.subr.mxu0 0.0
      %5606 = vmatpush1.msra.mxu0 %v5413
      %5607 = vmatprep.subr.mxu0 0.0
      %5608 = vmatpush1.msra.mxu0 %v5414
      %5609 = vmatprep.subr.mxu0 0.0
      %5610 = vmatpush1.msra.mxu0 %v5415
      %5611 = vmatprep.subr.mxu0 0.0
      %5612 = vmatpush1.msra.mxu0 %v5416
      %5613 = vmatprep.subr.mxu0 0.0
      %5614 = vmatpush1.msra.mxu0 %v5417
      %5615 = vmatprep.subr.mxu0 0.0
      %5616 = vmatpush1.msra.mxu0 %v5418
      %5617 = vmatprep.subr.mxu0 0.0
      %5618 = vmatpush1.msra.mxu0 %v5419
      %5619 = vmatprep.subr.mxu0 0.0
      %5620 = vmatpush1.msra.mxu0 %v5420
      %5621 = vmatprep.subr.mxu0 0.0
      %5622 = vmatpush1.msra.mxu0 %v5421
      %5623 = vmatprep.subr.mxu0 0.0
      %5624 = vmatpush1.msra.mxu0 %v5422
      %5625 = vmatprep.subr.mxu0 0.0
      %5626 = vmatpush1.msra.mxu0 %v5423
      %5627 = vmatprep.subr.mxu0 0.0
      %5628 = vmatpush1.msra.mxu0 %v5424
      %5629 = vmatprep.subr.mxu0 0.0
      %5630 = vmatpush1.msra.mxu0 %v5425
      %5631 = vmatprep.subr.mxu0 0.0
      %5632 = vmatpush1.msra.mxu0 %v5426
      %5633 = vmatprep.subr.mxu0 0.0
      %5634 = vmatpush1.msra.mxu0 %v5427
      %5635 = vmatprep.subr.mxu0 0.0
      %5636 = vmatpush1.msra.mxu0 %v5428
      %5637 = vmatprep.subr.mxu0 0.0
      %5638 = vmatpush1.msra.mxu0 %v5429
      %5639 = vmatprep.subr.mxu0 0.0
      %5640 = vmatpush1.msra.mxu0 %v5430
      %5641 = vmatprep.subr.mxu0 0.0
      %5642 = vmatpush1.msra.mxu0 %v5431
      %5643 = vmatprep.subr.mxu0 0.0
      %5644 = vmatpush1.msra.mxu0 %v5432
      %5645 = vmatprep.subr.mxu0 0.0
      %5646 = vmatpush1.msra.mxu0 %v5433
      %5647 = vmatprep.subr.mxu0 0.0
      %5648 = vmatpush1.msra.mxu0 %v5434
      %5649 = vmatprep.subr.mxu0 0.0
      %5650 = vmatpush1.msra.mxu0 %v5435
      %5651 = vmatprep.subr.mxu0 0.0
      %5652 = vmatpush1.msra.mxu0 %v5436
      %5653 = vmatprep.subr.mxu0 0.0
      %5654 = vmatpush1.msra.mxu0 %v5437
      %5655 = vmatprep.subr.mxu0 0.0
      %5656 = vmatpush1.msra.mxu0 %v5438
      %5657 = vmatprep.subr.mxu0 0.0
      %5658 = vmatpush1.msra.mxu0 %v5439
      %5659 = vmatprep.mubr.f32.mxu0 %v5265
      %5660 = vmatmul.mubr.f32.gmra.mrb[0].mxu0 %v5264
      %v5661 = vpop.f32.mrb[0].mxu0
      %v5662 = vadd.f32 %v5449, %v5661
      %v5663 = vpop.f32.mrb[0].mxu0
      %5664 = vmatprep.mubr.f32.mxu0 %v5268
      %5665 = vmatmul.mubr.f32.gmra.mrb[0].mxu0 %v5267
      %v5666 = vpop.f32.mrb[0].mxu0
      %v5667 = vadd.f32 %v5449, %v5666
      %v5668 = vpop.f32.mrb[0].mxu0
      %5669 = vmatprep.mubr.f32.mxu0 %v5271
      %5670 = vmatmul.mubr.f32.gmra.mrb[0].mxu0 %v5270
      %v5671 = vpop.f32.mrb[0].mxu0
      %v5672 = vadd.f32 %v5449, %v5671
      %v5673 = vpop.f32.mrb[0].mxu0
      %5674 = vmatprep.mubr.f32.mxu0 %v5274
      %5675 = vmatmul.mubr.f32.gmra.mrb[0].mxu0 %v5273
      %v5676 = vpop.f32.mrb[0].mxu0
      %v5677 = vadd.f32 %v5449, %v5676
      %v5678 = vpop.f32.mrb[0].mxu0
      %5679 = vmatprep.mubr.f32.mxu0 %v5277
      %5680 = vmatmul.mubr.f32.gmra.mrb[0].mxu0 %v5276
      %v5681 = vpop.f32.mrb[0].mxu0
      %v5682 = vadd.f32 %v5449, %v5681
      %v5683 = vpop.f32.mrb[0].mxu0
      %5684 = vmatprep.mubr.f32.mxu0 %v5280
      %5685 = vmatmul.mubr.f32.gmra.mrb[0].mxu0 %v5279
      %v5686 = vpop.f32.mrb[0].mxu0
      %v5687 = vadd.f32 %v5449, %v5686
      %v5688 = vpop.f32.mrb[0].mxu0
      %5689 = vmatprep.mubr.f32.mxu0 %v5283
      %5690 = vmatmul.mubr.f32.gmra.mrb[0].mxu0 %v5282
      %v5691 = vpop.f32.mrb[0].mxu0
      %v5692 = vadd.f32 %v5449, %v5691
      %v5693 = vpop.f32.mrb[0].mxu0
      %5694 = vmatprep.mubr.f32.mxu0 %v5286
      %5695 = vmatmul.mubr.f32.gmra.mrb[0].mxu0 %v5285
      %v5696 = vpop.f32.mrb[0].mxu0
      %v5697 = vadd.f32 %v5449, %v5696
      %v5698 = vpop.f32.mrb[0].mxu0
      %5699 = vmatprep.mubr.f32.mxu0 %v5289
      %5700 = vmatmul.mubr.f32.gmra.mrb[0].mxu0 %v5288
      %v5701 = vpop.f32.mrb[0].mxu0
      %v5702 = vadd.f32 %v5449, %v5701
      %v5703 = vpop.f32.mrb[0].mxu0
      %5704 = vmatprep.mubr.f32.mxu0 %v5292
      %5705 = vmatmul.mubr.f32.gmra.mrb[0].mxu0 %v5291
      %v5706 = vpop.f32.mrb[0].mxu0
      %v5707 = vadd.f32 %v5449, %v5706
      %v5708 = vpop.f32.mrb[0].mxu0
      %5709 = vmatprep.mubr.f32.mxu0 %v5295
      %5710 = vmatmul.mubr.f32.gmra.mrb[0].mxu0 %v5294
      %v5711 = vpop.f32.mrb[0].mxu0
      %v5712 = vadd.f32 %v5449, %v5711
      %v5713 = vpop.f32.mrb[0].mxu0
      %5714 = vmatprep.mubr.f32.mxu0 %v5298
      %5715 = vmatmul.mubr.f32.gmra.mrb[0].mxu0 %v5297
      %v5716 = vpop.f32.mrb[0].mxu0
      %v5717 = vadd.f32 %v5449, %v5716
      %v5718 = vpop.f32.mrb[0].mxu0
      %5719 = vmatprep.mubr.f32.mxu0 %v5301
      %5720 = vmatmul.mubr.f32.gmra.mrb[0].mxu0 %v5300
      %v5721 = vpop.f32.mrb[0].mxu0
      %v5722 = vadd.f32 %v5449, %v5721
      %v5723 = vpop.f32.mrb[0].mxu0
      %5724 = vmatprep.mubr.f32.mxu0 %v5304
      %5725 = vmatmul.mubr.f32.gmra.mrb[0].mxu0 %v5303
      %v5726 = vpop.f32.mrb[0].mxu0
      %v5727 = vadd.f32 %v5449, %v5726
      %v5728 = vpop.f32.mrb[0].mxu0
      %5729 = vmatprep.mubr.f32.mxu0 %v5307
      %5730 = vmatmul.mubr.f32.gmra.mrb[0].mxu0 %v5306
      %v5731 = vpop.f32.mrb[0].mxu0
      %v5732 = vadd.f32 %v5449, %v5731
      %v5733 = vpop.f32.mrb[0].mxu0
      %5734 = vmatprep.mubr.f32.mxu0 %v5310
      %5735 = vmatmul.mubr.f32.gmra.mrb[0].mxu0 %v5309
      %v5736 = vpop.f32.mrb[0].mxu0
      %v5737 = vadd.f32 %v5449, %v5736
      %v5738 = vpop.f32.mrb[0].mxu0
      %5739 = vmatprep.mubr.f32.mxu0 %v5313
      %5740 = vmatmul.mubr.f32.gmra.mrb[0].mxu0 %v5312
      %v5741 = vpop.f32.mrb[0].mxu0
      %v5742 = vadd.f32 %v5449, %v5741
      %v5743 = vpop.f32.mrb[0].mxu0
      %5744 = vmatprep.mubr.f32.mxu0 %v5316
      %5745 = vmatmul.mubr.f32.gmra.mrb[0].mxu0 %v5315
      %v5746 = vpop.f32.mrb[0].mxu0
      %v5747 = vadd.f32 %v5449, %v5746
      %v5748 = vpop.f32.mrb[0].mxu0
      %5749 = vmatprep.mubr.f32.mxu0 %v5319
      %5750 = vmatmul.mubr.f32.gmra.mrb[0].mxu0 %v5318
      %v5751 = vpop.f32.mrb[0].mxu0
      %v5752 = vadd.f32 %v5449, %v5751
      %v5753 = vpop.f32.mrb[0].mxu0
      %5754 = vmatprep.mubr.f32.mxu0 %v5322
      %5755 = vmatmul.mubr.f32.gmra.mrb[0].mxu0 %v5321
      %v5756 = vpop.f32.mrb[0].mxu0
      %v5757 = vadd.f32 %v5449, %v5756
      %v5758 = vpop.f32.mrb[0].mxu0
      %5759 = vmatprep.mubr.f32.mxu0 %v5325
      %5760 = vmatmul.mubr.f32.gmra.mrb[0].mxu0 %v5324
      %v5761 = vpop.f32.mrb[0].mxu0
      %v5762 = vadd.f32 %v5449, %v5761
      %v5763 = vpop.f32.mrb[0].mxu0
      %5764 = vmatprep.mubr.f32.mxu0 %v5328
      %5765 = vmatmul.mubr.f32.gmra.mrb[0].mxu0 %v5327
      %v5766 = vpop.f32.mrb[0].mxu0
      %v5767 = vadd.f32 %v5449, %v5766
      %v5768 = vpop.f32.mrb[0].mxu0
      %5769 = vmatprep.mubr.f32.mxu0 %v5331
      %5770 = vmatmul.mubr.f32.gmra.mrb[0].mxu0 %v5330
      %v5771 = vpop.f32.mrb[0].mxu0
      %v5772 = vadd.f32 %v5449, %v5771
      %v5773 = vpop.f32.mrb[0].mxu0
      %5774 = vmatprep.mubr.f32.mxu0 %v5334
      %5775 = vmatmul.mubr.f32.gmra.mrb[0].mxu0 %v5333
      %v5776 = vpop.f32.mrb[0].mxu0
      %v5777 = vadd.f32 %v5449, %v5776
      %v5778 = vpop.f32.mrb[0].mxu0
      %5779 = vmatprep.mubr.f32.mxu0 %v5337
      %5780 = vmatmul.mubr.f32.gmra.mrb[0].mxu0 %v5336
      %v5781 = vpop.f32.mrb[0].mxu0
      %v5782 = vadd.f32 %v5449, %v5781
      %v5783 = vpop.f32.mrb[0].mxu0
      %5784 = vmatprep.mubr.f32.mxu0 %v5340
      %5785 = vmatmul.mubr.f32.gmra.mrb[0].mxu0 %v5339
      %v5786 = vpop.f32.mrb[0].mxu0
      %v5787 = vadd.f32 %v5449, %v5786
      %v5788 = vpop.f32.mrb[0].mxu0
      %5789 = vmatprep.mubr.f32.mxu0 %v5343
      %5790 = vmatmul.mubr.f32.gmra.mrb[0].mxu0 %v5342
      %v5791 = vpop.f32.mrb[0].mxu0
      %v5792 = vadd.f32 %v5449, %v5791
      %v5793 = vpop.f32.mrb[0].mxu0
      %5794 = vmatprep.mubr.f32.mxu0 %v5346
      %5795 = vmatmul.mubr.f32.gmra.mrb[0].mxu0 %v5345
      %v5796 = vpop.f32.mrb[0].mxu0
      %v5797 = vadd.f32 %v5449, %v5796
      %v5798 = vpop.f32.mrb[0].mxu0
      %5799 = vmatprep.mubr.f32.mxu0 %v5349
      %5800 = vmatmul.mubr.f32.gmra.mrb[0].mxu0 %v5348
      %v5801 = vpop.f32.mrb[0].mxu0
      %v5802 = vadd.f32 %v5449, %v5801
      %v5803 = vpop.f32.mrb[0].mxu0
      %5804 = vmatprep.mubr.f32.mxu0 %v5352
      %5805 = vmatmul.mubr.f32.gmra.mrb[0].mxu0 %v5351
      %v5806 = vpop.f32.mrb[0].mxu0
      %v5807 = vadd.f32 %v5449, %v5806
      %v5808 = vpop.f32.mrb[0].mxu0
      %5809 = vmatprep.mubr.f32.mxu0 %v5355
      %5810 = vmatmul.mubr.f32.gmra.mrb[0].mxu0 %v5354
      %v5811 = vpop.f32.mrb[0].mxu0
      %v5812 = vadd.f32 %v5449, %v5811
      %v5813 = vpop.f32.mrb[0].mxu0
      %5814 = vmatprep.mubr.f32.mxu0 %v5358
      %5815 = vmatmul.mubr.f32.gmra.mrb[0].mxu0 %v5357
      %v5816 = vpop.f32.mrb[0].mxu0
      %v5817 = vadd.f32 %v5449, %v5816
      %v5818 = vpop.f32.mrb[0].mxu0
      %5819 = vmatprep.mubr.f32.mxu0 %v5361
      %5820 = vmatmul.mubr.f32.gmra.mrb[0].mxu0 %v5360
      %v5821 = vpop.f32.mrb[0].mxu0
      %v5822 = vadd.f32 %v5449, %v5821
      %v5823 = vpop.f32.mrb[0].mxu0
      %5824 = vmatprep.mubr.f32.mxu0 %v5364
      %5825 = vmatmul.mubr.f32.gmra.mrb[0].mxu0 %v5363
      %v5826 = vpop.f32.mrb[0].mxu0
      %v5827 = vadd.f32 %v5449, %v5826
      %v5828 = vpop.f32.mrb[0].mxu0
      %5829 = vmatprep.mubr.f32.mxu0 %v5367
      %5830 = vmatmul.mubr.f32.gmra.mrb[0].mxu0 %v5366
      %v5831 = vpop.f32.mrb[0].mxu0
      %v5832 = vadd.f32 %v5449, %v5831
      %v5833 = vpop.f32.mrb[0].mxu0
      %5834 = vmatprep.mubr.f32.mxu0 %v5370
      %5835 = vmatmul.mubr.f32.gmra.mrb[0].mxu0 %v5369
      %v5836 = vpop.f32.mrb[0].mxu0
      %v5837 = vadd.f32 %v5449, %v5836
      %v5838 = vpop.f32.mrb[0].mxu0
      %5839 = vmatprep.mubr.f32.mxu0 %v5373
      %5840 = vmatmul.mubr.f32.gmra.mrb[0].mxu0 %v5372
      %v5841 = vpop.f32.mrb[0].mxu0
      %v5842 = vadd.f32 %v5449, %v5841
      %v5843 = vpop.f32.mrb[0].mxu0
      %5844 = vmatprep.mubr.f32.mxu0 %v5376
      %5845 = vmatmul.mubr.f32.gmra.mrb[0].mxu0 %v5375
      %v5846 = vpop.f32.mrb[0].mxu0
      %v5847 = vadd.f32 %v5449, %v5846
      %v5848 = vpop.f32.mrb[0].mxu0
      %5849 = vmatprep.mubr.f32.mxu0 %v5379
      %5850 = vmatmul.mubr.f32.gmra.mrb[0].mxu0 %v5378
      %v5851 = vpop.f32.mrb[0].mxu0
      %v5852 = vadd.f32 %v5449, %v5851
      %v5853 = vpop.f32.mrb[0].mxu0
      %5854 = vmatprep.mubr.f32.mxu0 %v5382
      %5855 = vmatmul.mubr.f32.gmra.mrb[0].mxu0 %v5381
      %v5856 = vpop.f32.mrb[0].mxu0
      %v5857 = vadd.f32 %v5449, %v5856
      %v5858 = vpop.f32.mrb[0].mxu0
      %5859 = vmatprep.mubr.f32.mxu0 %v5385
      %5860 = vmatmul.mubr.f32.gmra.mrb[0].mxu0 %v5384
      %v5861 = vpop.f32.mrb[0].mxu0
      %v5862 = vadd.f32 %v5449, %v5861
      %v5863 = vpop.f32.mrb[0].mxu0
      %5864 = vmatprep.mubr.f32.mxu0 %v5388
      %5865 = vmatmul.mubr.f32.gmra.mrb[0].mxu0 %v5387
      %v5866 = vpop.f32.mrb[0].mxu0
      %v5867 = vadd.f32 %v5449, %v5866
      %v5868 = vpop.f32.mrb[0].mxu0
      %5869 = vmatprep.mubr.f32.mxu0 %v5391
      %5870 = vmatmul.mubr.f32.gmra.mrb[0].mxu0 %v5390
      %v5871 = vpop.f32.mrb[0].mxu0
      %v5872 = vadd.f32 %v5449, %v5871
      %v5873 = vpop.f32.mrb[0].mxu0
      %5874 = vmatprep.mubr.f32.mxu0 %v5394
      %5875 = vmatmul.mubr.f32.gmra.mrb[0].mxu0 %v5393
      %v5876 = vpop.f32.mrb[0].mxu0
      %v5877 = vadd.f32 %v5449, %v5876
      %v5878 = vpop.f32.mrb[0].mxu0
      %5879 = vmatprep.mubr.f32.mxu0 %v5397
      %5880 = vmatmul.mubr.f32.gmra.mrb[0].mxu0 %v5396
      %v5881 = vpop.f32.mrb[0].mxu0
      %v5882 = vadd.f32 %v5449, %v5881
      %v5883 = vpop.f32.mrb[0].mxu0
      %5884 = vmatprep.mubr.f32.mxu0 %v5400
      %5885 = vmatmul.mubr.f32.gmra.mrb[0].mxu0 %v5399
      %v5886 = vpop.f32.mrb[0].mxu0
      %v5887 = vadd.f32 %v5449, %v5886
      %v5888 = vpop.f32.mrb[0].mxu0
      %5889 = vmatprep.mubr.f32.mxu0 %v5403
      %5890 = vmatmul.mubr.f32.gmra.mrb[0].mxu0 %v5402
      %v5891 = vpop.f32.mrb[0].mxu0
      %v5892 = vadd.f32 %v5449, %v5891
      %v5893 = vpop.f32.mrb[0].mxu0
      %5894 = vmatprep.mubr.f32.mxu0 %v5406
      %5895 = vmatmul.mubr.f32.gmra.mrb[0].mxu0 %v5405
      %v5896 = vpop.f32.mrb[0].mxu0
      %v5897 = vadd.f32 %v5449, %v5896
      %v5898 = vpop.f32.mrb[0].mxu0
      %5899 = vdwg.mxu0
      %5900 = vmatprep.subr.mxu0 0.0
      %5901 = vmatpush1.msra.mxu0 %v5440
      %5902 = vmatprep.subr.mxu0 0.0
      %5903 = vmatpush1.msra.mxu0 %v5441
      %5904 = vmatprep.subr.mxu0 0.0
      %5905 = vmatpush1.msra.mxu0 %v5442
      %5906 = vmatprep.subr.mxu0 0.0
      %5907 = vmatpush1.msra.mxu0 %v5443
      %5908 = vmatprep.subr.mxu0 0.0
      %5909 = vmatpush1.msra.mxu0 0.0
      %5910 = vmatprep.subr.mxu0 0.0
      %5911 = vmatpush1.msra.mxu0 0.0
      %5912 = vmatprep.subr.mxu0 0.0
      %5913 = vmatpush1.msra.mxu0 0.0
      %5914 = vmatprep.subr.mxu0 0.0
      %5915 = vmatpush1.msra.mxu0 0.0
      %5916 = vmatprep.subr.mxu0 0.0
      %5917 = vmatpush1.msra.mxu0 0.0
      %5918 = vmatprep.subr.mxu0 0.0
      %5919 = vmatpush1.msra.mxu0 0.0
      %5920 = vmatprep.subr.mxu0 0.0
      %5921 = vmatpush1.msra.mxu0 0.0
      %5922 = vmatprep.subr.mxu0 0.0
      %5923 = vmatpush1.msra.mxu0 0.0
      %5924 = vmatprep.subr.mxu0 0.0
      %5925 = vmatpush1.msra.mxu0 0.0
      %5926 = vmatprep.subr.mxu0 0.0
      %5927 = vmatpush1.msra.mxu0 0.0
      %5928 = vmatprep.subr.mxu0 0.0
      %5929 = vmatpush1.msra.mxu0 0.0
      %5930 = vmatprep.subr.mxu0 0.0
      %5931 = vmatpush1.msra.mxu0 0.0
      %5932 = vmatprep.subr.mxu0 0.0
      %5933 = vmatpush1.msra.mxu0 0.0
      %5934 = vmatprep.subr.mxu0 0.0
      %5935 = vmatpush1.msra.mxu0 0.0
      %5936 = vmatprep.subr.mxu0 0.0
      %5937 = vmatpush1.msra.mxu0 0.0
      %5938 = vmatprep.subr.mxu0 0.0
      %5939 = vmatpush1.msra.mxu0 0.0
      %5940 = vmatprep.subr.mxu0 0.0
      %5941 = vmatpush1.msra.mxu0 0.0
      %5942 = vmatprep.subr.mxu0 0.0
      %5943 = vmatpush1.msra.mxu0 0.0
      %5944 = vmatprep.subr.mxu0 0.0
      %5945 = vmatpush1.msra.mxu0 0.0
      %5946 = vmatprep.subr.mxu0 0.0
      %5947 = vmatpush1.msra.mxu0 0.0
      %5948 = vmatprep.subr.mxu0 0.0
      %5949 = vmatpush1.msra.mxu0 0.0
      %5950 = vmatprep.subr.mxu0 0.0
      %5951 = vmatpush1.msra.mxu0 0.0
      %5952 = vmatprep.subr.mxu0 0.0
      %5953 = vmatpush1.msra.mxu0 0.0
      %5954 = vmatprep.subr.mxu0 0.0
      %5955 = vmatpush1.msra.mxu0 0.0
      %5956 = vmatprep.subr.mxu0 0.0
      %5957 = vmatpush1.msra.mxu0 0.0
      %5958 = vmatprep.subr.mxu0 0.0
      %5959 = vmatpush1.msra.mxu0 0.0
      %5960 = vmatprep.subr.mxu0 0.0
      %5961 = vmatpush1.msra.mxu0 0.0
      %5962 = vmatprep.subr.mxu0 0.0
      %5963 = vmatpush1.msra.mxu0 0.0
      %5964 = vmatprep.mubr.f32.mxu0 0.0
      %5965 = vmatmul.mubr.f32.gmra.mrb[0].mxu0 %v5452
      %v5966 = vpop.f32.mrb[0].mxu0
      %v5967 = vadd.f32 %v5662, %v5966
      %v5968 = vpop.f32.mrb[0].mxu0
      %5969 = vmatprep.mubr.f32.mxu0 0.0
      %5970 = vmatmul.mubr.f32.gmra.mrb[0].mxu0 %v5455
      %v5971 = vpop.f32.mrb[0].mxu0
      %v5972 = vadd.f32 %v5667, %v5971
      %v5973 = vpop.f32.mrb[0].mxu0
      %5974 = vmatprep.mubr.f32.mxu0 0.0
      %5975 = vmatmul.mubr.f32.gmra.mrb[0].mxu0 %v5458
      %v5976 = vpop.f32.mrb[0].mxu0
      %v5977 = vadd.f32 %v5672, %v5976
      %v5978 = vpop.f32.mrb[0].mxu0
      %5979 = vmatprep.mubr.f32.mxu0 0.0
      %5980 = vmatmul.mubr.f32.gmra.mrb[0].mxu0 %v5461
      %v5981 = vpop.f32.mrb[0].mxu0
      %v5982 = vadd.f32 %v5677, %v5981
      %v5983 = vpop.f32.mrb[0].mxu0
      %5984 = vmatprep.mubr.f32.mxu0 0.0
      %5985 = vmatmul.mubr.f32.gmra.mrb[0].mxu0 %v5464
      %v5986 = vpop.f32.mrb[0].mxu0
      %v5987 = vadd.f32 %v5682, %v5986
      %v5988 = vpop.f32.mrb[0].mxu0
      %5989 = vmatprep.mubr.f32.mxu0 0.0
      %5990 = vmatmul.mubr.f32.gmra.mrb[0].mxu0 %v5467
      %v5991 = vpop.f32.mrb[0].mxu0
      %v5992 = vadd.f32 %v5687, %v5991
      %v5993 = vpop.f32.mrb[0].mxu0
      %5994 = vmatprep.mubr.f32.mxu0 0.0
      %5995 = vmatmul.mubr.f32.gmra.mrb[0].mxu0 %v5470
      %v5996 = vpop.f32.mrb[0].mxu0
      %v5997 = vadd.f32 %v5692, %v5996
      %v5998 = vpop.f32.mrb[0].mxu0
      %5999 = vmatprep.mubr.f32.mxu0 0.0
      %6000 = vmatmul.mubr.f32.gmra.mrb[0].mxu0 %v5473
      %v6001 = vpop.f32.mrb[0].mxu0
      %v6002 = vadd.f32 %v5697, %v6001
      %v6003 = vpop.f32.mrb[0].mxu0
      %6004 = vmatprep.mubr.f32.mxu0 0.0
      %6005 = vmatmul.mubr.f32.gmra.mrb[0].mxu0 %v5476
      %v6006 = vpop.f32.mrb[0].mxu0
      %v6007 = vadd.f32 %v5702, %v6006
      %v6008 = vpop.f32.mrb[0].mxu0
      %6009 = vmatprep.mubr.f32.mxu0 0.0
      %6010 = vmatmul.mubr.f32.gmra.mrb[0].mxu0 %v5479
      %v6011 = vpop.f32.mrb[0].mxu0
      %v6012 = vadd.f32 %v5707, %v6011
      %v6013 = vpop.f32.mrb[0].mxu0
      %6014 = vmatprep.mubr.f32.mxu0 0.0
      %6015 = vmatmul.mubr.f32.gmra.mrb[0].mxu0 %v5482
      %v6016 = vpop.f32.mrb[0].mxu0
      %v6017 = vadd.f32 %v5712, %v6016
      %v6018 = vpop.f32.mrb[0].mxu0
      %6019 = vmatprep.mubr.f32.mxu0 0.0
      %6020 = vmatmul.mubr.f32.gmra.mrb[0].mxu0 %v5485
      %v6021 = vpop.f32.mrb[0].mxu0
      %v6022 = vadd.f32 %v5717, %v6021
      %v6023 = vpop.f32.mrb[0].mxu0
      %6024 = vmatprep.mubr.f32.mxu0 0.0
      %6025 = vmatmul.mubr.f32.gmra.mrb[0].mxu0 %v5488
      %v6026 = vpop.f32.mrb[0].mxu0
      %v6027 = vadd.f32 %v5722, %v6026
      %v6028 = vpop.f32.mrb[0].mxu0
      %6029 = vmatprep.mubr.f32.mxu0 0.0
      %6030 = vmatmul.mubr.f32.gmra.mrb[0].mxu0 %v5491
      %v6031 = vpop.f32.mrb[0].mxu0
      %v6032 = vadd.f32 %v5727, %v6031
      %v6033 = vpop.f32.mrb[0].mxu0
      %6034 = vmatprep.mubr.f32.mxu0 0.0
      %6035 = vmatmul.mubr.f32.gmra.mrb[0].mxu0 %v5494
      %v6036 = vpop.f32.mrb[0].mxu0
      %v6037 = vadd.f32 %v5732, %v6036
      %v6038 = vpop.f32.mrb[0].mxu0
      %6039 = vmatprep.mubr.f32.mxu0 0.0
      %6040 = vmatmul.mubr.f32.gmra.mrb[0].mxu0 %v5497
      %v6041 = vpop.f32.mrb[0].mxu0
      %v6042 = vadd.f32 %v5737, %v6041
      %v6043 = vpop.f32.mrb[0].mxu0
      %6044 = vmatprep.mubr.f32.mxu0 0.0
      %6045 = vmatmul.mubr.f32.gmra.mrb[0].mxu0 %v5500
      %v6046 = vpop.f32.mrb[0].mxu0
      %v6047 = vadd.f32 %v5742, %v6046
      %v6048 = vpop.f32.mrb[0].mxu0
      %6049 = vmatprep.mubr.f32.mxu0 0.0
      %6050 = vmatmul.mubr.f32.gmra.mrb[0].mxu0 %v5503
      %v6051 = vpop.f32.mrb[0].mxu0
      %v6052 = vadd.f32 %v5747, %v6051
      %v6053 = vpop.f32.mrb[0].mxu0
      %6054 = vmatprep.mubr.f32.mxu0 0.0
      %6055 = vmatmul.mubr.f32.gmra.mrb[0].mxu0 %v5506
      %v6056 = vpop.f32.mrb[0].mxu0
      %v6057 = vadd.f32 %v5752, %v6056
      %v6058 = vpop.f32.mrb[0].mxu0
      %6059 = vmatprep.mubr.f32.mxu0 0.0
      %6060 = vmatmul.mubr.f32.gmra.mrb[0].mxu0 %v5509
      %v6061 = vpop.f32.mrb[0].mxu0
      %v6062 = vadd.f32 %v5757, %v6061
      %v6063 = vpop.f32.mrb[0].mxu0
      %6064 = vmatprep.mubr.f32.mxu0 0.0
      %6065 = vmatmul.mubr.f32.gmra.mrb[0].mxu0 %v5512
      %v6066 = vpop.f32.mrb[0].mxu0
      %v6067 = vadd.f32 %v5762, %v6066
      %v6068 = vpop.f32.mrb[0].mxu0
      %6069 = vmatprep.mubr.f32.mxu0 0.0
      %6070 = vmatmul.mubr.f32.gmra.mrb[0].mxu0 %v5515
      %v6071 = vpop.f32.mrb[0].mxu0
      %v6072 = vadd.f32 %v5767, %v6071
      %v6073 = vpop.f32.mrb[0].mxu0
      %6074 = vmatprep.mubr.f32.mxu0 0.0
      %6075 = vmatmul.mubr.f32.gmra.mrb[0].mxu0 %v5518
      %v6076 = vpop.f32.mrb[0].mxu0
      %v6077 = vadd.f32 %v5772, %v6076
      %v6078 = vpop.f32.mrb[0].mxu0
      %6079 = vmatprep.mubr.f32.mxu0 0.0
      %6080 = vmatmul.mubr.f32.gmra.mrb[0].mxu0 %v5521
      %v6081 = vpop.f32.mrb[0].mxu0
      %v6082 = vadd.f32 %v5777, %v6081
      %v6083 = vpop.f32.mrb[0].mxu0
      %6084 = vmatprep.mubr.f32.mxu0 0.0
      %6085 = vmatmul.mubr.f32.gmra.mrb[0].mxu0 %v5524
      %v6086 = vpop.f32.mrb[0].mxu0
      %v6087 = vadd.f32 %v5782, %v6086
      %v6088 = vpop.f32.mrb[0].mxu0
      %6089 = vmatprep.mubr.f32.mxu0 0.0
      %6090 = vmatmul.mubr.f32.gmra.mrb[0].mxu0 %v5527
      %v6091 = vpop.f32.mrb[0].mxu0
      %v6092 = vadd.f32 %v5787, %v6091
      %v6093 = vpop.f32.mrb[0].mxu0
      %6094 = vmatprep.mubr.f32.mxu0 0.0
      %6095 = vmatmul.mubr.f32.gmra.mrb[0].mxu0 %v5530
      %v6096 = vpop.f32.mrb[0].mxu0
      %v6097 = vadd.f32 %v5792, %v6096
      %v6098 = vpop.f32.mrb[0].mxu0
      %6099 = vmatprep.mubr.f32.mxu0 0.0
      %6100 = vmatmul.mubr.f32.gmra.mrb[0].mxu0 %v5533
      %v6101 = vpop.f32.mrb[0].mxu0
      %v6102 = vadd.f32 %v5797, %v6101
      %v6103 = vpop.f32.mrb[0].mxu0
      %6104 = vmatprep.mubr.f32.mxu0 0.0
      %6105 = vmatmul.mubr.f32.gmra.mrb[0].mxu0 %v5536
      %v6106 = vpop.f32.mrb[0].mxu0
      %v6107 = vadd.f32 %v5802, %v6106
      %v6108 = vpop.f32.mrb[0].mxu0
      %6109 = vmatprep.mubr.f32.mxu0 0.0
      %6110 = vmatmul.mubr.f32.gmra.mrb[0].mxu0 %v5539
      %v6111 = vpop.f32.mrb[0].mxu0
      %v6112 = vadd.f32 %v5807, %v6111
      %v6113 = vpop.f32.mrb[0].mxu0
      %6114 = vmatprep.mubr.f32.mxu0 0.0
      %6115 = vmatmul.mubr.f32.gmra.mrb[0].mxu0 %v5542
      %v6116 = vpop.f32.mrb[0].mxu0
      %v6117 = vadd.f32 %v5812, %v6116
      %v6118 = vpop.f32.mrb[0].mxu0
      %6119 = vmatprep.mubr.f32.mxu0 0.0
      %6120 = vmatmul.mubr.f32.gmra.mrb[0].mxu0 %v5545
      %v6121 = vpop.f32.mrb[0].mxu0
      %v6122 = vadd.f32 %v5817, %v6121
      %v6123 = vpop.f32.mrb[0].mxu0
      %6124 = vmatprep.mubr.f32.mxu0 0.0
      %6125 = vmatmul.mubr.f32.gmra.mrb[0].mxu0 %v5548
      %v6126 = vpop.f32.mrb[0].mxu0
      %v6127 = vadd.f32 %v5822, %v6126
      %v6128 = vpop.f32.mrb[0].mxu0
      %6129 = vmatprep.mubr.f32.mxu0 0.0
      %6130 = vmatmul.mubr.f32.gmra.mrb[0].mxu0 %v5551
      %v6131 = vpop.f32.mrb[0].mxu0
      %v6132 = vadd.f32 %v5827, %v6131
      %v6133 = vpop.f32.mrb[0].mxu0
      %6134 = vmatprep.mubr.f32.mxu0 0.0
      %6135 = vmatmul.mubr.f32.gmra.mrb[0].mxu0 %v5554
      %v6136 = vpop.f32.mrb[0].mxu0
      %v6137 = vadd.f32 %v5832, %v6136
      %v6138 = vpop.f32.mrb[0].mxu0
      %6139 = vmatprep.mubr.f32.mxu0 0.0
      %6140 = vmatmul.mubr.f32.gmra.mrb[0].mxu0 %v5557
      %v6141 = vpop.f32.mrb[0].mxu0
      %v6142 = vadd.f32 %v5837, %v6141
      %v6143 = vpop.f32.mrb[0].mxu0
      %6144 = vmatprep.mubr.f32.mxu0 0.0
      %6145 = vmatmul.mubr.f32.gmra.mrb[0].mxu0 %v5560
      %v6146 = vpop.f32.mrb[0].mxu0
      %v6147 = vadd.f32 %v5842, %v6146
      %v6148 = vpop.f32.mrb[0].mxu0
      %6149 = vmatprep.mubr.f32.mxu0 0.0
      %6150 = vmatmul.mubr.f32.gmra.mrb[0].mxu0 %v5563
      %v6151 = vpop.f32.mrb[0].mxu0
      %v6152 = vadd.f32 %v5847, %v6151
      %v6153 = vpop.f32.mrb[0].mxu0
      %6154 = vmatprep.mubr.f32.mxu0 0.0
      %6155 = vmatmul.mubr.f32.gmra.mrb[0].mxu0 %v5566
      %v6156 = vpop.f32.mrb[0].mxu0
      %v6157 = vadd.f32 %v5852, %v6156
      %v6158 = vpop.f32.mrb[0].mxu0
      %6159 = vmatprep.mubr.f32.mxu0 0.0
      %6160 = vmatmul.mubr.f32.gmra.mrb[0].mxu0 %v5569
      %v6161 = vpop.f32.mrb[0].mxu0
      %v6162 = vadd.f32 %v5857, %v6161
      %v6163 = vpop.f32.mrb[0].mxu0
      %6164 = vmatprep.mubr.f32.mxu0 0.0
      %6165 = vmatmul.mubr.f32.gmra.mrb[0].mxu0 %v5572
      %v6166 = vpop.f32.mrb[0].mxu0
      %v6167 = vadd.f32 %v5862, %v6166
      %v6168 = vpop.f32.mrb[0].mxu0
      %6169 = vmatprep.mubr.f32.mxu0 0.0
      %6170 = vmatmul.mubr.f32.gmra.mrb[0].mxu0 %v5575
      %v6171 = vpop.f32.mrb[0].mxu0
      %v6172 = vadd.f32 %v5867, %v6171
      %v6173 = vpop.f32.mrb[0].mxu0
      %6174 = vmatprep.mubr.f32.mxu0 0.0
      %6175 = vmatmul.mubr.f32.gmra.mrb[0].mxu0 %v5578
      %v6176 = vpop.f32.mrb[0].mxu0
      %v6177 = vadd.f32 %v5872, %v6176
      %v6178 = vpop.f32.mrb[0].mxu0
      %6179 = vmatprep.mubr.f32.mxu0 0.0
      %6180 = vmatmul.mubr.f32.gmra.mrb[0].mxu0 %v5581
      %v6181 = vpop.f32.mrb[0].mxu0
      %v6182 = vadd.f32 %v5877, %v6181
      %v6183 = vpop.f32.mrb[0].mxu0
      %6184 = vmatprep.mubr.f32.mxu0 0.0
      %6185 = vmatmul.mubr.f32.gmra.mrb[0].mxu0 %v5584
      %v6186 = vpop.f32.mrb[0].mxu0
      %v6187 = vadd.f32 %v5882, %v6186
      %v6188 = vpop.f32.mrb[0].mxu0
      %6189 = vmatprep.mubr.f32.mxu0 0.0
      %6190 = vmatmul.mubr.f32.gmra.mrb[0].mxu0 %v5587
      %v6191 = vpop.f32.mrb[0].mxu0
      %v6192 = vadd.f32 %v5887, %v6191
      %v6193 = vpop.f32.mrb[0].mxu0
      %6194 = vmatprep.mubr.f32.mxu0 0.0
      %6195 = vmatmul.mubr.f32.gmra.mrb[0].mxu0 %v5590
      %v6196 = vpop.f32.mrb[0].mxu0
      %v6197 = vadd.f32 %v5892, %v6196
      %v6198 = vpop.f32.mrb[0].mxu0
      %6199 = vmatprep.mubr.f32.mxu0 0.0
      %6200 = vmatmul.mubr.f32.gmra.mrb[0].mxu0 %v5593
      %v6201 = vpop.f32.mrb[0].mxu0
      %v6202 = vadd.f32 %v5897, %v6201
      %v6203 = vpop.f32.mrb[0].mxu0
      %6204 = vdwg.mxu0
      %v6205 = vadd.f32 %v5967, %v5216
      %v6206 = vadd.f32 %v5972, %v5217
      %v6207 = vadd.f32 %v5977, %v5218
      %v6208 = vadd.f32 %v5982, %v5219
      %v6209 = vadd.f32 %v5987, %v5220
      %v6210 = vadd.f32 %v5992, %v5221
      %v6211 = vadd.f32 %v5997, %v5222
      %v6212 = vadd.f32 %v6002, %v5223
      %v6213 = vadd.f32 %v6007, %v5224
      %v6214 = vadd.f32 %v6012, %v5225
      %v6215 = vadd.f32 %v6017, %v5226
      %v6216 = vadd.f32 %v6022, %v5227
      %v6217 = vadd.f32 %v6027, %v5228
      %v6218 = vadd.f32 %v6032, %v5229
      %v6219 = vadd.f32 %v6037, %v5230
      %v6220 = vadd.f32 %v6042, %v5231
      %v6221 = vadd.f32 %v6047, %v5232
      %v6222 = vadd.f32 %v6052, %v5233
      %v6223 = vadd.f32 %v6057, %v5234
      %v6224 = vadd.f32 %v6062, %v5235
      %v6225 = vadd.f32 %v6067, %v5236
      %v6226 = vadd.f32 %v6072, %v5237
      %v6227 = vadd.f32 %v6077, %v5238
      %v6228 = vadd.f32 %v6082, %v5239
      %v6229 = vadd.f32 %v6087, %v5240
      %v6230 = vadd.f32 %v6092, %v5241
      %v6231 = vadd.f32 %v6097, %v5242
      %v6232 = vadd.f32 %v6102, %v5243
      %v6233 = vadd.f32 %v6107, %v5244
      %v6234 = vadd.f32 %v6112, %v5245
      %v6235 = vadd.f32 %v6117, %v5246
      %v6236 = vadd.f32 %v6122, %v5247
      %v6237 = vadd.f32 %v6127, %v5248
      %v6238 = vadd.f32 %v6132, %v5249
      %v6239 = vadd.f32 %v6137, %v5250
      %v6240 = vadd.f32 %v6142, %v5251
      %v6241 = vadd.f32 %v6147, %v5252
      %v6242 = vadd.f32 %v6152, %v5253
      %v6243 = vadd.f32 %v6157, %v5254
      %v6244 = vadd.f32 %v6162, %v5255
      %v6245 = vadd.f32 %v6167, %v5256
      %v6246 = vadd.f32 %v6172, %v5257
      %v6247 = vadd.f32 %v6177, %v5258
      %v6248 = vadd.f32 %v6182, %v5259
      %v6249 = vadd.f32 %v6187, %v5260
      %v6250 = vadd.f32 %v6192, %v5261
      %v6251 = vadd.f32 %v6197, %v5262
      %v6252 = vadd.f32 %v6202, %v5263
      %v6253 = vmax.f32 %v6205, 0.0
      %v6254 = vmax.f32 %v6206, 0.0
      %v6255 = vmax.f32 %v6207, 0.0
      %v6256 = vmax.f32 %v6208, 0.0
      %v6257 = vmax.f32 %v6209, 0.0
      %v6258 = vmax.f32 %v6210, 0.0
      %v6259 = vmax.f32 %v6211, 0.0
      %v6260 = vmax.f32 %v6212, 0.0
      %v6261 = vmax.f32 %v6213, 0.0
      %v6262 = vmax.f32 %v6214, 0.0
      %v6263 = vmax.f32 %v6215, 0.0
      %v6264 = vmax.f32 %v6216, 0.0
      %v6265 = vmax.f32 %v6217, 0.0
      %v6266 = vmax.f32 %v6218, 0.0
      %v6267 = vmax.f32 %v6219, 0.0
      %v6268 = vmax.f32 %v6220, 0.0
      %v6269 = vmax.f32 %v6221, 0.0
      %v6270 = vmax.f32 %v6222, 0.0
      %v6271 = vmax.f32 %v6223, 0.0
      %v6272 = vmax.f32 %v6224, 0.0
      %v6273 = vmax.f32 %v6225, 0.0
      %v6274 = vmax.f32 %v6226, 0.0
      %v6275 = vmax.f32 %v6227, 0.0
      %v6276 = vmax.f32 %v6228, 0.0
      %v6277 = vmax.f32 %v6229, 0.0
      %v6278 = vmax.f32 %v6230, 0.0
      %v6279 = vmax.f32 %v6231, 0.0
      %v6280 = vmax.f32 %v6232, 0.0
      %v6281 = vmax.f32 %v6233, 0.0
      %v6282 = vmax.f32 %v6234, 0.0
      %v6283 = vmax.f32 %v6235, 0.0
      %v6284 = vmax.f32 %v6236, 0.0
      %v6285 = vmax.f32 %v6237, 0.0
      %v6286 = vmax.f32 %v6238, 0.0
      %v6287 = vmax.f32 %v6239, 0.0
      %v6288 = vmax.f32 %v6240, 0.0
      %v6289 = vmax.f32 %v6241, 0.0
      %v6290 = vmax.f32 %v6242, 0.0
      %v6291 = vmax.f32 %v6243, 0.0
      %v6292 = vmax.f32 %v6244, 0.0
      %v6293 = vmax.f32 %v6245, 0.0
      %v6294 = vmax.f32 %v6246, 0.0
      %v6295 = vmax.f32 %v6247, 0.0
      %v6296 = vmax.f32 %v6248, 0.0
      %v6297 = vmax.f32 %v6249, 0.0
      %v6298 = vmax.f32 %v6250, 0.0
      %v6299 = vmax.f32 %v6251, 0.0
      %v6300 = vmax.f32 %v6252, 0.0
      %6301 = vst.msk [vmem:[%s251] sm:$0xff] %vm300, %v6253
      %6302 = vst.msk [vmem:[%s251 + $0x8] sm:$0xff] %vm300, %v6254
      %6303 = vst.msk [vmem:[%s251 + $0x10] sm:$0xff] %vm300, %v6255
      %6304 = vst.msk [vmem:[%s251 + $0x18] sm:$0xff] %vm300, %v6256
      %6305 = vst.msk [vmem:[%s251 + $0x20] sm:$0xff] %vm300, %v6257
      %6306 = vst.msk [vmem:[%s251 + $0x28] sm:$0xff] %vm300, %v6258
      %6307 = vst.msk [vmem:[%s251 + $0x30] sm:$0xff] %vm300, %v6259
      %6308 = vst.msk [vmem:[%s251 + $0x38] sm:$0xff] %vm300, %v6260
      %6309 = vst.msk [vmem:[%s251 + $0x40] sm:$0xff] %vm300, %v6261
      %6310 = vst.msk [vmem:[%s251 + $0x48] sm:$0xff] %vm300, %v6262
      %6311 = vst.msk [vmem:[%s251 + $0x50] sm:$0xff] %vm300, %v6263
      %6312 = vst.msk [vmem:[%s251 + $0x58] sm:$0xff] %vm300, %v6264
      %6313 = vst.msk [vmem:[%s251 + $0x60] sm:$0xff] %vm300, %v6265
      %6314 = vst.msk [vmem:[%s251 + $0x68] sm:$0xff] %vm300, %v6266
      %6315 = vst.msk [vmem:[%s251 + $0x70] sm:$0xff] %vm300, %v6267
      %6316 = vst.msk [vmem:[%s251 + $0x78] sm:$0xff] %vm300, %v6268
      %6317 = vst.msk [vmem:[%s251 + $0x80] sm:$0xff] %vm300, %v6269
      %6318 = vst.msk [vmem:[%s251 + $0x88] sm:$0xff] %vm300, %v6270
      %6319 = vst.msk [vmem:[%s251 + $0x90] sm:$0xff] %vm300, %v6271
      %6320 = vst.msk [vmem:[%s251 + $0x98] sm:$0xff] %vm300, %v6272
      %6321 = vst.msk [vmem:[%s251 + $0xa0] sm:$0xff] %vm300, %v6273
      %6322 = vst.msk [vmem:[%s251 + $0xa8] sm:$0xff] %vm300, %v6274
      %6323 = vst.msk [vmem:[%s251 + $0xb0] sm:$0xff] %vm300, %v6275
      %6324 = vst.msk [vmem:[%s251 + $0xb8] sm:$0xff] %vm300, %v6276
      %6325 = vst.msk [vmem:[%s251 + $0xc0] sm:$0xff] %vm300, %v6277
      %6326 = vst.msk [vmem:[%s251 + $0xc8] sm:$0xff] %vm300, %v6278
      %6327 = vst.msk [vmem:[%s251 + $0xd0] sm:$0xff] %vm300, %v6279
      %6328 = vst.msk [vmem:[%s251 + $0xd8] sm:$0xff] %vm300, %v6280
      %6329 = vst.msk [vmem:[%s251 + $0xe0] sm:$0xff] %vm300, %v6281
      %6330 = vst.msk [vmem:[%s251 + $0xe8] sm:$0xff] %vm300, %v6282
      %6331 = vst.msk [vmem:[%s251 + $0xf0] sm:$0xff] %vm300, %v6283
      %6332 = vst.msk [vmem:[%s251 + $0xf8] sm:$0xff] %vm300, %v6284
      %6333 = vst.msk [vmem:[%s251 + $0x100] sm:$0xff] %vm300, %v6285
      %6334 = vst.msk [vmem:[%s251 + $0x108] sm:$0xff] %vm300, %v6286
      %6335 = vst.msk [vmem:[%s251 + $0x110] sm:$0xff] %vm300, %v6287
      %6336 = vst.msk [vmem:[%s251 + $0x118] sm:$0xff] %vm300, %v6288
      %6337 = vst.msk [vmem:[%s251 + $0x120] sm:$0xff] %vm300, %v6289
      %6338 = vst.msk [vmem:[%s251 + $0x128] sm:$0xff] %vm300, %v6290
      %6339 = vst.msk [vmem:[%s251 + $0x130] sm:$0xff] %vm300, %v6291
      %6340 = vst.msk [vmem:[%s251 + $0x138] sm:$0xff] %vm300, %v6292
      %6341 = vst.msk [vmem:[%s251 + $0x140] sm:$0xff] %vm300, %v6293
      %6342 = vst.msk [vmem:[%s251 + $0x148] sm:$0xff] %vm300, %v6294
      %6343 = vst.msk [vmem:[%s251 + $0x150] sm:$0xff] %vm300, %v6295
      %6344 = vst.msk [vmem:[%s251 + $0x158] sm:$0xff] %vm300, %v6296
      %6345 = vst.msk [vmem:[%s251 + $0x160] sm:$0xff] %vm300, %v6297
      %6346 = vst.msk [vmem:[%s251 + $0x168] sm:$0xff] %vm300, %v6298
      %6347 = vst.msk [vmem:[%s251 + $0x170] sm:$0xff] %vm300, %v6299
      %6348 = vst.msk [vmem:[%s251 + $0x178] sm:$0xff] %vm300, %v6300
      %p6349 = scmp.lt.s32.totalorder %s17, 1
      %s6350 = scalar_select %p6349, %s17, 1
      %s6351 = smul.addr %s6350, 48
      %s6352 = smul.addr %s6351, 8
      %s6353 = scalar_lea.vmem %s6, %s6352
      // Predicated region
      $region45: #{basic_residual_block_forward.1} parent=43 // pred_check
        %p6354 = pneg %p166
      $region46: #{basic_residual_block_forward.1} parent=43 // pred_check_branch
        %6356 = sbr.rel (%p6354) target = $region48
      $region47: #{basic_residual_block_forward.1} parent=43 // pred_region
        _
      $region48: #{basic_residual_block_forward.1} parent=43 // pred_fallthru
        _
    $region44: #{basic_residual_block_forward.1} parent=5 // pred_fallthru
      _
    %p6357 = scmp.le.s32.totalorder 2, %s12
    // Predicated region
    $region49: #{basic_residual_block_forward.1} parent=5 // pred_check
      %p6358 = pneg %p6357
    $region50: #{basic_residual_block_forward.1} parent=5 // pred_check_branch
      %6360 = sbr.rel (%p6358) target = $region52
    $region51: #{basic_residual_block_forward.1} parent=5 // pred_region
      %s6361 = ssub.s32 %s12, 2
      // Predicated region
      $region53: #{basic_residual_block_forward.1} parent=51 // pred_check
        %p6362 = pneg %p172
      $region54: #{basic_residual_block_forward.1} parent=51 // pred_check_branch
        %6364 = sbr.rel (%p6362) target = $region56
      $region55: #{basic_residual_block_forward.1} parent=51 // pred_region
        %p6365 = scmp.lt.s32.totalorder %s18, 1
        %s6366 = scalar_select %p6365, %s18, 1
        %s6367 = smul.addr %s6366, 48
        %s6368 = smul.addr %s6367, 8
        %s6369 = scalar_lea.vmem %s6, %s6368
      $region56: #{basic_residual_block_forward.1} parent=51 // pred_fallthru
        _
    $region52: #{basic_residual_block_forward.1} parent=5 // pred_fallthru
      _
  $region6: #{basic_residual_block_forward.1} parent=0 // loop_footer
    %s16 = sadd.s32 1, %s12
  $region7: #{basic_residual_block_forward.1} parent=0 // loop_footer_branch
    %11 = sbr.rel target = $region3
  $region8: #{basic_residual_block_forward.1} parent=0 // loop_exit
    _

</llo_original>
